<compile_context>
chip_gen: v6e
topology: v6e:2x2x1
jax: 0.10.0
libtpu: 0.0.40
codegen_flags: <defaults>
</compile_context>

<pallas_src>
import functools

import jax
import jax.numpy as jnp
from jax.experimental import pallas as pl
from jax.experimental.pallas import tpu as pltpu


# ---------------------------------------------------------------------------
# Fused Pallas kernel: entire FSRCNN forward for one batch element.
# Activation layout inside the kernel: (channels, H*W) with spatial on lanes.
# ---------------------------------------------------------------------------
def _fsrcnn_kernel(x_ref, mask5_ref, mask3_ref,
                   w1_ref, ba1_ref, w2_ref, ba2_ref,
                   wm_ref, bam_ref, w7_ref, ba7_ref,
                   w8_ref, ba8_ref,
                   o_ref,
                   im1_ref, im3_ref, im8_ref,
                   *, H, W, m):
    HW = H * W
    d = w1_ref.shape[0]       # 56 feature channels
    s_ch = w2_ref.shape[0]    # 16 shrink channels

    def store_tap(im_ref, row0, rows, a, dy, dx, p, mask_ref, t):
        # Writes row block t of the im2col matrix: activation `a` (rows, HW)
        # shifted by conv tap (dy, dx) with zero padding.  Realized as a
        # static column-range store plus a precomputed boundary mask -> no
        # in-kernel reshapes / rolls / unaligned concats.
        off = (dy - p) * W + (dx - p)
        lo = max(0, -off)              # first valid output column
        hi = HW - max(0, off)          # one past last valid output column
        im_ref[row0:row0 + rows, lo:hi] = (
            a[:, lo + off:hi + off] * mask_ref[t:t + 1, lo:hi])
        if lo > 0:
            im_ref[row0:row0 + rows, 0:lo] = jnp.zeros((rows, lo), jnp.float32)
        if hi < HW:
            im_ref[row0:row0 + rows, hi:HW] = jnp.zeros((rows, HW - hi),
                                                        jnp.float32)

    def bias_prelu(acc, ba, prelu=True):
        acc = acc + ba[:, 0:1]                      # per-channel bias
        if prelu:
            acc = jnp.where(acc >= 0.0, acc, acc * ba[:, 1:2])
        return acc

    # ---- first_part: Conv2d(1 -> d, k=5, pad=2) + PReLU(d) -----------------
    x0 = x_ref[0]                                   # (1, HW)
    for dy in range(5):
        for dx in range(5):
            t = dy * 5 + dx
            store_tap(im1_ref, t, 1, x0, dy, dx, 2, mask5_ref, t)
    a = jnp.dot(w1_ref[...], im1_ref[...], preferred_element_type=jnp.float32)
    a = bias_prelu(a, ba1_ref[...])                 # (d, HW)

    # ---- mid_part[0]: Conv2d(d -> s, k=1) + PReLU(s) -----------------------
    a = jnp.dot(w2_ref[...], a, preferred_element_type=jnp.float32)
    a = bias_prelu(a, ba2_ref[...])                 # (s, HW)

    # ---- mid_part[1..m]: Conv2d(s -> s, k=3, pad=1) + PReLU(s) -------------
    for i in range(m):
        for dy in range(3):
            for dx in range(3):
                t = dy * 3 + dx
                store_tap(im3_ref, t * s_ch, s_ch, a, dy, dx, 1, mask3_ref, t)
        a = jnp.dot(wm_ref[i], im3_ref[...], preferred_element_type=jnp.float32)
        a = bias_prelu(a, bam_ref[i])               # (s, HW)

    # ---- mid_part[-1]: Conv2d(s -> d, k=1) + PReLU(d) ----------------------
    a = jnp.dot(w7_ref[...], a, preferred_element_type=jnp.float32)
    a = bias_prelu(a, ba7_ref[...])                 # (d, HW)

    # ---- last_part: ConvTranspose2d(d -> 1, k=9, stride=2, pad=4, op=1) ----
    # expressed as a 4-phase (sub-pixel) 5x5 conv over the low-res grid; the
    # phantom taps are zeros folded into the phase weight matrix.
    for dy in range(5):
        for dx in range(5):
            t = dy * 5 + dx
            store_tap(im8_ref, t * d, d, a, dy, dx, 2, mask5_ref, t)
    y = jnp.dot(w8_ref[...], im8_ref[...], preferred_element_type=jnp.float32)
    y = y + ba8_ref[:, 0:1]
    o_ref[0] = y.astype(o_ref.dtype)                # (4 phases, HW) lane-dense


# ---------------------------------------------------------------------------
# Plain-JAX packing glue (runs once under jit): weight re-layouts + masks
# ---------------------------------------------------------------------------
def _conv_w_mat(w):
    # PyTorch Conv2d (Cout, Cin, K, K) -> (Cout, K*K*Cin), column = (dy,dx,ci)
    cout, cin, k, _ = w.shape
    return jnp.transpose(w, (0, 2, 3, 1)).reshape(cout, k * k * cin)


def _bias_alpha(b, a):
    return jnp.stack([b, a], axis=1).astype(jnp.float32)      # (Cout, 2)


def _deconv_phase_weight(wt, stride):
    # ConvTranspose2d(d->1, k=9, stride=2, pad=4, output_padding=1) as a
    # sub-pixel decomposition: 4 output phases, each a 5x5 conv (pad=2) over
    # the low-res grid; taps whose source ky/kx fall outside [0,9) are zero.
    cin, cout, K, _ = wt.shape
    assert cout == 1 and stride == 2 and K == 9
    T = (K + stride - 1) // stride                              # 5
    w = wt[:, 0]                                                # (Cin, K, K)
    blk = jnp.zeros((stride, stride, T, T, cin), jnp.float32)
    for py in range(stride):
        for px in range(stride):
            for dy in range(T):
                ky = (K - 1) + py - stride * dy
                if not 0 <= ky < K:
                    continue
                for dx in range(T):
                    kx = (K - 1) + px - stride * dx
                    if not 0 <= kx < K:
                        continue
                    blk = blk.at[py, px, dy, dx, :].set(w[:, ky, kx])
    return blk.reshape(stride * stride, T * T * cin)            # (4, 25*Cin)


def _tap_masks(K, p, H, W):
    # mask[t, y*W+x] = 1 iff input pixel (y+dy-p, x+dx-p) is in-bounds
    y = jnp.arange(H).reshape(H, 1)
    x = jnp.arange(W).reshape(1, W)
    rows = []
    for dy in range(K):
        for dx in range(K):
            ok = ((y + dy - p >= 0) & (y + dy - p < H) &
                  (x + dx - p >= 0) & (x + dx - p < W))
            rows.append(ok.reshape(H * W))
    return jnp.stack(rows, 0).astype(jnp.float32)               # (K*K, H*W)


# ---------------------------------------------------------------------------
# Public forward pass (PyTorch-style NCHW in / NCHW out)
# ---------------------------------------------------------------------------
@functools.partial(jax.jit, static_argnames=("scale",))
def fsrcnn_forward(params, x_nchw, *, scale=2):
    N, C, H, W = x_nchw.shape
    assert C == 1
    HW = H * W
    m = len(params["mid"]) - 2

    # pack parameters into kernel layouts
    w1t, b1, a1 = params["first"]
    w1, ba1 = _conv_w_mat(w1t), _bias_alpha(b1, a1)
    w2t, b2, a2 = params["mid"][0]
    w2, ba2 = _conv_w_mat(w2t), _bias_alpha(b2, a2)
    wm = jnp.stack([_conv_w_mat(params["mid"][1 + i][0]) for i in range(m)])
    bam = jnp.stack([_bias_alpha(params["mid"][1 + i][1],
                                 params["mid"][1 + i][2]) for i in range(m)])
    w7t, b7, a7 = params["mid"][m + 1]
    w7, ba7 = _conv_w_mat(w7t), _bias_alpha(b7, a7)
    wt, bt = params["last"]
    w8 = _deconv_phase_weight(wt, scale)                        # (4, 25*d)
    ba8 = jnp.stack([jnp.broadcast_to(bt, (scale * scale,)),
                     jnp.zeros((scale * scale,), jnp.float32)], axis=1)

    mask5 = _tap_masks(5, 2, H, W)      # shared by first conv and deconv phases
    mask3 = _tap_masks(3, 1, H, W)

    x_flat = x_nchw.reshape(N, 1, HW)
    d, s_ch = w1.shape[0], w2.shape[0]

    kernel = functools.partial(_fsrcnn_kernel, H=H, W=W, m=m)

    def full_spec(arr):
        nd = arr.ndim
        return pl.BlockSpec(arr.shape, lambda n, _nd=nd: (0,) * _nd)

    out_ph = pl.pallas_call(
        kernel,
        out_shape=jax.ShapeDtypeStruct((N, scale * scale, HW), x_nchw.dtype),
        grid=(N,),
        in_specs=[
            pl.BlockSpec((1, 1, HW), lambda n: (n, 0, 0)),
            full_spec(mask5), full_spec(mask3),
            full_spec(w1), full_spec(ba1),
            full_spec(w2), full_spec(ba2),
            full_spec(wm), full_spec(bam),
            full_spec(w7), full_spec(ba7),
            full_spec(w8), full_spec(ba8),
        ],
        out_specs=pl.BlockSpec((1, scale * scale, HW), lambda n: (n, 0, 0)),
        scratch_shapes=[
            pltpu.VMEM((25, HW), jnp.float32),          # first-layer im2col
            pltpu.VMEM((9 * s_ch, HW), jnp.float32),    # 3x3 layers im2col
            pltpu.VMEM((25 * d, HW), jnp.float32),      # deconv-phase im2col
        ],
        compiler_params=pltpu.CompilerParams(
            dimension_semantics=("parallel",)),
    )(x_flat, mask5, mask3, w1, ba1, w2, ba2, wm, bam, w7, ba7, w8, ba8)

    # interleave the stride^2 phases back to the high-res image (layout glue)
    y = out_ph.reshape(N, scale, scale, H, W).transpose(0, 3, 1, 4, 2)
    return y.reshape(N, 1, H * scale, W * scale)


# ---------------------------------------------------------------------------
# FSRCNN parameters (deterministic synthetic init, PyTorch layouts)
# ---------------------------------------------------------------------------
def init_params(key, num_channels=1, d=56, s=16, m=4):
    keys = jax.random.split(key, m + 4)

    def conv_wb(k, cout, cin, ksz, shape=None):
        kw, kb = jax.random.split(k)
        wshape = shape if shape is not None else (cout, cin, ksz, ksz)
        w = jax.random.normal(kw, wshape, jnp.float32) * 0.1
        b = jax.random.normal(kb, (cout,), jnp.float32) * 0.01
        return w, b

    params = {}
    w, b = conv_wb(keys[0], d, num_channels, 5)
    params["first"] = (w, b, jnp.full((d,), 0.25, jnp.float32))

    mid = []
    w, b = conv_wb(keys[1], s, d, 1)
    mid.append((w, b, jnp.full((s,), 0.25, jnp.float32)))
    for i in range(m):
        w, b = conv_wb(keys[2 + i], s, s, 3)
        mid.append((w, b, jnp.full((s,), 0.25, jnp.float32)))
    w, b = conv_wb(keys[2 + m], d, s, 1)
    mid.append((w, b, jnp.full((d,), 0.25, jnp.float32)))
    params["mid"] = mid

    # ConvTranspose2d weight layout: (in_channels=d, out_channels=1, 9, 9)
    wt, bt = conv_wb(keys[m + 3], num_channels, d, 9,
                     shape=(d, num_channels, 9, 9))
    params["last"] = (wt, bt)
    return params


# ---------------------------------------------------------------------------
# Pure-JAX (XLA conv) reference for correctness checking
# ---------------------------------------------------------------------------
def _ref_conv(x, w, b, pad):
    w_hwio = jnp.transpose(w, (2, 3, 1, 0))
    y = jax.lax.conv_general_dilated(
        x, w_hwio, window_strides=(1, 1),
        padding=((pad, pad), (pad, pad)),
        dimension_numbers=('NHWC', 'HWIO', 'NHWC'))
    return y + b.reshape(1, 1, 1, -1)


def _ref_prelu(x, a):
    a = a.reshape(1, 1, 1, -1)
    return jnp.where(x >= 0, x, x * a)


def _ref_deconv(x, wt, b, stride, pad, out_pad, K):
    w_hwio = jnp.transpose(jnp.flip(wt, axis=(2, 3)), (2, 3, 0, 1))
    y = jax.lax.conv_general_dilated(
        x, w_hwio, window_strides=(1, 1),
        padding=((K - 1 - pad, K - 1 - pad + out_pad),) * 2,
        lhs_dilation=(stride, stride),
        dimension_numbers=('NHWC', 'HWIO', 'NHWC'))
    return y + b.reshape(1, 1, 1, -1)


def fsrcnn_reference(params, x_nchw, *, scale=2):
    x = jnp.transpose(x_nchw, (0, 2, 3, 1))
    w, b, a = params["first"]
    x = _ref_prelu(_ref_conv(x, w, b, pad=2), a)
    for (w, b, a) in params["mid"]:
        x = _ref_prelu(_ref_conv(x, w, b, pad=w.shape[-1] // 2), a)
    wt, bt = params["last"]
    x = _ref_deconv(x, wt, bt, stride=scale, pad=4, out_pad=scale - 1, K=9)
    return jnp.transpose(x, (0, 3, 1, 2))


if __name__ == "__main__":
    key = jax.random.PRNGKey(0)
    kp, kx = jax.random.split(key)

    scale_factor = 2
    params = init_params(kp)
    x = jax.random.normal(kx, (2, 1, 16, 16), jnp.float32)   # NCHW like PyTorch

    out = jax.block_until_ready(fsrcnn_forward(params, x, scale=scale_factor))
    ref = jax.block_until_ready(fsrcnn_reference(params, x, scale=scale_factor))

    assert out.shape == (2, 1, 16 * scale_factor, 16 * scale_factor), out.shape
    max_err = float(jnp.max(jnp.abs(out - ref)))
    assert jnp.allclose(out, ref, atol=1e-4, rtol=1e-4), max_err
    print("KERNEL_OK")
</pallas_src>

<mosaic_0001>
module attributes {stable_mosaic.version = 11 : i64} {
  func.func @_fsrcnn_kernel(%arg0: i32, %arg1: memref<1x1x256xf32, #tpu.memory_space<vmem>>, %arg2: memref<25x256xf32, #tpu.memory_space<vmem>>, %arg3: memref<9x256xf32, #tpu.memory_space<vmem>>, %arg4: memref<56x25xf32, #tpu.memory_space<vmem>>, %arg5: memref<56x2xf32, #tpu.memory_space<vmem>>, %arg6: memref<16x56xf32, #tpu.memory_space<vmem>>, %arg7: memref<16x2xf32, #tpu.memory_space<vmem>>, %arg8: memref<4x16x144xf32, #tpu.memory_space<vmem>>, %arg9: memref<4x16x2xf32, #tpu.memory_space<vmem>>, %arg10: memref<56x16xf32, #tpu.memory_space<vmem>>, %arg11: memref<56x2xf32, #tpu.memory_space<vmem>>, %arg12: memref<4x1400xf32, #tpu.memory_space<vmem>>, %arg13: memref<4x2xf32, #tpu.memory_space<vmem>>, %arg14: memref<1x4x256xf32, #tpu.memory_space<vmem>>, %arg15: memref<25x256xf32, #tpu.memory_space<vmem>>, %arg16: memref<144x256xf32, #tpu.memory_space<vmem>>, %arg17: memref<1400x256xf32, #tpu.memory_space<vmem>>) attributes {dimension_semantics = [#tpu.dimension_semantics<parallel>], iteration_bounds = array<i64: 2>, scalar_prefetch = 0 : i64, scratch_operands = 3 : i64, tpu.core_type = #tpu.core_type<tc>, window_params = [{transform_indices = @transform_0, window_bounds = array<i64: 1, 1, 256>}, {pipeline_mode = #tpu.pipeline_mode<synchronous>, transform_indices = @transform_1, window_bounds = array<i64: 25, 256>}, {pipeline_mode = #tpu.pipeline_mode<synchronous>, transform_indices = @transform_2, window_bounds = array<i64: 9, 256>}, {pipeline_mode = #tpu.pipeline_mode<synchronous>, transform_indices = @transform_3, window_bounds = array<i64: 56, 25>}, {pipeline_mode = #tpu.pipeline_mode<synchronous>, transform_indices = @transform_4, window_bounds = array<i64: 56, 2>}, {pipeline_mode = #tpu.pipeline_mode<synchronous>, transform_indices = @transform_5, window_bounds = array<i64: 16, 56>}, {pipeline_mode = #tpu.pipeline_mode<synchronous>, transform_indices = @transform_6, window_bounds = array<i64: 16, 2>}, {pipeline_mode = #tpu.pipeline_mode<synchronous>, transform_indices = @transform_7, window_bounds = array<i64: 4, 16, 144>}, {pipeline_mode = #tpu.pipeline_mode<synchronous>, transform_indices = @transform_8, window_bounds = array<i64: 4, 16, 2>}, {pipeline_mode = #tpu.pipeline_mode<synchronous>, transform_indices = @transform_9, window_bounds = array<i64: 56, 16>}, {pipeline_mode = #tpu.pipeline_mode<synchronous>, transform_indices = @transform_10, window_bounds = array<i64: 56, 2>}, {pipeline_mode = #tpu.pipeline_mode<synchronous>, transform_indices = @transform_11, window_bounds = array<i64: 4, 1400>}, {pipeline_mode = #tpu.pipeline_mode<synchronous>, transform_indices = @transform_12, window_bounds = array<i64: 4, 2>}, {transform_indices = @transform_13, window_bounds = array<i64: 1, 4, 256>}]} {
    %c0 = arith.constant 0 : index
    %c0_0 = arith.constant 0 : index
    %c0_1 = arith.constant 0 : index
    %0 = vector.load %arg1[%c0, %c0_0, %c0_1] : memref<1x1x256xf32, #tpu.memory_space<vmem>>, vector<1x1x256xf32>
    %1 = vector.shape_cast %0 : vector<1x1x256xf32> to vector<1x256xf32>
    %2 = vector.extract_strided_slice %1 {offsets = [0, 0], sizes = [1, 222], strides = [1, 1]} : vector<1x256xf32> to vector<1x222xf32>
    %c0_2 = arith.constant 0 : index
    %c34 = arith.constant 34 : index
    %3 = vector.load %arg2[%c0_2, %c34] : memref<25x256xf32, #tpu.memory_space<vmem>>, vector<1x222xf32>
    %4 = arith.mulf %2, %3 : vector<1x222xf32>
    %c0_3 = arith.constant 0 : index
    %c34_4 = arith.constant 34 : index
    %5 = vector.load %arg15[%c0_3, %c34_4] : memref<25x256xf32, #tpu.memory_space<vmem>>, vector<1x222xf32>
    tpu.vector_store %arg15[%c0_3, %c34_4], %4 {strides = array<i32>} : memref<25x256xf32, #tpu.memory_space<vmem>>, vector<1x222xf32>,
    %cst = arith.constant 0.000000e+00 : f32
    %6 = vector.broadcast %cst : f32 to vector<1x34xf32>
    %c0_5 = arith.constant 0 : index
    %c0_6 = arith.constant 0 : index
    %7 = vector.load %arg15[%c0_5, %c0_6] : memref<25x256xf32, #tpu.memory_space<vmem>>, vector<1x34xf32>
    tpu.vector_store %arg15[%c0_5, %c0_6], %6 {strides = array<i32>} : memref<25x256xf32, #tpu.memory_space<vmem>>, vector<1x34xf32>,
    %8 = vector.extract_strided_slice %1 {offsets = [0, 0], sizes = [1, 223], strides = [1, 1]} : vector<1x256xf32> to vector<1x223xf32>
    %c1 = arith.constant 1 : index
    %c33 = arith.constant 33 : index
    %9 = vector.load %arg2[%c1, %c33] : memref<25x256xf32, #tpu.memory_space<vmem>>, vector<1x223xf32>
    %10 = arith.mulf %8, %9 : vector<1x223xf32>
    %c1_7 = arith.constant 1 : index
    %c33_8 = arith.constant 33 : index
    %11 = vector.load %arg15[%c1_7, %c33_8] : memref<25x256xf32, #tpu.memory_space<vmem>>, vector<1x223xf32>
    tpu.vector_store %arg15[%c1_7, %c33_8], %10 {strides = array<i32>} : memref<25x256xf32, #tpu.memory_space<vmem>>, vector<1x223xf32>,
    %cst_9 = arith.constant 0.000000e+00 : f32
    %12 = vector.broadcast %cst_9 : f32 to vector<1x33xf32>
    %c1_10 = arith.constant 1 : index
    %c0_11 = arith.constant 0 : index
    %13 = vector.load %arg15[%c1_10, %c0_11] : memref<25x256xf32, #tpu.memory_space<vmem>>, vector<1x33xf32>
    tpu.vector_store %arg15[%c1_10, %c0_11], %12 {strides = array<i32>} : memref<25x256xf32, #tpu.memory_space<vmem>>, vector<1x33xf32>,
    %14 = vector.extract_strided_slice %1 {offsets = [0, 0], sizes = [1, 224], strides = [1, 1]} : vector<1x256xf32> to vector<1x224xf32>
    %c2 = arith.constant 2 : index
    %c32 = arith.constant 32 : index
    %15 = vector.load %arg2[%c2, %c32] : memref<25x256xf32, #tpu.memory_space<vmem>>, vector<1x224xf32>
    %16 = arith.mulf %14, %15 : vector<1x224xf32>
    %c2_12 = arith.constant 2 : index
    %c32_13 = arith.constant 32 : index
    %17 = vector.load %arg15[%c2_12, %c32_13] : memref<25x256xf32, #tpu.memory_space<vmem>>, vector<1x224xf32>
    tpu.vector_store %arg15[%c2_12, %c32_13], %16 {strides = array<i32>} : memref<25x256xf32, #tpu.memory_space<vmem>>, vector<1x224xf32>,
    %cst_14 = arith.constant 0.000000e+00 : f32
    %18 = vector.broadcast %cst_14 : f32 to vector<1x32xf32>
    %c2_15 = arith.constant 2 : index
    %c0_16 = arith.constant 0 : index
    %19 = vector.load %arg15[%c2_15, %c0_16] : memref<25x256xf32, #tpu.memory_space<vmem>>, vector<1x32xf32>
    tpu.vector_store %arg15[%c2_15, %c0_16], %18 {strides = array<i32>} : memref<25x256xf32, #tpu.memory_space<vmem>>, vector<1x32xf32>,
    %20 = vector.extract_strided_slice %1 {offsets = [0, 0], sizes = [1, 225], strides = [1, 1]} : vector<1x256xf32> to vector<1x225xf32>
    %c3 = arith.constant 3 : index
    %c31 = arith.constant 31 : index
    %21 = vector.load %arg2[%c3, %c31] : memref<25x256xf32, #tpu.memory_space<vmem>>, vector<1x225xf32>
    %22 = arith.mulf %20, %21 : vector<1x225xf32>
    %c3_17 = arith.constant 3 : index
    %c31_18 = arith.constant 31 : index
    %23 = vector.load %arg15[%c3_17, %c31_18] : memref<25x256xf32, #tpu.memory_space<vmem>>, vector<1x225xf32>
    tpu.vector_store %arg15[%c3_17, %c31_18], %22 {strides = array<i32>} : memref<25x256xf32, #tpu.memory_space<vmem>>, vector<1x225xf32>,
    %cst_19 = arith.constant 0.000000e+00 : f32
    %24 = vector.broadcast %cst_19 : f32 to vector<1x31xf32>
    %c3_20 = arith.constant 3 : index
    %c0_21 = arith.constant 0 : index
    %25 = vector.load %arg15[%c3_20, %c0_21] : memref<25x256xf32, #tpu.memory_space<vmem>>, vector<1x31xf32>
    tpu.vector_store %arg15[%c3_20, %c0_21], %24 {strides = array<i32>} : memref<25x256xf32, #tpu.memory_space<vmem>>, vector<1x31xf32>,
    %26 = vector.extract_strided_slice %1 {offsets = [0, 0], sizes = [1, 226], strides = [1, 1]} : vector<1x256xf32> to vector<1x226xf32>
    %c4 = arith.constant 4 : index
    %c30 = arith.constant 30 : index
    %27 = vector.load %arg2[%c4, %c30] : memref<25x256xf32, #tpu.memory_space<vmem>>, vector<1x226xf32>
    %28 = arith.mulf %26, %27 : vector<1x226xf32>
    %c4_22 = arith.constant 4 : index
    %c30_23 = arith.constant 30 : index
    %29 = vector.load %arg15[%c4_22, %c30_23] : memref<25x256xf32, #tpu.memory_space<vmem>>, vector<1x226xf32>
    tpu.vector_store %arg15[%c4_22, %c30_23], %28 {strides = array<i32>} : memref<25x256xf32, #tpu.memory_space<vmem>>, vector<1x226xf32>,
    %cst_24 = arith.constant 0.000000e+00 : f32
    %30 = vector.broadcast %cst_24 : f32 to vector<1x30xf32>
    %c4_25 = arith.constant 4 : index
    %c0_26 = arith.constant 0 : index
    %31 = vector.load %arg15[%c4_25, %c0_26] : memref<25x256xf32, #tpu.memory_space<vmem>>, vector<1x30xf32>
    tpu.vector_store %arg15[%c4_25, %c0_26], %30 {strides = array<i32>} : memref<25x256xf32, #tpu.memory_space<vmem>>, vector<1x30xf32>,
    %32 = vector.extract_strided_slice %1 {offsets = [0, 0], sizes = [1, 238], strides = [1, 1]} : vector<1x256xf32> to vector<1x238xf32>
    %c5 = arith.constant 5 : index
    %c18 = arith.constant 18 : index
    %33 = vector.load %arg2[%c5, %c18] : memref<25x256xf32, #tpu.memory_space<vmem>>, vector<1x238xf32>
    %34 = arith.mulf %32, %33 : vector<1x238xf32>
    %c5_27 = arith.constant 5 : index
    %c18_28 = arith.constant 18 : index
    %35 = vector.load %arg15[%c5_27, %c18_28] : memref<25x256xf32, #tpu.memory_space<vmem>>, vector<1x238xf32>
    tpu.vector_store %arg15[%c5_27, %c18_28], %34 {strides = array<i32>} : memref<25x256xf32, #tpu.memory_space<vmem>>, vector<1x238xf32>,
    %cst_29 = arith.constant 0.000000e+00 : f32
    %36 = vector.broadcast %cst_29 : f32 to vector<1x18xf32>
    %c5_30 = arith.constant 5 : index
    %c0_31 = arith.constant 0 : index
    %37 = vector.load %arg15[%c5_30, %c0_31] : memref<25x256xf32, #tpu.memory_space<vmem>>, vector<1x18xf32>
    tpu.vector_store %arg15[%c5_30, %c0_31], %36 {strides = array<i32>} : memref<25x256xf32, #tpu.memory_space<vmem>>, vector<1x18xf32>,
    %38 = vector.extract_strided_slice %1 {offsets = [0, 0], sizes = [1, 239], strides = [1, 1]} : vector<1x256xf32> to vector<1x239xf32>
    %c6 = arith.constant 6 : index
    %c17 = arith.constant 17 : index
    %39 = vector.load %arg2[%c6, %c17] : memref<25x256xf32, #tpu.memory_space<vmem>>, vector<1x239xf32>
    %40 = arith.mulf %38, %39 : vector<1x239xf32>
    %c6_32 = arith.constant 6 : index
    %c17_33 = arith.constant 17 : index
    %41 = vector.load %arg15[%c6_32, %c17_33] : memref<25x256xf32, #tpu.memory_space<vmem>>, vector<1x239xf32>
    tpu.vector_store %arg15[%c6_32, %c17_33], %40 {strides = array<i32>} : memref<25x256xf32, #tpu.memory_space<vmem>>, vector<1x239xf32>,
    %cst_34 = arith.constant 0.000000e+00 : f32
    %42 = vector.broadcast %cst_34 : f32 to vector<1x17xf32>
    %c6_35 = arith.constant 6 : index
    %c0_36 = arith.constant 0 : index
    %43 = vector.load %arg15[%c6_35, %c0_36] : memref<25x256xf32, #tpu.memory_space<vmem>>, vector<1x17xf32>
    tpu.vector_store %arg15[%c6_35, %c0_36], %42 {strides = array<i32>} : memref<25x256xf32, #tpu.memory_space<vmem>>, vector<1x17xf32>,
    %44 = vector.extract_strided_slice %1 {offsets = [0, 0], sizes = [1, 240], strides = [1, 1]} : vector<1x256xf32> to vector<1x240xf32>
    %c7 = arith.constant 7 : index
    %c16 = arith.constant 16 : index
    %45 = vector.load %arg2[%c7, %c16] : memref<25x256xf32, #tpu.memory_space<vmem>>, vector<1x240xf32>
    %46 = arith.mulf %44, %45 : vector<1x240xf32>
    %c7_37 = arith.constant 7 : index
    %c16_38 = arith.constant 16 : index
    %47 = vector.load %arg15[%c7_37, %c16_38] : memref<25x256xf32, #tpu.memory_space<vmem>>, vector<1x240xf32>
    tpu.vector_store %arg15[%c7_37, %c16_38], %46 {strides = array<i32>} : memref<25x256xf32, #tpu.memory_space<vmem>>, vector<1x240xf32>,
    %cst_39 = arith.constant 0.000000e+00 : f32
    %48 = vector.broadcast %cst_39 : f32 to vector<1x16xf32>
    %c7_40 = arith.constant 7 : index
    %c0_41 = arith.constant 0 : index
    %49 = vector.load %arg15[%c7_40, %c0_41] : memref<25x256xf32, #tpu.memory_space<vmem>>, vector<1x16xf32>
    tpu.vector_store %arg15[%c7_40, %c0_41], %48 {strides = array<i32>} : memref<25x256xf32, #tpu.memory_space<vmem>>, vector<1x16xf32>,
    %50 = vector.extract_strided_slice %1 {offsets = [0, 0], sizes = [1, 241], strides = [1, 1]} : vector<1x256xf32> to vector<1x241xf32>
    %c8 = arith.constant 8 : index
    %c15 = arith.constant 15 : index
    %51 = vector.load %arg2[%c8, %c15] : memref<25x256xf32, #tpu.memory_space<vmem>>, vector<1x241xf32>
    %52 = arith.mulf %50, %51 : vector<1x241xf32>
    %c8_42 = arith.constant 8 : index
    %c15_43 = arith.constant 15 : index
    %53 = vector.load %arg15[%c8_42, %c15_43] : memref<25x256xf32, #tpu.memory_space<vmem>>, vector<1x241xf32>
    tpu.vector_store %arg15[%c8_42, %c15_43], %52 {strides = array<i32>} : memref<25x256xf32, #tpu.memory_space<vmem>>, vector<1x241xf32>,
    %cst_44 = arith.constant 0.000000e+00 : f32
    %54 = vector.broadcast %cst_44 : f32 to vector<1x15xf32>
    %c8_45 = arith.constant 8 : index
    %c0_46 = arith.constant 0 : index
    %55 = vector.load %arg15[%c8_45, %c0_46] : memref<25x256xf32, #tpu.memory_space<vmem>>, vector<1x15xf32>
    tpu.vector_store %arg15[%c8_45, %c0_46], %54 {strides = array<i32>} : memref<25x256xf32, #tpu.memory_space<vmem>>, vector<1x15xf32>,
    %56 = vector.extract_strided_slice %1 {offsets = [0, 0], sizes = [1, 242], strides = [1, 1]} : vector<1x256xf32> to vector<1x242xf32>
    %c9 = arith.constant 9 : index
    %c14 = arith.constant 14 : index
    %57 = vector.load %arg2[%c9, %c14] : memref<25x256xf32, #tpu.memory_space<vmem>>, vector<1x242xf32>
    %58 = arith.mulf %56, %57 : vector<1x242xf32>
    %c9_47 = arith.constant 9 : index
    %c14_48 = arith.constant 14 : index
    %59 = vector.load %arg15[%c9_47, %c14_48] : memref<25x256xf32, #tpu.memory_space<vmem>>, vector<1x242xf32>
    tpu.vector_store %arg15[%c9_47, %c14_48], %58 {strides = array<i32>} : memref<25x256xf32, #tpu.memory_space<vmem>>, vector<1x242xf32>,
    %cst_49 = arith.constant 0.000000e+00 : f32
    %60 = vector.broadcast %cst_49 : f32 to vector<1x14xf32>
    %c9_50 = arith.constant 9 : index
    %c0_51 = arith.constant 0 : index
    %61 = vector.load %arg15[%c9_50, %c0_51] : memref<25x256xf32, #tpu.memory_space<vmem>>, vector<1x14xf32>
    tpu.vector_store %arg15[%c9_50, %c0_51], %60 {strides = array<i32>} : memref<25x256xf32, #tpu.memory_space<vmem>>, vector<1x14xf32>,
    %62 = vector.extract_strided_slice %1 {offsets = [0, 0], sizes = [1, 254], strides = [1, 1]} : vector<1x256xf32> to vector<1x254xf32>
    %c10 = arith.constant 10 : index
    %c2_52 = arith.constant 2 : index
    %63 = vector.load %arg2[%c10, %c2_52] : memref<25x256xf32, #tpu.memory_space<vmem>>, vector<1x254xf32>
    %64 = arith.mulf %62, %63 : vector<1x254xf32>
    %c10_53 = arith.constant 10 : index
    %c2_54 = arith.constant 2 : index
    %65 = vector.load %arg15[%c10_53, %c2_54] : memref<25x256xf32, #tpu.memory_space<vmem>>, vector<1x254xf32>
    tpu.vector_store %arg15[%c10_53, %c2_54], %64 {strides = array<i32>} : memref<25x256xf32, #tpu.memory_space<vmem>>, vector<1x254xf32>,
    %cst_55 = arith.constant 0.000000e+00 : f32
    %66 = vector.broadcast %cst_55 : f32 to vector<1x2xf32>
    %c10_56 = arith.constant 10 : index
    %c0_57 = arith.constant 0 : index
    %67 = vector.load %arg15[%c10_56, %c0_57] : memref<25x256xf32, #tpu.memory_space<vmem>>, vector<1x2xf32>
    tpu.vector_store %arg15[%c10_56, %c0_57], %66 {strides = array<i32>} : memref<25x256xf32, #tpu.memory_space<vmem>>, vector<1x2xf32>,
    %68 = vector.extract_strided_slice %1 {offsets = [0, 0], sizes = [1, 255], strides = [1, 1]} : vector<1x256xf32> to vector<1x255xf32>
    %c11 = arith.constant 11 : index
    %c1_58 = arith.constant 1 : index
    %69 = vector.load %arg2[%c11, %c1_58] : memref<25x256xf32, #tpu.memory_space<vmem>>, vector<1x255xf32>
    %70 = arith.mulf %68, %69 : vector<1x255xf32>
    %c11_59 = arith.constant 11 : index
    %c1_60 = arith.constant 1 : index
    %71 = vector.load %arg15[%c11_59, %c1_60] : memref<25x256xf32, #tpu.memory_space<vmem>>, vector<1x255xf32>
    tpu.vector_store %arg15[%c11_59, %c1_60], %70 {strides = array<i32>} : memref<25x256xf32, #tpu.memory_space<vmem>>, vector<1x255xf32>,
    %cst_61 = arith.constant 0.000000e+00 : f32
    %72 = vector.broadcast %cst_61 : f32 to vector<1x1xf32>
    %c11_62 = arith.constant 11 : index
    %c0_63 = arith.constant 0 : index
    %73 = vector.load %arg15[%c11_62, %c0_63] : memref<25x256xf32, #tpu.memory_space<vmem>>, vector<1x1xf32>
    tpu.vector_store %arg15[%c11_62, %c0_63], %72 {strides = array<i32>} : memref<25x256xf32, #tpu.memory_space<vmem>>, vector<1x1xf32>,
    %c12 = arith.constant 12 : index
    %c0_64 = arith.constant 0 : index
    %74 = vector.load %arg2[%c12, %c0_64] : memref<25x256xf32, #tpu.memory_space<vmem>>, vector<1x256xf32>
    %75 = arith.mulf %1, %74 : vector<1x256xf32>
    %c12_65 = arith.constant 12 : index
    %c0_66 = arith.constant 0 : index
    %76 = vector.load %arg15[%c12_65, %c0_66] : memref<25x256xf32, #tpu.memory_space<vmem>>, vector<1x256xf32>
    tpu.vector_store %arg15[%c12_65, %c0_66], %75 {strides = array<i32>} : memref<25x256xf32, #tpu.memory_space<vmem>>, vector<1x256xf32>,
    %77 = vector.extract_strided_slice %1 {offsets = [0, 1], sizes = [1, 255], strides = [1, 1]} : vector<1x256xf32> to vector<1x255xf32>
    %c13 = arith.constant 13 : index
    %c0_67 = arith.constant 0 : index
    %78 = vector.load %arg2[%c13, %c0_67] : memref<25x256xf32, #tpu.memory_space<vmem>>, vector<1x255xf32>
    %79 = arith.mulf %77, %78 : vector<1x255xf32>
    %c13_68 = arith.constant 13 : index
    %c0_69 = arith.constant 0 : index
    %80 = vector.load %arg15[%c13_68, %c0_69] : memref<25x256xf32, #tpu.memory_space<vmem>>, vector<1x255xf32>
    tpu.vector_store %arg15[%c13_68, %c0_69], %79 {strides = array<i32>} : memref<25x256xf32, #tpu.memory_space<vmem>>, vector<1x255xf32>,
    %cst_70 = arith.constant 0.000000e+00 : f32
    %81 = vector.broadcast %cst_70 : f32 to vector<1x1xf32>
    %c13_71 = arith.constant 13 : index
    %c255 = arith.constant 255 : index
    %82 = vector.load %arg15[%c13_71, %c255] : memref<25x256xf32, #tpu.memory_space<vmem>>, vector<1x1xf32>
    tpu.vector_store %arg15[%c13_71, %c255], %81 {strides = array<i32>} : memref<25x256xf32, #tpu.memory_space<vmem>>, vector<1x1xf32>,
    %83 = vector.extract_strided_slice %1 {offsets = [0, 2], sizes = [1, 254], strides = [1, 1]} : vector<1x256xf32> to vector<1x254xf32>
    %c14_72 = arith.constant 14 : index
    %c0_73 = arith.constant 0 : index
    %84 = vector.load %arg2[%c14_72, %c0_73] : memref<25x256xf32, #tpu.memory_space<vmem>>, vector<1x254xf32>
    %85 = arith.mulf %83, %84 : vector<1x254xf32>
    %c14_74 = arith.constant 14 : index
    %c0_75 = arith.constant 0 : index
    %86 = vector.load %arg15[%c14_74, %c0_75] : memref<25x256xf32, #tpu.memory_space<vmem>>, vector<1x254xf32>
    tpu.vector_store %arg15[%c14_74, %c0_75], %85 {strides = array<i32>} : memref<25x256xf32, #tpu.memory_space<vmem>>, vector<1x254xf32>,
    %cst_76 = arith.constant 0.000000e+00 : f32
    %87 = vector.broadcast %cst_76 : f32 to vector<1x2xf32>
    %c14_77 = arith.constant 14 : index
    %c254 = arith.constant 254 : index
    %88 = vector.load %arg15[%c14_77, %c254] : memref<25x256xf32, #tpu.memory_space<vmem>>, vector<1x2xf32>
    tpu.vector_store %arg15[%c14_77, %c254], %87 {strides = array<i32>} : memref<25x256xf32, #tpu.memory_space<vmem>>, vector<1x2xf32>,
    %89 = vector.extract_strided_slice %1 {offsets = [0, 14], sizes = [1, 242], strides = [1, 1]} : vector<1x256xf32> to vector<1x242xf32>
    %c15_78 = arith.constant 15 : index
    %c0_79 = arith.constant 0 : index
    %90 = vector.load %arg2[%c15_78, %c0_79] : memref<25x256xf32, #tpu.memory_space<vmem>>, vector<1x242xf32>
    %91 = arith.mulf %89, %90 : vector<1x242xf32>
    %c15_80 = arith.constant 15 : index
    %c0_81 = arith.constant 0 : index
    %92 = vector.load %arg15[%c15_80, %c0_81] : memref<25x256xf32, #tpu.memory_space<vmem>>, vector<1x242xf32>
    tpu.vector_store %arg15[%c15_80, %c0_81], %91 {strides = array<i32>} : memref<25x256xf32, #tpu.memory_space<vmem>>, vector<1x242xf32>,
    %cst_82 = arith.constant 0.000000e+00 : f32
    %93 = vector.broadcast %cst_82 : f32 to vector<1x14xf32>
    %c15_83 = arith.constant 15 : index
    %c242 = arith.constant 242 : index
    %94 = vector.load %arg15[%c15_83, %c242] : memref<25x256xf32, #tpu.memory_space<vmem>>, vector<1x14xf32>
    tpu.vector_store %arg15[%c15_83, %c242], %93 {strides = array<i32>} : memref<25x256xf32, #tpu.memory_space<vmem>>, vector<1x14xf32>,
    %95 = vector.extract_strided_slice %1 {offsets = [0, 15], sizes = [1, 241], strides = [1, 1]} : vector<1x256xf32> to vector<1x241xf32>
    %c16_84 = arith.constant 16 : index
    %c0_85 = arith.constant 0 : index
    %96 = vector.load %arg2[%c16_84, %c0_85] : memref<25x256xf32, #tpu.memory_space<vmem>>, vector<1x241xf32>
    %97 = arith.mulf %95, %96 : vector<1x241xf32>
    %c16_86 = arith.constant 16 : index
    %c0_87 = arith.constant 0 : index
    %98 = vector.load %arg15[%c16_86, %c0_87] : memref<25x256xf32, #tpu.memory_space<vmem>>, vector<1x241xf32>
    tpu.vector_store %arg15[%c16_86, %c0_87], %97 {strides = array<i32>} : memref<25x256xf32, #tpu.memory_space<vmem>>, vector<1x241xf32>,
    %cst_88 = arith.constant 0.000000e+00 : f32
    %99 = vector.broadcast %cst_88 : f32 to vector<1x15xf32>
    %c16_89 = arith.constant 16 : index
    %c241 = arith.constant 241 : index
    %100 = vector.load %arg15[%c16_89, %c241] : memref<25x256xf32, #tpu.memory_space<vmem>>, vector<1x15xf32>
    tpu.vector_store %arg15[%c16_89, %c241], %99 {strides = array<i32>} : memref<25x256xf32, #tpu.memory_space<vmem>>, vector<1x15xf32>,
    %101 = vector.extract_strided_slice %1 {offsets = [0, 16], sizes = [1, 240], strides = [1, 1]} : vector<1x256xf32> to vector<1x240xf32>
    %c17_90 = arith.constant 17 : index
    %c0_91 = arith.constant 0 : index
    %102 = vector.load %arg2[%c17_90, %c0_91] : memref<25x256xf32, #tpu.memory_space<vmem>>, vector<1x240xf32>
    %103 = arith.mulf %101, %102 : vector<1x240xf32>
    %c17_92 = arith.constant 17 : index
    %c0_93 = arith.constant 0 : index
    %104 = vector.load %arg15[%c17_92, %c0_93] : memref<25x256xf32, #tpu.memory_space<vmem>>, vector<1x240xf32>
    tpu.vector_store %arg15[%c17_92, %c0_93], %103 {strides = array<i32>} : memref<25x256xf32, #tpu.memory_space<vmem>>, vector<1x240xf32>,
    %cst_94 = arith.constant 0.000000e+00 : f32
    %105 = vector.broadcast %cst_94 : f32 to vector<1x16xf32>
    %c17_95 = arith.constant 17 : index
    %c240 = arith.constant 240 : index
    %106 = vector.load %arg15[%c17_95, %c240] : memref<25x256xf32, #tpu.memory_space<vmem>>, vector<1x16xf32>
    tpu.vector_store %arg15[%c17_95, %c240], %105 {strides = array<i32>} : memref<25x256xf32, #tpu.memory_space<vmem>>, vector<1x16xf32>,
    %107 = vector.extract_strided_slice %1 {offsets = [0, 17], sizes = [1, 239], strides = [1, 1]} : vector<1x256xf32> to vector<1x239xf32>
    %c18_96 = arith.constant 18 : index
    %c0_97 = arith.constant 0 : index
    %108 = vector.load %arg2[%c18_96, %c0_97] : memref<25x256xf32, #tpu.memory_space<vmem>>, vector<1x239xf32>
    %109 = arith.mulf %107, %108 : vector<1x239xf32>
    %c18_98 = arith.constant 18 : index
    %c0_99 = arith.constant 0 : index
    %110 = vector.load %arg15[%c18_98, %c0_99] : memref<25x256xf32, #tpu.memory_space<vmem>>, vector<1x239xf32>
    tpu.vector_store %arg15[%c18_98, %c0_99], %109 {strides = array<i32>} : memref<25x256xf32, #tpu.memory_space<vmem>>, vector<1x239xf32>,
    %cst_100 = arith.constant 0.000000e+00 : f32
    %111 = vector.broadcast %cst_100 : f32 to vector<1x17xf32>
    %c18_101 = arith.constant 18 : index
    %c239 = arith.constant 239 : index
    %112 = vector.load %arg15[%c18_101, %c239] : memref<25x256xf32, #tpu.memory_space<vmem>>, vector<1x17xf32>
    tpu.vector_store %arg15[%c18_101, %c239], %111 {strides = array<i32>} : memref<25x256xf32, #tpu.memory_space<vmem>>, vector<1x17xf32>,
    %113 = vector.extract_strided_slice %1 {offsets = [0, 18], sizes = [1, 238], strides = [1, 1]} : vector<1x256xf32> to vector<1x238xf32>
    %c19 = arith.constant 19 : index
    %c0_102 = arith.constant 0 : index
    %114 = vector.load %arg2[%c19, %c0_102] : memref<25x256xf32, #tpu.memory_space<vmem>>, vector<1x238xf32>
    %115 = arith.mulf %113, %114 : vector<1x238xf32>
    %c19_103 = arith.constant 19 : index
    %c0_104 = arith.constant 0 : index
    %116 = vector.load %arg15[%c19_103, %c0_104] : memref<25x256xf32, #tpu.memory_space<vmem>>, vector<1x238xf32>
    tpu.vector_store %arg15[%c19_103, %c0_104], %115 {strides = array<i32>} : memref<25x256xf32, #tpu.memory_space<vmem>>, vector<1x238xf32>,
    %cst_105 = arith.constant 0.000000e+00 : f32
    %117 = vector.broadcast %cst_105 : f32 to vector<1x18xf32>
    %c19_106 = arith.constant 19 : index
    %c238 = arith.constant 238 : index
    %118 = vector.load %arg15[%c19_106, %c238] : memref<25x256xf32, #tpu.memory_space<vmem>>, vector<1x18xf32>
    tpu.vector_store %arg15[%c19_106, %c238], %117 {strides = array<i32>} : memref<25x256xf32, #tpu.memory_space<vmem>>, vector<1x18xf32>,
    %119 = vector.extract_strided_slice %1 {offsets = [0, 30], sizes = [1, 226], strides = [1, 1]} : vector<1x256xf32> to vector<1x226xf32>
    %c20 = arith.constant 20 : index
    %c0_107 = arith.constant 0 : index
    %120 = vector.load %arg2[%c20, %c0_107] : memref<25x256xf32, #tpu.memory_space<vmem>>, vector<1x226xf32>
    %121 = arith.mulf %119, %120 : vector<1x226xf32>
    %c20_108 = arith.constant 20 : index
    %c0_109 = arith.constant 0 : index
    %122 = vector.load %arg15[%c20_108, %c0_109] : memref<25x256xf32, #tpu.memory_space<vmem>>, vector<1x226xf32>
    tpu.vector_store %arg15[%c20_108, %c0_109], %121 {strides = array<i32>} : memref<25x256xf32, #tpu.memory_space<vmem>>, vector<1x226xf32>,
    %cst_110 = arith.constant 0.000000e+00 : f32
    %123 = vector.broadcast %cst_110 : f32 to vector<1x30xf32>
    %c20_111 = arith.constant 20 : index
    %c226 = arith.constant 226 : index
    %124 = vector.load %arg15[%c20_111, %c226] : memref<25x256xf32, #tpu.memory_space<vmem>>, vector<1x30xf32>
    tpu.vector_store %arg15[%c20_111, %c226], %123 {strides = array<i32>} : memref<25x256xf32, #tpu.memory_space<vmem>>, vector<1x30xf32>,
    %125 = vector.extract_strided_slice %1 {offsets = [0, 31], sizes = [1, 225], strides = [1, 1]} : vector<1x256xf32> to vector<1x225xf32>
    %c21 = arith.constant 21 : index
    %c0_112 = arith.constant 0 : index
    %126 = vector.load %arg2[%c21, %c0_112] : memref<25x256xf32, #tpu.memory_space<vmem>>, vector<1x225xf32>
    %127 = arith.mulf %125, %126 : vector<1x225xf32>
    %c21_113 = arith.constant 21 : index
    %c0_114 = arith.constant 0 : index
    %128 = vector.load %arg15[%c21_113, %c0_114] : memref<25x256xf32, #tpu.memory_space<vmem>>, vector<1x225xf32>
    tpu.vector_store %arg15[%c21_113, %c0_114], %127 {strides = array<i32>} : memref<25x256xf32, #tpu.memory_space<vmem>>, vector<1x225xf32>,
    %cst_115 = arith.constant 0.000000e+00 : f32
    %129 = vector.broadcast %cst_115 : f32 to vector<1x31xf32>
    %c21_116 = arith.constant 21 : index
    %c225 = arith.constant 225 : index
    %130 = vector.load %arg15[%c21_116, %c225] : memref<25x256xf32, #tpu.memory_space<vmem>>, vector<1x31xf32>
    tpu.vector_store %arg15[%c21_116, %c225], %129 {strides = array<i32>} : memref<25x256xf32, #tpu.memory_space<vmem>>, vector<1x31xf32>,
    %131 = vector.extract_strided_slice %1 {offsets = [0, 32], sizes = [1, 224], strides = [1, 1]} : vector<1x256xf32> to vector<1x224xf32>
    %c22 = arith.constant 22 : index
    %c0_117 = arith.constant 0 : index
    %132 = vector.load %arg2[%c22, %c0_117] : memref<25x256xf32, #tpu.memory_space<vmem>>, vector<1x224xf32>
    %133 = arith.mulf %131, %132 : vector<1x224xf32>
    %c22_118 = arith.constant 22 : index
    %c0_119 = arith.constant 0 : index
    %134 = vector.load %arg15[%c22_118, %c0_119] : memref<25x256xf32, #tpu.memory_space<vmem>>, vector<1x224xf32>
    tpu.vector_store %arg15[%c22_118, %c0_119], %133 {strides = array<i32>} : memref<25x256xf32, #tpu.memory_space<vmem>>, vector<1x224xf32>,
    %cst_120 = arith.constant 0.000000e+00 : f32
    %135 = vector.broadcast %cst_120 : f32 to vector<1x32xf32>
    %c22_121 = arith.constant 22 : index
    %c224 = arith.constant 224 : index
    %136 = vector.load %arg15[%c22_121, %c224] : memref<25x256xf32, #tpu.memory_space<vmem>>, vector<1x32xf32>
    tpu.vector_store %arg15[%c22_121, %c224], %135 {strides = array<i32>} : memref<25x256xf32, #tpu.memory_space<vmem>>, vector<1x32xf32>,
    %137 = vector.extract_strided_slice %1 {offsets = [0, 33], sizes = [1, 223], strides = [1, 1]} : vector<1x256xf32> to vector<1x223xf32>
    %c23 = arith.constant 23 : index
    %c0_122 = arith.constant 0 : index
    %138 = vector.load %arg2[%c23, %c0_122] : memref<25x256xf32, #tpu.memory_space<vmem>>, vector<1x223xf32>
    %139 = arith.mulf %137, %138 : vector<1x223xf32>
    %c23_123 = arith.constant 23 : index
    %c0_124 = arith.constant 0 : index
    %140 = vector.load %arg15[%c23_123, %c0_124] : memref<25x256xf32, #tpu.memory_space<vmem>>, vector<1x223xf32>
    tpu.vector_store %arg15[%c23_123, %c0_124], %139 {strides = array<i32>} : memref<25x256xf32, #tpu.memory_space<vmem>>, vector<1x223xf32>,
    %cst_125 = arith.constant 0.000000e+00 : f32
    %141 = vector.broadcast %cst_125 : f32 to vector<1x33xf32>
    %c23_126 = arith.constant 23 : index
    %c223 = arith.constant 223 : index
    %142 = vector.load %arg15[%c23_126, %c223] : memref<25x256xf32, #tpu.memory_space<vmem>>, vector<1x33xf32>
    tpu.vector_store %arg15[%c23_126, %c223], %141 {strides = array<i32>} : memref<25x256xf32, #tpu.memory_space<vmem>>, vector<1x33xf32>,
    %143 = vector.extract_strided_slice %1 {offsets = [0, 34], sizes = [1, 222], strides = [1, 1]} : vector<1x256xf32> to vector<1x222xf32>
    %c24 = arith.constant 24 : index
    %c0_127 = arith.constant 0 : index
    %144 = vector.load %arg2[%c24, %c0_127] : memref<25x256xf32, #tpu.memory_space<vmem>>, vector<1x222xf32>
    %145 = arith.mulf %143, %144 : vector<1x222xf32>
    %c24_128 = arith.constant 24 : index
    %c0_129 = arith.constant 0 : index
    %146 = vector.load %arg15[%c24_128, %c0_129] : memref<25x256xf32, #tpu.memory_space<vmem>>, vector<1x222xf32>
    tpu.vector_store %arg15[%c24_128, %c0_129], %145 {strides = array<i32>} : memref<25x256xf32, #tpu.memory_space<vmem>>, vector<1x222xf32>,
    %cst_130 = arith.constant 0.000000e+00 : f32
    %147 = vector.broadcast %cst_130 : f32 to vector<1x34xf32>
    %c24_131 = arith.constant 24 : index
    %c222 = arith.constant 222 : index
    %148 = vector.load %arg15[%c24_131, %c222] : memref<25x256xf32, #tpu.memory_space<vmem>>, vector<1x34xf32>
    tpu.vector_store %arg15[%c24_131, %c222], %147 {strides = array<i32>} : memref<25x256xf32, #tpu.memory_space<vmem>>, vector<1x34xf32>,
    %c0_132 = arith.constant 0 : index
    %c0_133 = arith.constant 0 : index
    %149 = vector.load %arg4[%c0_132, %c0_133] : memref<56x25xf32, #tpu.memory_space<vmem>>, vector<56x25xf32>
    %c0_134 = arith.constant 0 : index
    %c0_135 = arith.constant 0 : index
    %150 = vector.load %arg15[%c0_134, %c0_135] : memref<25x256xf32, #tpu.memory_space<vmem>>, vector<25x256xf32>
    %cst_136 = arith.constant dense<0.000000e+00> : vector<56x256xf32>
    %151 = tpu.matmul %149, %150, %cst_136 {dimension_numbers = #tpu.dot_dimension_numbers<[1], [0], [0], [1], [0, 0, 1, 1], [], []>} : vector<56x25xf32>, vector<25x256xf32>, vector<56x256xf32> -> vector<56x256xf32>
    %c0_137 = arith.constant 0 : index
    %c0_138 = arith.constant 0 : index
    %152 = vector.load %arg5[%c0_137, %c0_138] : memref<56x2xf32, #tpu.memory_space<vmem>>, vector<56x2xf32>
    %153 = vector.extract_strided_slice %152 {offsets = [0, 0], sizes = [56, 1], strides = [1, 1]} : vector<56x2xf32> to vector<56x1xf32>
    %154 = vector.broadcast %153 : vector<56x1xf32> to vector<56x256xf32>
    %155 = arith.addf %151, %154 : vector<56x256xf32>
    %cst_139 = arith.constant 0.000000e+00 : f32
    %156 = vector.broadcast %cst_139 : f32 to vector<56x256xf32>
    %157 = arith.cmpf oge, %155, %156 : vector<56x256xf32>
    %158 = vector.extract_strided_slice %152 {offsets = [0, 1], sizes = [56, 1], strides = [1, 1]} : vector<56x2xf32> to vector<56x1xf32>
    %159 = vector.broadcast %158 : vector<56x1xf32> to vector<56x256xf32>
    %160 = arith.mulf %155, %159 : vector<56x256xf32>
    %161 = arith.select %157, %155, %160 : vector<56x256xi1>, vector<56x256xf32>
    %c0_140 = arith.constant 0 : index
    %c0_141 = arith.constant 0 : index
    %162 = vector.load %arg6[%c0_140, %c0_141] : memref<16x56xf32, #tpu.memory_space<vmem>>, vector<16x56xf32>
    %cst_142 = arith.constant dense<0.000000e+00> : vector<16x256xf32>
    %163 = tpu.matmul %162, %161, %cst_142 {dimension_numbers = #tpu.dot_dimension_numbers<[1], [0], [0], [1], [0, 0, 1, 1], [], []>} : vector<16x56xf32>, vector<56x256xf32>, vector<16x256xf32> -> vector<16x256xf32>
    %c0_143 = arith.constant 0 : index
    %c0_144 = arith.constant 0 : index
    %164 = vector.load %arg7[%c0_143, %c0_144] : memref<16x2xf32, #tpu.memory_space<vmem>>, vector<16x2xf32>
    %165 = vector.extract_strided_slice %164 {offsets = [0, 0], sizes = [16, 1], strides = [1, 1]} : vector<16x2xf32> to vector<16x1xf32>
    %166 = vector.broadcast %165 : vector<16x1xf32> to vector<16x256xf32>
    %167 = arith.addf %163, %166 : vector<16x256xf32>
    %cst_145 = arith.constant 0.000000e+00 : f32
    %168 = vector.broadcast %cst_145 : f32 to vector<16x256xf32>
    %169 = arith.cmpf oge, %167, %168 : vector<16x256xf32>
    %170 = vector.extract_strided_slice %164 {offsets = [0, 1], sizes = [16, 1], strides = [1, 1]} : vector<16x2xf32> to vector<16x1xf32>
    %171 = vector.broadcast %170 : vector<16x1xf32> to vector<16x256xf32>
    %172 = arith.mulf %167, %171 : vector<16x256xf32>
    %173 = arith.select %169, %167, %172 : vector<16x256xi1>, vector<16x256xf32>
    %174 = vector.extract_strided_slice %173 {offsets = [0, 0], sizes = [16, 239], strides = [1, 1]} : vector<16x256xf32> to vector<16x239xf32>
    %c0_146 = arith.constant 0 : index
    %c17_147 = arith.constant 17 : index
    %175 = vector.load %arg3[%c0_146, %c17_147] : memref<9x256xf32, #tpu.memory_space<vmem>>, vector<1x239xf32>
    %176 = vector.broadcast %175 : vector<1x239xf32> to vector<16x239xf32>
    %177 = arith.mulf %174, %176 : vector<16x239xf32>
    %c0_148 = arith.constant 0 : index
    %c17_149 = arith.constant 17 : index
    %178 = vector.load %arg16[%c0_148, %c17_149] : memref<144x256xf32, #tpu.memory_space<vmem>>, vector<16x239xf32>
    tpu.vector_store %arg16[%c0_148, %c17_149], %177 {strides = array<i32>} : memref<144x256xf32, #tpu.memory_space<vmem>>, vector<16x239xf32>,
    %cst_150 = arith.constant 0.000000e+00 : f32
    %179 = vector.broadcast %cst_150 : f32 to vector<16x17xf32>
    %c0_151 = arith.constant 0 : index
    %c0_152 = arith.constant 0 : index
    %180 = vector.load %arg16[%c0_151, %c0_152] : memref<144x256xf32, #tpu.memory_space<vmem>>, vector<16x17xf32>
    tpu.vector_store %arg16[%c0_151, %c0_152], %179 {strides = array<i32>} : memref<144x256xf32, #tpu.memory_space<vmem>>, vector<16x17xf32>,
    %181 = vector.extract_strided_slice %173 {offsets = [0, 0], sizes = [16, 240], strides = [1, 1]} : vector<16x256xf32> to vector<16x240xf32>
    %c1_153 = arith.constant 1 : index
    %c16_154 = arith.constant 16 : index
    %182 = vector.load %arg3[%c1_153, %c16_154] : memref<9x256xf32, #tpu.memory_space<vmem>>, vector<1x240xf32>
    %183 = vector.broadcast %182 : vector<1x240xf32> to vector<16x240xf32>
    %184 = arith.mulf %181, %183 : vector<16x240xf32>
    %c16_155 = arith.constant 16 : index
    %c16_156 = arith.constant 16 : index
    %185 = vector.load %arg16[%c16_155, %c16_156] : memref<144x256xf32, #tpu.memory_space<vmem>>, vector<16x240xf32>
    tpu.vector_store %arg16[%c16_155, %c16_156], %184 {strides = array<i32>} : memref<144x256xf32, #tpu.memory_space<vmem>>, vector<16x240xf32>,
    %cst_157 = arith.constant 0.000000e+00 : f32
    %186 = vector.broadcast %cst_157 : f32 to vector<16x16xf32>
    %c16_158 = arith.constant 16 : index
    %c0_159 = arith.constant 0 : index
    %187 = vector.load %arg16[%c16_158, %c0_159] : memref<144x256xf32, #tpu.memory_space<vmem>>, vector<16x16xf32>
    tpu.vector_store %arg16[%c16_158, %c0_159], %186 {strides = array<i32>} : memref<144x256xf32, #tpu.memory_space<vmem>>, vector<16x16xf32>,
    %188 = vector.extract_strided_slice %173 {offsets = [0, 0], sizes = [16, 241], strides = [1, 1]} : vector<16x256xf32> to vector<16x241xf32>
    %c2_160 = arith.constant 2 : index
    %c15_161 = arith.constant 15 : index
    %189 = vector.load %arg3[%c2_160, %c15_161] : memref<9x256xf32, #tpu.memory_space<vmem>>, vector<1x241xf32>
    %190 = vector.broadcast %189 : vector<1x241xf32> to vector<16x241xf32>
    %191 = arith.mulf %188, %190 : vector<16x241xf32>
    %c32_162 = arith.constant 32 : index
    %c15_163 = arith.constant 15 : index
    %192 = vector.load %arg16[%c32_162, %c15_163] : memref<144x256xf32, #tpu.memory_space<vmem>>, vector<16x241xf32>
    tpu.vector_store %arg16[%c32_162, %c15_163], %191 {strides = array<i32>} : memref<144x256xf32, #tpu.memory_space<vmem>>, vector<16x241xf32>,
    %cst_164 = arith.constant 0.000000e+00 : f32
    %193 = vector.broadcast %cst_164 : f32 to vector<16x15xf32>
    %c32_165 = arith.constant 32 : index
    %c0_166 = arith.constant 0 : index
    %194 = vector.load %arg16[%c32_165, %c0_166] : memref<144x256xf32, #tpu.memory_space<vmem>>, vector<16x15xf32>
    tpu.vector_store %arg16[%c32_165, %c0_166], %193 {strides = array<i32>} : memref<144x256xf32, #tpu.memory_space<vmem>>, vector<16x15xf32>,
    %195 = vector.extract_strided_slice %173 {offsets = [0, 0], sizes = [16, 255], strides = [1, 1]} : vector<16x256xf32> to vector<16x255xf32>
    %c3_167 = arith.constant 3 : index
    %c1_168 = arith.constant 1 : index
    %196 = vector.load %arg3[%c3_167, %c1_168] : memref<9x256xf32, #tpu.memory_space<vmem>>, vector<1x255xf32>
    %197 = vector.broadcast %196 : vector<1x255xf32> to vector<16x255xf32>
    %198 = arith.mulf %195, %197 : vector<16x255xf32>
    %c48 = arith.constant 48 : index
    %c1_169 = arith.constant 1 : index
    %199 = vector.load %arg16[%c48, %c1_169] : memref<144x256xf32, #tpu.memory_space<vmem>>, vector<16x255xf32>
    tpu.vector_store %arg16[%c48, %c1_169], %198 {strides = array<i32>} : memref<144x256xf32, #tpu.memory_space<vmem>>, vector<16x255xf32>,
    %cst_170 = arith.constant 0.000000e+00 : f32
    %200 = vector.broadcast %cst_170 : f32 to vector<16x1xf32>
    %c48_171 = arith.constant 48 : index
    %c0_172 = arith.constant 0 : index
    %201 = vector.load %arg16[%c48_171, %c0_172] : memref<144x256xf32, #tpu.memory_space<vmem>>, vector<16x1xf32>
    tpu.vector_store %arg16[%c48_171, %c0_172], %200 {strides = array<i32>} : memref<144x256xf32, #tpu.memory_space<vmem>>, vector<16x1xf32>,
    %c4_173 = arith.constant 4 : index
    %c0_174 = arith.constant 0 : index
    %202 = vector.load %arg3[%c4_173, %c0_174] : memref<9x256xf32, #tpu.memory_space<vmem>>, vector<1x256xf32>
    %203 = vector.broadcast %202 : vector<1x256xf32> to vector<16x256xf32>
    %204 = arith.mulf %173, %203 : vector<16x256xf32>
    %c64 = arith.constant 64 : index
    %c0_175 = arith.constant 0 : index
    %205 = vector.load %arg16[%c64, %c0_175] : memref<144x256xf32, #tpu.memory_space<vmem>>, vector<16x256xf32>
    tpu.vector_store %arg16[%c64, %c0_175], %204 {strides = array<i32>} : memref<144x256xf32, #tpu.memory_space<vmem>>, vector<16x256xf32>,
    %206 = vector.extract_strided_slice %173 {offsets = [0, 1], sizes = [16, 255], strides = [1, 1]} : vector<16x256xf32> to vector<16x255xf32>
    %c5_176 = arith.constant 5 : index
    %c0_177 = arith.constant 0 : index
    %207 = vector.load %arg3[%c5_176, %c0_177] : memref<9x256xf32, #tpu.memory_space<vmem>>, vector<1x255xf32>
    %208 = vector.broadcast %207 : vector<1x255xf32> to vector<16x255xf32>
    %209 = arith.mulf %206, %208 : vector<16x255xf32>
    %c80 = arith.constant 80 : index
    %c0_178 = arith.constant 0 : index
    %210 = vector.load %arg16[%c80, %c0_178] : memref<144x256xf32, #tpu.memory_space<vmem>>, vector<16x255xf32>
    tpu.vector_store %arg16[%c80, %c0_178], %209 {strides = array<i32>} : memref<144x256xf32, #tpu.memory_space<vmem>>, vector<16x255xf32>,
    %cst_179 = arith.constant 0.000000e+00 : f32
    %211 = vector.broadcast %cst_179 : f32 to vector<16x1xf32>
    %c80_180 = arith.constant 80 : index
    %c255_181 = arith.constant 255 : index
    %212 = vector.load %arg16[%c80_180, %c255_181] : memref<144x256xf32, #tpu.memory_space<vmem>>, vector<16x1xf32>
    tpu.vector_store %arg16[%c80_180, %c255_181], %211 {strides = array<i32>} : memref<144x256xf32, #tpu.memory_space<vmem>>, vector<16x1xf32>,
    %213 = vector.extract_strided_slice %173 {offsets = [0, 15], sizes = [16, 241], strides = [1, 1]} : vector<16x256xf32> to vector<16x241xf32>
    %c6_182 = arith.constant 6 : index
    %c0_183 = arith.constant 0 : index
    %214 = vector.load %arg3[%c6_182, %c0_183] : memref<9x256xf32, #tpu.memory_space<vmem>>, vector<1x241xf32>
    %215 = vector.broadcast %214 : vector<1x241xf32> to vector<16x241xf32>
    %216 = arith.mulf %213, %215 : vector<16x241xf32>
    %c96 = arith.constant 96 : index
    %c0_184 = arith.constant 0 : index
    %217 = vector.load %arg16[%c96, %c0_184] : memref<144x256xf32, #tpu.memory_space<vmem>>, vector<16x241xf32>
    tpu.vector_store %arg16[%c96, %c0_184], %216 {strides = array<i32>} : memref<144x256xf32, #tpu.memory_space<vmem>>, vector<16x241xf32>,
    %cst_185 = arith.constant 0.000000e+00 : f32
    %218 = vector.broadcast %cst_185 : f32 to vector<16x15xf32>
    %c96_186 = arith.constant 96 : index
    %c241_187 = arith.constant 241 : index
    %219 = vector.load %arg16[%c96_186, %c241_187] : memref<144x256xf32, #tpu.memory_space<vmem>>, vector<16x15xf32>
    tpu.vector_store %arg16[%c96_186, %c241_187], %218 {strides = array<i32>} : memref<144x256xf32, #tpu.memory_space<vmem>>, vector<16x15xf32>,
    %220 = vector.extract_strided_slice %173 {offsets = [0, 16], sizes = [16, 240], strides = [1, 1]} : vector<16x256xf32> to vector<16x240xf32>
    %c7_188 = arith.constant 7 : index
    %c0_189 = arith.constant 0 : index
    %221 = vector.load %arg3[%c7_188, %c0_189] : memref<9x256xf32, #tpu.memory_space<vmem>>, vector<1x240xf32>
    %222 = vector.broadcast %221 : vector<1x240xf32> to vector<16x240xf32>
    %223 = arith.mulf %220, %222 : vector<16x240xf32>
    %c112 = arith.constant 112 : index
    %c0_190 = arith.constant 0 : index
    %224 = vector.load %arg16[%c112, %c0_190] : memref<144x256xf32, #tpu.memory_space<vmem>>, vector<16x240xf32>
    tpu.vector_store %arg16[%c112, %c0_190], %223 {strides = array<i32>} : memref<144x256xf32, #tpu.memory_space<vmem>>, vector<16x240xf32>,
    %cst_191 = arith.constant 0.000000e+00 : f32
    %225 = vector.broadcast %cst_191 : f32 to vector<16x16xf32>
    %c112_192 = arith.constant 112 : index
    %c240_193 = arith.constant 240 : index
    %226 = vector.load %arg16[%c112_192, %c240_193] : memref<144x256xf32, #tpu.memory_space<vmem>>, vector<16x16xf32>
    tpu.vector_store %arg16[%c112_192, %c240_193], %225 {strides = array<i32>} : memref<144x256xf32, #tpu.memory_space<vmem>>, vector<16x16xf32>,
    %227 = vector.extract_strided_slice %173 {offsets = [0, 17], sizes = [16, 239], strides = [1, 1]} : vector<16x256xf32> to vector<16x239xf32>
    %c8_194 = arith.constant 8 : index
    %c0_195 = arith.constant 0 : index
    %228 = vector.load %arg3[%c8_194, %c0_195] : memref<9x256xf32, #tpu.memory_space<vmem>>, vector<1x239xf32>
    %229 = vector.broadcast %228 : vector<1x239xf32> to vector<16x239xf32>
    %230 = arith.mulf %227, %229 : vector<16x239xf32>
    %c128 = arith.constant 128 : index
    %c0_196 = arith.constant 0 : index
    %231 = vector.load %arg16[%c128, %c0_196] : memref<144x256xf32, #tpu.memory_space<vmem>>, vector<16x239xf32>
    tpu.vector_store %arg16[%c128, %c0_196], %230 {strides = array<i32>} : memref<144x256xf32, #tpu.memory_space<vmem>>, vector<16x239xf32>,
    %cst_197 = arith.constant 0.000000e+00 : f32
    %232 = vector.broadcast %cst_197 : f32 to vector<16x17xf32>
    %c128_198 = arith.constant 128 : index
    %c239_199 = arith.constant 239 : index
    %233 = vector.load %arg16[%c128_198, %c239_199] : memref<144x256xf32, #tpu.memory_space<vmem>>, vector<16x17xf32>
    tpu.vector_store %arg16[%c128_198, %c239_199], %232 {strides = array<i32>} : memref<144x256xf32, #tpu.memory_space<vmem>>, vector<16x17xf32>,
    %c0_200 = arith.constant 0 : index
    %c0_201 = arith.constant 0 : index
    %c0_202 = arith.constant 0 : index
    %234 = vector.load %arg8[%c0_200, %c0_201, %c0_202] : memref<4x16x144xf32, #tpu.memory_space<vmem>>, vector<1x16x144xf32>
    %235 = vector.shape_cast %234 : vector<1x16x144xf32> to vector<16x144xf32>
    %c0_203 = arith.constant 0 : index
    %c0_204 = arith.constant 0 : index
    %236 = vector.load %arg16[%c0_203, %c0_204] : memref<144x256xf32, #tpu.memory_space<vmem>>, vector<144x256xf32>
    %cst_205 = arith.constant dense<0.000000e+00> : vector<16x256xf32>
    %237 = tpu.matmul %235, %236, %cst_205 {dimension_numbers = #tpu.dot_dimension_numbers<[1], [0], [0], [1], [0, 0, 1, 1], [], []>} : vector<16x144xf32>, vector<144x256xf32>, vector<16x256xf32> -> vector<16x256xf32>
    %c0_206 = arith.constant 0 : index
    %c0_207 = arith.constant 0 : index
    %c0_208 = arith.constant 0 : index
    %238 = vector.load %arg9[%c0_206, %c0_207, %c0_208] : memref<4x16x2xf32, #tpu.memory_space<vmem>>, vector<1x16x2xf32>
    %239 = vector.shape_cast %238 : vector<1x16x2xf32> to vector<16x2xf32>
    %240 = vector.extract_strided_slice %239 {offsets = [0, 0], sizes = [16, 1], strides = [1, 1]} : vector<16x2xf32> to vector<16x1xf32>
    %241 = vector.broadcast %240 : vector<16x1xf32> to vector<16x256xf32>
    %242 = arith.addf %237, %241 : vector<16x256xf32>
    %cst_209 = arith.constant 0.000000e+00 : f32
    %243 = vector.broadcast %cst_209 : f32 to vector<16x256xf32>
    %244 = arith.cmpf oge, %242, %243 : vector<16x256xf32>
    %245 = vector.extract_strided_slice %239 {offsets = [0, 1], sizes = [16, 1], strides = [1, 1]} : vector<16x2xf32> to vector<16x1xf32>
    %246 = vector.broadcast %245 : vector<16x1xf32> to vector<16x256xf32>
    %247 = arith.mulf %242, %246 : vector<16x256xf32>
    %248 = arith.select %244, %242, %247 : vector<16x256xi1>, vector<16x256xf32>
    %249 = vector.extract_strided_slice %248 {offsets = [0, 0], sizes = [16, 239], strides = [1, 1]} : vector<16x256xf32> to vector<16x239xf32>
    %c0_210 = arith.constant 0 : index
    %c17_211 = arith.constant 17 : index
    %250 = vector.load %arg3[%c0_210, %c17_211] : memref<9x256xf32, #tpu.memory_space<vmem>>, vector<1x239xf32>
    %251 = vector.broadcast %250 : vector<1x239xf32> to vector<16x239xf32>
    %252 = arith.mulf %249, %251 : vector<16x239xf32>
    %c0_212 = arith.constant 0 : index
    %c17_213 = arith.constant 17 : index
    %253 = vector.load %arg16[%c0_212, %c17_213] : memref<144x256xf32, #tpu.memory_space<vmem>>, vector<16x239xf32>
    tpu.vector_store %arg16[%c0_212, %c17_213], %252 {strides = array<i32>} : memref<144x256xf32, #tpu.memory_space<vmem>>, vector<16x239xf32>,
    %cst_214 = arith.constant 0.000000e+00 : f32
    %254 = vector.broadcast %cst_214 : f32 to vector<16x17xf32>
    %c0_215 = arith.constant 0 : index
    %c0_216 = arith.constant 0 : index
    %255 = vector.load %arg16[%c0_215, %c0_216] : memref<144x256xf32, #tpu.memory_space<vmem>>, vector<16x17xf32>
    tpu.vector_store %arg16[%c0_215, %c0_216], %254 {strides = array<i32>} : memref<144x256xf32, #tpu.memory_space<vmem>>, vector<16x17xf32>,
    %256 = vector.extract_strided_slice %248 {offsets = [0, 0], sizes = [16, 240], strides = [1, 1]} : vector<16x256xf32> to vector<16x240xf32>
    %c1_217 = arith.constant 1 : index
    %c16_218 = arith.constant 16 : index
    %257 = vector.load %arg3[%c1_217, %c16_218] : memref<9x256xf32, #tpu.memory_space<vmem>>, vector<1x240xf32>
    %258 = vector.broadcast %257 : vector<1x240xf32> to vector<16x240xf32>
    %259 = arith.mulf %256, %258 : vector<16x240xf32>
    %c16_219 = arith.constant 16 : index
    %c16_220 = arith.constant 16 : index
    %260 = vector.load %arg16[%c16_219, %c16_220] : memref<144x256xf32, #tpu.memory_space<vmem>>, vector<16x240xf32>
    tpu.vector_store %arg16[%c16_219, %c16_220], %259 {strides = array<i32>} : memref<144x256xf32, #tpu.memory_space<vmem>>, vector<16x240xf32>,
    %cst_221 = arith.constant 0.000000e+00 : f32
    %261 = vector.broadcast %cst_221 : f32 to vector<16x16xf32>
    %c16_222 = arith.constant 16 : index
    %c0_223 = arith.constant 0 : index
    %262 = vector.load %arg16[%c16_222, %c0_223] : memref<144x256xf32, #tpu.memory_space<vmem>>, vector<16x16xf32>
    tpu.vector_store %arg16[%c16_222, %c0_223], %261 {strides = array<i32>} : memref<144x256xf32, #tpu.memory_space<vmem>>, vector<16x16xf32>,
    %263 = vector.extract_strided_slice %248 {offsets = [0, 0], sizes = [16, 241], strides = [1, 1]} : vector<16x256xf32> to vector<16x241xf32>
    %c2_224 = arith.constant 2 : index
    %c15_225 = arith.constant 15 : index
    %264 = vector.load %arg3[%c2_224, %c15_225] : memref<9x256xf32, #tpu.memory_space<vmem>>, vector<1x241xf32>
    %265 = vector.broadcast %264 : vector<1x241xf32> to vector<16x241xf32>
    %266 = arith.mulf %263, %265 : vector<16x241xf32>
    %c32_226 = arith.constant 32 : index
    %c15_227 = arith.constant 15 : index
    %267 = vector.load %arg16[%c32_226, %c15_227] : memref<144x256xf32, #tpu.memory_space<vmem>>, vector<16x241xf32>
    tpu.vector_store %arg16[%c32_226, %c15_227], %266 {strides = array<i32>} : memref<144x256xf32, #tpu.memory_space<vmem>>, vector<16x241xf32>,
    %cst_228 = arith.constant 0.000000e+00 : f32
    %268 = vector.broadcast %cst_228 : f32 to vector<16x15xf32>
    %c32_229 = arith.constant 32 : index
    %c0_230 = arith.constant 0 : index
    %269 = vector.load %arg16[%c32_229, %c0_230] : memref<144x256xf32, #tpu.memory_space<vmem>>, vector<16x15xf32>
    tpu.vector_store %arg16[%c32_229, %c0_230], %268 {strides = array<i32>} : memref<144x256xf32, #tpu.memory_space<vmem>>, vector<16x15xf32>,
    %270 = vector.extract_strided_slice %248 {offsets = [0, 0], sizes = [16, 255], strides = [1, 1]} : vector<16x256xf32> to vector<16x255xf32>
    %c3_231 = arith.constant 3 : index
    %c1_232 = arith.constant 1 : index
    %271 = vector.load %arg3[%c3_231, %c1_232] : memref<9x256xf32, #tpu.memory_space<vmem>>, vector<1x255xf32>
    %272 = vector.broadcast %271 : vector<1x255xf32> to vector<16x255xf32>
    %273 = arith.mulf %270, %272 : vector<16x255xf32>
    %c48_233 = arith.constant 48 : index
    %c1_234 = arith.constant 1 : index
    %274 = vector.load %arg16[%c48_233, %c1_234] : memref<144x256xf32, #tpu.memory_space<vmem>>, vector<16x255xf32>
    tpu.vector_store %arg16[%c48_233, %c1_234], %273 {strides = array<i32>} : memref<144x256xf32, #tpu.memory_space<vmem>>, vector<16x255xf32>,
    %cst_235 = arith.constant 0.000000e+00 : f32
    %275 = vector.broadcast %cst_235 : f32 to vector<16x1xf32>
    %c48_236 = arith.constant 48 : index
    %c0_237 = arith.constant 0 : index
    %276 = vector.load %arg16[%c48_236, %c0_237] : memref<144x256xf32, #tpu.memory_space<vmem>>, vector<16x1xf32>
    tpu.vector_store %arg16[%c48_236, %c0_237], %275 {strides = array<i32>} : memref<144x256xf32, #tpu.memory_space<vmem>>, vector<16x1xf32>,
    %c4_238 = arith.constant 4 : index
    %c0_239 = arith.constant 0 : index
    %277 = vector.load %arg3[%c4_238, %c0_239] : memref<9x256xf32, #tpu.memory_space<vmem>>, vector<1x256xf32>
    %278 = vector.broadcast %277 : vector<1x256xf32> to vector<16x256xf32>
    %279 = arith.mulf %248, %278 : vector<16x256xf32>
    %c64_240 = arith.constant 64 : index
    %c0_241 = arith.constant 0 : index
    %280 = vector.load %arg16[%c64_240, %c0_241] : memref<144x256xf32, #tpu.memory_space<vmem>>, vector<16x256xf32>
    tpu.vector_store %arg16[%c64_240, %c0_241], %279 {strides = array<i32>} : memref<144x256xf32, #tpu.memory_space<vmem>>, vector<16x256xf32>,
    %281 = vector.extract_strided_slice %248 {offsets = [0, 1], sizes = [16, 255], strides = [1, 1]} : vector<16x256xf32> to vector<16x255xf32>
    %c5_242 = arith.constant 5 : index
    %c0_243 = arith.constant 0 : index
    %282 = vector.load %arg3[%c5_242, %c0_243] : memref<9x256xf32, #tpu.memory_space<vmem>>, vector<1x255xf32>
    %283 = vector.broadcast %282 : vector<1x255xf32> to vector<16x255xf32>
    %284 = arith.mulf %281, %283 : vector<16x255xf32>
    %c80_244 = arith.constant 80 : index
    %c0_245 = arith.constant 0 : index
    %285 = vector.load %arg16[%c80_244, %c0_245] : memref<144x256xf32, #tpu.memory_space<vmem>>, vector<16x255xf32>
    tpu.vector_store %arg16[%c80_244, %c0_245], %284 {strides = array<i32>} : memref<144x256xf32, #tpu.memory_space<vmem>>, vector<16x255xf32>,
    %cst_246 = arith.constant 0.000000e+00 : f32
    %286 = vector.broadcast %cst_246 : f32 to vector<16x1xf32>
    %c80_247 = arith.constant 80 : index
    %c255_248 = arith.constant 255 : index
    %287 = vector.load %arg16[%c80_247, %c255_248] : memref<144x256xf32, #tpu.memory_space<vmem>>, vector<16x1xf32>
    tpu.vector_store %arg16[%c80_247, %c255_248], %286 {strides = array<i32>} : memref<144x256xf32, #tpu.memory_space<vmem>>, vector<16x1xf32>,
    %288 = vector.extract_strided_slice %248 {offsets = [0, 15], sizes = [16, 241], strides = [1, 1]} : vector<16x256xf32> to vector<16x241xf32>
    %c6_249 = arith.constant 6 : index
    %c0_250 = arith.constant 0 : index
    %289 = vector.load %arg3[%c6_249, %c0_250] : memref<9x256xf32, #tpu.memory_space<vmem>>, vector<1x241xf32>
    %290 = vector.broadcast %289 : vector<1x241xf32> to vector<16x241xf32>
    %291 = arith.mulf %288, %290 : vector<16x241xf32>
    %c96_251 = arith.constant 96 : index
    %c0_252 = arith.constant 0 : index
    %292 = vector.load %arg16[%c96_251, %c0_252] : memref<144x256xf32, #tpu.memory_space<vmem>>, vector<16x241xf32>
    tpu.vector_store %arg16[%c96_251, %c0_252], %291 {strides = array<i32>} : memref<144x256xf32, #tpu.memory_space<vmem>>, vector<16x241xf32>,
    %cst_253 = arith.constant 0.000000e+00 : f32
    %293 = vector.broadcast %cst_253 : f32 to vector<16x15xf32>
    %c96_254 = arith.constant 96 : index
    %c241_255 = arith.constant 241 : index
    %294 = vector.load %arg16[%c96_254, %c241_255] : memref<144x256xf32, #tpu.memory_space<vmem>>, vector<16x15xf32>
    tpu.vector_store %arg16[%c96_254, %c241_255], %293 {strides = array<i32>} : memref<144x256xf32, #tpu.memory_space<vmem>>, vector<16x15xf32>,
    %295 = vector.extract_strided_slice %248 {offsets = [0, 16], sizes = [16, 240], strides = [1, 1]} : vector<16x256xf32> to vector<16x240xf32>
    %c7_256 = arith.constant 7 : index
    %c0_257 = arith.constant 0 : index
    %296 = vector.load %arg3[%c7_256, %c0_257] : memref<9x256xf32, #tpu.memory_space<vmem>>, vector<1x240xf32>
    %297 = vector.broadcast %296 : vector<1x240xf32> to vector<16x240xf32>
    %298 = arith.mulf %295, %297 : vector<16x240xf32>
    %c112_258 = arith.constant 112 : index
    %c0_259 = arith.constant 0 : index
    %299 = vector.load %arg16[%c112_258, %c0_259] : memref<144x256xf32, #tpu.memory_space<vmem>>, vector<16x240xf32>
    tpu.vector_store %arg16[%c112_258, %c0_259], %298 {strides = array<i32>} : memref<144x256xf32, #tpu.memory_space<vmem>>, vector<16x240xf32>,
    %cst_260 = arith.constant 0.000000e+00 : f32
    %300 = vector.broadcast %cst_260 : f32 to vector<16x16xf32>
    %c112_261 = arith.constant 112 : index
    %c240_262 = arith.constant 240 : index
    %301 = vector.load %arg16[%c112_261, %c240_262] : memref<144x256xf32, #tpu.memory_space<vmem>>, vector<16x16xf32>
    tpu.vector_store %arg16[%c112_261, %c240_262], %300 {strides = array<i32>} : memref<144x256xf32, #tpu.memory_space<vmem>>, vector<16x16xf32>,
    %302 = vector.extract_strided_slice %248 {offsets = [0, 17], sizes = [16, 239], strides = [1, 1]} : vector<16x256xf32> to vector<16x239xf32>
    %c8_263 = arith.constant 8 : index
    %c0_264 = arith.constant 0 : index
    %303 = vector.load %arg3[%c8_263, %c0_264] : memref<9x256xf32, #tpu.memory_space<vmem>>, vector<1x239xf32>
    %304 = vector.broadcast %303 : vector<1x239xf32> to vector<16x239xf32>
    %305 = arith.mulf %302, %304 : vector<16x239xf32>
    %c128_265 = arith.constant 128 : index
    %c0_266 = arith.constant 0 : index
    %306 = vector.load %arg16[%c128_265, %c0_266] : memref<144x256xf32, #tpu.memory_space<vmem>>, vector<16x239xf32>
    tpu.vector_store %arg16[%c128_265, %c0_266], %305 {strides = array<i32>} : memref<144x256xf32, #tpu.memory_space<vmem>>, vector<16x239xf32>,
    %cst_267 = arith.constant 0.000000e+00 : f32
    %307 = vector.broadcast %cst_267 : f32 to vector<16x17xf32>
    %c128_268 = arith.constant 128 : index
    %c239_269 = arith.constant 239 : index
    %308 = vector.load %arg16[%c128_268, %c239_269] : memref<144x256xf32, #tpu.memory_space<vmem>>, vector<16x17xf32>
    tpu.vector_store %arg16[%c128_268, %c239_269], %307 {strides = array<i32>} : memref<144x256xf32, #tpu.memory_space<vmem>>, vector<16x17xf32>,
    %c1_270 = arith.constant 1 : index
    %c0_271 = arith.constant 0 : index
    %c0_272 = arith.constant 0 : index
    %309 = vector.load %arg8[%c1_270, %c0_271, %c0_272] : memref<4x16x144xf32, #tpu.memory_space<vmem>>, vector<1x16x144xf32>
    %310 = vector.shape_cast %309 : vector<1x16x144xf32> to vector<16x144xf32>
    %c0_273 = arith.constant 0 : index
    %c0_274 = arith.constant 0 : index
    %311 = vector.load %arg16[%c0_273, %c0_274] : memref<144x256xf32, #tpu.memory_space<vmem>>, vector<144x256xf32>
    %cst_275 = arith.constant dense<0.000000e+00> : vector<16x256xf32>
    %312 = tpu.matmul %310, %311, %cst_275 {dimension_numbers = #tpu.dot_dimension_numbers<[1], [0], [0], [1], [0, 0, 1, 1], [], []>} : vector<16x144xf32>, vector<144x256xf32>, vector<16x256xf32> -> vector<16x256xf32>
    %c1_276 = arith.constant 1 : index
    %c0_277 = arith.constant 0 : index
    %c0_278 = arith.constant 0 : index
    %313 = vector.load %arg9[%c1_276, %c0_277, %c0_278] : memref<4x16x2xf32, #tpu.memory_space<vmem>>, vector<1x16x2xf32>
    %314 = vector.shape_cast %313 : vector<1x16x2xf32> to vector<16x2xf32>
    %315 = vector.extract_strided_slice %314 {offsets = [0, 0], sizes = [16, 1], strides = [1, 1]} : vector<16x2xf32> to vector<16x1xf32>
    %316 = vector.broadcast %315 : vector<16x1xf32> to vector<16x256xf32>
    %317 = arith.addf %312, %316 : vector<16x256xf32>
    %cst_279 = arith.constant 0.000000e+00 : f32
    %318 = vector.broadcast %cst_279 : f32 to vector<16x256xf32>
    %319 = arith.cmpf oge, %317, %318 : vector<16x256xf32>
    %320 = vector.extract_strided_slice %314 {offsets = [0, 1], sizes = [16, 1], strides = [1, 1]} : vector<16x2xf32> to vector<16x1xf32>
    %321 = vector.broadcast %320 : vector<16x1xf32> to vector<16x256xf32>
    %322 = arith.mulf %317, %321 : vector<16x256xf32>
    %323 = arith.select %319, %317, %322 : vector<16x256xi1>, vector<16x256xf32>
    %324 = vector.extract_strided_slice %323 {offsets = [0, 0], sizes = [16, 239], strides = [1, 1]} : vector<16x256xf32> to vector<16x239xf32>
    %c0_280 = arith.constant 0 : index
    %c17_281 = arith.constant 17 : index
    %325 = vector.load %arg3[%c0_280, %c17_281] : memref<9x256xf32, #tpu.memory_space<vmem>>, vector<1x239xf32>
    %326 = vector.broadcast %325 : vector<1x239xf32> to vector<16x239xf32>
    %327 = arith.mulf %324, %326 : vector<16x239xf32>
    %c0_282 = arith.constant 0 : index
    %c17_283 = arith.constant 17 : index
    %328 = vector.load %arg16[%c0_282, %c17_283] : memref<144x256xf32, #tpu.memory_space<vmem>>, vector<16x239xf32>
    tpu.vector_store %arg16[%c0_282, %c17_283], %327 {strides = array<i32>} : memref<144x256xf32, #tpu.memory_space<vmem>>, vector<16x239xf32>,
    %cst_284 = arith.constant 0.000000e+00 : f32
    %329 = vector.broadcast %cst_284 : f32 to vector<16x17xf32>
    %c0_285 = arith.constant 0 : index
    %c0_286 = arith.constant 0 : index
    %330 = vector.load %arg16[%c0_285, %c0_286] : memref<144x256xf32, #tpu.memory_space<vmem>>, vector<16x17xf32>
    tpu.vector_store %arg16[%c0_285, %c0_286], %329 {strides = array<i32>} : memref<144x256xf32, #tpu.memory_space<vmem>>, vector<16x17xf32>,
    %331 = vector.extract_strided_slice %323 {offsets = [0, 0], sizes = [16, 240], strides = [1, 1]} : vector<16x256xf32> to vector<16x240xf32>
    %c1_287 = arith.constant 1 : index
    %c16_288 = arith.constant 16 : index
    %332 = vector.load %arg3[%c1_287, %c16_288] : memref<9x256xf32, #tpu.memory_space<vmem>>, vector<1x240xf32>
    %333 = vector.broadcast %332 : vector<1x240xf32> to vector<16x240xf32>
    %334 = arith.mulf %331, %333 : vector<16x240xf32>
    %c16_289 = arith.constant 16 : index
    %c16_290 = arith.constant 16 : index
    %335 = vector.load %arg16[%c16_289, %c16_290] : memref<144x256xf32, #tpu.memory_space<vmem>>, vector<16x240xf32>
    tpu.vector_store %arg16[%c16_289, %c16_290], %334 {strides = array<i32>} : memref<144x256xf32, #tpu.memory_space<vmem>>, vector<16x240xf32>,
    %cst_291 = arith.constant 0.000000e+00 : f32
    %336 = vector.broadcast %cst_291 : f32 to vector<16x16xf32>
    %c16_292 = arith.constant 16 : index
    %c0_293 = arith.constant 0 : index
    %337 = vector.load %arg16[%c16_292, %c0_293] : memref<144x256xf32, #tpu.memory_space<vmem>>, vector<16x16xf32>
    tpu.vector_store %arg16[%c16_292, %c0_293], %336 {strides = array<i32>} : memref<144x256xf32, #tpu.memory_space<vmem>>, vector<16x16xf32>,
    %338 = vector.extract_strided_slice %323 {offsets = [0, 0], sizes = [16, 241], strides = [1, 1]} : vector<16x256xf32> to vector<16x241xf32>
    %c2_294 = arith.constant 2 : index
    %c15_295 = arith.constant 15 : index
    %339 = vector.load %arg3[%c2_294, %c15_295] : memref<9x256xf32, #tpu.memory_space<vmem>>, vector<1x241xf32>
    %340 = vector.broadcast %339 : vector<1x241xf32> to vector<16x241xf32>
    %341 = arith.mulf %338, %340 : vector<16x241xf32>
    %c32_296 = arith.constant 32 : index
    %c15_297 = arith.constant 15 : index
    %342 = vector.load %arg16[%c32_296, %c15_297] : memref<144x256xf32, #tpu.memory_space<vmem>>, vector<16x241xf32>
    tpu.vector_store %arg16[%c32_296, %c15_297], %341 {strides = array<i32>} : memref<144x256xf32, #tpu.memory_space<vmem>>, vector<16x241xf32>,
    %cst_298 = arith.constant 0.000000e+00 : f32
    %343 = vector.broadcast %cst_298 : f32 to vector<16x15xf32>
    %c32_299 = arith.constant 32 : index
    %c0_300 = arith.constant 0 : index
    %344 = vector.load %arg16[%c32_299, %c0_300] : memref<144x256xf32, #tpu.memory_space<vmem>>, vector<16x15xf32>
    tpu.vector_store %arg16[%c32_299, %c0_300], %343 {strides = array<i32>} : memref<144x256xf32, #tpu.memory_space<vmem>>, vector<16x15xf32>,
    %345 = vector.extract_strided_slice %323 {offsets = [0, 0], sizes = [16, 255], strides = [1, 1]} : vector<16x256xf32> to vector<16x255xf32>
    %c3_301 = arith.constant 3 : index
    %c1_302 = arith.constant 1 : index
    %346 = vector.load %arg3[%c3_301, %c1_302] : memref<9x256xf32, #tpu.memory_space<vmem>>, vector<1x255xf32>
    %347 = vector.broadcast %346 : vector<1x255xf32> to vector<16x255xf32>
    %348 = arith.mulf %345, %347 : vector<16x255xf32>
    %c48_303 = arith.constant 48 : index
    %c1_304 = arith.constant 1 : index
    %349 = vector.load %arg16[%c48_303, %c1_304] : memref<144x256xf32, #tpu.memory_space<vmem>>, vector<16x255xf32>
    tpu.vector_store %arg16[%c48_303, %c1_304], %348 {strides = array<i32>} : memref<144x256xf32, #tpu.memory_space<vmem>>, vector<16x255xf32>,
    %cst_305 = arith.constant 0.000000e+00 : f32
    %350 = vector.broadcast %cst_305 : f32 to vector<16x1xf32>
    %c48_306 = arith.constant 48 : index
    %c0_307 = arith.constant 0 : index
    %351 = vector.load %arg16[%c48_306, %c0_307] : memref<144x256xf32, #tpu.memory_space<vmem>>, vector<16x1xf32>
    tpu.vector_store %arg16[%c48_306, %c0_307], %350 {strides = array<i32>} : memref<144x256xf32, #tpu.memory_space<vmem>>, vector<16x1xf32>,
    %c4_308 = arith.constant 4 : index
    %c0_309 = arith.constant 0 : index
    %352 = vector.load %arg3[%c4_308, %c0_309] : memref<9x256xf32, #tpu.memory_space<vmem>>, vector<1x256xf32>
    %353 = vector.broadcast %352 : vector<1x256xf32> to vector<16x256xf32>
    %354 = arith.mulf %323, %353 : vector<16x256xf32>
    %c64_310 = arith.constant 64 : index
    %c0_311 = arith.constant 0 : index
    %355 = vector.load %arg16[%c64_310, %c0_311] : memref<144x256xf32, #tpu.memory_space<vmem>>, vector<16x256xf32>
    tpu.vector_store %arg16[%c64_310, %c0_311], %354 {strides = array<i32>} : memref<144x256xf32, #tpu.memory_space<vmem>>, vector<16x256xf32>,
    %356 = vector.extract_strided_slice %323 {offsets = [0, 1], sizes = [16, 255], strides = [1, 1]} : vector<16x256xf32> to vector<16x255xf32>
    %c5_312 = arith.constant 5 : index
    %c0_313 = arith.constant 0 : index
    %357 = vector.load %arg3[%c5_312, %c0_313] : memref<9x256xf32, #tpu.memory_space<vmem>>, vector<1x255xf32>
    %358 = vector.broadcast %357 : vector<1x255xf32> to vector<16x255xf32>
    %359 = arith.mulf %356, %358 : vector<16x255xf32>
    %c80_314 = arith.constant 80 : index
    %c0_315 = arith.constant 0 : index
    %360 = vector.load %arg16[%c80_314, %c0_315] : memref<144x256xf32, #tpu.memory_space<vmem>>, vector<16x255xf32>
    tpu.vector_store %arg16[%c80_314, %c0_315], %359 {strides = array<i32>} : memref<144x256xf32, #tpu.memory_space<vmem>>, vector<16x255xf32>,
    %cst_316 = arith.constant 0.000000e+00 : f32
    %361 = vector.broadcast %cst_316 : f32 to vector<16x1xf32>
    %c80_317 = arith.constant 80 : index
    %c255_318 = arith.constant 255 : index
    %362 = vector.load %arg16[%c80_317, %c255_318] : memref<144x256xf32, #tpu.memory_space<vmem>>, vector<16x1xf32>
    tpu.vector_store %arg16[%c80_317, %c255_318], %361 {strides = array<i32>} : memref<144x256xf32, #tpu.memory_space<vmem>>, vector<16x1xf32>,
    %363 = vector.extract_strided_slice %323 {offsets = [0, 15], sizes = [16, 241], strides = [1, 1]} : vector<16x256xf32> to vector<16x241xf32>
    %c6_319 = arith.constant 6 : index
    %c0_320 = arith.constant 0 : index
    %364 = vector.load %arg3[%c6_319, %c0_320] : memref<9x256xf32, #tpu.memory_space<vmem>>, vector<1x241xf32>
    %365 = vector.broadcast %364 : vector<1x241xf32> to vector<16x241xf32>
    %366 = arith.mulf %363, %365 : vector<16x241xf32>
    %c96_321 = arith.constant 96 : index
    %c0_322 = arith.constant 0 : index
    %367 = vector.load %arg16[%c96_321, %c0_322] : memref<144x256xf32, #tpu.memory_space<vmem>>, vector<16x241xf32>
    tpu.vector_store %arg16[%c96_321, %c0_322], %366 {strides = array<i32>} : memref<144x256xf32, #tpu.memory_space<vmem>>, vector<16x241xf32>,
    %cst_323 = arith.constant 0.000000e+00 : f32
    %368 = vector.broadcast %cst_323 : f32 to vector<16x15xf32>
    %c96_324 = arith.constant 96 : index
    %c241_325 = arith.constant 241 : index
    %369 = vector.load %arg16[%c96_324, %c241_325] : memref<144x256xf32, #tpu.memory_space<vmem>>, vector<16x15xf32>
    tpu.vector_store %arg16[%c96_324, %c241_325], %368 {strides = array<i32>} : memref<144x256xf32, #tpu.memory_space<vmem>>, vector<16x15xf32>,
    %370 = vector.extract_strided_slice %323 {offsets = [0, 16], sizes = [16, 240], strides = [1, 1]} : vector<16x256xf32> to vector<16x240xf32>
    %c7_326 = arith.constant 7 : index
    %c0_327 = arith.constant 0 : index
    %371 = vector.load %arg3[%c7_326, %c0_327] : memref<9x256xf32, #tpu.memory_space<vmem>>, vector<1x240xf32>
    %372 = vector.broadcast %371 : vector<1x240xf32> to vector<16x240xf32>
    %373 = arith.mulf %370, %372 : vector<16x240xf32>
    %c112_328 = arith.constant 112 : index
    %c0_329 = arith.constant 0 : index
    %374 = vector.load %arg16[%c112_328, %c0_329] : memref<144x256xf32, #tpu.memory_space<vmem>>, vector<16x240xf32>
    tpu.vector_store %arg16[%c112_328, %c0_329], %373 {strides = array<i32>} : memref<144x256xf32, #tpu.memory_space<vmem>>, vector<16x240xf32>,
    %cst_330 = arith.constant 0.000000e+00 : f32
    %375 = vector.broadcast %cst_330 : f32 to vector<16x16xf32>
    %c112_331 = arith.constant 112 : index
    %c240_332 = arith.constant 240 : index
    %376 = vector.load %arg16[%c112_331, %c240_332] : memref<144x256xf32, #tpu.memory_space<vmem>>, vector<16x16xf32>
    tpu.vector_store %arg16[%c112_331, %c240_332], %375 {strides = array<i32>} : memref<144x256xf32, #tpu.memory_space<vmem>>, vector<16x16xf32>,
    %377 = vector.extract_strided_slice %323 {offsets = [0, 17], sizes = [16, 239], strides = [1, 1]} : vector<16x256xf32> to vector<16x239xf32>
    %c8_333 = arith.constant 8 : index
    %c0_334 = arith.constant 0 : index
    %378 = vector.load %arg3[%c8_333, %c0_334] : memref<9x256xf32, #tpu.memory_space<vmem>>, vector<1x239xf32>
    %379 = vector.broadcast %378 : vector<1x239xf32> to vector<16x239xf32>
    %380 = arith.mulf %377, %379 : vector<16x239xf32>
    %c128_335 = arith.constant 128 : index
    %c0_336 = arith.constant 0 : index
    %381 = vector.load %arg16[%c128_335, %c0_336] : memref<144x256xf32, #tpu.memory_space<vmem>>, vector<16x239xf32>
    tpu.vector_store %arg16[%c128_335, %c0_336], %380 {strides = array<i32>} : memref<144x256xf32, #tpu.memory_space<vmem>>, vector<16x239xf32>,
    %cst_337 = arith.constant 0.000000e+00 : f32
    %382 = vector.broadcast %cst_337 : f32 to vector<16x17xf32>
    %c128_338 = arith.constant 128 : index
    %c239_339 = arith.constant 239 : index
    %383 = vector.load %arg16[%c128_338, %c239_339] : memref<144x256xf32, #tpu.memory_space<vmem>>, vector<16x17xf32>
    tpu.vector_store %arg16[%c128_338, %c239_339], %382 {strides = array<i32>} : memref<144x256xf32, #tpu.memory_space<vmem>>, vector<16x17xf32>,
    %c2_340 = arith.constant 2 : index
    %c0_341 = arith.constant 0 : index
    %c0_342 = arith.constant 0 : index
    %384 = vector.load %arg8[%c2_340, %c0_341, %c0_342] : memref<4x16x144xf32, #tpu.memory_space<vmem>>, vector<1x16x144xf32>
    %385 = vector.shape_cast %384 : vector<1x16x144xf32> to vector<16x144xf32>
    %c0_343 = arith.constant 0 : index
    %c0_344 = arith.constant 0 : index
    %386 = vector.load %arg16[%c0_343, %c0_344] : memref<144x256xf32, #tpu.memory_space<vmem>>, vector<144x256xf32>
    %cst_345 = arith.constant dense<0.000000e+00> : vector<16x256xf32>
    %387 = tpu.matmul %385, %386, %cst_345 {dimension_numbers = #tpu.dot_dimension_numbers<[1], [0], [0], [1], [0, 0, 1, 1], [], []>} : vector<16x144xf32>, vector<144x256xf32>, vector<16x256xf32> -> vector<16x256xf32>
    %c2_346 = arith.constant 2 : index
    %c0_347 = arith.constant 0 : index
    %c0_348 = arith.constant 0 : index
    %388 = vector.load %arg9[%c2_346, %c0_347, %c0_348] : memref<4x16x2xf32, #tpu.memory_space<vmem>>, vector<1x16x2xf32>
    %389 = vector.shape_cast %388 : vector<1x16x2xf32> to vector<16x2xf32>
    %390 = vector.extract_strided_slice %389 {offsets = [0, 0], sizes = [16, 1], strides = [1, 1]} : vector<16x2xf32> to vector<16x1xf32>
    %391 = vector.broadcast %390 : vector<16x1xf32> to vector<16x256xf32>
    %392 = arith.addf %387, %391 : vector<16x256xf32>
    %cst_349 = arith.constant 0.000000e+00 : f32
    %393 = vector.broadcast %cst_349 : f32 to vector<16x256xf32>
    %394 = arith.cmpf oge, %392, %393 : vector<16x256xf32>
    %395 = vector.extract_strided_slice %389 {offsets = [0, 1], sizes = [16, 1], strides = [1, 1]} : vector<16x2xf32> to vector<16x1xf32>
    %396 = vector.broadcast %395 : vector<16x1xf32> to vector<16x256xf32>
    %397 = arith.mulf %392, %396 : vector<16x256xf32>
    %398 = arith.select %394, %392, %397 : vector<16x256xi1>, vector<16x256xf32>
    %399 = vector.extract_strided_slice %398 {offsets = [0, 0], sizes = [16, 239], strides = [1, 1]} : vector<16x256xf32> to vector<16x239xf32>
    %c0_350 = arith.constant 0 : index
    %c17_351 = arith.constant 17 : index
    %400 = vector.load %arg3[%c0_350, %c17_351] : memref<9x256xf32, #tpu.memory_space<vmem>>, vector<1x239xf32>
    %401 = vector.broadcast %400 : vector<1x239xf32> to vector<16x239xf32>
    %402 = arith.mulf %399, %401 : vector<16x239xf32>
    %c0_352 = arith.constant 0 : index
    %c17_353 = arith.constant 17 : index
    %403 = vector.load %arg16[%c0_352, %c17_353] : memref<144x256xf32, #tpu.memory_space<vmem>>, vector<16x239xf32>
    tpu.vector_store %arg16[%c0_352, %c17_353], %402 {strides = array<i32>} : memref<144x256xf32, #tpu.memory_space<vmem>>, vector<16x239xf32>,
    %cst_354 = arith.constant 0.000000e+00 : f32
    %404 = vector.broadcast %cst_354 : f32 to vector<16x17xf32>
    %c0_355 = arith.constant 0 : index
    %c0_356 = arith.constant 0 : index
    %405 = vector.load %arg16[%c0_355, %c0_356] : memref<144x256xf32, #tpu.memory_space<vmem>>, vector<16x17xf32>
    tpu.vector_store %arg16[%c0_355, %c0_356], %404 {strides = array<i32>} : memref<144x256xf32, #tpu.memory_space<vmem>>, vector<16x17xf32>,
    %406 = vector.extract_strided_slice %398 {offsets = [0, 0], sizes = [16, 240], strides = [1, 1]} : vector<16x256xf32> to vector<16x240xf32>
    %c1_357 = arith.constant 1 : index
    %c16_358 = arith.constant 16 : index
    %407 = vector.load %arg3[%c1_357, %c16_358] : memref<9x256xf32, #tpu.memory_space<vmem>>, vector<1x240xf32>
    %408 = vector.broadcast %407 : vector<1x240xf32> to vector<16x240xf32>
    %409 = arith.mulf %406, %408 : vector<16x240xf32>
    %c16_359 = arith.constant 16 : index
    %c16_360 = arith.constant 16 : index
    %410 = vector.load %arg16[%c16_359, %c16_360] : memref<144x256xf32, #tpu.memory_space<vmem>>, vector<16x240xf32>
    tpu.vector_store %arg16[%c16_359, %c16_360], %409 {strides = array<i32>} : memref<144x256xf32, #tpu.memory_space<vmem>>, vector<16x240xf32>,
    %cst_361 = arith.constant 0.000000e+00 : f32
    %411 = vector.broadcast %cst_361 : f32 to vector<16x16xf32>
    %c16_362 = arith.constant 16 : index
    %c0_363 = arith.constant 0 : index
    %412 = vector.load %arg16[%c16_362, %c0_363] : memref<144x256xf32, #tpu.memory_space<vmem>>, vector<16x16xf32>
    tpu.vector_store %arg16[%c16_362, %c0_363], %411 {strides = array<i32>} : memref<144x256xf32, #tpu.memory_space<vmem>>, vector<16x16xf32>,
    %413 = vector.extract_strided_slice %398 {offsets = [0, 0], sizes = [16, 241], strides = [1, 1]} : vector<16x256xf32> to vector<16x241xf32>
    %c2_364 = arith.constant 2 : index
    %c15_365 = arith.constant 15 : index
    %414 = vector.load %arg3[%c2_364, %c15_365] : memref<9x256xf32, #tpu.memory_space<vmem>>, vector<1x241xf32>
    %415 = vector.broadcast %414 : vector<1x241xf32> to vector<16x241xf32>
    %416 = arith.mulf %413, %415 : vector<16x241xf32>
    %c32_366 = arith.constant 32 : index
    %c15_367 = arith.constant 15 : index
    %417 = vector.load %arg16[%c32_366, %c15_367] : memref<144x256xf32, #tpu.memory_space<vmem>>, vector<16x241xf32>
    tpu.vector_store %arg16[%c32_366, %c15_367], %416 {strides = array<i32>} : memref<144x256xf32, #tpu.memory_space<vmem>>, vector<16x241xf32>,
    %cst_368 = arith.constant 0.000000e+00 : f32
    %418 = vector.broadcast %cst_368 : f32 to vector<16x15xf32>
    %c32_369 = arith.constant 32 : index
    %c0_370 = arith.constant 0 : index
    %419 = vector.load %arg16[%c32_369, %c0_370] : memref<144x256xf32, #tpu.memory_space<vmem>>, vector<16x15xf32>
    tpu.vector_store %arg16[%c32_369, %c0_370], %418 {strides = array<i32>} : memref<144x256xf32, #tpu.memory_space<vmem>>, vector<16x15xf32>,
    %420 = vector.extract_strided_slice %398 {offsets = [0, 0], sizes = [16, 255], strides = [1, 1]} : vector<16x256xf32> to vector<16x255xf32>
    %c3_371 = arith.constant 3 : index
    %c1_372 = arith.constant 1 : index
    %421 = vector.load %arg3[%c3_371, %c1_372] : memref<9x256xf32, #tpu.memory_space<vmem>>, vector<1x255xf32>
    %422 = vector.broadcast %421 : vector<1x255xf32> to vector<16x255xf32>
    %423 = arith.mulf %420, %422 : vector<16x255xf32>
    %c48_373 = arith.constant 48 : index
    %c1_374 = arith.constant 1 : index
    %424 = vector.load %arg16[%c48_373, %c1_374] : memref<144x256xf32, #tpu.memory_space<vmem>>, vector<16x255xf32>
    tpu.vector_store %arg16[%c48_373, %c1_374], %423 {strides = array<i32>} : memref<144x256xf32, #tpu.memory_space<vmem>>, vector<16x255xf32>,
    %cst_375 = arith.constant 0.000000e+00 : f32
    %425 = vector.broadcast %cst_375 : f32 to vector<16x1xf32>
    %c48_376 = arith.constant 48 : index
    %c0_377 = arith.constant 0 : index
    %426 = vector.load %arg16[%c48_376, %c0_377] : memref<144x256xf32, #tpu.memory_space<vmem>>, vector<16x1xf32>
    tpu.vector_store %arg16[%c48_376, %c0_377], %425 {strides = array<i32>} : memref<144x256xf32, #tpu.memory_space<vmem>>, vector<16x1xf32>,
    %c4_378 = arith.constant 4 : index
    %c0_379 = arith.constant 0 : index
    %427 = vector.load %arg3[%c4_378, %c0_379] : memref<9x256xf32, #tpu.memory_space<vmem>>, vector<1x256xf32>
    %428 = vector.broadcast %427 : vector<1x256xf32> to vector<16x256xf32>
    %429 = arith.mulf %398, %428 : vector<16x256xf32>
    %c64_380 = arith.constant 64 : index
    %c0_381 = arith.constant 0 : index
    %430 = vector.load %arg16[%c64_380, %c0_381] : memref<144x256xf32, #tpu.memory_space<vmem>>, vector<16x256xf32>
    tpu.vector_store %arg16[%c64_380, %c0_381], %429 {strides = array<i32>} : memref<144x256xf32, #tpu.memory_space<vmem>>, vector<16x256xf32>,
    %431 = vector.extract_strided_slice %398 {offsets = [0, 1], sizes = [16, 255], strides = [1, 1]} : vector<16x256xf32> to vector<16x255xf32>
    %c5_382 = arith.constant 5 : index
    %c0_383 = arith.constant 0 : index
    %432 = vector.load %arg3[%c5_382, %c0_383] : memref<9x256xf32, #tpu.memory_space<vmem>>, vector<1x255xf32>
    %433 = vector.broadcast %432 : vector<1x255xf32> to vector<16x255xf32>
    %434 = arith.mulf %431, %433 : vector<16x255xf32>
    %c80_384 = arith.constant 80 : index
    %c0_385 = arith.constant 0 : index
    %435 = vector.load %arg16[%c80_384, %c0_385] : memref<144x256xf32, #tpu.memory_space<vmem>>, vector<16x255xf32>
    tpu.vector_store %arg16[%c80_384, %c0_385], %434 {strides = array<i32>} : memref<144x256xf32, #tpu.memory_space<vmem>>, vector<16x255xf32>,
    %cst_386 = arith.constant 0.000000e+00 : f32
    %436 = vector.broadcast %cst_386 : f32 to vector<16x1xf32>
    %c80_387 = arith.constant 80 : index
    %c255_388 = arith.constant 255 : index
    %437 = vector.load %arg16[%c80_387, %c255_388] : memref<144x256xf32, #tpu.memory_space<vmem>>, vector<16x1xf32>
    tpu.vector_store %arg16[%c80_387, %c255_388], %436 {strides = array<i32>} : memref<144x256xf32, #tpu.memory_space<vmem>>, vector<16x1xf32>,
    %438 = vector.extract_strided_slice %398 {offsets = [0, 15], sizes = [16, 241], strides = [1, 1]} : vector<16x256xf32> to vector<16x241xf32>
    %c6_389 = arith.constant 6 : index
    %c0_390 = arith.constant 0 : index
    %439 = vector.load %arg3[%c6_389, %c0_390] : memref<9x256xf32, #tpu.memory_space<vmem>>, vector<1x241xf32>
    %440 = vector.broadcast %439 : vector<1x241xf32> to vector<16x241xf32>
    %441 = arith.mulf %438, %440 : vector<16x241xf32>
    %c96_391 = arith.constant 96 : index
    %c0_392 = arith.constant 0 : index
    %442 = vector.load %arg16[%c96_391, %c0_392] : memref<144x256xf32, #tpu.memory_space<vmem>>, vector<16x241xf32>
    tpu.vector_store %arg16[%c96_391, %c0_392], %441 {strides = array<i32>} : memref<144x256xf32, #tpu.memory_space<vmem>>, vector<16x241xf32>,
    %cst_393 = arith.constant 0.000000e+00 : f32
    %443 = vector.broadcast %cst_393 : f32 to vector<16x15xf32>
    %c96_394 = arith.constant 96 : index
    %c241_395 = arith.constant 241 : index
    %444 = vector.load %arg16[%c96_394, %c241_395] : memref<144x256xf32, #tpu.memory_space<vmem>>, vector<16x15xf32>
    tpu.vector_store %arg16[%c96_394, %c241_395], %443 {strides = array<i32>} : memref<144x256xf32, #tpu.memory_space<vmem>>, vector<16x15xf32>,
    %445 = vector.extract_strided_slice %398 {offsets = [0, 16], sizes = [16, 240], strides = [1, 1]} : vector<16x256xf32> to vector<16x240xf32>
    %c7_396 = arith.constant 7 : index
    %c0_397 = arith.constant 0 : index
    %446 = vector.load %arg3[%c7_396, %c0_397] : memref<9x256xf32, #tpu.memory_space<vmem>>, vector<1x240xf32>
    %447 = vector.broadcast %446 : vector<1x240xf32> to vector<16x240xf32>
    %448 = arith.mulf %445, %447 : vector<16x240xf32>
    %c112_398 = arith.constant 112 : index
    %c0_399 = arith.constant 0 : index
    %449 = vector.load %arg16[%c112_398, %c0_399] : memref<144x256xf32, #tpu.memory_space<vmem>>, vector<16x240xf32>
    tpu.vector_store %arg16[%c112_398, %c0_399], %448 {strides = array<i32>} : memref<144x256xf32, #tpu.memory_space<vmem>>, vector<16x240xf32>,
    %cst_400 = arith.constant 0.000000e+00 : f32
    %450 = vector.broadcast %cst_400 : f32 to vector<16x16xf32>
    %c112_401 = arith.constant 112 : index
    %c240_402 = arith.constant 240 : index
    %451 = vector.load %arg16[%c112_401, %c240_402] : memref<144x256xf32, #tpu.memory_space<vmem>>, vector<16x16xf32>
    tpu.vector_store %arg16[%c112_401, %c240_402], %450 {strides = array<i32>} : memref<144x256xf32, #tpu.memory_space<vmem>>, vector<16x16xf32>,
    %452 = vector.extract_strided_slice %398 {offsets = [0, 17], sizes = [16, 239], strides = [1, 1]} : vector<16x256xf32> to vector<16x239xf32>
    %c8_403 = arith.constant 8 : index
    %c0_404 = arith.constant 0 : index
    %453 = vector.load %arg3[%c8_403, %c0_404] : memref<9x256xf32, #tpu.memory_space<vmem>>, vector<1x239xf32>
    %454 = vector.broadcast %453 : vector<1x239xf32> to vector<16x239xf32>
    %455 = arith.mulf %452, %454 : vector<16x239xf32>
    %c128_405 = arith.constant 128 : index
    %c0_406 = arith.constant 0 : index
    %456 = vector.load %arg16[%c128_405, %c0_406] : memref<144x256xf32, #tpu.memory_space<vmem>>, vector<16x239xf32>
    tpu.vector_store %arg16[%c128_405, %c0_406], %455 {strides = array<i32>} : memref<144x256xf32, #tpu.memory_space<vmem>>, vector<16x239xf32>,
    %cst_407 = arith.constant 0.000000e+00 : f32
    %457 = vector.broadcast %cst_407 : f32 to vector<16x17xf32>
    %c128_408 = arith.constant 128 : index
    %c239_409 = arith.constant 239 : index
    %458 = vector.load %arg16[%c128_408, %c239_409] : memref<144x256xf32, #tpu.memory_space<vmem>>, vector<16x17xf32>
    tpu.vector_store %arg16[%c128_408, %c239_409], %457 {strides = array<i32>} : memref<144x256xf32, #tpu.memory_space<vmem>>, vector<16x17xf32>,
    %c3_410 = arith.constant 3 : index
    %c0_411 = arith.constant 0 : index
    %c0_412 = arith.constant 0 : index
    %459 = vector.load %arg8[%c3_410, %c0_411, %c0_412] : memref<4x16x144xf32, #tpu.memory_space<vmem>>, vector<1x16x144xf32>
    %460 = vector.shape_cast %459 : vector<1x16x144xf32> to vector<16x144xf32>
    %c0_413 = arith.constant 0 : index
    %c0_414 = arith.constant 0 : index
    %461 = vector.load %arg16[%c0_413, %c0_414] : memref<144x256xf32, #tpu.memory_space<vmem>>, vector<144x256xf32>
    %cst_415 = arith.constant dense<0.000000e+00> : vector<16x256xf32>
    %462 = tpu.matmul %460, %461, %cst_415 {dimension_numbers = #tpu.dot_dimension_numbers<[1], [0], [0], [1], [0, 0, 1, 1], [], []>} : vector<16x144xf32>, vector<144x256xf32>, vector<16x256xf32> -> vector<16x256xf32>
    %c3_416 = arith.constant 3 : index
    %c0_417 = arith.constant 0 : index
    %c0_418 = arith.constant 0 : index
    %463 = vector.load %arg9[%c3_416, %c0_417, %c0_418] : memref<4x16x2xf32, #tpu.memory_space<vmem>>, vector<1x16x2xf32>
    %464 = vector.shape_cast %463 : vector<1x16x2xf32> to vector<16x2xf32>
    %465 = vector.extract_strided_slice %464 {offsets = [0, 0], sizes = [16, 1], strides = [1, 1]} : vector<16x2xf32> to vector<16x1xf32>
    %466 = vector.broadcast %465 : vector<16x1xf32> to vector<16x256xf32>
    %467 = arith.addf %462, %466 : vector<16x256xf32>
    %cst_419 = arith.constant 0.000000e+00 : f32
    %468 = vector.broadcast %cst_419 : f32 to vector<16x256xf32>
    %469 = arith.cmpf oge, %467, %468 : vector<16x256xf32>
    %470 = vector.extract_strided_slice %464 {offsets = [0, 1], sizes = [16, 1], strides = [1, 1]} : vector<16x2xf32> to vector<16x1xf32>
    %471 = vector.broadcast %470 : vector<16x1xf32> to vector<16x256xf32>
    %472 = arith.mulf %467, %471 : vector<16x256xf32>
    %473 = arith.select %469, %467, %472 : vector<16x256xi1>, vector<16x256xf32>
    %c0_420 = arith.constant 0 : index
    %c0_421 = arith.constant 0 : index
    %474 = vector.load %arg10[%c0_420, %c0_421] : memref<56x16xf32, #tpu.memory_space<vmem>>, vector<56x16xf32>
    %cst_422 = arith.constant dense<0.000000e+00> : vector<56x256xf32>
    %475 = tpu.matmul %474, %473, %cst_422 {dimension_numbers = #tpu.dot_dimension_numbers<[1], [0], [0], [1], [0, 0, 1, 1], [], []>} : vector<56x16xf32>, vector<16x256xf32>, vector<56x256xf32> -> vector<56x256xf32>
    %c0_423 = arith.constant 0 : index
    %c0_424 = arith.constant 0 : index
    %476 = vector.load %arg11[%c0_423, %c0_424] : memref<56x2xf32, #tpu.memory_space<vmem>>, vector<56x2xf32>
    %477 = vector.extract_strided_slice %476 {offsets = [0, 0], sizes = [56, 1], strides = [1, 1]} : vector<56x2xf32> to vector<56x1xf32>
    %478 = vector.broadcast %477 : vector<56x1xf32> to vector<56x256xf32>
    %479 = arith.addf %475, %478 : vector<56x256xf32>
    %cst_425 = arith.constant 0.000000e+00 : f32
    %480 = vector.broadcast %cst_425 : f32 to vector<56x256xf32>
    %481 = arith.cmpf oge, %479, %480 : vector<56x256xf32>
    %482 = vector.extract_strided_slice %476 {offsets = [0, 1], sizes = [56, 1], strides = [1, 1]} : vector<56x2xf32> to vector<56x1xf32>
    %483 = vector.broadcast %482 : vector<56x1xf32> to vector<56x256xf32>
    %484 = arith.mulf %479, %483 : vector<56x256xf32>
    %485 = arith.select %481, %479, %484 : vector<56x256xi1>, vector<56x256xf32>
    %486 = vector.extract_strided_slice %485 {offsets = [0, 0], sizes = [56, 222], strides = [1, 1]} : vector<56x256xf32> to vector<56x222xf32>
    %c0_426 = arith.constant 0 : index
    %c34_427 = arith.constant 34 : index
    %487 = vector.load %arg2[%c0_426, %c34_427] : memref<25x256xf32, #tpu.memory_space<vmem>>, vector<1x222xf32>
    %488 = vector.broadcast %487 : vector<1x222xf32> to vector<56x222xf32>
    %489 = arith.mulf %486, %488 : vector<56x222xf32>
    %c0_428 = arith.constant 0 : index
    %c34_429 = arith.constant 34 : index
    %490 = vector.load %arg17[%c0_428, %c34_429] : memref<1400x256xf32, #tpu.memory_space<vmem>>, vector<56x222xf32>
    tpu.vector_store %arg17[%c0_428, %c34_429], %489 {strides = array<i32>} : memref<1400x256xf32, #tpu.memory_space<vmem>>, vector<56x222xf32>,
    %cst_430 = arith.constant 0.000000e+00 : f32
    %491 = vector.broadcast %cst_430 : f32 to vector<56x34xf32>
    %c0_431 = arith.constant 0 : index
    %c0_432 = arith.constant 0 : index
    %492 = vector.load %arg17[%c0_431, %c0_432] : memref<1400x256xf32, #tpu.memory_space<vmem>>, vector<56x34xf32>
    tpu.vector_store %arg17[%c0_431, %c0_432], %491 {strides = array<i32>} : memref<1400x256xf32, #tpu.memory_space<vmem>>, vector<56x34xf32>,
    %493 = vector.extract_strided_slice %485 {offsets = [0, 0], sizes = [56, 223], strides = [1, 1]} : vector<56x256xf32> to vector<56x223xf32>
    %c1_433 = arith.constant 1 : index
    %c33_434 = arith.constant 33 : index
    %494 = vector.load %arg2[%c1_433, %c33_434] : memref<25x256xf32, #tpu.memory_space<vmem>>, vector<1x223xf32>
    %495 = vector.broadcast %494 : vector<1x223xf32> to vector<56x223xf32>
    %496 = arith.mulf %493, %495 : vector<56x223xf32>
    %c56 = arith.constant 56 : index
    %c33_435 = arith.constant 33 : index
    %497 = vector.load %arg17[%c56, %c33_435] : memref<1400x256xf32, #tpu.memory_space<vmem>>, vector<56x223xf32>
    tpu.vector_store %arg17[%c56, %c33_435], %496 {strides = array<i32>} : memref<1400x256xf32, #tpu.memory_space<vmem>>, vector<56x223xf32>,
    %cst_436 = arith.constant 0.000000e+00 : f32
    %498 = vector.broadcast %cst_436 : f32 to vector<56x33xf32>
    %c56_437 = arith.constant 56 : index
    %c0_438 = arith.constant 0 : index
    %499 = vector.load %arg17[%c56_437, %c0_438] : memref<1400x256xf32, #tpu.memory_space<vmem>>, vector<56x33xf32>
    tpu.vector_store %arg17[%c56_437, %c0_438], %498 {strides = array<i32>} : memref<1400x256xf32, #tpu.memory_space<vmem>>, vector<56x33xf32>,
    %500 = vector.extract_strided_slice %485 {offsets = [0, 0], sizes = [56, 224], strides = [1, 1]} : vector<56x256xf32> to vector<56x224xf32>
    %c2_439 = arith.constant 2 : index
    %c32_440 = arith.constant 32 : index
    %501 = vector.load %arg2[%c2_439, %c32_440] : memref<25x256xf32, #tpu.memory_space<vmem>>, vector<1x224xf32>
    %502 = vector.broadcast %501 : vector<1x224xf32> to vector<56x224xf32>
    %503 = arith.mulf %500, %502 : vector<56x224xf32>
    %c112_441 = arith.constant 112 : index
    %c32_442 = arith.constant 32 : index
    %504 = vector.load %arg17[%c112_441, %c32_442] : memref<1400x256xf32, #tpu.memory_space<vmem>>, vector<56x224xf32>
    tpu.vector_store %arg17[%c112_441, %c32_442], %503 {strides = array<i32>} : memref<1400x256xf32, #tpu.memory_space<vmem>>, vector<56x224xf32>,
    %cst_443 = arith.constant 0.000000e+00 : f32
    %505 = vector.broadcast %cst_443 : f32 to vector<56x32xf32>
    %c112_444 = arith.constant 112 : index
    %c0_445 = arith.constant 0 : index
    %506 = vector.load %arg17[%c112_444, %c0_445] : memref<1400x256xf32, #tpu.memory_space<vmem>>, vector<56x32xf32>
    tpu.vector_store %arg17[%c112_444, %c0_445], %505 {strides = array<i32>} : memref<1400x256xf32, #tpu.memory_space<vmem>>, vector<56x32xf32>,
    %507 = vector.extract_strided_slice %485 {offsets = [0, 0], sizes = [56, 225], strides = [1, 1]} : vector<56x256xf32> to vector<56x225xf32>
    %c3_446 = arith.constant 3 : index
    %c31_447 = arith.constant 31 : index
    %508 = vector.load %arg2[%c3_446, %c31_447] : memref<25x256xf32, #tpu.memory_space<vmem>>, vector<1x225xf32>
    %509 = vector.broadcast %508 : vector<1x225xf32> to vector<56x225xf32>
    %510 = arith.mulf %507, %509 : vector<56x225xf32>
    %c168 = arith.constant 168 : index
    %c31_448 = arith.constant 31 : index
    %511 = vector.load %arg17[%c168, %c31_448] : memref<1400x256xf32, #tpu.memory_space<vmem>>, vector<56x225xf32>
    tpu.vector_store %arg17[%c168, %c31_448], %510 {strides = array<i32>} : memref<1400x256xf32, #tpu.memory_space<vmem>>, vector<56x225xf32>,
    %cst_449 = arith.constant 0.000000e+00 : f32
    %512 = vector.broadcast %cst_449 : f32 to vector<56x31xf32>
    %c168_450 = arith.constant 168 : index
    %c0_451 = arith.constant 0 : index
    %513 = vector.load %arg17[%c168_450, %c0_451] : memref<1400x256xf32, #tpu.memory_space<vmem>>, vector<56x31xf32>
    tpu.vector_store %arg17[%c168_450, %c0_451], %512 {strides = array<i32>} : memref<1400x256xf32, #tpu.memory_space<vmem>>, vector<56x31xf32>,
    %514 = vector.extract_strided_slice %485 {offsets = [0, 0], sizes = [56, 226], strides = [1, 1]} : vector<56x256xf32> to vector<56x226xf32>
    %c4_452 = arith.constant 4 : index
    %c30_453 = arith.constant 30 : index
    %515 = vector.load %arg2[%c4_452, %c30_453] : memref<25x256xf32, #tpu.memory_space<vmem>>, vector<1x226xf32>
    %516 = vector.broadcast %515 : vector<1x226xf32> to vector<56x226xf32>
    %517 = arith.mulf %514, %516 : vector<56x226xf32>
    %c224_454 = arith.constant 224 : index
    %c30_455 = arith.constant 30 : index
    %518 = vector.load %arg17[%c224_454, %c30_455] : memref<1400x256xf32, #tpu.memory_space<vmem>>, vector<56x226xf32>
    tpu.vector_store %arg17[%c224_454, %c30_455], %517 {strides = array<i32>} : memref<1400x256xf32, #tpu.memory_space<vmem>>, vector<56x226xf32>,
    %cst_456 = arith.constant 0.000000e+00 : f32
    %519 = vector.broadcast %cst_456 : f32 to vector<56x30xf32>
    %c224_457 = arith.constant 224 : index
    %c0_458 = arith.constant 0 : index
    %520 = vector.load %arg17[%c224_457, %c0_458] : memref<1400x256xf32, #tpu.memory_space<vmem>>, vector<56x30xf32>
    tpu.vector_store %arg17[%c224_457, %c0_458], %519 {strides = array<i32>} : memref<1400x256xf32, #tpu.memory_space<vmem>>, vector<56x30xf32>,
    %521 = vector.extract_strided_slice %485 {offsets = [0, 0], sizes = [56, 238], strides = [1, 1]} : vector<56x256xf32> to vector<56x238xf32>
    %c5_459 = arith.constant 5 : index
    %c18_460 = arith.constant 18 : index
    %522 = vector.load %arg2[%c5_459, %c18_460] : memref<25x256xf32, #tpu.memory_space<vmem>>, vector<1x238xf32>
    %523 = vector.broadcast %522 : vector<1x238xf32> to vector<56x238xf32>
    %524 = arith.mulf %521, %523 : vector<56x238xf32>
    %c280 = arith.constant 280 : index
    %c18_461 = arith.constant 18 : index
    %525 = vector.load %arg17[%c280, %c18_461] : memref<1400x256xf32, #tpu.memory_space<vmem>>, vector<56x238xf32>
    tpu.vector_store %arg17[%c280, %c18_461], %524 {strides = array<i32>} : memref<1400x256xf32, #tpu.memory_space<vmem>>, vector<56x238xf32>,
    %cst_462 = arith.constant 0.000000e+00 : f32
    %526 = vector.broadcast %cst_462 : f32 to vector<56x18xf32>
    %c280_463 = arith.constant 280 : index
    %c0_464 = arith.constant 0 : index
    %527 = vector.load %arg17[%c280_463, %c0_464] : memref<1400x256xf32, #tpu.memory_space<vmem>>, vector<56x18xf32>
    tpu.vector_store %arg17[%c280_463, %c0_464], %526 {strides = array<i32>} : memref<1400x256xf32, #tpu.memory_space<vmem>>, vector<56x18xf32>,
    %528 = vector.extract_strided_slice %485 {offsets = [0, 0], sizes = [56, 239], strides = [1, 1]} : vector<56x256xf32> to vector<56x239xf32>
    %c6_465 = arith.constant 6 : index
    %c17_466 = arith.constant 17 : index
    %529 = vector.load %arg2[%c6_465, %c17_466] : memref<25x256xf32, #tpu.memory_space<vmem>>, vector<1x239xf32>
    %530 = vector.broadcast %529 : vector<1x239xf32> to vector<56x239xf32>
    %531 = arith.mulf %528, %530 : vector<56x239xf32>
    %c336 = arith.constant 336 : index
    %c17_467 = arith.constant 17 : index
    %532 = vector.load %arg17[%c336, %c17_467] : memref<1400x256xf32, #tpu.memory_space<vmem>>, vector<56x239xf32>
    tpu.vector_store %arg17[%c336, %c17_467], %531 {strides = array<i32>} : memref<1400x256xf32, #tpu.memory_space<vmem>>, vector<56x239xf32>,
    %cst_468 = arith.constant 0.000000e+00 : f32
    %533 = vector.broadcast %cst_468 : f32 to vector<56x17xf32>
    %c336_469 = arith.constant 336 : index
    %c0_470 = arith.constant 0 : index
    %534 = vector.load %arg17[%c336_469, %c0_470] : memref<1400x256xf32, #tpu.memory_space<vmem>>, vector<56x17xf32>
    tpu.vector_store %arg17[%c336_469, %c0_470], %533 {strides = array<i32>} : memref<1400x256xf32, #tpu.memory_space<vmem>>, vector<56x17xf32>,
    %535 = vector.extract_strided_slice %485 {offsets = [0, 0], sizes = [56, 240], strides = [1, 1]} : vector<56x256xf32> to vector<56x240xf32>
    %c7_471 = arith.constant 7 : index
    %c16_472 = arith.constant 16 : index
    %536 = vector.load %arg2[%c7_471, %c16_472] : memref<25x256xf32, #tpu.memory_space<vmem>>, vector<1x240xf32>
    %537 = vector.broadcast %536 : vector<1x240xf32> to vector<56x240xf32>
    %538 = arith.mulf %535, %537 : vector<56x240xf32>
    %c392 = arith.constant 392 : index
    %c16_473 = arith.constant 16 : index
    %539 = vector.load %arg17[%c392, %c16_473] : memref<1400x256xf32, #tpu.memory_space<vmem>>, vector<56x240xf32>
    tpu.vector_store %arg17[%c392, %c16_473], %538 {strides = array<i32>} : memref<1400x256xf32, #tpu.memory_space<vmem>>, vector<56x240xf32>,
    %cst_474 = arith.constant 0.000000e+00 : f32
    %540 = vector.broadcast %cst_474 : f32 to vector<56x16xf32>
    %c392_475 = arith.constant 392 : index
    %c0_476 = arith.constant 0 : index
    %541 = vector.load %arg17[%c392_475, %c0_476] : memref<1400x256xf32, #tpu.memory_space<vmem>>, vector<56x16xf32>
    tpu.vector_store %arg17[%c392_475, %c0_476], %540 {strides = array<i32>} : memref<1400x256xf32, #tpu.memory_space<vmem>>, vector<56x16xf32>,
    %542 = vector.extract_strided_slice %485 {offsets = [0, 0], sizes = [56, 241], strides = [1, 1]} : vector<56x256xf32> to vector<56x241xf32>
    %c8_477 = arith.constant 8 : index
    %c15_478 = arith.constant 15 : index
    %543 = vector.load %arg2[%c8_477, %c15_478] : memref<25x256xf32, #tpu.memory_space<vmem>>, vector<1x241xf32>
    %544 = vector.broadcast %543 : vector<1x241xf32> to vector<56x241xf32>
    %545 = arith.mulf %542, %544 : vector<56x241xf32>
    %c448 = arith.constant 448 : index
    %c15_479 = arith.constant 15 : index
    %546 = vector.load %arg17[%c448, %c15_479] : memref<1400x256xf32, #tpu.memory_space<vmem>>, vector<56x241xf32>
    tpu.vector_store %arg17[%c448, %c15_479], %545 {strides = array<i32>} : memref<1400x256xf32, #tpu.memory_space<vmem>>, vector<56x241xf32>,
    %cst_480 = arith.constant 0.000000e+00 : f32
    %547 = vector.broadcast %cst_480 : f32 to vector<56x15xf32>
    %c448_481 = arith.constant 448 : index
    %c0_482 = arith.constant 0 : index
    %548 = vector.load %arg17[%c448_481, %c0_482] : memref<1400x256xf32, #tpu.memory_space<vmem>>, vector<56x15xf32>
    tpu.vector_store %arg17[%c448_481, %c0_482], %547 {strides = array<i32>} : memref<1400x256xf32, #tpu.memory_space<vmem>>, vector<56x15xf32>,
    %549 = vector.extract_strided_slice %485 {offsets = [0, 0], sizes = [56, 242], strides = [1, 1]} : vector<56x256xf32> to vector<56x242xf32>
    %c9_483 = arith.constant 9 : index
    %c14_484 = arith.constant 14 : index
    %550 = vector.load %arg2[%c9_483, %c14_484] : memref<25x256xf32, #tpu.memory_space<vmem>>, vector<1x242xf32>
    %551 = vector.broadcast %550 : vector<1x242xf32> to vector<56x242xf32>
    %552 = arith.mulf %549, %551 : vector<56x242xf32>
    %c504 = arith.constant 504 : index
    %c14_485 = arith.constant 14 : index
    %553 = vector.load %arg17[%c504, %c14_485] : memref<1400x256xf32, #tpu.memory_space<vmem>>, vector<56x242xf32>
    tpu.vector_store %arg17[%c504, %c14_485], %552 {strides = array<i32>} : memref<1400x256xf32, #tpu.memory_space<vmem>>, vector<56x242xf32>,
    %cst_486 = arith.constant 0.000000e+00 : f32
    %554 = vector.broadcast %cst_486 : f32 to vector<56x14xf32>
    %c504_487 = arith.constant 504 : index
    %c0_488 = arith.constant 0 : index
    %555 = vector.load %arg17[%c504_487, %c0_488] : memref<1400x256xf32, #tpu.memory_space<vmem>>, vector<56x14xf32>
    tpu.vector_store %arg17[%c504_487, %c0_488], %554 {strides = array<i32>} : memref<1400x256xf32, #tpu.memory_space<vmem>>, vector<56x14xf32>,
    %556 = vector.extract_strided_slice %485 {offsets = [0, 0], sizes = [56, 254], strides = [1, 1]} : vector<56x256xf32> to vector<56x254xf32>
    %c10_489 = arith.constant 10 : index
    %c2_490 = arith.constant 2 : index
    %557 = vector.load %arg2[%c10_489, %c2_490] : memref<25x256xf32, #tpu.memory_space<vmem>>, vector<1x254xf32>
    %558 = vector.broadcast %557 : vector<1x254xf32> to vector<56x254xf32>
    %559 = arith.mulf %556, %558 : vector<56x254xf32>
    %c560 = arith.constant 560 : index
    %c2_491 = arith.constant 2 : index
    %560 = vector.load %arg17[%c560, %c2_491] : memref<1400x256xf32, #tpu.memory_space<vmem>>, vector<56x254xf32>
    tpu.vector_store %arg17[%c560, %c2_491], %559 {strides = array<i32>} : memref<1400x256xf32, #tpu.memory_space<vmem>>, vector<56x254xf32>,
    %cst_492 = arith.constant 0.000000e+00 : f32
    %561 = vector.broadcast %cst_492 : f32 to vector<56x2xf32>
    %c560_493 = arith.constant 560 : index
    %c0_494 = arith.constant 0 : index
    %562 = vector.load %arg17[%c560_493, %c0_494] : memref<1400x256xf32, #tpu.memory_space<vmem>>, vector<56x2xf32>
    tpu.vector_store %arg17[%c560_493, %c0_494], %561 {strides = array<i32>} : memref<1400x256xf32, #tpu.memory_space<vmem>>, vector<56x2xf32>,
    %563 = vector.extract_strided_slice %485 {offsets = [0, 0], sizes = [56, 255], strides = [1, 1]} : vector<56x256xf32> to vector<56x255xf32>
    %c11_495 = arith.constant 11 : index
    %c1_496 = arith.constant 1 : index
    %564 = vector.load %arg2[%c11_495, %c1_496] : memref<25x256xf32, #tpu.memory_space<vmem>>, vector<1x255xf32>
    %565 = vector.broadcast %564 : vector<1x255xf32> to vector<56x255xf32>
    %566 = arith.mulf %563, %565 : vector<56x255xf32>
    %c616 = arith.constant 616 : index
    %c1_497 = arith.constant 1 : index
    %567 = vector.load %arg17[%c616, %c1_497] : memref<1400x256xf32, #tpu.memory_space<vmem>>, vector<56x255xf32>
    tpu.vector_store %arg17[%c616, %c1_497], %566 {strides = array<i32>} : memref<1400x256xf32, #tpu.memory_space<vmem>>, vector<56x255xf32>,
    %cst_498 = arith.constant 0.000000e+00 : f32
    %568 = vector.broadcast %cst_498 : f32 to vector<56x1xf32>
    %c616_499 = arith.constant 616 : index
    %c0_500 = arith.constant 0 : index
    %569 = vector.load %arg17[%c616_499, %c0_500] : memref<1400x256xf32, #tpu.memory_space<vmem>>, vector<56x1xf32>
    tpu.vector_store %arg17[%c616_499, %c0_500], %568 {strides = array<i32>} : memref<1400x256xf32, #tpu.memory_space<vmem>>, vector<56x1xf32>,
    %c12_501 = arith.constant 12 : index
    %c0_502 = arith.constant 0 : index
    %570 = vector.load %arg2[%c12_501, %c0_502] : memref<25x256xf32, #tpu.memory_space<vmem>>, vector<1x256xf32>
    %571 = vector.broadcast %570 : vector<1x256xf32> to vector<56x256xf32>
    %572 = arith.mulf %485, %571 : vector<56x256xf32>
    %c672 = arith.constant 672 : index
    %c0_503 = arith.constant 0 : index
    %573 = vector.load %arg17[%c672, %c0_503] : memref<1400x256xf32, #tpu.memory_space<vmem>>, vector<56x256xf32>
    tpu.vector_store %arg17[%c672, %c0_503], %572 {strides = array<i32>} : memref<1400x256xf32, #tpu.memory_space<vmem>>, vector<56x256xf32>,
    %574 = vector.extract_strided_slice %485 {offsets = [0, 1], sizes = [56, 255], strides = [1, 1]} : vector<56x256xf32> to vector<56x255xf32>
    %c13_504 = arith.constant 13 : index
    %c0_505 = arith.constant 0 : index
    %575 = vector.load %arg2[%c13_504, %c0_505] : memref<25x256xf32, #tpu.memory_space<vmem>>, vector<1x255xf32>
    %576 = vector.broadcast %575 : vector<1x255xf32> to vector<56x255xf32>
    %577 = arith.mulf %574, %576 : vector<56x255xf32>
    %c728 = arith.constant 728 : index
    %c0_506 = arith.constant 0 : index
    %578 = vector.load %arg17[%c728, %c0_506] : memref<1400x256xf32, #tpu.memory_space<vmem>>, vector<56x255xf32>
    tpu.vector_store %arg17[%c728, %c0_506], %577 {strides = array<i32>} : memref<1400x256xf32, #tpu.memory_space<vmem>>, vector<56x255xf32>,
    %cst_507 = arith.constant 0.000000e+00 : f32
    %579 = vector.broadcast %cst_507 : f32 to vector<56x1xf32>
    %c728_508 = arith.constant 728 : index
    %c255_509 = arith.constant 255 : index
    %580 = vector.load %arg17[%c728_508, %c255_509] : memref<1400x256xf32, #tpu.memory_space<vmem>>, vector<56x1xf32>
    tpu.vector_store %arg17[%c728_508, %c255_509], %579 {strides = array<i32>} : memref<1400x256xf32, #tpu.memory_space<vmem>>, vector<56x1xf32>,
    %581 = vector.extract_strided_slice %485 {offsets = [0, 2], sizes = [56, 254], strides = [1, 1]} : vector<56x256xf32> to vector<56x254xf32>
    %c14_510 = arith.constant 14 : index
    %c0_511 = arith.constant 0 : index
    %582 = vector.load %arg2[%c14_510, %c0_511] : memref<25x256xf32, #tpu.memory_space<vmem>>, vector<1x254xf32>
    %583 = vector.broadcast %582 : vector<1x254xf32> to vector<56x254xf32>
    %584 = arith.mulf %581, %583 : vector<56x254xf32>
    %c784 = arith.constant 784 : index
    %c0_512 = arith.constant 0 : index
    %585 = vector.load %arg17[%c784, %c0_512] : memref<1400x256xf32, #tpu.memory_space<vmem>>, vector<56x254xf32>
    tpu.vector_store %arg17[%c784, %c0_512], %584 {strides = array<i32>} : memref<1400x256xf32, #tpu.memory_space<vmem>>, vector<56x254xf32>,
    %cst_513 = arith.constant 0.000000e+00 : f32
    %586 = vector.broadcast %cst_513 : f32 to vector<56x2xf32>
    %c784_514 = arith.constant 784 : index
    %c254_515 = arith.constant 254 : index
    %587 = vector.load %arg17[%c784_514, %c254_515] : memref<1400x256xf32, #tpu.memory_space<vmem>>, vector<56x2xf32>
    tpu.vector_store %arg17[%c784_514, %c254_515], %586 {strides = array<i32>} : memref<1400x256xf32, #tpu.memory_space<vmem>>, vector<56x2xf32>,
    %588 = vector.extract_strided_slice %485 {offsets = [0, 14], sizes = [56, 242], strides = [1, 1]} : vector<56x256xf32> to vector<56x242xf32>
    %c15_516 = arith.constant 15 : index
    %c0_517 = arith.constant 0 : index
    %589 = vector.load %arg2[%c15_516, %c0_517] : memref<25x256xf32, #tpu.memory_space<vmem>>, vector<1x242xf32>
    %590 = vector.broadcast %589 : vector<1x242xf32> to vector<56x242xf32>
    %591 = arith.mulf %588, %590 : vector<56x242xf32>
    %c840 = arith.constant 840 : index
    %c0_518 = arith.constant 0 : index
    %592 = vector.load %arg17[%c840, %c0_518] : memref<1400x256xf32, #tpu.memory_space<vmem>>, vector<56x242xf32>
    tpu.vector_store %arg17[%c840, %c0_518], %591 {strides = array<i32>} : memref<1400x256xf32, #tpu.memory_space<vmem>>, vector<56x242xf32>,
    %cst_519 = arith.constant 0.000000e+00 : f32
    %593 = vector.broadcast %cst_519 : f32 to vector<56x14xf32>
    %c840_520 = arith.constant 840 : index
    %c242_521 = arith.constant 242 : index
    %594 = vector.load %arg17[%c840_520, %c242_521] : memref<1400x256xf32, #tpu.memory_space<vmem>>, vector<56x14xf32>
    tpu.vector_store %arg17[%c840_520, %c242_521], %593 {strides = array<i32>} : memref<1400x256xf32, #tpu.memory_space<vmem>>, vector<56x14xf32>,
    %595 = vector.extract_strided_slice %485 {offsets = [0, 15], sizes = [56, 241], strides = [1, 1]} : vector<56x256xf32> to vector<56x241xf32>
    %c16_522 = arith.constant 16 : index
    %c0_523 = arith.constant 0 : index
    %596 = vector.load %arg2[%c16_522, %c0_523] : memref<25x256xf32, #tpu.memory_space<vmem>>, vector<1x241xf32>
    %597 = vector.broadcast %596 : vector<1x241xf32> to vector<56x241xf32>
    %598 = arith.mulf %595, %597 : vector<56x241xf32>
    %c896 = arith.constant 896 : index
    %c0_524 = arith.constant 0 : index
    %599 = vector.load %arg17[%c896, %c0_524] : memref<1400x256xf32, #tpu.memory_space<vmem>>, vector<56x241xf32>
    tpu.vector_store %arg17[%c896, %c0_524], %598 {strides = array<i32>} : memref<1400x256xf32, #tpu.memory_space<vmem>>, vector<56x241xf32>,
    %cst_525 = arith.constant 0.000000e+00 : f32
    %600 = vector.broadcast %cst_525 : f32 to vector<56x15xf32>
    %c896_526 = arith.constant 896 : index
    %c241_527 = arith.constant 241 : index
    %601 = vector.load %arg17[%c896_526, %c241_527] : memref<1400x256xf32, #tpu.memory_space<vmem>>, vector<56x15xf32>
    tpu.vector_store %arg17[%c896_526, %c241_527], %600 {strides = array<i32>} : memref<1400x256xf32, #tpu.memory_space<vmem>>, vector<56x15xf32>,
    %602 = vector.extract_strided_slice %485 {offsets = [0, 16], sizes = [56, 240], strides = [1, 1]} : vector<56x256xf32> to vector<56x240xf32>
    %c17_528 = arith.constant 17 : index
    %c0_529 = arith.constant 0 : index
    %603 = vector.load %arg2[%c17_528, %c0_529] : memref<25x256xf32, #tpu.memory_space<vmem>>, vector<1x240xf32>
    %604 = vector.broadcast %603 : vector<1x240xf32> to vector<56x240xf32>
    %605 = arith.mulf %602, %604 : vector<56x240xf32>
    %c952 = arith.constant 952 : index
    %c0_530 = arith.constant 0 : index
    %606 = vector.load %arg17[%c952, %c0_530] : memref<1400x256xf32, #tpu.memory_space<vmem>>, vector<56x240xf32>
    tpu.vector_store %arg17[%c952, %c0_530], %605 {strides = array<i32>} : memref<1400x256xf32, #tpu.memory_space<vmem>>, vector<56x240xf32>,
    %cst_531 = arith.constant 0.000000e+00 : f32
    %607 = vector.broadcast %cst_531 : f32 to vector<56x16xf32>
    %c952_532 = arith.constant 952 : index
    %c240_533 = arith.constant 240 : index
    %608 = vector.load %arg17[%c952_532, %c240_533] : memref<1400x256xf32, #tpu.memory_space<vmem>>, vector<56x16xf32>
    tpu.vector_store %arg17[%c952_532, %c240_533], %607 {strides = array<i32>} : memref<1400x256xf32, #tpu.memory_space<vmem>>, vector<56x16xf32>,
    %609 = vector.extract_strided_slice %485 {offsets = [0, 17], sizes = [56, 239], strides = [1, 1]} : vector<56x256xf32> to vector<56x239xf32>
    %c18_534 = arith.constant 18 : index
    %c0_535 = arith.constant 0 : index
    %610 = vector.load %arg2[%c18_534, %c0_535] : memref<25x256xf32, #tpu.memory_space<vmem>>, vector<1x239xf32>
    %611 = vector.broadcast %610 : vector<1x239xf32> to vector<56x239xf32>
    %612 = arith.mulf %609, %611 : vector<56x239xf32>
    %c1008 = arith.constant 1008 : index
    %c0_536 = arith.constant 0 : index
    %613 = vector.load %arg17[%c1008, %c0_536] : memref<1400x256xf32, #tpu.memory_space<vmem>>, vector<56x239xf32>
    tpu.vector_store %arg17[%c1008, %c0_536], %612 {strides = array<i32>} : memref<1400x256xf32, #tpu.memory_space<vmem>>, vector<56x239xf32>,
    %cst_537 = arith.constant 0.000000e+00 : f32
    %614 = vector.broadcast %cst_537 : f32 to vector<56x17xf32>
    %c1008_538 = arith.constant 1008 : index
    %c239_539 = arith.constant 239 : index
    %615 = vector.load %arg17[%c1008_538, %c239_539] : memref<1400x256xf32, #tpu.memory_space<vmem>>, vector<56x17xf32>
    tpu.vector_store %arg17[%c1008_538, %c239_539], %614 {strides = array<i32>} : memref<1400x256xf32, #tpu.memory_space<vmem>>, vector<56x17xf32>,
    %616 = vector.extract_strided_slice %485 {offsets = [0, 18], sizes = [56, 238], strides = [1, 1]} : vector<56x256xf32> to vector<56x238xf32>
    %c19_540 = arith.constant 19 : index
    %c0_541 = arith.constant 0 : index
    %617 = vector.load %arg2[%c19_540, %c0_541] : memref<25x256xf32, #tpu.memory_space<vmem>>, vector<1x238xf32>
    %618 = vector.broadcast %617 : vector<1x238xf32> to vector<56x238xf32>
    %619 = arith.mulf %616, %618 : vector<56x238xf32>
    %c1064 = arith.constant 1064 : index
    %c0_542 = arith.constant 0 : index
    %620 = vector.load %arg17[%c1064, %c0_542] : memref<1400x256xf32, #tpu.memory_space<vmem>>, vector<56x238xf32>
    tpu.vector_store %arg17[%c1064, %c0_542], %619 {strides = array<i32>} : memref<1400x256xf32, #tpu.memory_space<vmem>>, vector<56x238xf32>,
    %cst_543 = arith.constant 0.000000e+00 : f32
    %621 = vector.broadcast %cst_543 : f32 to vector<56x18xf32>
    %c1064_544 = arith.constant 1064 : index
    %c238_545 = arith.constant 238 : index
    %622 = vector.load %arg17[%c1064_544, %c238_545] : memref<1400x256xf32, #tpu.memory_space<vmem>>, vector<56x18xf32>
    tpu.vector_store %arg17[%c1064_544, %c238_545], %621 {strides = array<i32>} : memref<1400x256xf32, #tpu.memory_space<vmem>>, vector<56x18xf32>,
    %623 = vector.extract_strided_slice %485 {offsets = [0, 30], sizes = [56, 226], strides = [1, 1]} : vector<56x256xf32> to vector<56x226xf32>
    %c20_546 = arith.constant 20 : index
    %c0_547 = arith.constant 0 : index
    %624 = vector.load %arg2[%c20_546, %c0_547] : memref<25x256xf32, #tpu.memory_space<vmem>>, vector<1x226xf32>
    %625 = vector.broadcast %624 : vector<1x226xf32> to vector<56x226xf32>
    %626 = arith.mulf %623, %625 : vector<56x226xf32>
    %c1120 = arith.constant 1120 : index
    %c0_548 = arith.constant 0 : index
    %627 = vector.load %arg17[%c1120, %c0_548] : memref<1400x256xf32, #tpu.memory_space<vmem>>, vector<56x226xf32>
    tpu.vector_store %arg17[%c1120, %c0_548], %626 {strides = array<i32>} : memref<1400x256xf32, #tpu.memory_space<vmem>>, vector<56x226xf32>,
    %cst_549 = arith.constant 0.000000e+00 : f32
    %628 = vector.broadcast %cst_549 : f32 to vector<56x30xf32>
    %c1120_550 = arith.constant 1120 : index
    %c226_551 = arith.constant 226 : index
    %629 = vector.load %arg17[%c1120_550, %c226_551] : memref<1400x256xf32, #tpu.memory_space<vmem>>, vector<56x30xf32>
    tpu.vector_store %arg17[%c1120_550, %c226_551], %628 {strides = array<i32>} : memref<1400x256xf32, #tpu.memory_space<vmem>>, vector<56x30xf32>,
    %630 = vector.extract_strided_slice %485 {offsets = [0, 31], sizes = [56, 225], strides = [1, 1]} : vector<56x256xf32> to vector<56x225xf32>
    %c21_552 = arith.constant 21 : index
    %c0_553 = arith.constant 0 : index
    %631 = vector.load %arg2[%c21_552, %c0_553] : memref<25x256xf32, #tpu.memory_space<vmem>>, vector<1x225xf32>
    %632 = vector.broadcast %631 : vector<1x225xf32> to vector<56x225xf32>
    %633 = arith.mulf %630, %632 : vector<56x225xf32>
    %c1176 = arith.constant 1176 : index
    %c0_554 = arith.constant 0 : index
    %634 = vector.load %arg17[%c1176, %c0_554] : memref<1400x256xf32, #tpu.memory_space<vmem>>, vector<56x225xf32>
    tpu.vector_store %arg17[%c1176, %c0_554], %633 {strides = array<i32>} : memref<1400x256xf32, #tpu.memory_space<vmem>>, vector<56x225xf32>,
    %cst_555 = arith.constant 0.000000e+00 : f32
    %635 = vector.broadcast %cst_555 : f32 to vector<56x31xf32>
    %c1176_556 = arith.constant 1176 : index
    %c225_557 = arith.constant 225 : index
    %636 = vector.load %arg17[%c1176_556, %c225_557] : memref<1400x256xf32, #tpu.memory_space<vmem>>, vector<56x31xf32>
    tpu.vector_store %arg17[%c1176_556, %c225_557], %635 {strides = array<i32>} : memref<1400x256xf32, #tpu.memory_space<vmem>>, vector<56x31xf32>,
    %637 = vector.extract_strided_slice %485 {offsets = [0, 32], sizes = [56, 224], strides = [1, 1]} : vector<56x256xf32> to vector<56x224xf32>
    %c22_558 = arith.constant 22 : index
    %c0_559 = arith.constant 0 : index
    %638 = vector.load %arg2[%c22_558, %c0_559] : memref<25x256xf32, #tpu.memory_space<vmem>>, vector<1x224xf32>
    %639 = vector.broadcast %638 : vector<1x224xf32> to vector<56x224xf32>
    %640 = arith.mulf %637, %639 : vector<56x224xf32>
    %c1232 = arith.constant 1232 : index
    %c0_560 = arith.constant 0 : index
    %641 = vector.load %arg17[%c1232, %c0_560] : memref<1400x256xf32, #tpu.memory_space<vmem>>, vector<56x224xf32>
    tpu.vector_store %arg17[%c1232, %c0_560], %640 {strides = array<i32>} : memref<1400x256xf32, #tpu.memory_space<vmem>>, vector<56x224xf32>,
    %cst_561 = arith.constant 0.000000e+00 : f32
    %642 = vector.broadcast %cst_561 : f32 to vector<56x32xf32>
    %c1232_562 = arith.constant 1232 : index
    %c224_563 = arith.constant 224 : index
    %643 = vector.load %arg17[%c1232_562, %c224_563] : memref<1400x256xf32, #tpu.memory_space<vmem>>, vector<56x32xf32>
    tpu.vector_store %arg17[%c1232_562, %c224_563], %642 {strides = array<i32>} : memref<1400x256xf32, #tpu.memory_space<vmem>>, vector<56x32xf32>,
    %644 = vector.extract_strided_slice %485 {offsets = [0, 33], sizes = [56, 223], strides = [1, 1]} : vector<56x256xf32> to vector<56x223xf32>
    %c23_564 = arith.constant 23 : index
    %c0_565 = arith.constant 0 : index
    %645 = vector.load %arg2[%c23_564, %c0_565] : memref<25x256xf32, #tpu.memory_space<vmem>>, vector<1x223xf32>
    %646 = vector.broadcast %645 : vector<1x223xf32> to vector<56x223xf32>
    %647 = arith.mulf %644, %646 : vector<56x223xf32>
    %c1288 = arith.constant 1288 : index
    %c0_566 = arith.constant 0 : index
    %648 = vector.load %arg17[%c1288, %c0_566] : memref<1400x256xf32, #tpu.memory_space<vmem>>, vector<56x223xf32>
    tpu.vector_store %arg17[%c1288, %c0_566], %647 {strides = array<i32>} : memref<1400x256xf32, #tpu.memory_space<vmem>>, vector<56x223xf32>,
    %cst_567 = arith.constant 0.000000e+00 : f32
    %649 = vector.broadcast %cst_567 : f32 to vector<56x33xf32>
    %c1288_568 = arith.constant 1288 : index
    %c223_569 = arith.constant 223 : index
    %650 = vector.load %arg17[%c1288_568, %c223_569] : memref<1400x256xf32, #tpu.memory_space<vmem>>, vector<56x33xf32>
    tpu.vector_store %arg17[%c1288_568, %c223_569], %649 {strides = array<i32>} : memref<1400x256xf32, #tpu.memory_space<vmem>>, vector<56x33xf32>,
    %651 = vector.extract_strided_slice %485 {offsets = [0, 34], sizes = [56, 222], strides = [1, 1]} : vector<56x256xf32> to vector<56x222xf32>
    %c24_570 = arith.constant 24 : index
    %c0_571 = arith.constant 0 : index
    %652 = vector.load %arg2[%c24_570, %c0_571] : memref<25x256xf32, #tpu.memory_space<vmem>>, vector<1x222xf32>
    %653 = vector.broadcast %652 : vector<1x222xf32> to vector<56x222xf32>
    %654 = arith.mulf %651, %653 : vector<56x222xf32>
    %c1344 = arith.constant 1344 : index
    %c0_572 = arith.constant 0 : index
    %655 = vector.load %arg17[%c1344, %c0_572] : memref<1400x256xf32, #tpu.memory_space<vmem>>, vector<56x222xf32>
    tpu.vector_store %arg17[%c1344, %c0_572], %654 {strides = array<i32>} : memref<1400x256xf32, #tpu.memory_space<vmem>>, vector<56x222xf32>,
    %cst_573 = arith.constant 0.000000e+00 : f32
    %656 = vector.broadcast %cst_573 : f32 to vector<56x34xf32>
    %c1344_574 = arith.constant 1344 : index
    %c222_575 = arith.constant 222 : index
    %657 = vector.load %arg17[%c1344_574, %c222_575] : memref<1400x256xf32, #tpu.memory_space<vmem>>, vector<56x34xf32>
    tpu.vector_store %arg17[%c1344_574, %c222_575], %656 {strides = array<i32>} : memref<1400x256xf32, #tpu.memory_space<vmem>>, vector<56x34xf32>,
    %c0_576 = arith.constant 0 : index
    %c0_577 = arith.constant 0 : index
    %658 = vector.load %arg12[%c0_576, %c0_577] : memref<4x1400xf32, #tpu.memory_space<vmem>>, vector<4x1400xf32>
    %c0_578 = arith.constant 0 : index
    %c0_579 = arith.constant 0 : index
    %659 = vector.load %arg17[%c0_578, %c0_579] : memref<1400x256xf32, #tpu.memory_space<vmem>>, vector<1400x256xf32>
    %cst_580 = arith.constant dense<0.000000e+00> : vector<4x256xf32>
    %660 = tpu.matmul %658, %659, %cst_580 {dimension_numbers = #tpu.dot_dimension_numbers<[1], [0], [0], [1], [0, 0, 1, 1], [], []>} : vector<4x1400xf32>, vector<1400x256xf32>, vector<4x256xf32> -> vector<4x256xf32>
    %c0_581 = arith.constant 0 : index
    %c0_582 = arith.constant 0 : index
    %661 = vector.load %arg13[%c0_581, %c0_582] : memref<4x2xf32, #tpu.memory_space<vmem>>, vector<4x1xf32>
    %662 = vector.broadcast %661 : vector<4x1xf32> to vector<4x256xf32>
    %663 = arith.addf %660, %662 : vector<4x256xf32>
    %c0_583 = arith.constant 0 : index
    %c0_584 = arith.constant 0 : index
    %c0_585 = arith.constant 0 : index
    %664 = vector.load %arg14[%c0_583, %c0_584, %c0_585] : memref<1x4x256xf32, #tpu.memory_space<vmem>>, vector<1x4x256xf32>
    %665 = vector.shape_cast %664 : vector<1x4x256xf32> to vector<4x256xf32>
    %666 = vector.shape_cast %663 : vector<4x256xf32> to vector<1x4x256xf32>
    tpu.vector_store %arg14[%c0_583, %c0_584, %c0_585], %666 {strides = array<i32>} : memref<1x4x256xf32, #tpu.memory_space<vmem>>, vector<1x4x256xf32>,
    return
  }
  func.func @transform_0(%arg0: i32) -> (i32, i32, i32) {
    %c0_i32 = arith.constant 0 : i32
    %c0_i32_0 = arith.constant 0 : i32
    %c0_i32_1 = arith.constant 0 : i32
    return %arg0, %c0_i32, %c0_i32_0 : i32, i32, i32
  }
  func.func @transform_1(%arg0: i32) -> (i32, i32) {
    %c0_i32 = arith.constant 0 : i32
    %c0_i32_0 = arith.constant 0 : i32
    %c0_i32_1 = arith.constant 0 : i32
    return %c0_i32, %c0_i32_0 : i32, i32
  }
  func.func @transform_2(%arg0: i32) -> (i32, i32) {
    %c0_i32 = arith.constant 0 : i32
    %c0_i32_0 = arith.constant 0 : i32
    %c0_i32_1 = arith.constant 0 : i32
    return %c0_i32, %c0_i32_0 : i32, i32
  }
  func.func @transform_3(%arg0: i32) -> (i32, i32) {
    %c0_i32 = arith.constant 0 : i32
    %c0_i32_0 = arith.constant 0 : i32
    %c0_i32_1 = arith.constant 0 : i32
    return %c0_i32, %c0_i32_0 : i32, i32
  }
  func.func @transform_4(%arg0: i32) -> (i32, i32) {
    %c0_i32 = arith.constant 0 : i32
    %c0_i32_0 = arith.constant 0 : i32
    %c0_i32_1 = arith.constant 0 : i32
    return %c0_i32, %c0_i32_0 : i32, i32
  }
  func.func @transform_5(%arg0: i32) -> (i32, i32) {
    %c0_i32 = arith.constant 0 : i32
    %c0_i32_0 = arith.constant 0 : i32
    %c0_i32_1 = arith.constant 0 : i32
    return %c0_i32, %c0_i32_0 : i32, i32
  }
  func.func @transform_6(%arg0: i32) -> (i32, i32) {
    %c0_i32 = arith.constant 0 : i32
    %c0_i32_0 = arith.constant 0 : i32
    %c0_i32_1 = arith.constant 0 : i32
    return %c0_i32, %c0_i32_0 : i32, i32
  }
  func.func @transform_7(%arg0: i32) -> (i32, i32, i32) {
    %c0_i32 = arith.constant 0 : i32
    %c0_i32_0 = arith.constant 0 : i32
    %c0_i32_1 = arith.constant 0 : i32
    %c0_i32_2 = arith.constant 0 : i32
    return %c0_i32, %c0_i32_0, %c0_i32_1 : i32, i32, i32
  }
  func.func @transform_8(%arg0: i32) -> (i32, i32, i32) {
    %c0_i32 = arith.constant 0 : i32
    %c0_i32_0 = arith.constant 0 : i32
    %c0_i32_1 = arith.constant 0 : i32
    %c0_i32_2 = arith.constant 0 : i32
    return %c0_i32, %c0_i32_0, %c0_i32_1 : i32, i32, i32
  }
  func.func @transform_9(%arg0: i32) -> (i32, i32) {
    %c0_i32 = arith.constant 0 : i32
    %c0_i32_0 = arith.constant 0 : i32
    %c0_i32_1 = arith.constant 0 : i32
    return %c0_i32, %c0_i32_0 : i32, i32
  }
  func.func @transform_10(%arg0: i32) -> (i32, i32) {
    %c0_i32 = arith.constant 0 : i32
    %c0_i32_0 = arith.constant 0 : i32
    %c0_i32_1 = arith.constant 0 : i32
    return %c0_i32, %c0_i32_0 : i32, i32
  }
  func.func @transform_11(%arg0: i32) -> (i32, i32) {
    %c0_i32 = arith.constant 0 : i32
    %c0_i32_0 = arith.constant 0 : i32
    %c0_i32_1 = arith.constant 0 : i32
    return %c0_i32, %c0_i32_0 : i32, i32
  }
  func.func @transform_12(%arg0: i32) -> (i32, i32) {
    %c0_i32 = arith.constant 0 : i32
    %c0_i32_0 = arith.constant 0 : i32
    %c0_i32_1 = arith.constant 0 : i32
    return %c0_i32, %c0_i32_0 : i32, i32
  }
  func.func @transform_13(%arg0: i32) -> (i32, i32, i32) {
    %c0_i32 = arith.constant 0 : i32
    %c0_i32_0 = arith.constant 0 : i32
    %c0_i32_1 = arith.constant 0 : i32
    return %arg0, %c0_i32, %c0_i32_0 : i32, i32, i32
  }
}

</mosaic_0001>

<llo_original>
// kernel: fsrcnn_forward.1
$region0: #{fsrcnn_forward.1}
  #allocation0 [shape = 'u32[]', space=smem, size = 0x4, offset = 0x4, fixed_abs, tag = 'smem constant byte address 0x4 - core index']
  #allocation1 [shape = 'u32[144,128]{1,0:T(1,128)}', space=vmem, size = 0x12000, scoped, tag = 'internal scratch']
  #allocation2 [shape = 'f32[25,256]{1,0:T(8,128)}', space=vmem, size = 0x8000, scoped, tag = 'scratch operand']
  #allocation3 [shape = 'f32[144,256]{1,0:T(8,128)}', space=vmem, size = 0x24000, scoped, tag = 'scratch operand']
  #allocation4 [shape = 'f32[1400,256]{1,0:T(8,128)}', space=vmem, size = 0x15e000, scoped, tag = 'scratch operand']
  %s0 = inlined_call_operand.vmem [shape: f32[2,1,256], index: 0, kind: input, shape index: {}]
  %s1 = inlined_call_operand.vmem [shape: f32[25,256], index: 1, kind: input, shape index: {}]
  %s2 = inlined_call_operand.vmem [shape: f32[9,256], index: 2, kind: input, shape index: {}]
  %s3 = inlined_call_operand.vmem [shape: f32[56,25], index: 3, kind: input, shape index: {}]
  %s4 = inlined_call_operand.vmem [shape: f32[56,2], index: 4, kind: input, shape index: {}]
  %s5 = inlined_call_operand.vmem [shape: f32[16,56], index: 5, kind: input, shape index: {}]
  %s6 = inlined_call_operand.vmem [shape: f32[16,2], index: 6, kind: input, shape index: {}]
  %s7 = inlined_call_operand.vmem [shape: f32[4,16,144], index: 7, kind: input, shape index: {}]
  %s8 = inlined_call_operand.vmem [shape: f32[4,16,2], index: 8, kind: input, shape index: {}]
  %s9 = inlined_call_operand.vmem [shape: f32[56,16], index: 9, kind: input, shape index: {}]
  %s10 = inlined_call_operand.vmem [shape: f32[56,2], index: 10, kind: input, shape index: {}]
  %s11 = inlined_call_operand.vmem [shape: f32[4,1400], index: 11, kind: input, shape index: {}]
  %s12 = inlined_call_operand.vmem [shape: f32[4,2], index: 12, kind: input, shape index: {}]
  %s13 = inlined_call_operand.vmem [shape: f32[2,4,256], index: 13, kind: output, shape index: {}]
  %s14 = sld [smem:[#allocation0]]
  $region85: #{fsrcnn_forward.1} parent=0
    _
  %s16 = ssub.s32 1, %s14
  %s17 = scalar_select 0, %s16, %s14
  loop: start=0, step=1, limit=4
  $region2: #{fsrcnn_forward.1} parent=0 // loop_pre_header
    _
  $region3: #{fsrcnn_forward.1} parent=0 // loop_header
    %s19 = sphi 0, %s23
    %p20 = scmp.ge.s32.totalorder %s19, 4
    %s29 = sphi 0, %s31
    %s32 = sphi 0, %s29
    %s33 = sphi 0, %s32
    %s49 = sphi 0, %s33
    %s53 = sphi 0, %s53
    %s55 = sphi 0, %s53
    %s56 = sphi 0, %s55
    %s70 = sphi 0, %s56
    %s74 = sphi 0, %s74
    %s76 = sphi 0, %s74
    %s77 = sphi 0, %s76
    %s91 = sphi 0, %s77
    %s95 = sphi 0, %s95
    %s97 = sphi 0, %s95
    %s98 = sphi 0, %s97
    %s112 = sphi 0, %s98
    %s116 = sphi 0, %s116
    %s118 = sphi 0, %s116
    %s119 = sphi 0, %s118
    %s133 = sphi 0, %s119
    %s137 = sphi 0, %s137
    %s139 = sphi 0, %s137
    %s140 = sphi 0, %s139
    %s154 = sphi 0, %s140
    %s158 = sphi 0, %s158
    %s160 = sphi 0, %s158
    %s161 = sphi 0, %s160
    %s175 = sphi 0, %s161
    %s179 = sphi 0, %s179
    %s181 = sphi 0, %s179
    %s182 = sphi 0, %s181
    %s196 = sphi 0, %s182
    %s200 = sphi 0, %s200
    %s202 = sphi 0, %s200
    %s203 = sphi 0, %s202
    %s217 = sphi 0, %s203
    %s221 = sphi 0, %s221
    %s223 = sphi 0, %s221
    %s224 = sphi 0, %s223
    %s238 = sphi 0, %s224
    %s242 = sphi 0, %s242
    %s244 = sphi 0, %s242
    %s245 = sphi 0, %s244
    %s259 = sphi 0, %s245
    %s263 = sphi 0, %s263
    %s265 = sphi 0, %s263
    %s266 = sphi 0, %s265
    %s280 = sphi 0, %s266
    %s284 = sphi 0, %s284
    %s286 = sphi 0, %s284
    %s287 = sphi 0, %s286
    %s301 = sphi 0, %s287
    %s307 = sphi 0, %s309
    %s310 = sphi 0, %s307
    %s311 = sphi 0, %s310
    %s327 = sphi 0, %s311
  $region4: #{fsrcnn_forward.1} parent=0 // loop_header_branch
    %22 = sbr.rel (%p20) target = $region8
  $region5: #{fsrcnn_forward.1} parent=0 // loop_body
    %s24 = ssub.s32 %s19, 1
    %s25 = ssub.s32 %s19, 2
    %s26 = sadd.s32 %s19, 1
    %s27 = ssub.s32 %s19, %s26
    %p28 = scmp.eq.s32.totalorder %s27, 0
    %s30 = sadd.s32 %s29, 1
    %s31 = scalar_select %p28, %s29, %s30
    %p34 = pneg %p28
    %p35 = scmp.eq.s32.totalorder %s19, 1
    %p36 = por %p34, %p35
    %p37 = scmp.ne.s32.totalorder %s29, %s32
    %p38 = scmp.eq.s32.totalorder %s19, 0
    %p39 = por %p37, %p38
    %p40 = scmp.ne.s32.totalorder %s29, %s32
    %p41 = scmp.eq.s32.totalorder %s24, 1
    %p42 = por %p40, %p41
    %p43 = scmp.ne.s32.totalorder %s32, %s33
    %p44 = scmp.eq.s32.totalorder %s24, 0
    %p45 = por %p43, %p44
    %p46 = scmp.ne.s32.totalorder %s32, %s33
    %p47 = scmp.eq.s32.totalorder %s25, 1
    %p48 = por %p46, %p47
    %p50 = scmp.ne.s32.totalorder %s33, %s49
    %p51 = scmp.eq.s32.totalorder %s25, 0
    %p52 = por %p50, %p51
    %s54 = sadd.s32 %s53, 1
    %p57 = scmp.eq.s32.totalorder %s19, 1
    %p58 = scmp.ne.s32.totalorder %s53, %s55
    %p59 = scmp.eq.s32.totalorder %s19, 0
    %p60 = por %p58, %p59
    %p61 = scmp.ne.s32.totalorder %s53, %s55
    %p62 = scmp.eq.s32.totalorder %s24, 1
    %p63 = por %p61, %p62
    %p64 = scmp.ne.s32.totalorder %s55, %s56
    %p65 = scmp.eq.s32.totalorder %s24, 0
    %p66 = por %p64, %p65
    %p67 = scmp.ne.s32.totalorder %s55, %s56
    %p68 = scmp.eq.s32.totalorder %s25, 1
    %p69 = por %p67, %p68
    %p71 = scmp.ne.s32.totalorder %s56, %s70
    %p72 = scmp.eq.s32.totalorder %s25, 0
    %p73 = por %p71, %p72
    %s75 = sadd.s32 %s74, 1
    %p78 = scmp.eq.s32.totalorder %s19, 1
    %p79 = scmp.ne.s32.totalorder %s74, %s76
    %p80 = scmp.eq.s32.totalorder %s19, 0
    %p81 = por %p79, %p80
    %p82 = scmp.ne.s32.totalorder %s74, %s76
    %p83 = scmp.eq.s32.totalorder %s24, 1
    %p84 = por %p82, %p83
    %p85 = scmp.ne.s32.totalorder %s76, %s77
    %p86 = scmp.eq.s32.totalorder %s24, 0
    %p87 = por %p85, %p86
    %p88 = scmp.ne.s32.totalorder %s76, %s77
    %p89 = scmp.eq.s32.totalorder %s25, 1
    %p90 = por %p88, %p89
    %p92 = scmp.ne.s32.totalorder %s77, %s91
    %p93 = scmp.eq.s32.totalorder %s25, 0
    %p94 = por %p92, %p93
    %s96 = sadd.s32 %s95, 1
    %p99 = scmp.eq.s32.totalorder %s19, 1
    %p100 = scmp.ne.s32.totalorder %s95, %s97
    %p101 = scmp.eq.s32.totalorder %s19, 0
    %p102 = por %p100, %p101
    %p103 = scmp.ne.s32.totalorder %s95, %s97
    %p104 = scmp.eq.s32.totalorder %s24, 1
    %p105 = por %p103, %p104
    %p106 = scmp.ne.s32.totalorder %s97, %s98
    %p107 = scmp.eq.s32.totalorder %s24, 0
    %p108 = por %p106, %p107
    %p109 = scmp.ne.s32.totalorder %s97, %s98
    %p110 = scmp.eq.s32.totalorder %s25, 1
    %p111 = por %p109, %p110
    %p113 = scmp.ne.s32.totalorder %s98, %s112
    %p114 = scmp.eq.s32.totalorder %s25, 0
    %p115 = por %p113, %p114
    %s117 = sadd.s32 %s116, 1
    %p120 = scmp.eq.s32.totalorder %s19, 1
    %p121 = scmp.ne.s32.totalorder %s116, %s118
    %p122 = scmp.eq.s32.totalorder %s19, 0
    %p123 = por %p121, %p122
    %p124 = scmp.ne.s32.totalorder %s116, %s118
    %p125 = scmp.eq.s32.totalorder %s24, 1
    %p126 = por %p124, %p125
    %p127 = scmp.ne.s32.totalorder %s118, %s119
    %p128 = scmp.eq.s32.totalorder %s24, 0
    %p129 = por %p127, %p128
    %p130 = scmp.ne.s32.totalorder %s118, %s119
    %p131 = scmp.eq.s32.totalorder %s25, 1
    %p132 = por %p130, %p131
    %p134 = scmp.ne.s32.totalorder %s119, %s133
    %p135 = scmp.eq.s32.totalorder %s25, 0
    %p136 = por %p134, %p135
    %s138 = sadd.s32 %s137, 1
    %p141 = scmp.eq.s32.totalorder %s19, 1
    %p142 = scmp.ne.s32.totalorder %s137, %s139
    %p143 = scmp.eq.s32.totalorder %s19, 0
    %p144 = por %p142, %p143
    %p145 = scmp.ne.s32.totalorder %s137, %s139
    %p146 = scmp.eq.s32.totalorder %s24, 1
    %p147 = por %p145, %p146
    %p148 = scmp.ne.s32.totalorder %s139, %s140
    %p149 = scmp.eq.s32.totalorder %s24, 0
    %p150 = por %p148, %p149
    %p151 = scmp.ne.s32.totalorder %s139, %s140
    %p152 = scmp.eq.s32.totalorder %s25, 1
    %p153 = por %p151, %p152
    %p155 = scmp.ne.s32.totalorder %s140, %s154
    %p156 = scmp.eq.s32.totalorder %s25, 0
    %p157 = por %p155, %p156
    %s159 = sadd.s32 %s158, 1
    %p162 = scmp.eq.s32.totalorder %s19, 1
    %p163 = scmp.ne.s32.totalorder %s158, %s160
    %p164 = scmp.eq.s32.totalorder %s19, 0
    %p165 = por %p163, %p164
    %p166 = scmp.ne.s32.totalorder %s158, %s160
    %p167 = scmp.eq.s32.totalorder %s24, 1
    %p168 = por %p166, %p167
    %p169 = scmp.ne.s32.totalorder %s160, %s161
    %p170 = scmp.eq.s32.totalorder %s24, 0
    %p171 = por %p169, %p170
    %p172 = scmp.ne.s32.totalorder %s160, %s161
    %p173 = scmp.eq.s32.totalorder %s25, 1
    %p174 = por %p172, %p173
    %p176 = scmp.ne.s32.totalorder %s161, %s175
    %p177 = scmp.eq.s32.totalorder %s25, 0
    %p178 = por %p176, %p177
    %s180 = sadd.s32 %s179, 1
    %p183 = scmp.eq.s32.totalorder %s19, 1
    %p184 = scmp.ne.s32.totalorder %s179, %s181
    %p185 = scmp.eq.s32.totalorder %s19, 0
    %p186 = por %p184, %p185
    %p187 = scmp.ne.s32.totalorder %s179, %s181
    %p188 = scmp.eq.s32.totalorder %s24, 1
    %p189 = por %p187, %p188
    %p190 = scmp.ne.s32.totalorder %s181, %s182
    %p191 = scmp.eq.s32.totalorder %s24, 0
    %p192 = por %p190, %p191
    %p193 = scmp.ne.s32.totalorder %s181, %s182
    %p194 = scmp.eq.s32.totalorder %s25, 1
    %p195 = por %p193, %p194
    %p197 = scmp.ne.s32.totalorder %s182, %s196
    %p198 = scmp.eq.s32.totalorder %s25, 0
    %p199 = por %p197, %p198
    %s201 = sadd.s32 %s200, 1
    %p204 = scmp.eq.s32.totalorder %s19, 1
    %p205 = scmp.ne.s32.totalorder %s200, %s202
    %p206 = scmp.eq.s32.totalorder %s19, 0
    %p207 = por %p205, %p206
    %p208 = scmp.ne.s32.totalorder %s200, %s202
    %p209 = scmp.eq.s32.totalorder %s24, 1
    %p210 = por %p208, %p209
    %p211 = scmp.ne.s32.totalorder %s202, %s203
    %p212 = scmp.eq.s32.totalorder %s24, 0
    %p213 = por %p211, %p212
    %p214 = scmp.ne.s32.totalorder %s202, %s203
    %p215 = scmp.eq.s32.totalorder %s25, 1
    %p216 = por %p214, %p215
    %p218 = scmp.ne.s32.totalorder %s203, %s217
    %p219 = scmp.eq.s32.totalorder %s25, 0
    %p220 = por %p218, %p219
    %s222 = sadd.s32 %s221, 1
    %p225 = scmp.eq.s32.totalorder %s19, 1
    %p226 = scmp.ne.s32.totalorder %s221, %s223
    %p227 = scmp.eq.s32.totalorder %s19, 0
    %p228 = por %p226, %p227
    %p229 = scmp.ne.s32.totalorder %s221, %s223
    %p230 = scmp.eq.s32.totalorder %s24, 1
    %p231 = por %p229, %p230
    %p232 = scmp.ne.s32.totalorder %s223, %s224
    %p233 = scmp.eq.s32.totalorder %s24, 0
    %p234 = por %p232, %p233
    %p235 = scmp.ne.s32.totalorder %s223, %s224
    %p236 = scmp.eq.s32.totalorder %s25, 1
    %p237 = por %p235, %p236
    %p239 = scmp.ne.s32.totalorder %s224, %s238
    %p240 = scmp.eq.s32.totalorder %s25, 0
    %p241 = por %p239, %p240
    %s243 = sadd.s32 %s242, 1
    %p246 = scmp.eq.s32.totalorder %s19, 1
    %p247 = scmp.ne.s32.totalorder %s242, %s244
    %p248 = scmp.eq.s32.totalorder %s19, 0
    %p249 = por %p247, %p248
    %p250 = scmp.ne.s32.totalorder %s242, %s244
    %p251 = scmp.eq.s32.totalorder %s24, 1
    %p252 = por %p250, %p251
    %p253 = scmp.ne.s32.totalorder %s244, %s245
    %p254 = scmp.eq.s32.totalorder %s24, 0
    %p255 = por %p253, %p254
    %p256 = scmp.ne.s32.totalorder %s244, %s245
    %p257 = scmp.eq.s32.totalorder %s25, 1
    %p258 = por %p256, %p257
    %p260 = scmp.ne.s32.totalorder %s245, %s259
    %p261 = scmp.eq.s32.totalorder %s25, 0
    %p262 = por %p260, %p261
    %s264 = sadd.s32 %s263, 1
    %p267 = scmp.eq.s32.totalorder %s19, 1
    %p268 = scmp.ne.s32.totalorder %s263, %s265
    %p269 = scmp.eq.s32.totalorder %s19, 0
    %p270 = por %p268, %p269
    %p271 = scmp.ne.s32.totalorder %s263, %s265
    %p272 = scmp.eq.s32.totalorder %s24, 1
    %p273 = por %p271, %p272
    %p274 = scmp.ne.s32.totalorder %s265, %s266
    %p275 = scmp.eq.s32.totalorder %s24, 0
    %p276 = por %p274, %p275
    %p277 = scmp.ne.s32.totalorder %s265, %s266
    %p278 = scmp.eq.s32.totalorder %s25, 1
    %p279 = por %p277, %p278
    %p281 = scmp.ne.s32.totalorder %s266, %s280
    %p282 = scmp.eq.s32.totalorder %s25, 0
    %p283 = por %p281, %p282
    %s285 = sadd.s32 %s284, 1
    %p288 = scmp.eq.s32.totalorder %s19, 1
    %p289 = scmp.ne.s32.totalorder %s284, %s286
    %p290 = scmp.eq.s32.totalorder %s19, 0
    %p291 = por %p289, %p290
    %p292 = scmp.ne.s32.totalorder %s284, %s286
    %p293 = scmp.eq.s32.totalorder %s24, 1
    %p294 = por %p292, %p293
    %p295 = scmp.ne.s32.totalorder %s286, %s287
    %p296 = scmp.eq.s32.totalorder %s24, 0
    %p297 = por %p295, %p296
    %p298 = scmp.ne.s32.totalorder %s286, %s287
    %p299 = scmp.eq.s32.totalorder %s25, 1
    %p300 = por %p298, %p299
    %p302 = scmp.ne.s32.totalorder %s287, %s301
    %p303 = scmp.eq.s32.totalorder %s25, 0
    %p304 = por %p302, %p303
    %s305 = ssub.s32 %s19, %s26
    %p306 = scmp.eq.s32.totalorder %s305, 0
    %s308 = sadd.s32 %s307, 1
    %s309 = scalar_select %p306, %s307, %s308
    %p312 = pneg %p306
    %p313 = scmp.eq.s32.totalorder %s19, 1
    %p314 = por %p312, %p313
    %p315 = scmp.ne.s32.totalorder %s307, %s310
    %p316 = scmp.eq.s32.totalorder %s19, 0
    %p317 = por %p315, %p316
    %p318 = scmp.ne.s32.totalorder %s307, %s310
    %p319 = scmp.eq.s32.totalorder %s24, 1
    %p320 = por %p318, %p319
    %p321 = scmp.ne.s32.totalorder %s310, %s311
    %p322 = scmp.eq.s32.totalorder %s24, 0
    %p323 = por %p321, %p322
    %p324 = scmp.ne.s32.totalorder %s310, %s311
    %p325 = scmp.eq.s32.totalorder %s25, 1
    %p326 = por %p324, %p325
    %p328 = scmp.ne.s32.totalorder %s311, %s327
    %p329 = scmp.eq.s32.totalorder %s25, 0
    %p330 = por %p328, %p329
    %p331 = scmp.le.s32.totalorder 1, %s19
    %p332 = scmp.lt.s32.totalorder %s19, 3
    %p333 = pnand %p331, %p332
    %p334 = pneg %p333
    // Predicated region
    $region9: #{fsrcnn_forward.1} parent=5 // pred_check
      _
    $region10: #{fsrcnn_forward.1} parent=5 // pred_check_branch
      %336 = sbr.rel (%p333) target = $region12
    $region11: #{fsrcnn_forward.1} parent=5 // pred_region
      %s337 = ssub.s32 %s19, 1
      // Predicated region
      $region13: #{fsrcnn_forward.1} parent=11 // pred_check
        %p338 = pneg %p66
      $region14: #{fsrcnn_forward.1} parent=11 // pred_check_branch
        %340 = sbr.rel (%p338) target = $region16
      $region15: #{fsrcnn_forward.1} parent=11 // pred_region
        _
      $region16: #{fsrcnn_forward.1} parent=11 // pred_fallthru
        _
      // Predicated region
      $region17: #{fsrcnn_forward.1} parent=11 // pred_check
        %p341 = pneg %p87
      $region18: #{fsrcnn_forward.1} parent=11 // pred_check_branch
        %343 = sbr.rel (%p341) target = $region20
      $region19: #{fsrcnn_forward.1} parent=11 // pred_region
        _
      $region20: #{fsrcnn_forward.1} parent=11 // pred_fallthru
        _
      // Predicated region
      $region21: #{fsrcnn_forward.1} parent=11 // pred_check
        %p344 = pneg %p108
      $region22: #{fsrcnn_forward.1} parent=11 // pred_check_branch
        %346 = sbr.rel (%p344) target = $region24
      $region23: #{fsrcnn_forward.1} parent=11 // pred_region
        _
      $region24: #{fsrcnn_forward.1} parent=11 // pred_fallthru
        _
      // Predicated region
      $region25: #{fsrcnn_forward.1} parent=11 // pred_check
        %p347 = pneg %p129
      $region26: #{fsrcnn_forward.1} parent=11 // pred_check_branch
        %349 = sbr.rel (%p347) target = $region28
      $region27: #{fsrcnn_forward.1} parent=11 // pred_region
        _
      $region28: #{fsrcnn_forward.1} parent=11 // pred_fallthru
        _
      // Predicated region
      $region29: #{fsrcnn_forward.1} parent=11 // pred_check
        %p350 = pneg %p150
      $region30: #{fsrcnn_forward.1} parent=11 // pred_check_branch
        %352 = sbr.rel (%p350) target = $region32
      $region31: #{fsrcnn_forward.1} parent=11 // pred_region
        _
      $region32: #{fsrcnn_forward.1} parent=11 // pred_fallthru
        _
      // Predicated region
      $region33: #{fsrcnn_forward.1} parent=11 // pred_check
        %p353 = pneg %p171
      $region34: #{fsrcnn_forward.1} parent=11 // pred_check_branch
        %355 = sbr.rel (%p353) target = $region36
      $region35: #{fsrcnn_forward.1} parent=11 // pred_region
        _
      $region36: #{fsrcnn_forward.1} parent=11 // pred_fallthru
        _
      // Predicated region
      $region37: #{fsrcnn_forward.1} parent=11 // pred_check
        %p356 = pneg %p192
      $region38: #{fsrcnn_forward.1} parent=11 // pred_check_branch
        %358 = sbr.rel (%p356) target = $region40
      $region39: #{fsrcnn_forward.1} parent=11 // pred_region
        _
      $region40: #{fsrcnn_forward.1} parent=11 // pred_fallthru
        _
      // Predicated region
      $region41: #{fsrcnn_forward.1} parent=11 // pred_check
        %p359 = pneg %p213
      $region42: #{fsrcnn_forward.1} parent=11 // pred_check_branch
        %361 = sbr.rel (%p359) target = $region44
      $region43: #{fsrcnn_forward.1} parent=11 // pred_region
        _
      $region44: #{fsrcnn_forward.1} parent=11 // pred_fallthru
        _
      // Predicated region
      $region45: #{fsrcnn_forward.1} parent=11 // pred_check
        %p362 = pneg %p234
      $region46: #{fsrcnn_forward.1} parent=11 // pred_check_branch
        %364 = sbr.rel (%p362) target = $region48
      $region47: #{fsrcnn_forward.1} parent=11 // pred_region
        _
      $region48: #{fsrcnn_forward.1} parent=11 // pred_fallthru
        _
      // Predicated region
      $region49: #{fsrcnn_forward.1} parent=11 // pred_check
        %p365 = pneg %p255
      $region50: #{fsrcnn_forward.1} parent=11 // pred_check_branch
        %367 = sbr.rel (%p365) target = $region52
      $region51: #{fsrcnn_forward.1} parent=11 // pred_region
        _
      $region52: #{fsrcnn_forward.1} parent=11 // pred_fallthru
        _
      // Predicated region
      $region53: #{fsrcnn_forward.1} parent=11 // pred_check
        %p368 = pneg %p276
      $region54: #{fsrcnn_forward.1} parent=11 // pred_check_branch
        %370 = sbr.rel (%p368) target = $region56
      $region55: #{fsrcnn_forward.1} parent=11 // pred_region
        _
      $region56: #{fsrcnn_forward.1} parent=11 // pred_fallthru
        _
      // Predicated region
      $region57: #{fsrcnn_forward.1} parent=11 // pred_check
        %p371 = pneg %p297
      $region58: #{fsrcnn_forward.1} parent=11 // pred_check_branch
        %373 = sbr.rel (%p371) target = $region60
      $region59: #{fsrcnn_forward.1} parent=11 // pred_region
        _
      $region60: #{fsrcnn_forward.1} parent=11 // pred_fallthru
        _
    $region12: #{fsrcnn_forward.1} parent=5 // pred_fallthru
      _
    %p374 = scmp.lt.s32.totalorder %s19, 2
    // Predicated region
    $region61: #{fsrcnn_forward.1} parent=5 // pred_check
      %p375 = pneg %p374
    $region62: #{fsrcnn_forward.1} parent=5 // pred_check_branch
      %377 = sbr.rel (%p375) target = $region64
    $region63: #{fsrcnn_forward.1} parent=5 // pred_region
      // Predicated region
      $region65: #{fsrcnn_forward.1} parent=63 // pred_check
        %p378 = pneg %p39
      $region66: #{fsrcnn_forward.1} parent=63 // pred_check_branch
        %380 = sbr.rel (%p378) target = $region68
      $region67: #{fsrcnn_forward.1} parent=63 // pred_region
        %p381 = scmp.lt.s32.totalorder %s19, 1
        %s382 = scalar_select %p381, %s19, 1
        %s383 = smul.addr %s382, 2
        %s384 = scalar_lea.vmem %s0, %s383
      $region68: #{fsrcnn_forward.1} parent=63 // pred_fallthru
        _
    $region64: #{fsrcnn_forward.1} parent=5 // pred_fallthru
      _
    %p385 = scmp.le.s32.totalorder 1, %s19
    %p386 = scmp.lt.s32.totalorder %s19, 3
    %p387 = pnand %p385, %p386
    %p388 = pneg %p387
    // Predicated region
    $region69: #{fsrcnn_forward.1} parent=5 // pred_check
      _
    $region70: #{fsrcnn_forward.1} parent=5 // pred_check_branch
      %390 = sbr.rel (%p387) target = $region72
    $region71: #{fsrcnn_forward.1} parent=5 // pred_region
      %s391 = ssub.s32 %s19, 1
      %p392 = scmp.lt.s32.totalorder %s24, 1
      %s393 = scalar_select %p392, %s24, 1
      %s394 = smul.addr %s393, 2
      %s395 = scalar_lea.vmem %s0, %s394
      %p396 = pneg %p45
      %p397 = pneg %p42
      %p398 = pneg %p66
      %p399 = pneg %p63
      %p400 = pneg %p87
      %p401 = pneg %p84
      %p402 = pneg %p108
      %p403 = pneg %p105
      %p404 = pneg %p129
      %p405 = pneg %p126
      %p406 = pneg %p150
      %p407 = pneg %p147
      %p408 = pneg %p171
      %p409 = pneg %p168
      %p410 = pneg %p192
      %p411 = pneg %p189
      %p412 = pneg %p213
      %p413 = pneg %p210
      %p414 = pneg %p234
      %p415 = pneg %p231
      %p416 = pneg %p255
      %p417 = pneg %p252
      %p418 = pneg %p276
      %p419 = pneg %p273
      %p420 = pneg %p297
      %p421 = pneg %p294
      %p422 = pneg %p323
      %p423 = pneg %p320
      %p424 = scmp.lt.s32.totalorder %s24, 1
      %s425 = scalar_select %p424, %s24, 1
      %s426 = smul.addr %s425, 2
      %s427 = smul.addr %s426, 4
      %s428 = scalar_lea.vmem %s13, %s427
      %p429 = scmp.lt.s32.totalorder %s24, 1
      %s430 = scalar_select %p429, %s24, 1
      %s431 = smul.addr %s430, 2
      %s432 = scalar_lea.vmem %s0, %s431
      %p433 = scmp.lt.s32.totalorder %s24, 1
      %s434 = scalar_select %p433, %s24, 1
      %s435 = smul.addr %s434, 2
      %s436 = smul.addr %s435, 4
      %s437 = scalar_lea.vmem %s13, %s436
      %v438 = vld [vmem:[%s432] sm:$0x3]
      %v439 = vld [vmem:[%s1] ss:$8 sm:$0x3]
      %441 = vrot.lane.b32.xlu0 %v439, 94
      %v442 = vpop.permute.xlu0 %441
      %v443 = vrot.slane %v442, 1
      %vm444 = vcmask 769024
      %v445 = vsel %vm444, %v442, %v443
      %v447 = vmul.f32 %v438, %v445
      %449 = vrot.lane.b32.xlu0 %v447, 34
      %v450 = vpop.permute.xlu0 %449
      %v451 = vrot.slane %v450, 7
      %vm452 = vcmask 277504
      %v453 = vsel %vm452, %v451, %v450
      %v455 = vlaneseq
      %vm456 = vcmp.ge.s32.totalorder %v455, 34
      %vm457 = vcmp.lt.s32.totalorder %v455, 256
      %vm458 = vmand %vm456, %vm457
      %459 = vst.msk [vmem:[#allocation2] ss:$8 sm:$0x3] %vm458, %v453
      %460 = vst.msk [vmem:[#allocation2] ss:$8 sm:$0x0] %vm458, %v453
      %vm461 = vcmask 270336
      %462 = vst.msk [vmem:[#allocation2] sm:$0x1] %vm461, 0.0
      %s463 = scalar_lea.vmem %s1, 1
      %v464 = vld [vmem:[%s463] ss:$8 sm:$0x3]
      %466 = vrot.lane.b32.xlu0 %v464, 95
      %v467 = vpop.permute.xlu0 %466
      %v468 = vrot.slane %v467, 1
      %vm469 = vcmask 777216
      %v470 = vsel %vm469, %v467, %v468
      %v472 = vmul.f32 %v438, %v470
      %474 = vrot.lane.b32.xlu0 %v472, 33
      %v475 = vpop.permute.xlu0 %474
      %v476 = vrot.slane %v475, 7
      %vm477 = vcmask 269312
      %v478 = vsel %vm477, %v476, %v475
      %vm480 = vcmp.ge.s32.totalorder %v455, 33
      %vm481 = vmand %vm480, %vm457
      %s482 = scalar_lea.vmem [#allocation2], 1
      %483 = vst.msk [vmem:[%s482] ss:$8 sm:$0x3] %vm481, %v478
      %484 = vst.msk [vmem:[%s482] ss:$8 sm:$0x0] %vm481, %v478
      %vm485 = vcmask 262144
      %486 = vst.msk [vmem:[#allocation2 + $0x1] sm:$0x1] %vm485, 0.0
      %s487 = scalar_lea.vmem %s1, 2
      %v488 = vld [vmem:[%s487] ss:$8 sm:$0x3]
      %490 = vrot.lane.b32.xlu0 %v488, 96
      %v491 = vpop.permute.xlu0 %490
      %v492 = vrot.slane %v491, 1
      %vm493 = vcmask 785408
      %v494 = vsel %vm493, %v491, %v492
      %v496 = vmul.f32 %v438, %v494
      %498 = vrot.lane.b32.xlu0 %v496, 32
      %v499 = vpop.permute.xlu0 %498
      %v500 = vrot.slane %v499, 7
      %vm501 = vcmask 261120
      %v502 = vsel %vm501, %v500, %v499
      %vm504 = vcmp.ge.s32.totalorder %v455, 32
      %vm505 = vmand %vm504, %vm457
      %s506 = scalar_lea.vmem [#allocation2], 2
      %507 = vst.msk [vmem:[%s506] ss:$8 sm:$0x3] %vm505, %v502
      %508 = vst.msk [vmem:[%s506] ss:$8 sm:$0x0] %vm505, %v502
      %vm509 = vcmask 253952
      %510 = vst.msk [vmem:[#allocation2 + $0x2] sm:$0x1] %vm509, 0.0
      %s511 = scalar_lea.vmem %s1, 3
      %v512 = vld [vmem:[%s511] ss:$8 sm:$0x3]
      %514 = vrot.lane.b32.xlu0 %v512, 97
      %v515 = vpop.permute.xlu0 %514
      %v516 = vrot.slane %v515, 1
      %vm517 = vcmask 793600
      %v518 = vsel %vm517, %v515, %v516
      %v520 = vmul.f32 %v438, %v518
      %522 = vrot.lane.b32.xlu0 %v520, 31
      %v523 = vpop.permute.xlu0 %522
      %v524 = vrot.slane %v523, 7
      %vm525 = vcmask 252928
      %v526 = vsel %vm525, %v524, %v523
      %vm528 = vcmp.ge.s32.totalorder %v455, 31
      %vm529 = vmand %vm528, %vm457
      %s530 = scalar_lea.vmem [#allocation2], 3
      %531 = vst.msk [vmem:[%s530] ss:$8 sm:$0x3] %vm529, %v526
      %532 = vst.msk [vmem:[%s530] ss:$8 sm:$0x0] %vm529, %v526
      %vm533 = vcmask 245760
      %534 = vst.msk [vmem:[#allocation2 + $0x3] sm:$0x1] %vm533, 0.0
      %s535 = scalar_lea.vmem %s1, 4
      %v536 = vld [vmem:[%s535] ss:$8 sm:$0x3]
      %538 = vrot.lane.b32.xlu0 %v536, 98
      %v539 = vpop.permute.xlu0 %538
      %v540 = vrot.slane %v539, 1
      %vm541 = vcmask 801792
      %v542 = vsel %vm541, %v539, %v540
      %v544 = vmul.f32 %v438, %v542
      %546 = vrot.lane.b32.xlu0 %v544, 30
      %v547 = vpop.permute.xlu0 %546
      %v548 = vrot.slane %v547, 7
      %vm549 = vcmask 244736
      %v550 = vsel %vm549, %v548, %v547
      %vm552 = vcmp.ge.s32.totalorder %v455, 30
      %vm553 = vmand %vm552, %vm457
      %s554 = scalar_lea.vmem [#allocation2], 4
      %555 = vst.msk [vmem:[%s554] ss:$8 sm:$0x3] %vm553, %v550
      %556 = vst.msk [vmem:[%s554] ss:$8 sm:$0x0] %vm553, %v550
      %vm557 = vcmask 237568
      %558 = vst.msk [vmem:[#allocation2 + $0x4] sm:$0x1] %vm557, 0.0
      %s559 = scalar_lea.vmem %s1, 5
      %v560 = vld [vmem:[%s559] ss:$8 sm:$0x3]
      %562 = vrot.lane.b32.xlu0 %v560, 110
      %v563 = vpop.permute.xlu0 %562
      %v564 = vrot.slane %v563, 1
      %vm565 = vcmask 900096
      %v566 = vsel %vm565, %v563, %v564
      %v568 = vmul.f32 %v438, %v566
      %570 = vrot.lane.b32.xlu0 %v568, 18
      %v571 = vpop.permute.xlu0 %570
      %v572 = vrot.slane %v571, 7
      %vm573 = vcmask 146432
      %v574 = vsel %vm573, %v572, %v571
      %vm576 = vcmp.ge.s32.totalorder %v455, 18
      %vm577 = vmand %vm576, %vm457
      %s578 = scalar_lea.vmem [#allocation2], 5
      %579 = vst.msk [vmem:[%s578] ss:$8 sm:$0x3] %vm577, %v574
      %580 = vst.msk [vmem:[%s578] ss:$8 sm:$0x0] %vm577, %v574
      %vm581 = vcmask 139264
      %582 = vst.msk [vmem:[#allocation2 + $0x5] sm:$0x1] %vm581, 0.0
      %s583 = scalar_lea.vmem %s1, 6
      %v584 = vld [vmem:[%s583] ss:$8 sm:$0x3]
      %586 = vrot.lane.b32.xlu0 %v584, 111
      %v587 = vpop.permute.xlu0 %586
      %v588 = vrot.slane %v587, 1
      %vm589 = vcmask 908288
      %v590 = vsel %vm589, %v587, %v588
      %v592 = vmul.f32 %v438, %v590
      %594 = vrot.lane.b32.xlu0 %v592, 17
      %v595 = vpop.permute.xlu0 %594
      %v596 = vrot.slane %v595, 7
      %vm597 = vcmask 138240
      %v598 = vsel %vm597, %v596, %v595
      %vm600 = vcmp.ge.s32.totalorder %v455, 17
      %vm601 = vmand %vm600, %vm457
      %s602 = scalar_lea.vmem [#allocation2], 6
      %603 = vst.msk [vmem:[%s602] ss:$8 sm:$0x3] %vm601, %v598
      %604 = vst.msk [vmem:[%s602] ss:$8 sm:$0x0] %vm601, %v598
      %vm605 = vcmask 131072
      %606 = vst.msk [vmem:[#allocation2 + $0x6] sm:$0x1] %vm605, 0.0
      %s607 = scalar_lea.vmem %s1, 7
      %v608 = vld [vmem:[%s607] ss:$8 sm:$0x3]
      %610 = vrot.lane.b32.xlu0 %v608, 112
      %v611 = vpop.permute.xlu0 %610
      %v612 = vrot.slane %v611, 1
      %vm613 = vcmask 916480
      %v614 = vsel %vm613, %v611, %v612
      %v616 = vmul.f32 %v438, %v614
      %618 = vrot.lane.b32.xlu0 %v616, 16
      %v619 = vpop.permute.xlu0 %618
      %v620 = vrot.slane %v619, 7
      %vm621 = vcmask 130048
      %v622 = vsel %vm621, %v620, %v619
      %vm624 = vcmp.ge.s32.totalorder %v455, 16
      %vm625 = vmand %vm624, %vm457
      %s626 = scalar_lea.vmem [#allocation2], 7
      %627 = vst.msk [vmem:[%s626] ss:$8 sm:$0x3] %vm625, %v622
      %628 = vst.msk [vmem:[%s626] ss:$8 sm:$0x0] %vm625, %v622
      %vm629 = vcmask 122880
      %630 = vst.msk [vmem:[#allocation2 + $0x7] sm:$0x1] %vm629, 0.0
      %s631 = scalar_lea.vmem %s1, 16
      %v632 = vld [vmem:[%s631] ss:$8 sm:$0x3]
      %634 = vrot.lane.b32.xlu0 %v632, 113
      %v635 = vpop.permute.xlu0 %634
      %v636 = vrot.slane %v635, 1
      %vm637 = vcmask 924672
      %v638 = vsel %vm637, %v635, %v636
      %v640 = vmul.f32 %v438, %v638
      %642 = vrot.lane.b32.xlu0 %v640, 15
      %v643 = vpop.permute.xlu0 %642
      %v644 = vrot.slane %v643, 7
      %vm645 = vcmask 121856
      %v646 = vsel %vm645, %v644, %v643
      %vm648 = vcmp.ge.s32.totalorder %v455, 15
      %vm649 = vmand %vm648, %vm457
      %s650 = scalar_lea.vmem [#allocation2], 16
      %651 = vst.msk [vmem:[%s650] ss:$8 sm:$0x3] %vm649, %v646
      %652 = vst.msk [vmem:[%s650] ss:$8 sm:$0x0] %vm649, %v646
      %vm653 = vcmask 114688
      %654 = vst.msk [vmem:[#allocation2 + $0x10] sm:$0x1] %vm653, 0.0
      %s655 = scalar_lea.vmem %s1, 17
      %v656 = vld [vmem:[%s655] ss:$8 sm:$0x3]
      %658 = vrot.lane.b32.xlu0 %v656, 114
      %v659 = vpop.permute.xlu0 %658
      %v660 = vrot.slane %v659, 1
      %vm661 = vcmask 932864
      %v662 = vsel %vm661, %v659, %v660
      %v664 = vmul.f32 %v438, %v662
      %666 = vrot.lane.b32.xlu0 %v664, 14
      %v667 = vpop.permute.xlu0 %666
      %v668 = vrot.slane %v667, 7
      %vm669 = vcmask 113664
      %v670 = vsel %vm669, %v668, %v667
      %vm672 = vcmp.ge.s32.totalorder %v455, 14
      %vm673 = vmand %vm672, %vm457
      %s674 = scalar_lea.vmem [#allocation2], 17
      %675 = vst.msk [vmem:[%s674] ss:$8 sm:$0x3] %vm673, %v670
      %676 = vst.msk [vmem:[%s674] ss:$8 sm:$0x0] %vm673, %v670
      %vm677 = vcmask 106496
      %678 = vst.msk [vmem:[#allocation2 + $0x11] sm:$0x1] %vm677, 0.0
      %s679 = scalar_lea.vmem %s1, 18
      %v680 = vld [vmem:[%s679] ss:$8 sm:$0x3]
      %682 = vrot.lane.b32.xlu0 %v680, 126
      %v683 = vpop.permute.xlu0 %682
      %v684 = vrot.slane %v683, 1
      %vm685 = vcmask 1031168
      %v686 = vsel %vm685, %v683, %v684
      %v688 = vmul.f32 %v438, %v686
      %690 = vrot.lane.b32.xlu0 %v688, 2
      %v691 = vpop.permute.xlu0 %690
      %v692 = vrot.slane %v691, 7
      %vm693 = vcmask 15360
      %v694 = vsel %vm693, %v692, %v691
      %vm696 = vcmp.ge.s32.totalorder %v455, 2
      %vm697 = vmand %vm696, %vm457
      %s698 = scalar_lea.vmem [#allocation2], 18
      %699 = vst.msk [vmem:[%s698] ss:$8 sm:$0x3] %vm697, %v694
      %700 = vst.msk [vmem:[%s698] ss:$8 sm:$0x0] %vm697, %v694
      %vm701 = vcmask 8192
      %702 = vst.msk [vmem:[#allocation2 + $0x12] sm:$0x1] %vm701, 0.0
      %s703 = scalar_lea.vmem %s1, 19
      %v704 = vld [vmem:[%s703] ss:$8 sm:$0x3]
      %706 = vrot.lane.b32.xlu0 %v704, 127
      %v707 = vpop.permute.xlu0 %706
      %v708 = vrot.slane %v707, 1
      %vm709 = vcmask 1039360
      %v710 = vsel %vm709, %v707, %v708
      %v712 = vmul.f32 %v438, %v710
      %714 = vrot.lane.b32.xlu0 %v712, 1
      %v715 = vpop.permute.xlu0 %714
      %v716 = vrot.slane %v715, 7
      %vm717 = vcmask 7168
      %v718 = vsel %vm717, %v716, %v715
      %vm720 = vcmp.ge.s32.totalorder %v455, 1
      %vm721 = vmand %vm720, %vm457
      %s722 = scalar_lea.vmem [#allocation2], 19
      %723 = vst.msk [vmem:[%s722] ss:$8 sm:$0x3] %vm721, %v718
      %724 = vst.msk [vmem:[%s722] ss:$8 sm:$0x0] %vm721, %v718
      %vm725 = vcmask 0
      %726 = vst.msk [vmem:[#allocation2 + $0x13] sm:$0x1] %vm725, 0.0
      %s727 = scalar_lea.vmem %s1, 20
      %v728 = vld [vmem:[%s727] ss:$8 sm:$0x3]
      %v729 = vmul.f32 %v438, %v728
      %vm730 = vcmp.ge.s32.totalorder %v455, 0
      %vm731 = vmand %vm730, %vm457
      %s732 = scalar_lea.vmem [#allocation2], 20
      %733 = vst.msk [vmem:[%s732] ss:$8 sm:$0x3] %vm731, %v729
      %734 = vst.msk [vmem:[%s732] ss:$8 sm:$0x0] %vm731, %v729
      %s735 = scalar_lea.vmem %s1, 21
      %v736 = vld [vmem:[%s735] ss:$8 sm:$0x3]
      %738 = vrot.lane.b32.xlu0 %v736, 1
      %v739 = vpop.permute.xlu0 %738
      %v740 = vrot.slane %v739, 7
      %v741 = vsel %vm717, %v740, %v739
      %v743 = vmul.f32 %v438, %v741
      %745 = vrot.lane.b32.xlu0 %v743, 127
      %v746 = vpop.permute.xlu0 %745
      %v747 = vrot.slane %v746, 1
      %v748 = vsel %vm709, %v746, %v747
      %vm750 = vcmp.lt.s32.totalorder %v455, 255
      %vm751 = vmand %vm730, %vm750
      %s752 = scalar_lea.vmem [#allocation2], 21
      %753 = vst.msk [vmem:[%s752] ss:$8 sm:$0x3] %vm751, %v748
      %754 = vst.msk [vmem:[%s752] ss:$8 sm:$0x0] %vm751, %v748
      %vm755 = vcmask 1041400
      %756 = vst.msk [vmem:[#allocation2 + $0x1d] sm:$0x1] %vm755, 0.0
      %s757 = scalar_lea.vmem %s1, 22
      %v758 = vld [vmem:[%s757] ss:$8 sm:$0x3]
      %760 = vrot.lane.b32.xlu0 %v758, 2
      %v761 = vpop.permute.xlu0 %760
      %v762 = vrot.slane %v761, 7
      %v763 = vsel %vm693, %v762, %v761
      %v765 = vmul.f32 %v438, %v763
      %767 = vrot.lane.b32.xlu0 %v765, 126
      %v768 = vpop.permute.xlu0 %767
      %v769 = vrot.slane %v768, 1
      %v770 = vsel %vm685, %v768, %v769
      %vm772 = vcmp.lt.s32.totalorder %v455, 254
      %vm773 = vmand %vm730, %vm772
      %s774 = scalar_lea.vmem [#allocation2], 22
      %775 = vst.msk [vmem:[%s774] ss:$8 sm:$0x3] %vm773, %v770
      %776 = vst.msk [vmem:[%s774] ss:$8 sm:$0x0] %vm773, %v770
      %vm777 = vcmask 1041392
      %778 = vst.msk [vmem:[#allocation2 + $0x1e] sm:$0x1] %vm777, 0.0
      %s779 = scalar_lea.vmem %s1, 23
      %v780 = vld [vmem:[%s779] ss:$8 sm:$0x3]
      %782 = vrot.lane.b32.xlu0 %v780, 14
      %v783 = vpop.permute.xlu0 %782
      %v784 = vrot.slane %v783, 7
      %v785 = vsel %vm669, %v784, %v783
      %v787 = vmul.f32 %v438, %v785
      %789 = vrot.lane.b32.xlu0 %v787, 114
      %v790 = vpop.permute.xlu0 %789
      %v791 = vrot.slane %v790, 1
      %v792 = vsel %vm661, %v790, %v791
      %vm794 = vcmp.lt.s32.totalorder %v455, 242
      %vm795 = vmand %vm730, %vm794
      %s796 = scalar_lea.vmem [#allocation2], 23
      %797 = vst.msk [vmem:[%s796] ss:$8 sm:$0x3] %vm795, %v792
      %798 = vst.msk [vmem:[%s796] ss:$8 sm:$0x0] %vm795, %v792
      %vm799 = vcmask 1041296
      %800 = vst.msk [vmem:[#allocation2 + $0x1f] sm:$0x1] %vm799, 0.0
      %s801 = scalar_lea.vmem %s1, 32
      %v802 = vld [vmem:[%s801] ss:$8 sm:$0x3]
      %804 = vrot.lane.b32.xlu0 %v802, 15
      %v805 = vpop.permute.xlu0 %804
      %v806 = vrot.slane %v805, 7
      %v807 = vsel %vm645, %v806, %v805
      %v809 = vmul.f32 %v438, %v807
      %811 = vrot.lane.b32.xlu0 %v809, 113
      %v812 = vpop.permute.xlu0 %811
      %v813 = vrot.slane %v812, 1
      %v814 = vsel %vm637, %v812, %v813
      %vm816 = vcmp.lt.s32.totalorder %v455, 241
      %vm817 = vmand %vm730, %vm816
      %s818 = scalar_lea.vmem [#allocation2], 32
      %819 = vst.msk [vmem:[%s818] ss:$8 sm:$0x3] %vm817, %v814
      %820 = vst.msk [vmem:[%s818] ss:$8 sm:$0x0] %vm817, %v814
      %vm821 = vcmask 1041288
      %822 = vst.msk [vmem:[#allocation2 + $0x28] sm:$0x1] %vm821, 0.0
      %s823 = scalar_lea.vmem %s1, 33
      %v824 = vld [vmem:[%s823] ss:$8 sm:$0x3]
      %826 = vrot.lane.b32.xlu0 %v824, 16
      %v827 = vpop.permute.xlu0 %826
      %v828 = vrot.slane %v827, 7
      %v829 = vsel %vm621, %v828, %v827
      %v831 = vmul.f32 %v438, %v829
      %833 = vrot.lane.b32.xlu0 %v831, 112
      %v834 = vpop.permute.xlu0 %833
      %v835 = vrot.slane %v834, 1
      %v836 = vsel %vm613, %v834, %v835
      %vm838 = vcmp.lt.s32.totalorder %v455, 240
      %vm839 = vmand %vm730, %vm838
      %s840 = scalar_lea.vmem [#allocation2], 33
      %841 = vst.msk [vmem:[%s840] ss:$8 sm:$0x3] %vm839, %v836
      %842 = vst.msk [vmem:[%s840] ss:$8 sm:$0x0] %vm839, %v836
      %vm843 = vcmask 1041280
      %844 = vst.msk [vmem:[#allocation2 + $0x29] sm:$0x1] %vm843, 0.0
      %s845 = scalar_lea.vmem %s1, 34
      %v846 = vld [vmem:[%s845] ss:$8 sm:$0x3]
      %848 = vrot.lane.b32.xlu0 %v846, 17
      %v849 = vpop.permute.xlu0 %848
      %v850 = vrot.slane %v849, 7
      %v851 = vsel %vm597, %v850, %v849
      %v853 = vmul.f32 %v438, %v851
      %855 = vrot.lane.b32.xlu0 %v853, 111
      %v856 = vpop.permute.xlu0 %855
      %v857 = vrot.slane %v856, 1
      %v858 = vsel %vm589, %v856, %v857
      %vm860 = vcmp.lt.s32.totalorder %v455, 239
      %vm861 = vmand %vm730, %vm860
      %s862 = scalar_lea.vmem [#allocation2], 34
      %863 = vst.msk [vmem:[%s862] ss:$8 sm:$0x3] %vm861, %v858
      %864 = vst.msk [vmem:[%s862] ss:$8 sm:$0x0] %vm861, %v858
      %vm865 = vcmask 1041272
      %866 = vst.msk [vmem:[#allocation2 + $0x2a] sm:$0x1] %vm865, 0.0
      %s867 = scalar_lea.vmem %s1, 35
      %v868 = vld [vmem:[%s867] ss:$8 sm:$0x3]
      %870 = vrot.lane.b32.xlu0 %v868, 18
      %v871 = vpop.permute.xlu0 %870
      %v872 = vrot.slane %v871, 7
      %v873 = vsel %vm573, %v872, %v871
      %v875 = vmul.f32 %v438, %v873
      %877 = vrot.lane.b32.xlu0 %v875, 110
      %v878 = vpop.permute.xlu0 %877
      %v879 = vrot.slane %v878, 1
      %v880 = vsel %vm565, %v878, %v879
      %vm882 = vcmp.lt.s32.totalorder %v455, 238
      %vm883 = vmand %vm730, %vm882
      %s884 = scalar_lea.vmem [#allocation2], 35
      %885 = vst.msk [vmem:[%s884] ss:$8 sm:$0x3] %vm883, %v880
      %886 = vst.msk [vmem:[%s884] ss:$8 sm:$0x0] %vm883, %v880
      %vm887 = vcmask 1041264
      %888 = vst.msk [vmem:[#allocation2 + $0x2b] sm:$0x1] %vm887, 0.0
      %s889 = scalar_lea.vmem %s1, 36
      %v890 = vld [vmem:[%s889] ss:$8 sm:$0x3]
      %892 = vrot.lane.b32.xlu0 %v890, 30
      %v893 = vpop.permute.xlu0 %892
      %v894 = vrot.slane %v893, 7
      %v895 = vsel %vm549, %v894, %v893
      %v897 = vmul.f32 %v438, %v895
      %899 = vrot.lane.b32.xlu0 %v897, 98
      %v900 = vpop.permute.xlu0 %899
      %v901 = vrot.slane %v900, 1
      %v902 = vsel %vm541, %v900, %v901
      %vm904 = vcmp.lt.s32.totalorder %v455, 226
      %vm905 = vmand %vm730, %vm904
      %s906 = scalar_lea.vmem [#allocation2], 36
      %907 = vst.msk [vmem:[%s906] ss:$8 sm:$0x3] %vm905, %v902
      %908 = vst.msk [vmem:[%s906] ss:$8 sm:$0x0] %vm905, %v902
      %vm909 = vcmask 1041168
      %910 = vst.msk [vmem:[#allocation2 + $0x2c] sm:$0x1] %vm909, 0.0
      %s911 = scalar_lea.vmem %s1, 37
      %v912 = vld [vmem:[%s911] ss:$8 sm:$0x3]
      %914 = vrot.lane.b32.xlu0 %v912, 31
      %v915 = vpop.permute.xlu0 %914
      %v916 = vrot.slane %v915, 7
      %v917 = vsel %vm525, %v916, %v915
      %v919 = vmul.f32 %v438, %v917
      %921 = vrot.lane.b32.xlu0 %v919, 97
      %v922 = vpop.permute.xlu0 %921
      %v923 = vrot.slane %v922, 1
      %v924 = vsel %vm517, %v922, %v923
      %vm926 = vcmp.lt.s32.totalorder %v455, 225
      %vm927 = vmand %vm730, %vm926
      %s928 = scalar_lea.vmem [#allocation2], 37
      %929 = vst.msk [vmem:[%s928] ss:$8 sm:$0x3] %vm927, %v924
      %930 = vst.msk [vmem:[%s928] ss:$8 sm:$0x0] %vm927, %v924
      %vm931 = vcmask 1041160
      %932 = vst.msk [vmem:[#allocation2 + $0x2d] sm:$0x1] %vm931, 0.0
      %s933 = scalar_lea.vmem %s1, 38
      %v934 = vld [vmem:[%s933] ss:$8 sm:$0x3]
      %936 = vrot.lane.b32.xlu0 %v934, 32
      %v937 = vpop.permute.xlu0 %936
      %v938 = vrot.slane %v937, 7
      %v939 = vsel %vm501, %v938, %v937
      %v941 = vmul.f32 %v438, %v939
      %943 = vrot.lane.b32.xlu0 %v941, 96
      %v944 = vpop.permute.xlu0 %943
      %v945 = vrot.slane %v944, 1
      %v946 = vsel %vm493, %v944, %v945
      %vm948 = vcmp.lt.s32.totalorder %v455, 224
      %vm949 = vmand %vm730, %vm948
      %s950 = scalar_lea.vmem [#allocation2], 38
      %951 = vst.msk [vmem:[%s950] ss:$8 sm:$0x3] %vm949, %v946
      %952 = vst.msk [vmem:[%s950] ss:$8 sm:$0x0] %vm949, %v946
      %vm953 = vcmask 1041152
      %954 = vst.msk [vmem:[#allocation2 + $0x2e] sm:$0x1] %vm953, 0.0
      %s955 = scalar_lea.vmem %s1, 39
      %v956 = vld [vmem:[%s955] ss:$8 sm:$0x3]
      %958 = vrot.lane.b32.xlu0 %v956, 33
      %v959 = vpop.permute.xlu0 %958
      %v960 = vrot.slane %v959, 7
      %v961 = vsel %vm477, %v960, %v959
      %v963 = vmul.f32 %v438, %v961
      %965 = vrot.lane.b32.xlu0 %v963, 95
      %v966 = vpop.permute.xlu0 %965
      %v967 = vrot.slane %v966, 1
      %v968 = vsel %vm469, %v966, %v967
      %vm970 = vcmp.lt.s32.totalorder %v455, 223
      %vm971 = vmand %vm730, %vm970
      %s972 = scalar_lea.vmem [#allocation2], 39
      %973 = vst.msk [vmem:[%s972] ss:$8 sm:$0x3] %vm971, %v968
      %974 = vst.msk [vmem:[%s972] ss:$8 sm:$0x0] %vm971, %v968
      %vm975 = vcmask 1041144
      %976 = vst.msk [vmem:[#allocation2 + $0x2f] sm:$0x1] %vm975, 0.0
      %s977 = scalar_lea.vmem %s1, 48
      %v978 = vld [vmem:[%s977] ss:$8 sm:$0x3]
      %980 = vrot.lane.b32.xlu0 %v978, 34
      %v981 = vpop.permute.xlu0 %980
      %v982 = vrot.slane %v981, 7
      %v983 = vsel %vm452, %v982, %v981
      %v985 = vmul.f32 %v438, %v983
      %987 = vrot.lane.b32.xlu0 %v985, 94
      %v988 = vpop.permute.xlu0 %987
      %v989 = vrot.slane %v988, 1
      %v990 = vsel %vm444, %v988, %v989
      %vm992 = vcmp.lt.s32.totalorder %v455, 222
      %vm993 = vmand %vm730, %vm992
      %s994 = scalar_lea.vmem [#allocation2], 48
      %995 = vst.msk [vmem:[%s994] ss:$8 sm:$0x3] %vm993, %v990
      %996 = vst.msk [vmem:[%s994] ss:$8 sm:$0x0] %vm993, %v990
      %vm997 = vcmask 1041136
      %998 = vst.msk [vmem:[#allocation2 + $0x38] sm:$0x1] %vm997, 0.0
      %v999 = vld [vmem:[%s3] sm:$0xff]
      %v1000 = vld [vmem:[%s3 + $0x8] sm:$0xff]
      %v1001 = vld [vmem:[%s3 + $0x10] sm:$0xff]
      %v1002 = vld [vmem:[%s3 + $0x18] sm:$0xff]
      %v1003 = vld [vmem:[%s3 + $0x20] sm:$0xff]
      %v1004 = vld [vmem:[%s3 + $0x28] sm:$0xff]
      %v1005 = vld [vmem:[%s3 + $0x30] sm:$0xff]
      %v1006 = vld [vmem:[#allocation2] sm:$0xff]
      %v1007 = vld [vmem:[#allocation2 + $0x8] sm:$0xff]
      %v1008 = vld [vmem:[#allocation2 + $0x10] sm:$0xff]
      %v1009 = vld [vmem:[#allocation2 + $0x18] sm:$0xff]
      %v1010 = vld [vmem:[#allocation2 + $0x20] sm:$0xff]
      %v1011 = vld [vmem:[#allocation2 + $0x28] sm:$0xff]
      %v1012 = vld [vmem:[#allocation2 + $0x30] sm:$0x1]
      %v1013 = vld [vmem:[#allocation2 + $0x38] sm:$0x1]
      %v1014 = vld [vmem:[%s4] sm:$0xff]
      %v1015 = vld [vmem:[%s4 + $0x8] sm:$0xff]
      %v1016 = vld [vmem:[%s4 + $0x10] sm:$0xff]
      %v1017 = vld [vmem:[%s4 + $0x18] sm:$0xff]
      %v1018 = vld [vmem:[%s4 + $0x20] sm:$0xff]
      %v1019 = vld [vmem:[%s4 + $0x28] sm:$0xff]
      %v1020 = vld [vmem:[%s4 + $0x30] sm:$0xff]
      %1022 = vset.pattern.permute.xlu0 0
      %1023 = vperm.xlu0 %1022, %v1014
      %v1024 = vpop.permute.xlu0 %1023
      %1027 = vset.pattern.permute.xlu0 0
      %1028 = vperm.xlu0 %1027, %v1015
      %v1029 = vpop.permute.xlu0 %1028
      %1032 = vset.pattern.permute.xlu0 0
      %1033 = vperm.xlu0 %1032, %v1016
      %v1034 = vpop.permute.xlu0 %1033
      %1037 = vset.pattern.permute.xlu0 0
      %1038 = vperm.xlu0 %1037, %v1017
      %v1039 = vpop.permute.xlu0 %1038
      %1042 = vset.pattern.permute.xlu0 0
      %1043 = vperm.xlu0 %1042, %v1018
      %v1044 = vpop.permute.xlu0 %1043
      %1047 = vset.pattern.permute.xlu0 0
      %1048 = vperm.xlu0 %1047, %v1019
      %v1049 = vpop.permute.xlu0 %1048
      %1052 = vset.pattern.permute.xlu0 0
      %1053 = vperm.xlu0 %1052, %v1020
      %v1054 = vpop.permute.xlu0 %1053
      %vm1056 = vcmask 203776
      %v1058 = vsel %vm1056, %v999, 0
      %v1061 = vsel %vm1056, %v1000, 0
      %v1064 = vsel %vm1056, %v1001, 0
      %v1067 = vsel %vm1056, %v1002, 0
      %v1070 = vsel %vm1056, %v1003, 0
      %v1073 = vsel %vm1056, %v1004, 0
      %v1076 = vsel %vm1056, %v1005, 0
      %vm1078 = vcmask 1040384
      %v1080 = vsel %vm1078, %v1012, 0
      %v1083 = vsel %vm1078, %v1013, 0
      %1085 = vmatprep.subr.mxu0 0.0
      %1086 = vmatpush1.msra.mxu0 0.0
      %1087 = vmatprep.subr.mxu0 0.0
      %1088 = vmatpush1.msra.mxu0 0.0
      %1089 = vmatprep.subr.mxu0 0.0
      %1090 = vmatpush1.msra.mxu0 0.0
      %1091 = vmatprep.subr.mxu0 0.0
      %1092 = vmatpush1.msra.mxu0 0.0
      %1093 = vmatprep.subr.mxu0 0.0
      %1094 = vmatpush1.msra.mxu0 0.0
      %1095 = vmatprep.subr.mxu0 0.0
      %1096 = vmatpush1.msra.mxu0 0.0
      %1097 = vmatprep.subr.mxu0 0.0
      %1098 = vmatpush1.msra.mxu0 0.0
      %1099 = vmatprep.subr.mxu0 0.0
      %1100 = vmatpush1.msra.mxu0 0.0
      %1101 = vmatprep.subr.mxu0 0.0
      %1102 = vmatpush1.msra.mxu0 0.0
      %1103 = vmatprep.subr.mxu0 0.0
      %1104 = vmatpush1.msra.mxu0 0.0
      %1105 = vmatprep.subr.mxu0 0.0
      %1106 = vmatpush1.msra.mxu0 0.0
      %1107 = vmatprep.subr.mxu0 0.0
      %1108 = vmatpush1.msra.mxu0 0.0
      %1109 = vmatprep.subr.mxu0 %v1083
      %1110 = vmatpush1.msra.mxu0 %v1080
      %1111 = vmatprep.subr.mxu0 %v1011
      %1112 = vmatpush1.msra.mxu0 %v1010
      %1113 = vmatprep.subr.mxu0 %v1009
      %1114 = vmatpush1.msra.mxu0 %v1008
      %1115 = vmatprep.subr.mxu0 %v1007
      %1116 = vmatpush1.msra.mxu0 %v1006
      %1117 = vmatprep.subr.mxu0 0.0
      %1118 = vmatpush2.msra.mxu0 0.0
      %1119 = vmatprep.subr.mxu0 0.0
      %1120 = vmatpush2.msra.mxu0 0.0
      %1121 = vmatprep.subr.mxu0 0.0
      %1122 = vmatpush2.msra.mxu0 0.0
      %1123 = vmatprep.subr.mxu0 0.0
      %1124 = vmatpush2.msra.mxu0 0.0
      %1125 = vmatprep.subr.mxu0 0.0
      %1126 = vmatpush2.msra.mxu0 0.0
      %1127 = vmatprep.subr.mxu0 0.0
      %1128 = vmatpush2.msra.mxu0 0.0
      %1129 = vmatprep.subr.mxu0 0.0
      %1130 = vmatpush2.msra.mxu0 0.0
      %1131 = vmatprep.subr.mxu0 0.0
      %1132 = vmatpush2.msra.mxu0 0.0
      %1133 = vmatprep.subr.mxu0 0.0
      %1134 = vmatpush2.msra.mxu0 0.0
      %1135 = vmatprep.subr.mxu0 0.0
      %1136 = vmatpush2.msra.mxu0 0.0
      %1137 = vmatprep.subr.mxu0 0.0
      %1138 = vmatpush2.msra.mxu0 0.0
      %1139 = vmatprep.subr.mxu0 0.0
      %1140 = vmatpush2.msra.mxu0 0.0
      %1141 = vmatprep.subr.mxu0 0.0
      %1142 = vmatpush2.msra.mxu0 0.0
      %1143 = vmatprep.subr.mxu0 0.0
      %1144 = vmatpush2.msra.mxu0 0.0
      %1145 = vmatprep.subr.mxu0 0.0
      %1146 = vmatpush2.msra.mxu0 0.0
      %1147 = vmatprep.subr.mxu0 0.0
      %1148 = vmatpush2.msra.mxu0 0.0
      %1149 = vmatprep.mubr.f32.mxu0 0.0
      %1150 = vmatmul.mubr.f32.gmra.mxu0 %v1058
      %v1151 = vpop.f32.mrf.mxu0
      %v1152 = vadd.f32 %v1024, %v1151
      %v1153 = vpop.f32.mrf.mxu0
      %v1154 = vadd.f32 %v1024, %v1153
      %1155 = vmatprep.mubr.f32.mxu0 0.0
      %1156 = vmatmul.mubr.f32.gmra.mxu0 %v1061
      %v1157 = vpop.f32.mrf.mxu0
      %v1158 = vadd.f32 %v1029, %v1157
      %v1159 = vpop.f32.mrf.mxu0
      %v1160 = vadd.f32 %v1029, %v1159
      %1161 = vmatprep.mubr.f32.mxu0 0.0
      %1162 = vmatmul.mubr.f32.gmra.mxu0 %v1064
      %v1163 = vpop.f32.mrf.mxu0
      %v1164 = vadd.f32 %v1034, %v1163
      %v1165 = vpop.f32.mrf.mxu0
      %v1166 = vadd.f32 %v1034, %v1165
      %1167 = vmatprep.mubr.f32.mxu0 0.0
      %1168 = vmatmul.mubr.f32.gmra.mxu0 %v1067
      %v1169 = vpop.f32.mrf.mxu0
      %v1170 = vadd.f32 %v1039, %v1169
      %v1171 = vpop.f32.mrf.mxu0
      %v1172 = vadd.f32 %v1039, %v1171
      %1173 = vmatprep.mubr.f32.mxu0 0.0
      %1174 = vmatmul.mubr.f32.gmra.mxu0 %v1070
      %v1175 = vpop.f32.mrf.mxu0
      %v1176 = vadd.f32 %v1044, %v1175
      %v1177 = vpop.f32.mrf.mxu0
      %v1178 = vadd.f32 %v1044, %v1177
      %1179 = vmatprep.mubr.f32.mxu0 0.0
      %1180 = vmatmul.mubr.f32.gmra.mxu0 %v1073
      %v1181 = vpop.f32.mrf.mxu0
      %v1182 = vadd.f32 %v1049, %v1181
      %v1183 = vpop.f32.mrf.mxu0
      %v1184 = vadd.f32 %v1049, %v1183
      %1185 = vmatprep.mubr.f32.mxu0 0.0
      %1186 = vmatmul.mubr.f32.gmra.mxu0 %v1076
      %v1187 = vpop.f32.mrf.mxu0
      %v1188 = vadd.f32 %v1054, %v1187
      %v1189 = vpop.f32.mrf.mxu0
      %v1190 = vadd.f32 %v1054, %v1189
      %1191 = vdwg.mxu0
      %vm1192 = vcmp.ge.f32.partialorder %v1152, 0.0
      %vm1193 = vcmp.ge.f32.partialorder %v1154, 0.0
      %vm1194 = vcmp.ge.f32.partialorder %v1158, 0.0
      %vm1195 = vcmp.ge.f32.partialorder %v1160, 0.0
      %vm1196 = vcmp.ge.f32.partialorder %v1164, 0.0
      %vm1197 = vcmp.ge.f32.partialorder %v1166, 0.0
      %vm1198 = vcmp.ge.f32.partialorder %v1170, 0.0
      %vm1199 = vcmp.ge.f32.partialorder %v1172, 0.0
      %vm1200 = vcmp.ge.f32.partialorder %v1176, 0.0
      %vm1201 = vcmp.ge.f32.partialorder %v1178, 0.0
      %vm1202 = vcmp.ge.f32.partialorder %v1182, 0.0
      %vm1203 = vcmp.ge.f32.partialorder %v1184, 0.0
      %vm1204 = vcmp.ge.f32.partialorder %v1188, 0.0
      %vm1205 = vcmp.ge.f32.partialorder %v1190, 0.0
      %1206 = vset.pattern.permute.xlu0 1
      %1207 = vperm.xlu0 %1206, %v1014
      %v1208 = vpop.permute.xlu0 %1207
      %1210 = vset.pattern.permute.xlu0 1
      %1211 = vperm.xlu0 %1210, %v1015
      %v1212 = vpop.permute.xlu0 %1211
      %1214 = vset.pattern.permute.xlu0 1
      %1215 = vperm.xlu0 %1214, %v1016
      %v1216 = vpop.permute.xlu0 %1215
      %1218 = vset.pattern.permute.xlu0 1
      %1219 = vperm.xlu0 %1218, %v1017
      %v1220 = vpop.permute.xlu0 %1219
      %1222 = vset.pattern.permute.xlu0 1
      %1223 = vperm.xlu0 %1222, %v1018
      %v1224 = vpop.permute.xlu0 %1223
      %1226 = vset.pattern.permute.xlu0 1
      %1227 = vperm.xlu0 %1226, %v1019
      %v1228 = vpop.permute.xlu0 %1227
      %1230 = vset.pattern.permute.xlu0 1
      %1231 = vperm.xlu0 %1230, %v1020
      %v1232 = vpop.permute.xlu0 %1231
      %v1234 = vmul.f32 %v1152, %v1208
      %v1235 = vmul.f32 %v1154, %v1208
      %v1236 = vmul.f32 %v1158, %v1212
      %v1237 = vmul.f32 %v1160, %v1212
      %v1238 = vmul.f32 %v1164, %v1216
      %v1239 = vmul.f32 %v1166, %v1216
      %v1240 = vmul.f32 %v1170, %v1220
      %v1241 = vmul.f32 %v1172, %v1220
      %v1242 = vmul.f32 %v1176, %v1224
      %v1243 = vmul.f32 %v1178, %v1224
      %v1244 = vmul.f32 %v1182, %v1228
      %v1245 = vmul.f32 %v1184, %v1228
      %v1246 = vmul.f32 %v1188, %v1232
      %v1247 = vmul.f32 %v1190, %v1232
      %v1248 = vsel %vm1192, %v1152, %v1234
      %v1249 = vsel %vm1193, %v1154, %v1235
      %v1250 = vsel %vm1194, %v1158, %v1236
      %v1251 = vsel %vm1195, %v1160, %v1237
      %v1252 = vsel %vm1196, %v1164, %v1238
      %v1253 = vsel %vm1197, %v1166, %v1239
      %v1254 = vsel %vm1198, %v1170, %v1240
      %v1255 = vsel %vm1199, %v1172, %v1241
      %v1256 = vsel %vm1200, %v1176, %v1242
      %v1257 = vsel %vm1201, %v1178, %v1243
      %v1258 = vsel %vm1202, %v1182, %v1244
      %v1259 = vsel %vm1203, %v1184, %v1245
      %v1260 = vsel %vm1204, %v1188, %v1246
      %v1261 = vsel %vm1205, %v1190, %v1247
      %v1262 = vld [vmem:[%s5] sm:$0xff]
      %v1263 = vld [vmem:[%s5 + $0x8] sm:$0xff]
      %v1264 = vld [vmem:[%s6] sm:$0xff]
      %v1265 = vld [vmem:[%s6 + $0x8] sm:$0xff]
      %1267 = vset.pattern.permute.xlu0 0
      %1268 = vperm.xlu0 %1267, %v1264
      %v1269 = vpop.permute.xlu0 %1268
      %1272 = vset.pattern.permute.xlu0 0
      %1273 = vperm.xlu0 %1272, %v1265
      %v1274 = vpop.permute.xlu0 %1273
      %vm1276 = vcmask 457728
      %v1278 = vsel %vm1276, %v1262, 0
      %v1281 = vsel %vm1276, %v1263, 0
      %1283 = vmatprep.subr.mxu0 0.0
      %1284 = vmatpush1.msra.mxu0 0.0
      %1285 = vmatprep.subr.mxu0 0.0
      %1286 = vmatpush1.msra.mxu0 0.0
      %1287 = vmatprep.subr.mxu0 0.0
      %1288 = vmatpush1.msra.mxu0 0.0
      %1289 = vmatprep.subr.mxu0 0.0
      %1290 = vmatpush1.msra.mxu0 0.0
      %1291 = vmatprep.subr.mxu0 0.0
      %1292 = vmatpush1.msra.mxu0 0.0
      %1293 = vmatprep.subr.mxu0 0.0
      %1294 = vmatpush1.msra.mxu0 0.0
      %1295 = vmatprep.subr.mxu0 0.0
      %1296 = vmatpush1.msra.mxu0 0.0
      %1297 = vmatprep.subr.mxu0 0.0
      %1298 = vmatpush1.msra.mxu0 0.0
      %1299 = vmatprep.subr.mxu0 0.0
      %1300 = vmatpush1.msra.mxu0 0.0
      %1301 = vmatprep.subr.mxu0 %v1261
      %1302 = vmatpush1.msra.mxu0 %v1260
      %1303 = vmatprep.subr.mxu0 %v1259
      %1304 = vmatpush1.msra.mxu0 %v1258
      %1305 = vmatprep.subr.mxu0 %v1257
      %1306 = vmatpush1.msra.mxu0 %v1256
      %1307 = vmatprep.subr.mxu0 %v1255
      %1308 = vmatpush1.msra.mxu0 %v1254
      %1309 = vmatprep.subr.mxu0 %v1253
      %1310 = vmatpush1.msra.mxu0 %v1252
      %1311 = vmatprep.subr.mxu0 %v1251
      %1312 = vmatpush1.msra.mxu0 %v1250
      %1313 = vmatprep.subr.mxu0 %v1249
      %1314 = vmatpush1.msra.mxu0 %v1248
      %1315 = vmatprep.subr.mxu0 0.0
      %1316 = vmatpush2.msra.mxu0 0.0
      %1317 = vmatprep.subr.mxu0 0.0
      %1318 = vmatpush2.msra.mxu0 0.0
      %1319 = vmatprep.subr.mxu0 0.0
      %1320 = vmatpush2.msra.mxu0 0.0
      %1321 = vmatprep.subr.mxu0 0.0
      %1322 = vmatpush2.msra.mxu0 0.0
      %1323 = vmatprep.subr.mxu0 0.0
      %1324 = vmatpush2.msra.mxu0 0.0
      %1325 = vmatprep.subr.mxu0 0.0
      %1326 = vmatpush2.msra.mxu0 0.0
      %1327 = vmatprep.subr.mxu0 0.0
      %1328 = vmatpush2.msra.mxu0 0.0
      %1329 = vmatprep.subr.mxu0 0.0
      %1330 = vmatpush2.msra.mxu0 0.0
      %1331 = vmatprep.subr.mxu0 0.0
      %1332 = vmatpush2.msra.mxu0 0.0
      %1333 = vmatprep.subr.mxu0 0.0
      %1334 = vmatpush2.msra.mxu0 0.0
      %1335 = vmatprep.subr.mxu0 0.0
      %1336 = vmatpush2.msra.mxu0 0.0
      %1337 = vmatprep.subr.mxu0 0.0
      %1338 = vmatpush2.msra.mxu0 0.0
      %1339 = vmatprep.subr.mxu0 0.0
      %1340 = vmatpush2.msra.mxu0 0.0
      %1341 = vmatprep.subr.mxu0 0.0
      %1342 = vmatpush2.msra.mxu0 0.0
      %1343 = vmatprep.subr.mxu0 0.0
      %1344 = vmatpush2.msra.mxu0 0.0
      %1345 = vmatprep.subr.mxu0 0.0
      %1346 = vmatpush2.msra.mxu0 0.0
      %1347 = vmatprep.mubr.f32.mxu0 0.0
      %1348 = vmatmul.mubr.f32.gmra.mxu0 %v1278
      %v1349 = vpop.f32.mrf.mxu0
      %v1350 = vadd.f32 %v1269, %v1349
      %v1351 = vpop.f32.mrf.mxu0
      %v1352 = vadd.f32 %v1269, %v1351
      %1353 = vmatprep.mubr.f32.mxu0 0.0
      %1354 = vmatmul.mubr.f32.gmra.mxu0 %v1281
      %v1355 = vpop.f32.mrf.mxu0
      %v1356 = vadd.f32 %v1274, %v1355
      %v1357 = vpop.f32.mrf.mxu0
      %v1358 = vadd.f32 %v1274, %v1357
      %1359 = vdwg.mxu0
      %vm1360 = vcmp.ge.f32.partialorder %v1350, 0.0
      %vm1361 = vcmp.ge.f32.partialorder %v1352, 0.0
      %vm1362 = vcmp.ge.f32.partialorder %v1356, 0.0
      %vm1363 = vcmp.ge.f32.partialorder %v1358, 0.0
      %1364 = vset.pattern.permute.xlu0 1
      %1365 = vperm.xlu0 %1364, %v1264
      %v1366 = vpop.permute.xlu0 %1365
      %1368 = vset.pattern.permute.xlu0 1
      %1369 = vperm.xlu0 %1368, %v1265
      %v1370 = vpop.permute.xlu0 %1369
      %v1372 = vmul.f32 %v1350, %v1366
      %v1373 = vmul.f32 %v1352, %v1366
      %v1374 = vmul.f32 %v1356, %v1370
      %v1375 = vmul.f32 %v1358, %v1370
      %v1376 = vsel %vm1360, %v1350, %v1372
      %v1377 = vsel %vm1361, %v1352, %v1373
      %v1378 = vsel %vm1362, %v1356, %v1374
      %v1379 = vsel %vm1363, %v1358, %v1375
      %v1380 = vld [vmem:[%s2] ss:$8 sm:$0x3]
      %v1382 = vlaneseq
      %v1383 = vshrl.u32 %v1382, 7
      %v1384 = vsub.s32 0, %v1383
      %v1385 = vrot.slane %v1380, %v1384
      %v1386 = vlaneseq
      %v1387 = vshrl.u32 %v1386, 7
      %v1388 = vsub.s32 1, %v1387
      %v1389 = vrot.slane %v1380, %v1388
      %1390 = vrot.lane.b32.xlu0 %v1385, 111
      %v1391 = vpop.permute.xlu0 %1390
      %1392 = vrot.lane.b32.xlu0 %v1389, 111
      %v1393 = vpop.permute.xlu0 %1392
      %v1394 = vsel %vm589, %v1391, %v1393
      %v1397 = vmul.f32 %v1376, %v1394
      %v1398 = vmul.f32 %v1377, %v1393
      %v1399 = vmul.f32 %v1378, %v1394
      %v1400 = vmul.f32 %v1379, %v1393
      %1405 = vrot.lane.b32.xlu0 %v1397, 17
      %v1406 = vpop.permute.xlu0 %1405
      %1407 = vrot.lane.b32.xlu0 %v1398, 17
      %v1408 = vpop.permute.xlu0 %1407
      %1409 = vrot.lane.b32.xlu0 %v1399, 17
      %v1410 = vpop.permute.xlu0 %1409
      %1411 = vrot.lane.b32.xlu0 %v1400, 17
      %v1412 = vpop.permute.xlu0 %1411
      %v1413 = vsel %vm597, %v1406, %v1408
      %v1414 = vsel %vm597, %v1410, %v1412
      %vm1419 = vcmask 1047688
      %1420 = vst.msk [vmem:[#allocation3] sm:$0xff] %vm1419, %v1406
      %1421 = vst [vmem:[#allocation3 + $0x8] sm:$0xff] %v1413
      %1422 = vst.msk [vmem:[#allocation3 + $0x10] sm:$0xff] %vm1419, %v1410
      %1423 = vst [vmem:[#allocation3 + $0x18] sm:$0xff] %v1414
      %1424 = vst.msk [vmem:[#allocation3] sm:$0xff] %vm597, 0.0
      %1425 = vst.msk [vmem:[#allocation3 + $0x10] sm:$0xff] %vm597, 0.0
      %s1426 = scalar_lea.vmem %s2, 1
      %v1427 = vld [vmem:[%s1426] ss:$8 sm:$0x3]
      %v1429 = vlaneseq
      %v1430 = vshrl.u32 %v1429, 7
      %v1431 = vsub.s32 0, %v1430
      %v1432 = vrot.slane %v1427, %v1431
      %v1433 = vlaneseq
      %v1434 = vshrl.u32 %v1433, 7
      %v1435 = vsub.s32 1, %v1434
      %v1436 = vrot.slane %v1427, %v1435
      %1437 = vrot.lane.b32.xlu0 %v1432, 112
      %v1438 = vpop.permute.xlu0 %1437
      %1439 = vrot.lane.b32.xlu0 %v1436, 112
      %v1440 = vpop.permute.xlu0 %1439
      %v1441 = vsel %vm613, %v1438, %v1440
      %v1444 = vmul.f32 %v1376, %v1441
      %v1445 = vmul.f32 %v1377, %v1440
      %v1446 = vmul.f32 %v1378, %v1441
      %v1447 = vmul.f32 %v1379, %v1440
      %1452 = vrot.lane.b32.xlu0 %v1444, 16
      %v1453 = vpop.permute.xlu0 %1452
      %1454 = vrot.lane.b32.xlu0 %v1445, 16
      %v1455 = vpop.permute.xlu0 %1454
      %1456 = vrot.lane.b32.xlu0 %v1446, 16
      %v1457 = vpop.permute.xlu0 %1456
      %1458 = vrot.lane.b32.xlu0 %v1447, 16
      %v1459 = vpop.permute.xlu0 %1458
      %v1460 = vsel %vm621, %v1453, %v1455
      %v1461 = vsel %vm621, %v1457, %v1459
      %vm1466 = vcmask 1047680
      %1467 = vst.msk [vmem:[#allocation3 + $0x20] sm:$0xff] %vm1466, %v1453
      %1468 = vst [vmem:[#allocation3 + $0x28] sm:$0xff] %v1460
      %1469 = vst.msk [vmem:[#allocation3 + $0x30] sm:$0xff] %vm1466, %v1457
      %1470 = vst [vmem:[#allocation3 + $0x38] sm:$0xff] %v1461
      %1471 = vst.msk [vmem:[#allocation3 + $0x20] sm:$0xff] %vm621, 0.0
      %1472 = vst.msk [vmem:[#allocation3 + $0x30] sm:$0xff] %vm621, 0.0
      %s1473 = scalar_lea.vmem %s2, 2
      %v1474 = vld [vmem:[%s1473] ss:$8 sm:$0x3]
      %v1476 = vlaneseq
      %v1477 = vshrl.u32 %v1476, 7
      %v1478 = vsub.s32 0, %v1477
      %v1479 = vrot.slane %v1474, %v1478
      %v1480 = vlaneseq
      %v1481 = vshrl.u32 %v1480, 7
      %v1482 = vsub.s32 1, %v1481
      %v1483 = vrot.slane %v1474, %v1482
      %1484 = vrot.lane.b32.xlu0 %v1479, 113
      %v1485 = vpop.permute.xlu0 %1484
      %1486 = vrot.lane.b32.xlu0 %v1483, 113
      %v1487 = vpop.permute.xlu0 %1486
      %v1488 = vsel %vm637, %v1485, %v1487
      %v1491 = vmul.f32 %v1376, %v1488
      %v1492 = vmul.f32 %v1377, %v1487
      %v1493 = vmul.f32 %v1378, %v1488
      %v1494 = vmul.f32 %v1379, %v1487
      %1499 = vrot.lane.b32.xlu0 %v1491, 15
      %v1500 = vpop.permute.xlu0 %1499
      %1501 = vrot.lane.b32.xlu0 %v1492, 15
      %v1502 = vpop.permute.xlu0 %1501
      %1503 = vrot.lane.b32.xlu0 %v1493, 15
      %v1504 = vpop.permute.xlu0 %1503
      %1505 = vrot.lane.b32.xlu0 %v1494, 15
      %v1506 = vpop.permute.xlu0 %1505
      %v1507 = vsel %vm645, %v1500, %v1502
      %v1508 = vsel %vm645, %v1504, %v1506
      %vm1513 = vcmask 1047672
      %1514 = vst.msk [vmem:[#allocation3 + $0x40] sm:$0xff] %vm1513, %v1500
      %1515 = vst [vmem:[#allocation3 + $0x48] sm:$0xff] %v1507
      %1516 = vst.msk [vmem:[#allocation3 + $0x50] sm:$0xff] %vm1513, %v1504
      %1517 = vst [vmem:[#allocation3 + $0x58] sm:$0xff] %v1508
      %1518 = vst.msk [vmem:[#allocation3 + $0x40] sm:$0xff] %vm645, 0.0
      %1519 = vst.msk [vmem:[#allocation3 + $0x50] sm:$0xff] %vm645, 0.0
      %s1520 = scalar_lea.vmem %s2, 3
      %v1521 = vld [vmem:[%s1520] ss:$8 sm:$0x3]
      %v1523 = vlaneseq
      %v1524 = vshrl.u32 %v1523, 7
      %v1525 = vsub.s32 0, %v1524
      %v1526 = vrot.slane %v1521, %v1525
      %v1527 = vlaneseq
      %v1528 = vshrl.u32 %v1527, 7
      %v1529 = vsub.s32 1, %v1528
      %v1530 = vrot.slane %v1521, %v1529
      %1531 = vrot.lane.b32.xlu0 %v1526, 127
      %v1532 = vpop.permute.xlu0 %1531
      %1533 = vrot.lane.b32.xlu0 %v1530, 127
      %v1534 = vpop.permute.xlu0 %1533
      %v1535 = vsel %vm709, %v1532, %v1534
      %v1538 = vmul.f32 %v1376, %v1535
      %v1539 = vmul.f32 %v1377, %v1534
      %v1540 = vmul.f32 %v1378, %v1535
      %v1541 = vmul.f32 %v1379, %v1534
      %1546 = vrot.lane.b32.xlu0 %v1538, 1
      %v1547 = vpop.permute.xlu0 %1546
      %1548 = vrot.lane.b32.xlu0 %v1539, 1
      %v1549 = vpop.permute.xlu0 %1548
      %1550 = vrot.lane.b32.xlu0 %v1540, 1
      %v1551 = vpop.permute.xlu0 %1550
      %1552 = vrot.lane.b32.xlu0 %v1541, 1
      %v1553 = vpop.permute.xlu0 %1552
      %v1554 = vsel %vm717, %v1547, %v1549
      %v1555 = vsel %vm717, %v1551, %v1553
      %vm1560 = vcmask 1047560
      %1561 = vst.msk [vmem:[#allocation3 + $0x60] sm:$0xff] %vm1560, %v1547
      %1562 = vst [vmem:[#allocation3 + $0x68] sm:$0xff] %v1554
      %1563 = vst.msk [vmem:[#allocation3 + $0x70] sm:$0xff] %vm1560, %v1551
      %1564 = vst [vmem:[#allocation3 + $0x78] sm:$0xff] %v1555
      %1565 = vst.msk [vmem:[#allocation3 + $0x60] sm:$0xff] %vm717, 0.0
      %1566 = vst.msk [vmem:[#allocation3 + $0x70] sm:$0xff] %vm717, 0.0
      %s1567 = scalar_lea.vmem %s2, 4
      %v1568 = vld [vmem:[%s1567] ss:$8 sm:$0x3]
      %v1570 = vlaneseq
      %v1571 = vshrl.u32 %v1570, 7
      %v1572 = vsub.s32 0, %v1571
      %v1573 = vrot.slane %v1568, %v1572
      %v1574 = vlaneseq
      %v1575 = vshrl.u32 %v1574, 7
      %v1576 = vsub.s32 1, %v1575
      %v1577 = vrot.slane %v1568, %v1576
      %v1580 = vmul.f32 %v1376, %v1573
      %v1581 = vmul.f32 %v1377, %v1577
      %v1582 = vmul.f32 %v1378, %v1573
      %v1583 = vmul.f32 %v1379, %v1577
      %1584 = vst [vmem:[#allocation3 + $0x80] sm:$0xff] %v1580
      %1585 = vst [vmem:[#allocation3 + $0x88] sm:$0xff] %v1581
      %1586 = vst [vmem:[#allocation3 + $0x90] sm:$0xff] %v1582
      %1587 = vst [vmem:[#allocation3 + $0x98] sm:$0xff] %v1583
      %s1588 = scalar_lea.vmem %s2, 5
      %v1589 = vld [vmem:[%s1588] ss:$8 sm:$0x3]
      %v1591 = vlaneseq
      %v1592 = vshrl.u32 %v1591, 7
      %v1593 = vsub.s32 0, %v1592
      %v1594 = vrot.slane %v1589, %v1593
      %v1595 = vlaneseq
      %v1596 = vshrl.u32 %v1595, 7
      %v1597 = vsub.s32 1, %v1596
      %v1598 = vrot.slane %v1589, %v1597
      %1599 = vrot.lane.b32.xlu0 %v1594, 1
      %v1600 = vpop.permute.xlu0 %1599
      %1601 = vrot.lane.b32.xlu0 %v1598, 1
      %v1602 = vpop.permute.xlu0 %1601
      %v1603 = vsel %vm717, %v1600, %v1602
      %v1606 = vmul.f32 %v1376, %v1600
      %v1607 = vmul.f32 %v1377, %v1603
      %v1608 = vmul.f32 %v1378, %v1600
      %v1609 = vmul.f32 %v1379, %v1603
      %1614 = vrot.lane.b32.xlu0 %v1606, 127
      %v1615 = vpop.permute.xlu0 %1614
      %1616 = vrot.lane.b32.xlu0 %v1607, 127
      %v1617 = vpop.permute.xlu0 %1616
      %1618 = vrot.lane.b32.xlu0 %v1608, 127
      %v1619 = vpop.permute.xlu0 %1618
      %1620 = vrot.lane.b32.xlu0 %v1609, 127
      %v1621 = vpop.permute.xlu0 %1620
      %v1622 = vsel %vm709, %v1615, %v1617
      %v1623 = vsel %vm709, %v1619, %v1621
      %1628 = vst [vmem:[#allocation3 + $0xa0] sm:$0xff] %v1622
      %1629 = vst.msk [vmem:[#allocation3 + $0xa8] sm:$0xff] %vm709, %v1617
      %1630 = vst [vmem:[#allocation3 + $0xb0] sm:$0xff] %v1623
      %1631 = vst.msk [vmem:[#allocation3 + $0xb8] sm:$0xff] %vm709, %v1621
      %vm1632 = vcmask 1048568
      %1633 = vst.msk [vmem:[#allocation3 + $0xa8] sm:$0xff] %vm1632, 0.0
      %1634 = vst.msk [vmem:[#allocation3 + $0xb8] sm:$0xff] %vm1632, 0.0
      %s1635 = scalar_lea.vmem %s2, 6
      %v1636 = vld [vmem:[%s1635] ss:$8 sm:$0x3]
      %v1638 = vlaneseq
      %v1639 = vshrl.u32 %v1638, 7
      %v1640 = vsub.s32 0, %v1639
      %v1641 = vrot.slane %v1636, %v1640
      %v1642 = vlaneseq
      %v1643 = vshrl.u32 %v1642, 7
      %v1644 = vsub.s32 1, %v1643
      %v1645 = vrot.slane %v1636, %v1644
      %1646 = vrot.lane.b32.xlu0 %v1641, 15
      %v1647 = vpop.permute.xlu0 %1646
      %1648 = vrot.lane.b32.xlu0 %v1645, 15
      %v1649 = vpop.permute.xlu0 %1648
      %v1650 = vsel %vm645, %v1647, %v1649
      %v1653 = vmul.f32 %v1376, %v1647
      %v1654 = vmul.f32 %v1377, %v1650
      %v1655 = vmul.f32 %v1378, %v1647
      %v1656 = vmul.f32 %v1379, %v1650
      %1661 = vrot.lane.b32.xlu0 %v1653, 113
      %v1662 = vpop.permute.xlu0 %1661
      %1663 = vrot.lane.b32.xlu0 %v1654, 113
      %v1664 = vpop.permute.xlu0 %1663
      %1665 = vrot.lane.b32.xlu0 %v1655, 113
      %v1666 = vpop.permute.xlu0 %1665
      %1667 = vrot.lane.b32.xlu0 %v1656, 113
      %v1668 = vpop.permute.xlu0 %1667
      %v1669 = vsel %vm637, %v1662, %v1664
      %v1670 = vsel %vm637, %v1666, %v1668
      %1675 = vst [vmem:[#allocation3 + $0xc0] sm:$0xff] %v1669
      %1676 = vst.msk [vmem:[#allocation3 + $0xc8] sm:$0xff] %vm637, %v1664
      %1677 = vst [vmem:[#allocation3 + $0xd0] sm:$0xff] %v1670
      %1678 = vst.msk [vmem:[#allocation3 + $0xd8] sm:$0xff] %vm637, %v1668
      %vm1679 = vcmask 1048456
      %1680 = vst.msk [vmem:[#allocation3 + $0xc8] sm:$0xff] %vm1679, 0.0
      %1681 = vst.msk [vmem:[#allocation3 + $0xd8] sm:$0xff] %vm1679, 0.0
      %s1682 = scalar_lea.vmem %s2, 7
      %v1683 = vld [vmem:[%s1682] ss:$8 sm:$0x3]
      %v1685 = vlaneseq
      %v1686 = vshrl.u32 %v1685, 7
      %v1687 = vsub.s32 0, %v1686
      %v1688 = vrot.slane %v1683, %v1687
      %v1689 = vlaneseq
      %v1690 = vshrl.u32 %v1689, 7
      %v1691 = vsub.s32 1, %v1690
      %v1692 = vrot.slane %v1683, %v1691
      %1693 = vrot.lane.b32.xlu0 %v1688, 16
      %v1694 = vpop.permute.xlu0 %1693
      %1695 = vrot.lane.b32.xlu0 %v1692, 16
      %v1696 = vpop.permute.xlu0 %1695
      %v1697 = vsel %vm621, %v1694, %v1696
      %v1700 = vmul.f32 %v1376, %v1694
      %v1701 = vmul.f32 %v1377, %v1697
      %v1702 = vmul.f32 %v1378, %v1694
      %v1703 = vmul.f32 %v1379, %v1697
      %1708 = vrot.lane.b32.xlu0 %v1700, 112
      %v1709 = vpop.permute.xlu0 %1708
      %1710 = vrot.lane.b32.xlu0 %v1701, 112
      %v1711 = vpop.permute.xlu0 %1710
      %1712 = vrot.lane.b32.xlu0 %v1702, 112
      %v1713 = vpop.permute.xlu0 %1712
      %1714 = vrot.lane.b32.xlu0 %v1703, 112
      %v1715 = vpop.permute.xlu0 %1714
      %v1716 = vsel %vm613, %v1709, %v1711
      %v1717 = vsel %vm613, %v1713, %v1715
      %1722 = vst [vmem:[#allocation3 + $0xe0] sm:$0xff] %v1716
      %1723 = vst.msk [vmem:[#allocation3 + $0xe8] sm:$0xff] %vm613, %v1711
      %1724 = vst [vmem:[#allocation3 + $0xf0] sm:$0xff] %v1717
      %1725 = vst.msk [vmem:[#allocation3 + $0xf8] sm:$0xff] %vm613, %v1715
      %vm1726 = vcmask 1048448
      %1727 = vst.msk [vmem:[#allocation3 + $0xe8] sm:$0xff] %vm1726, 0.0
      %1728 = vst.msk [vmem:[#allocation3 + $0xf8] sm:$0xff] %vm1726, 0.0
      %s1729 = scalar_lea.vmem %s2, 16
      %v1730 = vld [vmem:[%s1729] ss:$8 sm:$0x3]
      %v1732 = vlaneseq
      %v1733 = vshrl.u32 %v1732, 7
      %v1734 = vsub.s32 0, %v1733
      %v1735 = vrot.slane %v1730, %v1734
      %v1736 = vlaneseq
      %v1737 = vshrl.u32 %v1736, 7
      %v1738 = vsub.s32 1, %v1737
      %v1739 = vrot.slane %v1730, %v1738
      %1740 = vrot.lane.b32.xlu0 %v1735, 17
      %v1741 = vpop.permute.xlu0 %1740
      %1742 = vrot.lane.b32.xlu0 %v1739, 17
      %v1743 = vpop.permute.xlu0 %1742
      %v1744 = vsel %vm597, %v1741, %v1743
      %v1747 = vmul.f32 %v1376, %v1741
      %v1748 = vmul.f32 %v1377, %v1744
      %v1749 = vmul.f32 %v1378, %v1741
      %v1750 = vmul.f32 %v1379, %v1744
      %1755 = vrot.lane.b32.xlu0 %v1747, 111
      %v1756 = vpop.permute.xlu0 %1755
      %1757 = vrot.lane.b32.xlu0 %v1748, 111
      %v1758 = vpop.permute.xlu0 %1757
      %1759 = vrot.lane.b32.xlu0 %v1749, 111
      %v1760 = vpop.permute.xlu0 %1759
      %1761 = vrot.lane.b32.xlu0 %v1750, 111
      %v1762 = vpop.permute.xlu0 %1761
      %v1763 = vsel %vm589, %v1756, %v1758
      %v1764 = vsel %vm589, %v1760, %v1762
      %1769 = vst [vmem:[#allocation3 + $0x100] sm:$0xff] %v1763
      %1770 = vst.msk [vmem:[#allocation3 + $0x108] sm:$0xff] %vm589, %v1758
      %1771 = vst [vmem:[#allocation3 + $0x110] sm:$0xff] %v1764
      %1772 = vst.msk [vmem:[#allocation3 + $0x118] sm:$0xff] %vm589, %v1762
      %vm1773 = vcmask 1048440
      %1774 = vst.msk [vmem:[#allocation3 + $0x108] sm:$0xff] %vm1773, 0.0
      %1775 = vst.msk [vmem:[#allocation3 + $0x118] sm:$0xff] %vm1773, 0.0
      %v1776 = vld [vmem:[%s7] sm:$0xff]
      %v1777 = vld [vmem:[%s7 + $0x8] sm:$0xff]
      %v1778 = vld [vmem:[%s7 + $0x10] sm:$0xff]
      %v1779 = vld [vmem:[%s7 + $0x18] sm:$0xff]
      %v1780 = vld [vmem:[#allocation3] sm:$0xff]
      %v1781 = vld [vmem:[#allocation3 + $0x8] sm:$0xff]
      %v1782 = vld [vmem:[#allocation3 + $0x10] sm:$0xff]
      %v1783 = vld [vmem:[#allocation3 + $0x18] sm:$0xff]
      %v1784 = vld [vmem:[#allocation3 + $0x20] sm:$0xff]
      %v1785 = vld [vmem:[#allocation3 + $0x28] sm:$0xff]
      %v1786 = vld [vmem:[#allocation3 + $0x30] sm:$0xff]
      %v1787 = vld [vmem:[#allocation3 + $0x38] sm:$0xff]
      %v1788 = vld [vmem:[#allocation3 + $0x40] sm:$0xff]
      %v1789 = vld [vmem:[#allocation3 + $0x48] sm:$0xff]
      %v1790 = vld [vmem:[#allocation3 + $0x50] sm:$0xff]
      %v1791 = vld [vmem:[#allocation3 + $0x58] sm:$0xff]
      %v1792 = vld [vmem:[#allocation3 + $0x60] sm:$0xff]
      %v1793 = vld [vmem:[#allocation3 + $0x68] sm:$0xff]
      %v1794 = vld [vmem:[#allocation3 + $0x70] sm:$0xff]
      %v1795 = vld [vmem:[#allocation3 + $0x78] sm:$0xff]
      %v1796 = vld [vmem:[#allocation3 + $0x80] sm:$0xff]
      %v1797 = vld [vmem:[#allocation3 + $0x88] sm:$0xff]
      %v1798 = vld [vmem:[#allocation3 + $0x90] sm:$0xff]
      %v1799 = vld [vmem:[#allocation3 + $0x98] sm:$0xff]
      %v1800 = vld [vmem:[#allocation3 + $0xa0] sm:$0xff]
      %v1801 = vld [vmem:[#allocation3 + $0xa8] sm:$0xff]
      %v1802 = vld [vmem:[#allocation3 + $0xb0] sm:$0xff]
      %v1803 = vld [vmem:[#allocation3 + $0xb8] sm:$0xff]
      %v1804 = vld [vmem:[#allocation3 + $0xc0] sm:$0xff]
      %v1805 = vld [vmem:[#allocation3 + $0xc8] sm:$0xff]
      %v1806 = vld [vmem:[#allocation3 + $0xd0] sm:$0xff]
      %v1807 = vld [vmem:[#allocation3 + $0xd8] sm:$0xff]
      %v1808 = vld [vmem:[#allocation3 + $0xe0] sm:$0xff]
      %v1809 = vld [vmem:[#allocation3 + $0xe8] sm:$0xff]
      %v1810 = vld [vmem:[#allocation3 + $0xf0] sm:$0xff]
      %v1811 = vld [vmem:[#allocation3 + $0xf8] sm:$0xff]
      %v1812 = vld [vmem:[#allocation3 + $0x100] sm:$0xff]
      %v1813 = vld [vmem:[#allocation3 + $0x108] sm:$0xff]
      %v1814 = vld [vmem:[#allocation3 + $0x110] sm:$0xff]
      %v1815 = vld [vmem:[#allocation3 + $0x118] sm:$0xff]
      %v1816 = vld [vmem:[%s8] sm:$0xff]
      %v1817 = vld [vmem:[%s8 + $0x8] sm:$0xff]
      %1819 = vset.pattern.permute.xlu0 0
      %1820 = vperm.xlu0 %1819, %v1816
      %v1821 = vpop.permute.xlu0 %1820
      %1824 = vset.pattern.permute.xlu0 0
      %1825 = vperm.xlu0 %1824, %v1817
      %v1826 = vpop.permute.xlu0 %1825
      %v1829 = vsel %vm621, %v1777, 0
      %v1832 = vsel %vm621, %v1779, 0
      %1834 = vmatprep.subr.mxu0 %v1811
      %1835 = vmatpush1.msra.mxu0 %v1810
      %1836 = vmatprep.subr.mxu0 %v1809
      %1837 = vmatpush1.msra.mxu0 %v1808
      %1838 = vmatprep.subr.mxu0 %v1807
      %1839 = vmatpush1.msra.mxu0 %v1806
      %1840 = vmatprep.subr.mxu0 %v1805
      %1841 = vmatpush1.msra.mxu0 %v1804
      %1842 = vmatprep.subr.mxu0 %v1803
      %1843 = vmatpush1.msra.mxu0 %v1802
      %1844 = vmatprep.subr.mxu0 %v1801
      %1845 = vmatpush1.msra.mxu0 %v1800
      %1846 = vmatprep.subr.mxu0 %v1799
      %1847 = vmatpush1.msra.mxu0 %v1798
      %1848 = vmatprep.subr.mxu0 %v1797
      %1849 = vmatpush1.msra.mxu0 %v1796
      %1850 = vmatprep.subr.mxu0 %v1795
      %1851 = vmatpush1.msra.mxu0 %v1794
      %1852 = vmatprep.subr.mxu0 %v1793
      %1853 = vmatpush1.msra.mxu0 %v1792
      %1854 = vmatprep.subr.mxu0 %v1791
      %1855 = vmatpush1.msra.mxu0 %v1790
      %1856 = vmatprep.subr.mxu0 %v1789
      %1857 = vmatpush1.msra.mxu0 %v1788
      %1858 = vmatprep.subr.mxu0 %v1787
      %1859 = vmatpush1.msra.mxu0 %v1786
      %1860 = vmatprep.subr.mxu0 %v1785
      %1861 = vmatpush1.msra.mxu0 %v1784
      %1862 = vmatprep.subr.mxu0 %v1783
      %1863 = vmatpush1.msra.mxu0 %v1782
      %1864 = vmatprep.subr.mxu0 %v1781
      %1865 = vmatpush1.msra.mxu0 %v1780
      %1866 = vmatprep.subr.mxu0 0.0
      %1867 = vmatpush2.msra.mxu0 0.0
      %1868 = vmatprep.subr.mxu0 0.0
      %1869 = vmatpush2.msra.mxu0 0.0
      %1870 = vmatprep.subr.mxu0 0.0
      %1871 = vmatpush2.msra.mxu0 0.0
      %1872 = vmatprep.subr.mxu0 0.0
      %1873 = vmatpush2.msra.mxu0 0.0
      %1874 = vmatprep.subr.mxu0 0.0
      %1875 = vmatpush2.msra.mxu0 0.0
      %1876 = vmatprep.subr.mxu0 0.0
      %1877 = vmatpush2.msra.mxu0 0.0
      %1878 = vmatprep.subr.mxu0 0.0
      %1879 = vmatpush2.msra.mxu0 0.0
      %1880 = vmatprep.subr.mxu0 0.0
      %1881 = vmatpush2.msra.mxu0 0.0
      %1882 = vmatprep.subr.mxu0 0.0
      %1883 = vmatpush2.msra.mxu0 0.0
      %1884 = vmatprep.subr.mxu0 0.0
      %1885 = vmatpush2.msra.mxu0 0.0
      %1886 = vmatprep.subr.mxu0 0.0
      %1887 = vmatpush2.msra.mxu0 0.0
      %1888 = vmatprep.subr.mxu0 0.0
      %1889 = vmatpush2.msra.mxu0 0.0
      %1890 = vmatprep.subr.mxu0 0.0
      %1891 = vmatpush2.msra.mxu0 0.0
      %1892 = vmatprep.subr.mxu0 0.0
      %1893 = vmatpush2.msra.mxu0 0.0
      %1894 = vmatprep.subr.mxu0 %v1815
      %1895 = vmatpush2.msra.mxu0 %v1814
      %1896 = vmatprep.subr.mxu0 %v1813
      %1897 = vmatpush2.msra.mxu0 %v1812
      %1898 = vmatprep.mubr.f32.mxu0 %v1829
      %1899 = vmatmul.mubr.f32.gmra.mxu0 %v1776
      %v1900 = vpop.f32.mrf.mxu0
      %v1901 = vadd.f32 %v1821, %v1900
      %v1902 = vpop.f32.mrf.mxu0
      %v1903 = vadd.f32 %v1821, %v1902
      %1904 = vmatprep.mubr.f32.mxu0 %v1832
      %1905 = vmatmul.mubr.f32.gmra.mxu0 %v1778
      %v1906 = vpop.f32.mrf.mxu0
      %v1907 = vadd.f32 %v1826, %v1906
      %v1908 = vpop.f32.mrf.mxu0
      %v1909 = vadd.f32 %v1826, %v1908
      %1910 = vdwg.mxu0
      %vm1911 = vcmp.ge.f32.partialorder %v1901, 0.0
      %vm1912 = vcmp.ge.f32.partialorder %v1903, 0.0
      %vm1913 = vcmp.ge.f32.partialorder %v1907, 0.0
      %vm1914 = vcmp.ge.f32.partialorder %v1909, 0.0
      %1915 = vset.pattern.permute.xlu0 1
      %1916 = vperm.xlu0 %1915, %v1816
      %v1917 = vpop.permute.xlu0 %1916
      %1919 = vset.pattern.permute.xlu0 1
      %1920 = vperm.xlu0 %1919, %v1817
      %v1921 = vpop.permute.xlu0 %1920
      %v1923 = vmul.f32 %v1901, %v1917
      %v1924 = vmul.f32 %v1903, %v1917
      %v1925 = vmul.f32 %v1907, %v1921
      %v1926 = vmul.f32 %v1909, %v1921
      %v1927 = vsel %vm1911, %v1901, %v1923
      %v1928 = vsel %vm1912, %v1903, %v1924
      %v1929 = vsel %vm1913, %v1907, %v1925
      %v1930 = vsel %vm1914, %v1909, %v1926
      %v1931 = vld [vmem:[%s2] ss:$8 sm:$0x3]
      %v1933 = vlaneseq
      %v1934 = vshrl.u32 %v1933, 7
      %v1935 = vsub.s32 0, %v1934
      %v1936 = vrot.slane %v1931, %v1935
      %v1937 = vlaneseq
      %v1938 = vshrl.u32 %v1937, 7
      %v1939 = vsub.s32 1, %v1938
      %v1940 = vrot.slane %v1931, %v1939
      %1941 = vrot.lane.b32.xlu0 %v1936, 111
      %v1942 = vpop.permute.xlu0 %1941
      %1943 = vrot.lane.b32.xlu0 %v1940, 111
      %v1944 = vpop.permute.xlu0 %1943
      %v1945 = vsel %vm589, %v1942, %v1944
      %v1948 = vmul.f32 %v1927, %v1945
      %v1949 = vmul.f32 %v1928, %v1944
      %v1950 = vmul.f32 %v1929, %v1945
      %v1951 = vmul.f32 %v1930, %v1944
      %1956 = vrot.lane.b32.xlu0 %v1948, 17
      %v1957 = vpop.permute.xlu0 %1956
      %1958 = vrot.lane.b32.xlu0 %v1949, 17
      %v1959 = vpop.permute.xlu0 %1958
      %1960 = vrot.lane.b32.xlu0 %v1950, 17
      %v1961 = vpop.permute.xlu0 %1960
      %1962 = vrot.lane.b32.xlu0 %v1951, 17
      %v1963 = vpop.permute.xlu0 %1962
      %v1964 = vsel %vm597, %v1957, %v1959
      %v1965 = vsel %vm597, %v1961, %v1963
      %1970 = vst.msk [vmem:[#allocation3] sm:$0xff] %vm1419, %v1957
      %1971 = vst [vmem:[#allocation3 + $0x8] sm:$0xff] %v1964
      %1972 = vst.msk [vmem:[#allocation3 + $0x10] sm:$0xff] %vm1419, %v1961
      %1973 = vst [vmem:[#allocation3 + $0x18] sm:$0xff] %v1965
      %1974 = vst.msk [vmem:[#allocation3] sm:$0xff] %vm597, 0.0
      %1975 = vst.msk [vmem:[#allocation3 + $0x10] sm:$0xff] %vm597, 0.0
      %v1976 = vld [vmem:[%s1426] ss:$8 sm:$0x3]
      %v1978 = vlaneseq
      %v1979 = vshrl.u32 %v1978, 7
      %v1980 = vsub.s32 0, %v1979
      %v1981 = vrot.slane %v1976, %v1980
      %v1982 = vlaneseq
      %v1983 = vshrl.u32 %v1982, 7
      %v1984 = vsub.s32 1, %v1983
      %v1985 = vrot.slane %v1976, %v1984
      %1986 = vrot.lane.b32.xlu0 %v1981, 112
      %v1987 = vpop.permute.xlu0 %1986
      %1988 = vrot.lane.b32.xlu0 %v1985, 112
      %v1989 = vpop.permute.xlu0 %1988
      %v1990 = vsel %vm613, %v1987, %v1989
      %v1993 = vmul.f32 %v1927, %v1990
      %v1994 = vmul.f32 %v1928, %v1989
      %v1995 = vmul.f32 %v1929, %v1990
      %v1996 = vmul.f32 %v1930, %v1989
      %2001 = vrot.lane.b32.xlu0 %v1993, 16
      %v2002 = vpop.permute.xlu0 %2001
      %2003 = vrot.lane.b32.xlu0 %v1994, 16
      %v2004 = vpop.permute.xlu0 %2003
      %2005 = vrot.lane.b32.xlu0 %v1995, 16
      %v2006 = vpop.permute.xlu0 %2005
      %2007 = vrot.lane.b32.xlu0 %v1996, 16
      %v2008 = vpop.permute.xlu0 %2007
      %v2009 = vsel %vm621, %v2002, %v2004
      %v2010 = vsel %vm621, %v2006, %v2008
      %2015 = vst.msk [vmem:[#allocation3 + $0x20] sm:$0xff] %vm1466, %v2002
      %2016 = vst [vmem:[#allocation3 + $0x28] sm:$0xff] %v2009
      %2017 = vst.msk [vmem:[#allocation3 + $0x30] sm:$0xff] %vm1466, %v2006
      %2018 = vst [vmem:[#allocation3 + $0x38] sm:$0xff] %v2010
      %2019 = vst.msk [vmem:[#allocation3 + $0x20] sm:$0xff] %vm621, 0.0
      %2020 = vst.msk [vmem:[#allocation3 + $0x30] sm:$0xff] %vm621, 0.0
      %v2021 = vld [vmem:[%s1473] ss:$8 sm:$0x3]
      %v2023 = vlaneseq
      %v2024 = vshrl.u32 %v2023, 7
      %v2025 = vsub.s32 0, %v2024
      %v2026 = vrot.slane %v2021, %v2025
      %v2027 = vlaneseq
      %v2028 = vshrl.u32 %v2027, 7
      %v2029 = vsub.s32 1, %v2028
      %v2030 = vrot.slane %v2021, %v2029
      %2031 = vrot.lane.b32.xlu0 %v2026, 113
      %v2032 = vpop.permute.xlu0 %2031
      %2033 = vrot.lane.b32.xlu0 %v2030, 113
      %v2034 = vpop.permute.xlu0 %2033
      %v2035 = vsel %vm637, %v2032, %v2034
      %v2038 = vmul.f32 %v1927, %v2035
      %v2039 = vmul.f32 %v1928, %v2034
      %v2040 = vmul.f32 %v1929, %v2035
      %v2041 = vmul.f32 %v1930, %v2034
      %2046 = vrot.lane.b32.xlu0 %v2038, 15
      %v2047 = vpop.permute.xlu0 %2046
      %2048 = vrot.lane.b32.xlu0 %v2039, 15
      %v2049 = vpop.permute.xlu0 %2048
      %2050 = vrot.lane.b32.xlu0 %v2040, 15
      %v2051 = vpop.permute.xlu0 %2050
      %2052 = vrot.lane.b32.xlu0 %v2041, 15
      %v2053 = vpop.permute.xlu0 %2052
      %v2054 = vsel %vm645, %v2047, %v2049
      %v2055 = vsel %vm645, %v2051, %v2053
      %2060 = vst.msk [vmem:[#allocation3 + $0x40] sm:$0xff] %vm1513, %v2047
      %2061 = vst [vmem:[#allocation3 + $0x48] sm:$0xff] %v2054
      %2062 = vst.msk [vmem:[#allocation3 + $0x50] sm:$0xff] %vm1513, %v2051
      %2063 = vst [vmem:[#allocation3 + $0x58] sm:$0xff] %v2055
      %2064 = vst.msk [vmem:[#allocation3 + $0x40] sm:$0xff] %vm645, 0.0
      %2065 = vst.msk [vmem:[#allocation3 + $0x50] sm:$0xff] %vm645, 0.0
      %v2066 = vld [vmem:[%s1520] ss:$8 sm:$0x3]
      %v2068 = vlaneseq
      %v2069 = vshrl.u32 %v2068, 7
      %v2070 = vsub.s32 0, %v2069
      %v2071 = vrot.slane %v2066, %v2070
      %v2072 = vlaneseq
      %v2073 = vshrl.u32 %v2072, 7
      %v2074 = vsub.s32 1, %v2073
      %v2075 = vrot.slane %v2066, %v2074
      %2076 = vrot.lane.b32.xlu0 %v2071, 127
      %v2077 = vpop.permute.xlu0 %2076
      %2078 = vrot.lane.b32.xlu0 %v2075, 127
      %v2079 = vpop.permute.xlu0 %2078
      %v2080 = vsel %vm709, %v2077, %v2079
      %v2083 = vmul.f32 %v1927, %v2080
      %v2084 = vmul.f32 %v1928, %v2079
      %v2085 = vmul.f32 %v1929, %v2080
      %v2086 = vmul.f32 %v1930, %v2079
      %2091 = vrot.lane.b32.xlu0 %v2083, 1
      %v2092 = vpop.permute.xlu0 %2091
      %2093 = vrot.lane.b32.xlu0 %v2084, 1
      %v2094 = vpop.permute.xlu0 %2093
      %2095 = vrot.lane.b32.xlu0 %v2085, 1
      %v2096 = vpop.permute.xlu0 %2095
      %2097 = vrot.lane.b32.xlu0 %v2086, 1
      %v2098 = vpop.permute.xlu0 %2097
      %v2099 = vsel %vm717, %v2092, %v2094
      %v2100 = vsel %vm717, %v2096, %v2098
      %2105 = vst.msk [vmem:[#allocation3 + $0x60] sm:$0xff] %vm1560, %v2092
      %2106 = vst [vmem:[#allocation3 + $0x68] sm:$0xff] %v2099
      %2107 = vst.msk [vmem:[#allocation3 + $0x70] sm:$0xff] %vm1560, %v2096
      %2108 = vst [vmem:[#allocation3 + $0x78] sm:$0xff] %v2100
      %2109 = vst.msk [vmem:[#allocation3 + $0x60] sm:$0xff] %vm717, 0.0
      %2110 = vst.msk [vmem:[#allocation3 + $0x70] sm:$0xff] %vm717, 0.0
      %v2111 = vld [vmem:[%s1567] ss:$8 sm:$0x3]
      %v2113 = vlaneseq
      %v2114 = vshrl.u32 %v2113, 7
      %v2115 = vsub.s32 0, %v2114
      %v2116 = vrot.slane %v2111, %v2115
      %v2117 = vlaneseq
      %v2118 = vshrl.u32 %v2117, 7
      %v2119 = vsub.s32 1, %v2118
      %v2120 = vrot.slane %v2111, %v2119
      %v2123 = vmul.f32 %v1927, %v2116
      %v2124 = vmul.f32 %v1928, %v2120
      %v2125 = vmul.f32 %v1929, %v2116
      %v2126 = vmul.f32 %v1930, %v2120
      %2127 = vst [vmem:[#allocation3 + $0x80] sm:$0xff] %v2123
      %2128 = vst [vmem:[#allocation3 + $0x88] sm:$0xff] %v2124
      %2129 = vst [vmem:[#allocation3 + $0x90] sm:$0xff] %v2125
      %2130 = vst [vmem:[#allocation3 + $0x98] sm:$0xff] %v2126
      %v2131 = vld [vmem:[%s1588] ss:$8 sm:$0x3]
      %v2133 = vlaneseq
      %v2134 = vshrl.u32 %v2133, 7
      %v2135 = vsub.s32 0, %v2134
      %v2136 = vrot.slane %v2131, %v2135
      %v2137 = vlaneseq
      %v2138 = vshrl.u32 %v2137, 7
      %v2139 = vsub.s32 1, %v2138
      %v2140 = vrot.slane %v2131, %v2139
      %2141 = vrot.lane.b32.xlu0 %v2136, 1
      %v2142 = vpop.permute.xlu0 %2141
      %2143 = vrot.lane.b32.xlu0 %v2140, 1
      %v2144 = vpop.permute.xlu0 %2143
      %v2145 = vsel %vm717, %v2142, %v2144
      %v2148 = vmul.f32 %v1927, %v2142
      %v2149 = vmul.f32 %v1928, %v2145
      %v2150 = vmul.f32 %v1929, %v2142
      %v2151 = vmul.f32 %v1930, %v2145
      %2156 = vrot.lane.b32.xlu0 %v2148, 127
      %v2157 = vpop.permute.xlu0 %2156
      %2158 = vrot.lane.b32.xlu0 %v2149, 127
      %v2159 = vpop.permute.xlu0 %2158
      %2160 = vrot.lane.b32.xlu0 %v2150, 127
      %v2161 = vpop.permute.xlu0 %2160
      %2162 = vrot.lane.b32.xlu0 %v2151, 127
      %v2163 = vpop.permute.xlu0 %2162
      %v2164 = vsel %vm709, %v2157, %v2159
      %v2165 = vsel %vm709, %v2161, %v2163
      %2170 = vst [vmem:[#allocation3 + $0xa0] sm:$0xff] %v2164
      %2171 = vst.msk [vmem:[#allocation3 + $0xa8] sm:$0xff] %vm709, %v2159
      %2172 = vst [vmem:[#allocation3 + $0xb0] sm:$0xff] %v2165
      %2173 = vst.msk [vmem:[#allocation3 + $0xb8] sm:$0xff] %vm709, %v2163
      %2174 = vst.msk [vmem:[#allocation3 + $0xa8] sm:$0xff] %vm1632, 0.0
      %2175 = vst.msk [vmem:[#allocation3 + $0xb8] sm:$0xff] %vm1632, 0.0
      %v2176 = vld [vmem:[%s1635] ss:$8 sm:$0x3]
      %v2178 = vlaneseq
      %v2179 = vshrl.u32 %v2178, 7
      %v2180 = vsub.s32 0, %v2179
      %v2181 = vrot.slane %v2176, %v2180
      %v2182 = vlaneseq
      %v2183 = vshrl.u32 %v2182, 7
      %v2184 = vsub.s32 1, %v2183
      %v2185 = vrot.slane %v2176, %v2184
      %2186 = vrot.lane.b32.xlu0 %v2181, 15
      %v2187 = vpop.permute.xlu0 %2186
      %2188 = vrot.lane.b32.xlu0 %v2185, 15
      %v2189 = vpop.permute.xlu0 %2188
      %v2190 = vsel %vm645, %v2187, %v2189
      %v2193 = vmul.f32 %v1927, %v2187
      %v2194 = vmul.f32 %v1928, %v2190
      %v2195 = vmul.f32 %v1929, %v2187
      %v2196 = vmul.f32 %v1930, %v2190
      %2201 = vrot.lane.b32.xlu0 %v2193, 113
      %v2202 = vpop.permute.xlu0 %2201
      %2203 = vrot.lane.b32.xlu0 %v2194, 113
      %v2204 = vpop.permute.xlu0 %2203
      %2205 = vrot.lane.b32.xlu0 %v2195, 113
      %v2206 = vpop.permute.xlu0 %2205
      %2207 = vrot.lane.b32.xlu0 %v2196, 113
      %v2208 = vpop.permute.xlu0 %2207
      %v2209 = vsel %vm637, %v2202, %v2204
      %v2210 = vsel %vm637, %v2206, %v2208
      %2215 = vst [vmem:[#allocation3 + $0xc0] sm:$0xff] %v2209
      %2216 = vst.msk [vmem:[#allocation3 + $0xc8] sm:$0xff] %vm637, %v2204
      %2217 = vst [vmem:[#allocation3 + $0xd0] sm:$0xff] %v2210
      %2218 = vst.msk [vmem:[#allocation3 + $0xd8] sm:$0xff] %vm637, %v2208
      %2219 = vst.msk [vmem:[#allocation3 + $0xc8] sm:$0xff] %vm1679, 0.0
      %2220 = vst.msk [vmem:[#allocation3 + $0xd8] sm:$0xff] %vm1679, 0.0
      %v2221 = vld [vmem:[%s1682] ss:$8 sm:$0x3]
      %v2223 = vlaneseq
      %v2224 = vshrl.u32 %v2223, 7
      %v2225 = vsub.s32 0, %v2224
      %v2226 = vrot.slane %v2221, %v2225
      %v2227 = vlaneseq
      %v2228 = vshrl.u32 %v2227, 7
      %v2229 = vsub.s32 1, %v2228
      %v2230 = vrot.slane %v2221, %v2229
      %2231 = vrot.lane.b32.xlu0 %v2226, 16
      %v2232 = vpop.permute.xlu0 %2231
      %2233 = vrot.lane.b32.xlu0 %v2230, 16
      %v2234 = vpop.permute.xlu0 %2233
      %v2235 = vsel %vm621, %v2232, %v2234
      %v2238 = vmul.f32 %v1927, %v2232
      %v2239 = vmul.f32 %v1928, %v2235
      %v2240 = vmul.f32 %v1929, %v2232
      %v2241 = vmul.f32 %v1930, %v2235
      %2246 = vrot.lane.b32.xlu0 %v2238, 112
      %v2247 = vpop.permute.xlu0 %2246
      %2248 = vrot.lane.b32.xlu0 %v2239, 112
      %v2249 = vpop.permute.xlu0 %2248
      %2250 = vrot.lane.b32.xlu0 %v2240, 112
      %v2251 = vpop.permute.xlu0 %2250
      %2252 = vrot.lane.b32.xlu0 %v2241, 112
      %v2253 = vpop.permute.xlu0 %2252
      %v2254 = vsel %vm613, %v2247, %v2249
      %v2255 = vsel %vm613, %v2251, %v2253
      %2260 = vst [vmem:[#allocation3 + $0xe0] sm:$0xff] %v2254
      %2261 = vst.msk [vmem:[#allocation3 + $0xe8] sm:$0xff] %vm613, %v2249
      %2262 = vst [vmem:[#allocation3 + $0xf0] sm:$0xff] %v2255
      %2263 = vst.msk [vmem:[#allocation3 + $0xf8] sm:$0xff] %vm613, %v2253
      %2264 = vst.msk [vmem:[#allocation3 + $0xe8] sm:$0xff] %vm1726, 0.0
      %2265 = vst.msk [vmem:[#allocation3 + $0xf8] sm:$0xff] %vm1726, 0.0
      %v2266 = vld [vmem:[%s1729] ss:$8 sm:$0x3]
      %v2268 = vlaneseq
      %v2269 = vshrl.u32 %v2268, 7
      %v2270 = vsub.s32 0, %v2269
      %v2271 = vrot.slane %v2266, %v2270
      %v2272 = vlaneseq
      %v2273 = vshrl.u32 %v2272, 7
      %v2274 = vsub.s32 1, %v2273
      %v2275 = vrot.slane %v2266, %v2274
      %2276 = vrot.lane.b32.xlu0 %v2271, 17
      %v2277 = vpop.permute.xlu0 %2276
      %2278 = vrot.lane.b32.xlu0 %v2275, 17
      %v2279 = vpop.permute.xlu0 %2278
      %v2280 = vsel %vm597, %v2277, %v2279
      %v2283 = vmul.f32 %v1927, %v2277
      %v2284 = vmul.f32 %v1928, %v2280
      %v2285 = vmul.f32 %v1929, %v2277
      %v2286 = vmul.f32 %v1930, %v2280
      %2291 = vrot.lane.b32.xlu0 %v2283, 111
      %v2292 = vpop.permute.xlu0 %2291
      %2293 = vrot.lane.b32.xlu0 %v2284, 111
      %v2294 = vpop.permute.xlu0 %2293
      %2295 = vrot.lane.b32.xlu0 %v2285, 111
      %v2296 = vpop.permute.xlu0 %2295
      %2297 = vrot.lane.b32.xlu0 %v2286, 111
      %v2298 = vpop.permute.xlu0 %2297
      %v2299 = vsel %vm589, %v2292, %v2294
      %v2300 = vsel %vm589, %v2296, %v2298
      %2305 = vst [vmem:[#allocation3 + $0x100] sm:$0xff] %v2299
      %2306 = vst.msk [vmem:[#allocation3 + $0x108] sm:$0xff] %vm589, %v2294
      %2307 = vst [vmem:[#allocation3 + $0x110] sm:$0xff] %v2300
      %2308 = vst.msk [vmem:[#allocation3 + $0x118] sm:$0xff] %vm589, %v2298
      %2309 = vst.msk [vmem:[#allocation3 + $0x108] sm:$0xff] %vm1773, 0.0
      %2310 = vst.msk [vmem:[#allocation3 + $0x118] sm:$0xff] %vm1773, 0.0
      %s2311 = scalar_lea.vmem %s7, 32
      %v2312 = vld [vmem:[%s2311] sm:$0xff]
      %v2313 = vld [vmem:[%s2311 + $0x8] sm:$0xff]
      %v2314 = vld [vmem:[%s2311 + $0x10] sm:$0xff]
      %v2315 = vld [vmem:[%s2311 + $0x18] sm:$0xff]
      %v2316 = vld [vmem:[#allocation3] sm:$0xff]
      %v2317 = vld [vmem:[#allocation3 + $0x8] sm:$0xff]
      %v2318 = vld [vmem:[#allocation3 + $0x10] sm:$0xff]
      %v2319 = vld [vmem:[#allocation3 + $0x18] sm:$0xff]
      %v2320 = vld [vmem:[#allocation3 + $0x20] sm:$0xff]
      %v2321 = vld [vmem:[#allocation3 + $0x28] sm:$0xff]
      %v2322 = vld [vmem:[#allocation3 + $0x30] sm:$0xff]
      %v2323 = vld [vmem:[#allocation3 + $0x38] sm:$0xff]
      %v2324 = vld [vmem:[#allocation3 + $0x40] sm:$0xff]
      %v2325 = vld [vmem:[#allocation3 + $0x48] sm:$0xff]
      %v2326 = vld [vmem:[#allocation3 + $0x50] sm:$0xff]
      %v2327 = vld [vmem:[#allocation3 + $0x58] sm:$0xff]
      %v2328 = vld [vmem:[#allocation3 + $0x60] sm:$0xff]
      %v2329 = vld [vmem:[#allocation3 + $0x68] sm:$0xff]
      %v2330 = vld [vmem:[#allocation3 + $0x70] sm:$0xff]
      %v2331 = vld [vmem:[#allocation3 + $0x78] sm:$0xff]
      %v2332 = vld [vmem:[#allocation3 + $0x80] sm:$0xff]
      %v2333 = vld [vmem:[#allocation3 + $0x88] sm:$0xff]
      %v2334 = vld [vmem:[#allocation3 + $0x90] sm:$0xff]
      %v2335 = vld [vmem:[#allocation3 + $0x98] sm:$0xff]
      %v2336 = vld [vmem:[#allocation3 + $0xa0] sm:$0xff]
      %v2337 = vld [vmem:[#allocation3 + $0xa8] sm:$0xff]
      %v2338 = vld [vmem:[#allocation3 + $0xb0] sm:$0xff]
      %v2339 = vld [vmem:[#allocation3 + $0xb8] sm:$0xff]
      %v2340 = vld [vmem:[#allocation3 + $0xc0] sm:$0xff]
      %v2341 = vld [vmem:[#allocation3 + $0xc8] sm:$0xff]
      %v2342 = vld [vmem:[#allocation3 + $0xd0] sm:$0xff]
      %v2343 = vld [vmem:[#allocation3 + $0xd8] sm:$0xff]
      %v2344 = vld [vmem:[#allocation3 + $0xe0] sm:$0xff]
      %v2345 = vld [vmem:[#allocation3 + $0xe8] sm:$0xff]
      %v2346 = vld [vmem:[#allocation3 + $0xf0] sm:$0xff]
      %v2347 = vld [vmem:[#allocation3 + $0xf8] sm:$0xff]
      %v2348 = vld [vmem:[#allocation3 + $0x100] sm:$0xff]
      %v2349 = vld [vmem:[#allocation3 + $0x108] sm:$0xff]
      %v2350 = vld [vmem:[#allocation3 + $0x110] sm:$0xff]
      %v2351 = vld [vmem:[#allocation3 + $0x118] sm:$0xff]
      %s2352 = scalar_lea.vmem %s8, 16
      %v2353 = vld [vmem:[%s2352] sm:$0xff]
      %v2354 = vld [vmem:[%s2352 + $0x8] sm:$0xff]
      %2356 = vset.pattern.permute.xlu0 0
      %2357 = vperm.xlu0 %2356, %v2353
      %v2358 = vpop.permute.xlu0 %2357
      %2361 = vset.pattern.permute.xlu0 0
      %2362 = vperm.xlu0 %2361, %v2354
      %v2363 = vpop.permute.xlu0 %2362
      %v2366 = vsel %vm621, %v2313, 0
      %v2369 = vsel %vm621, %v2315, 0
      %2371 = vmatprep.subr.mxu0 %v2347
      %2372 = vmatpush1.msra.mxu0 %v2346
      %2373 = vmatprep.subr.mxu0 %v2345
      %2374 = vmatpush1.msra.mxu0 %v2344
      %2375 = vmatprep.subr.mxu0 %v2343
      %2376 = vmatpush1.msra.mxu0 %v2342
      %2377 = vmatprep.subr.mxu0 %v2341
      %2378 = vmatpush1.msra.mxu0 %v2340
      %2379 = vmatprep.subr.mxu0 %v2339
      %2380 = vmatpush1.msra.mxu0 %v2338
      %2381 = vmatprep.subr.mxu0 %v2337
      %2382 = vmatpush1.msra.mxu0 %v2336
      %2383 = vmatprep.subr.mxu0 %v2335
      %2384 = vmatpush1.msra.mxu0 %v2334
      %2385 = vmatprep.subr.mxu0 %v2333
      %2386 = vmatpush1.msra.mxu0 %v2332
      %2387 = vmatprep.subr.mxu0 %v2331
      %2388 = vmatpush1.msra.mxu0 %v2330
      %2389 = vmatprep.subr.mxu0 %v2329
      %2390 = vmatpush1.msra.mxu0 %v2328
      %2391 = vmatprep.subr.mxu0 %v2327
      %2392 = vmatpush1.msra.mxu0 %v2326
      %2393 = vmatprep.subr.mxu0 %v2325
      %2394 = vmatpush1.msra.mxu0 %v2324
      %2395 = vmatprep.subr.mxu0 %v2323
      %2396 = vmatpush1.msra.mxu0 %v2322
      %2397 = vmatprep.subr.mxu0 %v2321
      %2398 = vmatpush1.msra.mxu0 %v2320
      %2399 = vmatprep.subr.mxu0 %v2319
      %2400 = vmatpush1.msra.mxu0 %v2318
      %2401 = vmatprep.subr.mxu0 %v2317
      %2402 = vmatpush1.msra.mxu0 %v2316
      %2403 = vmatprep.subr.mxu0 0.0
      %2404 = vmatpush2.msra.mxu0 0.0
      %2405 = vmatprep.subr.mxu0 0.0
      %2406 = vmatpush2.msra.mxu0 0.0
      %2407 = vmatprep.subr.mxu0 0.0
      %2408 = vmatpush2.msra.mxu0 0.0
      %2409 = vmatprep.subr.mxu0 0.0
      %2410 = vmatpush2.msra.mxu0 0.0
      %2411 = vmatprep.subr.mxu0 0.0
      %2412 = vmatpush2.msra.mxu0 0.0
      %2413 = vmatprep.subr.mxu0 0.0
      %2414 = vmatpush2.msra.mxu0 0.0
      %2415 = vmatprep.subr.mxu0 0.0
      %2416 = vmatpush2.msra.mxu0 0.0
      %2417 = vmatprep.subr.mxu0 0.0
      %2418 = vmatpush2.msra.mxu0 0.0
      %2419 = vmatprep.subr.mxu0 0.0
      %2420 = vmatpush2.msra.mxu0 0.0
      %2421 = vmatprep.subr.mxu0 0.0
      %2422 = vmatpush2.msra.mxu0 0.0
      %2423 = vmatprep.subr.mxu0 0.0
      %2424 = vmatpush2.msra.mxu0 0.0
      %2425 = vmatprep.subr.mxu0 0.0
      %2426 = vmatpush2.msra.mxu0 0.0
      %2427 = vmatprep.subr.mxu0 0.0
      %2428 = vmatpush2.msra.mxu0 0.0
      %2429 = vmatprep.subr.mxu0 0.0
      %2430 = vmatpush2.msra.mxu0 0.0
      %2431 = vmatprep.subr.mxu0 %v2351
      %2432 = vmatpush2.msra.mxu0 %v2350
      %2433 = vmatprep.subr.mxu0 %v2349
      %2434 = vmatpush2.msra.mxu0 %v2348
      %2435 = vmatprep.mubr.f32.mxu0 %v2366
      %2436 = vmatmul.mubr.f32.gmra.mxu0 %v2312
      %v2437 = vpop.f32.mrf.mxu0
      %v2438 = vadd.f32 %v2358, %v2437
      %v2439 = vpop.f32.mrf.mxu0
      %v2440 = vadd.f32 %v2358, %v2439
      %2441 = vmatprep.mubr.f32.mxu0 %v2369
      %2442 = vmatmul.mubr.f32.gmra.mxu0 %v2314
      %v2443 = vpop.f32.mrf.mxu0
      %v2444 = vadd.f32 %v2363, %v2443
      %v2445 = vpop.f32.mrf.mxu0
      %v2446 = vadd.f32 %v2363, %v2445
      %2447 = vdwg.mxu0
      %vm2448 = vcmp.ge.f32.partialorder %v2438, 0.0
      %vm2449 = vcmp.ge.f32.partialorder %v2440, 0.0
      %vm2450 = vcmp.ge.f32.partialorder %v2444, 0.0
      %vm2451 = vcmp.ge.f32.partialorder %v2446, 0.0
      %2452 = vset.pattern.permute.xlu0 1
      %2453 = vperm.xlu0 %2452, %v2353
      %v2454 = vpop.permute.xlu0 %2453
      %2456 = vset.pattern.permute.xlu0 1
      %2457 = vperm.xlu0 %2456, %v2354
      %v2458 = vpop.permute.xlu0 %2457
      %v2460 = vmul.f32 %v2438, %v2454
      %v2461 = vmul.f32 %v2440, %v2454
      %v2462 = vmul.f32 %v2444, %v2458
      %v2463 = vmul.f32 %v2446, %v2458
      %v2464 = vsel %vm2448, %v2438, %v2460
      %v2465 = vsel %vm2449, %v2440, %v2461
      %v2466 = vsel %vm2450, %v2444, %v2462
      %v2467 = vsel %vm2451, %v2446, %v2463
      %v2468 = vld [vmem:[%s2] ss:$8 sm:$0x3]
      %v2470 = vlaneseq
      %v2471 = vshrl.u32 %v2470, 7
      %v2472 = vsub.s32 0, %v2471
      %v2473 = vrot.slane %v2468, %v2472
      %v2474 = vlaneseq
      %v2475 = vshrl.u32 %v2474, 7
      %v2476 = vsub.s32 1, %v2475
      %v2477 = vrot.slane %v2468, %v2476
      %2478 = vrot.lane.b32.xlu0 %v2473, 111
      %v2479 = vpop.permute.xlu0 %2478
      %2480 = vrot.lane.b32.xlu0 %v2477, 111
      %v2481 = vpop.permute.xlu0 %2480
      %v2482 = vsel %vm589, %v2479, %v2481
      %v2485 = vmul.f32 %v2464, %v2482
      %v2486 = vmul.f32 %v2465, %v2481
      %v2487 = vmul.f32 %v2466, %v2482
      %v2488 = vmul.f32 %v2467, %v2481
      %2493 = vrot.lane.b32.xlu0 %v2485, 17
      %v2494 = vpop.permute.xlu0 %2493
      %2495 = vrot.lane.b32.xlu0 %v2486, 17
      %v2496 = vpop.permute.xlu0 %2495
      %2497 = vrot.lane.b32.xlu0 %v2487, 17
      %v2498 = vpop.permute.xlu0 %2497
      %2499 = vrot.lane.b32.xlu0 %v2488, 17
      %v2500 = vpop.permute.xlu0 %2499
      %v2501 = vsel %vm597, %v2494, %v2496
      %v2502 = vsel %vm597, %v2498, %v2500
      %2507 = vst.msk [vmem:[#allocation3] sm:$0xff] %vm1419, %v2494
      %2508 = vst [vmem:[#allocation3 + $0x8] sm:$0xff] %v2501
      %2509 = vst.msk [vmem:[#allocation3 + $0x10] sm:$0xff] %vm1419, %v2498
      %2510 = vst [vmem:[#allocation3 + $0x18] sm:$0xff] %v2502
      %2511 = vst.msk [vmem:[#allocation3] sm:$0xff] %vm597, 0.0
      %2512 = vst.msk [vmem:[#allocation3 + $0x10] sm:$0xff] %vm597, 0.0
      %v2513 = vld [vmem:[%s1426] ss:$8 sm:$0x3]
      %v2515 = vlaneseq
      %v2516 = vshrl.u32 %v2515, 7
      %v2517 = vsub.s32 0, %v2516
      %v2518 = vrot.slane %v2513, %v2517
      %v2519 = vlaneseq
      %v2520 = vshrl.u32 %v2519, 7
      %v2521 = vsub.s32 1, %v2520
      %v2522 = vrot.slane %v2513, %v2521
      %2523 = vrot.lane.b32.xlu0 %v2518, 112
      %v2524 = vpop.permute.xlu0 %2523
      %2525 = vrot.lane.b32.xlu0 %v2522, 112
      %v2526 = vpop.permute.xlu0 %2525
      %v2527 = vsel %vm613, %v2524, %v2526
      %v2530 = vmul.f32 %v2464, %v2527
      %v2531 = vmul.f32 %v2465, %v2526
      %v2532 = vmul.f32 %v2466, %v2527
      %v2533 = vmul.f32 %v2467, %v2526
      %2538 = vrot.lane.b32.xlu0 %v2530, 16
      %v2539 = vpop.permute.xlu0 %2538
      %2540 = vrot.lane.b32.xlu0 %v2531, 16
      %v2541 = vpop.permute.xlu0 %2540
      %2542 = vrot.lane.b32.xlu0 %v2532, 16
      %v2543 = vpop.permute.xlu0 %2542
      %2544 = vrot.lane.b32.xlu0 %v2533, 16
      %v2545 = vpop.permute.xlu0 %2544
      %v2546 = vsel %vm621, %v2539, %v2541
      %v2547 = vsel %vm621, %v2543, %v2545
      %2552 = vst.msk [vmem:[#allocation3 + $0x20] sm:$0xff] %vm1466, %v2539
      %2553 = vst [vmem:[#allocation3 + $0x28] sm:$0xff] %v2546
      %2554 = vst.msk [vmem:[#allocation3 + $0x30] sm:$0xff] %vm1466, %v2543
      %2555 = vst [vmem:[#allocation3 + $0x38] sm:$0xff] %v2547
      %2556 = vst.msk [vmem:[#allocation3 + $0x20] sm:$0xff] %vm621, 0.0
      %2557 = vst.msk [vmem:[#allocation3 + $0x30] sm:$0xff] %vm621, 0.0
      %v2558 = vld [vmem:[%s1473] ss:$8 sm:$0x3]
      %v2560 = vlaneseq
      %v2561 = vshrl.u32 %v2560, 7
      %v2562 = vsub.s32 0, %v2561
      %v2563 = vrot.slane %v2558, %v2562
      %v2564 = vlaneseq
      %v2565 = vshrl.u32 %v2564, 7
      %v2566 = vsub.s32 1, %v2565
      %v2567 = vrot.slane %v2558, %v2566
      %2568 = vrot.lane.b32.xlu0 %v2563, 113
      %v2569 = vpop.permute.xlu0 %2568
      %2570 = vrot.lane.b32.xlu0 %v2567, 113
      %v2571 = vpop.permute.xlu0 %2570
      %v2572 = vsel %vm637, %v2569, %v2571
      %v2575 = vmul.f32 %v2464, %v2572
      %v2576 = vmul.f32 %v2465, %v2571
      %v2577 = vmul.f32 %v2466, %v2572
      %v2578 = vmul.f32 %v2467, %v2571
      %2583 = vrot.lane.b32.xlu0 %v2575, 15
      %v2584 = vpop.permute.xlu0 %2583
      %2585 = vrot.lane.b32.xlu0 %v2576, 15
      %v2586 = vpop.permute.xlu0 %2585
      %2587 = vrot.lane.b32.xlu0 %v2577, 15
      %v2588 = vpop.permute.xlu0 %2587
      %2589 = vrot.lane.b32.xlu0 %v2578, 15
      %v2590 = vpop.permute.xlu0 %2589
      %v2591 = vsel %vm645, %v2584, %v2586
      %v2592 = vsel %vm645, %v2588, %v2590
      %2597 = vst.msk [vmem:[#allocation3 + $0x40] sm:$0xff] %vm1513, %v2584
      %2598 = vst [vmem:[#allocation3 + $0x48] sm:$0xff] %v2591
      %2599 = vst.msk [vmem:[#allocation3 + $0x50] sm:$0xff] %vm1513, %v2588
      %2600 = vst [vmem:[#allocation3 + $0x58] sm:$0xff] %v2592
      %2601 = vst.msk [vmem:[#allocation3 + $0x40] sm:$0xff] %vm645, 0.0
      %2602 = vst.msk [vmem:[#allocation3 + $0x50] sm:$0xff] %vm645, 0.0
      %v2603 = vld [vmem:[%s1520] ss:$8 sm:$0x3]
      %v2605 = vlaneseq
      %v2606 = vshrl.u32 %v2605, 7
      %v2607 = vsub.s32 0, %v2606
      %v2608 = vrot.slane %v2603, %v2607
      %v2609 = vlaneseq
      %v2610 = vshrl.u32 %v2609, 7
      %v2611 = vsub.s32 1, %v2610
      %v2612 = vrot.slane %v2603, %v2611
      %2613 = vrot.lane.b32.xlu0 %v2608, 127
      %v2614 = vpop.permute.xlu0 %2613
      %2615 = vrot.lane.b32.xlu0 %v2612, 127
      %v2616 = vpop.permute.xlu0 %2615
      %v2617 = vsel %vm709, %v2614, %v2616
      %v2620 = vmul.f32 %v2464, %v2617
      %v2621 = vmul.f32 %v2465, %v2616
      %v2622 = vmul.f32 %v2466, %v2617
      %v2623 = vmul.f32 %v2467, %v2616
      %2628 = vrot.lane.b32.xlu0 %v2620, 1
      %v2629 = vpop.permute.xlu0 %2628
      %2630 = vrot.lane.b32.xlu0 %v2621, 1
      %v2631 = vpop.permute.xlu0 %2630
      %2632 = vrot.lane.b32.xlu0 %v2622, 1
      %v2633 = vpop.permute.xlu0 %2632
      %2634 = vrot.lane.b32.xlu0 %v2623, 1
      %v2635 = vpop.permute.xlu0 %2634
      %v2636 = vsel %vm717, %v2629, %v2631
      %v2637 = vsel %vm717, %v2633, %v2635
      %2642 = vst.msk [vmem:[#allocation3 + $0x60] sm:$0xff] %vm1560, %v2629
      %2643 = vst [vmem:[#allocation3 + $0x68] sm:$0xff] %v2636
      %2644 = vst.msk [vmem:[#allocation3 + $0x70] sm:$0xff] %vm1560, %v2633
      %2645 = vst [vmem:[#allocation3 + $0x78] sm:$0xff] %v2637
      %2646 = vst.msk [vmem:[#allocation3 + $0x60] sm:$0xff] %vm717, 0.0
      %2647 = vst.msk [vmem:[#allocation3 + $0x70] sm:$0xff] %vm717, 0.0
      %v2648 = vld [vmem:[%s1567] ss:$8 sm:$0x3]
      %v2650 = vlaneseq
      %v2651 = vshrl.u32 %v2650, 7
      %v2652 = vsub.s32 0, %v2651
      %v2653 = vrot.slane %v2648, %v2652
      %v2654 = vlaneseq
      %v2655 = vshrl.u32 %v2654, 7
      %v2656 = vsub.s32 1, %v2655
      %v2657 = vrot.slane %v2648, %v2656
      %v2660 = vmul.f32 %v2464, %v2653
      %v2661 = vmul.f32 %v2465, %v2657
      %v2662 = vmul.f32 %v2466, %v2653
      %v2663 = vmul.f32 %v2467, %v2657
      %2664 = vst [vmem:[#allocation3 + $0x80] sm:$0xff] %v2660
      %2665 = vst [vmem:[#allocation3 + $0x88] sm:$0xff] %v2661
      %2666 = vst [vmem:[#allocation3 + $0x90] sm:$0xff] %v2662
      %2667 = vst [vmem:[#allocation3 + $0x98] sm:$0xff] %v2663
      %v2668 = vld [vmem:[%s1588] ss:$8 sm:$0x3]
      %v2670 = vlaneseq
      %v2671 = vshrl.u32 %v2670, 7
      %v2672 = vsub.s32 0, %v2671
      %v2673 = vrot.slane %v2668, %v2672
      %v2674 = vlaneseq
      %v2675 = vshrl.u32 %v2674, 7
      %v2676 = vsub.s32 1, %v2675
      %v2677 = vrot.slane %v2668, %v2676
      %2678 = vrot.lane.b32.xlu0 %v2673, 1
      %v2679 = vpop.permute.xlu0 %2678
      %2680 = vrot.lane.b32.xlu0 %v2677, 1
      %v2681 = vpop.permute.xlu0 %2680
      %v2682 = vsel %vm717, %v2679, %v2681
      %v2685 = vmul.f32 %v2464, %v2679
      %v2686 = vmul.f32 %v2465, %v2682
      %v2687 = vmul.f32 %v2466, %v2679
      %v2688 = vmul.f32 %v2467, %v2682
      %2693 = vrot.lane.b32.xlu0 %v2685, 127
      %v2694 = vpop.permute.xlu0 %2693
      %2695 = vrot.lane.b32.xlu0 %v2686, 127
      %v2696 = vpop.permute.xlu0 %2695
      %2697 = vrot.lane.b32.xlu0 %v2687, 127
      %v2698 = vpop.permute.xlu0 %2697
      %2699 = vrot.lane.b32.xlu0 %v2688, 127
      %v2700 = vpop.permute.xlu0 %2699
      %v2701 = vsel %vm709, %v2694, %v2696
      %v2702 = vsel %vm709, %v2698, %v2700
      %2707 = vst [vmem:[#allocation3 + $0xa0] sm:$0xff] %v2701
      %2708 = vst.msk [vmem:[#allocation3 + $0xa8] sm:$0xff] %vm709, %v2696
      %2709 = vst [vmem:[#allocation3 + $0xb0] sm:$0xff] %v2702
      %2710 = vst.msk [vmem:[#allocation3 + $0xb8] sm:$0xff] %vm709, %v2700
      %2711 = vst.msk [vmem:[#allocation3 + $0xa8] sm:$0xff] %vm1632, 0.0
      %2712 = vst.msk [vmem:[#allocation3 + $0xb8] sm:$0xff] %vm1632, 0.0
      %v2713 = vld [vmem:[%s1635] ss:$8 sm:$0x3]
      %v2715 = vlaneseq
      %v2716 = vshrl.u32 %v2715, 7
      %v2717 = vsub.s32 0, %v2716
      %v2718 = vrot.slane %v2713, %v2717
      %v2719 = vlaneseq
      %v2720 = vshrl.u32 %v2719, 7
      %v2721 = vsub.s32 1, %v2720
      %v2722 = vrot.slane %v2713, %v2721
      %2723 = vrot.lane.b32.xlu0 %v2718, 15
      %v2724 = vpop.permute.xlu0 %2723
      %2725 = vrot.lane.b32.xlu0 %v2722, 15
      %v2726 = vpop.permute.xlu0 %2725
      %v2727 = vsel %vm645, %v2724, %v2726
      %v2730 = vmul.f32 %v2464, %v2724
      %v2731 = vmul.f32 %v2465, %v2727
      %v2732 = vmul.f32 %v2466, %v2724
      %v2733 = vmul.f32 %v2467, %v2727
      %2738 = vrot.lane.b32.xlu0 %v2730, 113
      %v2739 = vpop.permute.xlu0 %2738
      %2740 = vrot.lane.b32.xlu0 %v2731, 113
      %v2741 = vpop.permute.xlu0 %2740
      %2742 = vrot.lane.b32.xlu0 %v2732, 113
      %v2743 = vpop.permute.xlu0 %2742
      %2744 = vrot.lane.b32.xlu0 %v2733, 113
      %v2745 = vpop.permute.xlu0 %2744
      %v2746 = vsel %vm637, %v2739, %v2741
      %v2747 = vsel %vm637, %v2743, %v2745
      %2752 = vst [vmem:[#allocation3 + $0xc0] sm:$0xff] %v2746
      %2753 = vst.msk [vmem:[#allocation3 + $0xc8] sm:$0xff] %vm637, %v2741
      %2754 = vst [vmem:[#allocation3 + $0xd0] sm:$0xff] %v2747
      %2755 = vst.msk [vmem:[#allocation3 + $0xd8] sm:$0xff] %vm637, %v2745
      %2756 = vst.msk [vmem:[#allocation3 + $0xc8] sm:$0xff] %vm1679, 0.0
      %2757 = vst.msk [vmem:[#allocation3 + $0xd8] sm:$0xff] %vm1679, 0.0
      %v2758 = vld [vmem:[%s1682] ss:$8 sm:$0x3]
      %v2760 = vlaneseq
      %v2761 = vshrl.u32 %v2760, 7
      %v2762 = vsub.s32 0, %v2761
      %v2763 = vrot.slane %v2758, %v2762
      %v2764 = vlaneseq
      %v2765 = vshrl.u32 %v2764, 7
      %v2766 = vsub.s32 1, %v2765
      %v2767 = vrot.slane %v2758, %v2766
      %2768 = vrot.lane.b32.xlu0 %v2763, 16
      %v2769 = vpop.permute.xlu0 %2768
      %2770 = vrot.lane.b32.xlu0 %v2767, 16
      %v2771 = vpop.permute.xlu0 %2770
      %v2772 = vsel %vm621, %v2769, %v2771
      %v2775 = vmul.f32 %v2464, %v2769
      %v2776 = vmul.f32 %v2465, %v2772
      %v2777 = vmul.f32 %v2466, %v2769
      %v2778 = vmul.f32 %v2467, %v2772
      %2783 = vrot.lane.b32.xlu0 %v2775, 112
      %v2784 = vpop.permute.xlu0 %2783
      %2785 = vrot.lane.b32.xlu0 %v2776, 112
      %v2786 = vpop.permute.xlu0 %2785
      %2787 = vrot.lane.b32.xlu0 %v2777, 112
      %v2788 = vpop.permute.xlu0 %2787
      %2789 = vrot.lane.b32.xlu0 %v2778, 112
      %v2790 = vpop.permute.xlu0 %2789
      %v2791 = vsel %vm613, %v2784, %v2786
      %v2792 = vsel %vm613, %v2788, %v2790
      %2797 = vst [vmem:[#allocation3 + $0xe0] sm:$0xff] %v2791
      %2798 = vst.msk [vmem:[#allocation3 + $0xe8] sm:$0xff] %vm613, %v2786
      %2799 = vst [vmem:[#allocation3 + $0xf0] sm:$0xff] %v2792
      %2800 = vst.msk [vmem:[#allocation3 + $0xf8] sm:$0xff] %vm613, %v2790
      %2801 = vst.msk [vmem:[#allocation3 + $0xe8] sm:$0xff] %vm1726, 0.0
      %2802 = vst.msk [vmem:[#allocation3 + $0xf8] sm:$0xff] %vm1726, 0.0
      %v2803 = vld [vmem:[%s1729] ss:$8 sm:$0x3]
      %v2805 = vlaneseq
      %v2806 = vshrl.u32 %v2805, 7
      %v2807 = vsub.s32 0, %v2806
      %v2808 = vrot.slane %v2803, %v2807
      %v2809 = vlaneseq
      %v2810 = vshrl.u32 %v2809, 7
      %v2811 = vsub.s32 1, %v2810
      %v2812 = vrot.slane %v2803, %v2811
      %2813 = vrot.lane.b32.xlu0 %v2808, 17
      %v2814 = vpop.permute.xlu0 %2813
      %2815 = vrot.lane.b32.xlu0 %v2812, 17
      %v2816 = vpop.permute.xlu0 %2815
      %v2817 = vsel %vm597, %v2814, %v2816
      %v2820 = vmul.f32 %v2464, %v2814
      %v2821 = vmul.f32 %v2465, %v2817
      %v2822 = vmul.f32 %v2466, %v2814
      %v2823 = vmul.f32 %v2467, %v2817
      %2828 = vrot.lane.b32.xlu0 %v2820, 111
      %v2829 = vpop.permute.xlu0 %2828
      %2830 = vrot.lane.b32.xlu0 %v2821, 111
      %v2831 = vpop.permute.xlu0 %2830
      %2832 = vrot.lane.b32.xlu0 %v2822, 111
      %v2833 = vpop.permute.xlu0 %2832
      %2834 = vrot.lane.b32.xlu0 %v2823, 111
      %v2835 = vpop.permute.xlu0 %2834
      %v2836 = vsel %vm589, %v2829, %v2831
      %v2837 = vsel %vm589, %v2833, %v2835
      %2842 = vst [vmem:[#allocation3 + $0x100] sm:$0xff] %v2836
      %2843 = vst.msk [vmem:[#allocation3 + $0x108] sm:$0xff] %vm589, %v2831
      %2844 = vst [vmem:[#allocation3 + $0x110] sm:$0xff] %v2837
      %2845 = vst.msk [vmem:[#allocation3 + $0x118] sm:$0xff] %vm589, %v2835
      %2846 = vst.msk [vmem:[#allocation3 + $0x108] sm:$0xff] %vm1773, 0.0
      %2847 = vst.msk [vmem:[#allocation3 + $0x118] sm:$0xff] %vm1773, 0.0
      %s2848 = scalar_lea.vmem %s7, 64
      %v2849 = vld [vmem:[%s2848] sm:$0xff]
      %v2850 = vld [vmem:[%s2848 + $0x8] sm:$0xff]
      %v2851 = vld [vmem:[%s2848 + $0x10] sm:$0xff]
      %v2852 = vld [vmem:[%s2848 + $0x18] sm:$0xff]
      %v2853 = vld [vmem:[#allocation3] sm:$0xff]
      %v2854 = vld [vmem:[#allocation3 + $0x8] sm:$0xff]
      %v2855 = vld [vmem:[#allocation3 + $0x10] sm:$0xff]
      %v2856 = vld [vmem:[#allocation3 + $0x18] sm:$0xff]
      %v2857 = vld [vmem:[#allocation3 + $0x20] sm:$0xff]
      %v2858 = vld [vmem:[#allocation3 + $0x28] sm:$0xff]
      %v2859 = vld [vmem:[#allocation3 + $0x30] sm:$0xff]
      %v2860 = vld [vmem:[#allocation3 + $0x38] sm:$0xff]
      %v2861 = vld [vmem:[#allocation3 + $0x40] sm:$0xff]
      %v2862 = vld [vmem:[#allocation3 + $0x48] sm:$0xff]
      %v2863 = vld [vmem:[#allocation3 + $0x50] sm:$0xff]
      %v2864 = vld [vmem:[#allocation3 + $0x58] sm:$0xff]
      %v2865 = vld [vmem:[#allocation3 + $0x60] sm:$0xff]
      %v2866 = vld [vmem:[#allocation3 + $0x68] sm:$0xff]
      %v2867 = vld [vmem:[#allocation3 + $0x70] sm:$0xff]
      %v2868 = vld [vmem:[#allocation3 + $0x78] sm:$0xff]
      %v2869 = vld [vmem:[#allocation3 + $0x80] sm:$0xff]
      %v2870 = vld [vmem:[#allocation3 + $0x88] sm:$0xff]
      %v2871 = vld [vmem:[#allocation3 + $0x90] sm:$0xff]
      %v2872 = vld [vmem:[#allocation3 + $0x98] sm:$0xff]
      %v2873 = vld [vmem:[#allocation3 + $0xa0] sm:$0xff]
      %v2874 = vld [vmem:[#allocation3 + $0xa8] sm:$0xff]
      %v2875 = vld [vmem:[#allocation3 + $0xb0] sm:$0xff]
      %v2876 = vld [vmem:[#allocation3 + $0xb8] sm:$0xff]
      %v2877 = vld [vmem:[#allocation3 + $0xc0] sm:$0xff]
      %v2878 = vld [vmem:[#allocation3 + $0xc8] sm:$0xff]
      %v2879 = vld [vmem:[#allocation3 + $0xd0] sm:$0xff]
      %v2880 = vld [vmem:[#allocation3 + $0xd8] sm:$0xff]
      %v2881 = vld [vmem:[#allocation3 + $0xe0] sm:$0xff]
      %v2882 = vld [vmem:[#allocation3 + $0xe8] sm:$0xff]
      %v2883 = vld [vmem:[#allocation3 + $0xf0] sm:$0xff]
      %v2884 = vld [vmem:[#allocation3 + $0xf8] sm:$0xff]
      %v2885 = vld [vmem:[#allocation3 + $0x100] sm:$0xff]
      %v2886 = vld [vmem:[#allocation3 + $0x108] sm:$0xff]
      %v2887 = vld [vmem:[#allocation3 + $0x110] sm:$0xff]
      %v2888 = vld [vmem:[#allocation3 + $0x118] sm:$0xff]
      %s2889 = scalar_lea.vmem %s8, 32
      %v2890 = vld [vmem:[%s2889] sm:$0xff]
      %v2891 = vld [vmem:[%s2889 + $0x8] sm:$0xff]
      %2893 = vset.pattern.permute.xlu0 0
      %2894 = vperm.xlu0 %2893, %v2890
      %v2895 = vpop.permute.xlu0 %2894
      %2898 = vset.pattern.permute.xlu0 0
      %2899 = vperm.xlu0 %2898, %v2891
      %v2900 = vpop.permute.xlu0 %2899
      %v2903 = vsel %vm621, %v2850, 0
      %v2906 = vsel %vm621, %v2852, 0
      %2908 = vmatprep.subr.mxu0 %v2884
      %2909 = vmatpush1.msra.mxu0 %v2883
      %2910 = vmatprep.subr.mxu0 %v2882
      %2911 = vmatpush1.msra.mxu0 %v2881
      %2912 = vmatprep.subr.mxu0 %v2880
      %2913 = vmatpush1.msra.mxu0 %v2879
      %2914 = vmatprep.subr.mxu0 %v2878
      %2915 = vmatpush1.msra.mxu0 %v2877
      %2916 = vmatprep.subr.mxu0 %v2876
      %2917 = vmatpush1.msra.mxu0 %v2875
      %2918 = vmatprep.subr.mxu0 %v2874
      %2919 = vmatpush1.msra.mxu0 %v2873
      %2920 = vmatprep.subr.mxu0 %v2872
      %2921 = vmatpush1.msra.mxu0 %v2871
      %2922 = vmatprep.subr.mxu0 %v2870
      %2923 = vmatpush1.msra.mxu0 %v2869
      %2924 = vmatprep.subr.mxu0 %v2868
      %2925 = vmatpush1.msra.mxu0 %v2867
      %2926 = vmatprep.subr.mxu0 %v2866
      %2927 = vmatpush1.msra.mxu0 %v2865
      %2928 = vmatprep.subr.mxu0 %v2864
      %2929 = vmatpush1.msra.mxu0 %v2863
      %2930 = vmatprep.subr.mxu0 %v2862
      %2931 = vmatpush1.msra.mxu0 %v2861
      %2932 = vmatprep.subr.mxu0 %v2860
      %2933 = vmatpush1.msra.mxu0 %v2859
      %2934 = vmatprep.subr.mxu0 %v2858
      %2935 = vmatpush1.msra.mxu0 %v2857
      %2936 = vmatprep.subr.mxu0 %v2856
      %2937 = vmatpush1.msra.mxu0 %v2855
      %2938 = vmatprep.subr.mxu0 %v2854
      %2939 = vmatpush1.msra.mxu0 %v2853
      %2940 = vmatprep.subr.mxu0 0.0
      %2941 = vmatpush2.msra.mxu0 0.0
      %2942 = vmatprep.subr.mxu0 0.0
      %2943 = vmatpush2.msra.mxu0 0.0
      %2944 = vmatprep.subr.mxu0 0.0
      %2945 = vmatpush2.msra.mxu0 0.0
      %2946 = vmatprep.subr.mxu0 0.0
      %2947 = vmatpush2.msra.mxu0 0.0
      %2948 = vmatprep.subr.mxu0 0.0
      %2949 = vmatpush2.msra.mxu0 0.0
      %2950 = vmatprep.subr.mxu0 0.0
      %2951 = vmatpush2.msra.mxu0 0.0
      %2952 = vmatprep.subr.mxu0 0.0
      %2953 = vmatpush2.msra.mxu0 0.0
      %2954 = vmatprep.subr.mxu0 0.0
      %2955 = vmatpush2.msra.mxu0 0.0
      %2956 = vmatprep.subr.mxu0 0.0
      %2957 = vmatpush2.msra.mxu0 0.0
      %2958 = vmatprep.subr.mxu0 0.0
      %2959 = vmatpush2.msra.mxu0 0.0
      %2960 = vmatprep.subr.mxu0 0.0
      %2961 = vmatpush2.msra.mxu0 0.0
      %2962 = vmatprep.subr.mxu0 0.0
      %2963 = vmatpush2.msra.mxu0 0.0
      %2964 = vmatprep.subr.mxu0 0.0
      %2965 = vmatpush2.msra.mxu0 0.0
      %2966 = vmatprep.subr.mxu0 0.0
      %2967 = vmatpush2.msra.mxu0 0.0
      %2968 = vmatprep.subr.mxu0 %v2888
      %2969 = vmatpush2.msra.mxu0 %v2887
      %2970 = vmatprep.subr.mxu0 %v2886
      %2971 = vmatpush2.msra.mxu0 %v2885
      %2972 = vmatprep.mubr.f32.mxu0 %v2903
      %2973 = vmatmul.mubr.f32.gmra.mxu0 %v2849
      %v2974 = vpop.f32.mrf.mxu0
      %v2975 = vadd.f32 %v2895, %v2974
      %v2976 = vpop.f32.mrf.mxu0
      %v2977 = vadd.f32 %v2895, %v2976
      %2978 = vmatprep.mubr.f32.mxu0 %v2906
      %2979 = vmatmul.mubr.f32.gmra.mxu0 %v2851
      %v2980 = vpop.f32.mrf.mxu0
      %v2981 = vadd.f32 %v2900, %v2980
      %v2982 = vpop.f32.mrf.mxu0
      %v2983 = vadd.f32 %v2900, %v2982
      %2984 = vdwg.mxu0
      %vm2985 = vcmp.ge.f32.partialorder %v2975, 0.0
      %vm2986 = vcmp.ge.f32.partialorder %v2977, 0.0
      %vm2987 = vcmp.ge.f32.partialorder %v2981, 0.0
      %vm2988 = vcmp.ge.f32.partialorder %v2983, 0.0
      %2989 = vset.pattern.permute.xlu0 1
      %2990 = vperm.xlu0 %2989, %v2890
      %v2991 = vpop.permute.xlu0 %2990
      %2993 = vset.pattern.permute.xlu0 1
      %2994 = vperm.xlu0 %2993, %v2891
      %v2995 = vpop.permute.xlu0 %2994
      %v2997 = vmul.f32 %v2975, %v2991
      %v2998 = vmul.f32 %v2977, %v2991
      %v2999 = vmul.f32 %v2981, %v2995
      %v3000 = vmul.f32 %v2983, %v2995
      %v3001 = vsel %vm2985, %v2975, %v2997
      %v3002 = vsel %vm2986, %v2977, %v2998
      %v3003 = vsel %vm2987, %v2981, %v2999
      %v3004 = vsel %vm2988, %v2983, %v3000
      %v3005 = vld [vmem:[%s2] ss:$8 sm:$0x3]
      %v3007 = vlaneseq
      %v3008 = vshrl.u32 %v3007, 7
      %v3009 = vsub.s32 0, %v3008
      %v3010 = vrot.slane %v3005, %v3009
      %v3011 = vlaneseq
      %v3012 = vshrl.u32 %v3011, 7
      %v3013 = vsub.s32 1, %v3012
      %v3014 = vrot.slane %v3005, %v3013
      %3015 = vrot.lane.b32.xlu0 %v3010, 111
      %v3016 = vpop.permute.xlu0 %3015
      %3017 = vrot.lane.b32.xlu0 %v3014, 111
      %v3018 = vpop.permute.xlu0 %3017
      %v3019 = vsel %vm589, %v3016, %v3018
      %v3022 = vmul.f32 %v3001, %v3019
      %v3023 = vmul.f32 %v3002, %v3018
      %v3024 = vmul.f32 %v3003, %v3019
      %v3025 = vmul.f32 %v3004, %v3018
      %3030 = vrot.lane.b32.xlu0 %v3022, 17
      %v3031 = vpop.permute.xlu0 %3030
      %3032 = vrot.lane.b32.xlu0 %v3023, 17
      %v3033 = vpop.permute.xlu0 %3032
      %3034 = vrot.lane.b32.xlu0 %v3024, 17
      %v3035 = vpop.permute.xlu0 %3034
      %3036 = vrot.lane.b32.xlu0 %v3025, 17
      %v3037 = vpop.permute.xlu0 %3036
      %v3038 = vsel %vm597, %v3031, %v3033
      %v3039 = vsel %vm597, %v3035, %v3037
      %3044 = vst.msk [vmem:[#allocation3] sm:$0xff] %vm1419, %v3031
      %3045 = vst [vmem:[#allocation3 + $0x8] sm:$0xff] %v3038
      %3046 = vst.msk [vmem:[#allocation3 + $0x10] sm:$0xff] %vm1419, %v3035
      %3047 = vst [vmem:[#allocation3 + $0x18] sm:$0xff] %v3039
      %3048 = vst.msk [vmem:[#allocation3] sm:$0xff] %vm597, 0.0
      %3049 = vst.msk [vmem:[#allocation3 + $0x10] sm:$0xff] %vm597, 0.0
      %v3050 = vld [vmem:[%s1426] ss:$8 sm:$0x3]
      %v3052 = vlaneseq
      %v3053 = vshrl.u32 %v3052, 7
      %v3054 = vsub.s32 0, %v3053
      %v3055 = vrot.slane %v3050, %v3054
      %v3056 = vlaneseq
      %v3057 = vshrl.u32 %v3056, 7
      %v3058 = vsub.s32 1, %v3057
      %v3059 = vrot.slane %v3050, %v3058
      %3060 = vrot.lane.b32.xlu0 %v3055, 112
      %v3061 = vpop.permute.xlu0 %3060
      %3062 = vrot.lane.b32.xlu0 %v3059, 112
      %v3063 = vpop.permute.xlu0 %3062
      %v3064 = vsel %vm613, %v3061, %v3063
      %v3067 = vmul.f32 %v3001, %v3064
      %v3068 = vmul.f32 %v3002, %v3063
      %v3069 = vmul.f32 %v3003, %v3064
      %v3070 = vmul.f32 %v3004, %v3063
      %3075 = vrot.lane.b32.xlu0 %v3067, 16
      %v3076 = vpop.permute.xlu0 %3075
      %3077 = vrot.lane.b32.xlu0 %v3068, 16
      %v3078 = vpop.permute.xlu0 %3077
      %3079 = vrot.lane.b32.xlu0 %v3069, 16
      %v3080 = vpop.permute.xlu0 %3079
      %3081 = vrot.lane.b32.xlu0 %v3070, 16
      %v3082 = vpop.permute.xlu0 %3081
      %v3083 = vsel %vm621, %v3076, %v3078
      %v3084 = vsel %vm621, %v3080, %v3082
      %3089 = vst.msk [vmem:[#allocation3 + $0x20] sm:$0xff] %vm1466, %v3076
      %3090 = vst [vmem:[#allocation3 + $0x28] sm:$0xff] %v3083
      %3091 = vst.msk [vmem:[#allocation3 + $0x30] sm:$0xff] %vm1466, %v3080
      %3092 = vst [vmem:[#allocation3 + $0x38] sm:$0xff] %v3084
      %3093 = vst.msk [vmem:[#allocation3 + $0x20] sm:$0xff] %vm621, 0.0
      %3094 = vst.msk [vmem:[#allocation3 + $0x30] sm:$0xff] %vm621, 0.0
      %v3095 = vld [vmem:[%s1473] ss:$8 sm:$0x3]
      %v3097 = vlaneseq
      %v3098 = vshrl.u32 %v3097, 7
      %v3099 = vsub.s32 0, %v3098
      %v3100 = vrot.slane %v3095, %v3099
      %v3101 = vlaneseq
      %v3102 = vshrl.u32 %v3101, 7
      %v3103 = vsub.s32 1, %v3102
      %v3104 = vrot.slane %v3095, %v3103
      %3105 = vrot.lane.b32.xlu0 %v3100, 113
      %v3106 = vpop.permute.xlu0 %3105
      %3107 = vrot.lane.b32.xlu0 %v3104, 113
      %v3108 = vpop.permute.xlu0 %3107
      %v3109 = vsel %vm637, %v3106, %v3108
      %v3112 = vmul.f32 %v3001, %v3109
      %v3113 = vmul.f32 %v3002, %v3108
      %v3114 = vmul.f32 %v3003, %v3109
      %v3115 = vmul.f32 %v3004, %v3108
      %3120 = vrot.lane.b32.xlu0 %v3112, 15
      %v3121 = vpop.permute.xlu0 %3120
      %3122 = vrot.lane.b32.xlu0 %v3113, 15
      %v3123 = vpop.permute.xlu0 %3122
      %3124 = vrot.lane.b32.xlu0 %v3114, 15
      %v3125 = vpop.permute.xlu0 %3124
      %3126 = vrot.lane.b32.xlu0 %v3115, 15
      %v3127 = vpop.permute.xlu0 %3126
      %v3128 = vsel %vm645, %v3121, %v3123
      %v3129 = vsel %vm645, %v3125, %v3127
      %3134 = vst.msk [vmem:[#allocation3 + $0x40] sm:$0xff] %vm1513, %v3121
      %3135 = vst [vmem:[#allocation3 + $0x48] sm:$0xff] %v3128
      %3136 = vst.msk [vmem:[#allocation3 + $0x50] sm:$0xff] %vm1513, %v3125
      %3137 = vst [vmem:[#allocation3 + $0x58] sm:$0xff] %v3129
      %3138 = vst.msk [vmem:[#allocation3 + $0x40] sm:$0xff] %vm645, 0.0
      %3139 = vst.msk [vmem:[#allocation3 + $0x50] sm:$0xff] %vm645, 0.0
      %v3140 = vld [vmem:[%s1520] ss:$8 sm:$0x3]
      %v3142 = vlaneseq
      %v3143 = vshrl.u32 %v3142, 7
      %v3144 = vsub.s32 0, %v3143
      %v3145 = vrot.slane %v3140, %v3144
      %v3146 = vlaneseq
      %v3147 = vshrl.u32 %v3146, 7
      %v3148 = vsub.s32 1, %v3147
      %v3149 = vrot.slane %v3140, %v3148
      %3150 = vrot.lane.b32.xlu0 %v3145, 127
      %v3151 = vpop.permute.xlu0 %3150
      %3152 = vrot.lane.b32.xlu0 %v3149, 127
      %v3153 = vpop.permute.xlu0 %3152
      %v3154 = vsel %vm709, %v3151, %v3153
      %v3157 = vmul.f32 %v3001, %v3154
      %v3158 = vmul.f32 %v3002, %v3153
      %v3159 = vmul.f32 %v3003, %v3154
      %v3160 = vmul.f32 %v3004, %v3153
      %3165 = vrot.lane.b32.xlu0 %v3157, 1
      %v3166 = vpop.permute.xlu0 %3165
      %3167 = vrot.lane.b32.xlu0 %v3158, 1
      %v3168 = vpop.permute.xlu0 %3167
      %3169 = vrot.lane.b32.xlu0 %v3159, 1
      %v3170 = vpop.permute.xlu0 %3169
      %3171 = vrot.lane.b32.xlu0 %v3160, 1
      %v3172 = vpop.permute.xlu0 %3171
      %v3173 = vsel %vm717, %v3166, %v3168
      %v3174 = vsel %vm717, %v3170, %v3172
      %3179 = vst.msk [vmem:[#allocation3 + $0x60] sm:$0xff] %vm1560, %v3166
      %3180 = vst [vmem:[#allocation3 + $0x68] sm:$0xff] %v3173
      %3181 = vst.msk [vmem:[#allocation3 + $0x70] sm:$0xff] %vm1560, %v3170
      %3182 = vst [vmem:[#allocation3 + $0x78] sm:$0xff] %v3174
      %3183 = vst.msk [vmem:[#allocation3 + $0x60] sm:$0xff] %vm717, 0.0
      %3184 = vst.msk [vmem:[#allocation3 + $0x70] sm:$0xff] %vm717, 0.0
      %v3185 = vld [vmem:[%s1567] ss:$8 sm:$0x3]
      %v3187 = vlaneseq
      %v3188 = vshrl.u32 %v3187, 7
      %v3189 = vsub.s32 0, %v3188
      %v3190 = vrot.slane %v3185, %v3189
      %v3191 = vlaneseq
      %v3192 = vshrl.u32 %v3191, 7
      %v3193 = vsub.s32 1, %v3192
      %v3194 = vrot.slane %v3185, %v3193
      %v3197 = vmul.f32 %v3001, %v3190
      %v3198 = vmul.f32 %v3002, %v3194
      %v3199 = vmul.f32 %v3003, %v3190
      %v3200 = vmul.f32 %v3004, %v3194
      %3201 = vst [vmem:[#allocation3 + $0x80] sm:$0xff] %v3197
      %3202 = vst [vmem:[#allocation3 + $0x88] sm:$0xff] %v3198
      %3203 = vst [vmem:[#allocation3 + $0x90] sm:$0xff] %v3199
      %3204 = vst [vmem:[#allocation3 + $0x98] sm:$0xff] %v3200
      %v3205 = vld [vmem:[%s1588] ss:$8 sm:$0x3]
      %v3207 = vlaneseq
      %v3208 = vshrl.u32 %v3207, 7
      %v3209 = vsub.s32 0, %v3208
      %v3210 = vrot.slane %v3205, %v3209
      %v3211 = vlaneseq
      %v3212 = vshrl.u32 %v3211, 7
      %v3213 = vsub.s32 1, %v3212
      %v3214 = vrot.slane %v3205, %v3213
      %3215 = vrot.lane.b32.xlu0 %v3210, 1
      %v3216 = vpop.permute.xlu0 %3215
      %3217 = vrot.lane.b32.xlu0 %v3214, 1
      %v3218 = vpop.permute.xlu0 %3217
      %v3219 = vsel %vm717, %v3216, %v3218
      %v3222 = vmul.f32 %v3001, %v3216
      %v3223 = vmul.f32 %v3002, %v3219
      %v3224 = vmul.f32 %v3003, %v3216
      %v3225 = vmul.f32 %v3004, %v3219
      %3230 = vrot.lane.b32.xlu0 %v3222, 127
      %v3231 = vpop.permute.xlu0 %3230
      %3232 = vrot.lane.b32.xlu0 %v3223, 127
      %v3233 = vpop.permute.xlu0 %3232
      %3234 = vrot.lane.b32.xlu0 %v3224, 127
      %v3235 = vpop.permute.xlu0 %3234
      %3236 = vrot.lane.b32.xlu0 %v3225, 127
      %v3237 = vpop.permute.xlu0 %3236
      %v3238 = vsel %vm709, %v3231, %v3233
      %v3239 = vsel %vm709, %v3235, %v3237
      %3244 = vst [vmem:[#allocation3 + $0xa0] sm:$0xff] %v3238
      %3245 = vst.msk [vmem:[#allocation3 + $0xa8] sm:$0xff] %vm709, %v3233
      %3246 = vst [vmem:[#allocation3 + $0xb0] sm:$0xff] %v3239
      %3247 = vst.msk [vmem:[#allocation3 + $0xb8] sm:$0xff] %vm709, %v3237
      %3248 = vst.msk [vmem:[#allocation3 + $0xa8] sm:$0xff] %vm1632, 0.0
      %3249 = vst.msk [vmem:[#allocation3 + $0xb8] sm:$0xff] %vm1632, 0.0
      %v3250 = vld [vmem:[%s1635] ss:$8 sm:$0x3]
      %v3252 = vlaneseq
      %v3253 = vshrl.u32 %v3252, 7
      %v3254 = vsub.s32 0, %v3253
      %v3255 = vrot.slane %v3250, %v3254
      %v3256 = vlaneseq
      %v3257 = vshrl.u32 %v3256, 7
      %v3258 = vsub.s32 1, %v3257
      %v3259 = vrot.slane %v3250, %v3258
      %3260 = vrot.lane.b32.xlu0 %v3255, 15
      %v3261 = vpop.permute.xlu0 %3260
      %3262 = vrot.lane.b32.xlu0 %v3259, 15
      %v3263 = vpop.permute.xlu0 %3262
      %v3264 = vsel %vm645, %v3261, %v3263
      %v3267 = vmul.f32 %v3001, %v3261
      %v3268 = vmul.f32 %v3002, %v3264
      %v3269 = vmul.f32 %v3003, %v3261
      %v3270 = vmul.f32 %v3004, %v3264
      %3275 = vrot.lane.b32.xlu0 %v3267, 113
      %v3276 = vpop.permute.xlu0 %3275
      %3277 = vrot.lane.b32.xlu0 %v3268, 113
      %v3278 = vpop.permute.xlu0 %3277
      %3279 = vrot.lane.b32.xlu0 %v3269, 113
      %v3280 = vpop.permute.xlu0 %3279
      %3281 = vrot.lane.b32.xlu0 %v3270, 113
      %v3282 = vpop.permute.xlu0 %3281
      %v3283 = vsel %vm637, %v3276, %v3278
      %v3284 = vsel %vm637, %v3280, %v3282
      %3289 = vst [vmem:[#allocation3 + $0xc0] sm:$0xff] %v3283
      %3290 = vst.msk [vmem:[#allocation3 + $0xc8] sm:$0xff] %vm637, %v3278
      %3291 = vst [vmem:[#allocation3 + $0xd0] sm:$0xff] %v3284
      %3292 = vst.msk [vmem:[#allocation3 + $0xd8] sm:$0xff] %vm637, %v3282
      %3293 = vst.msk [vmem:[#allocation3 + $0xc8] sm:$0xff] %vm1679, 0.0
      %3294 = vst.msk [vmem:[#allocation3 + $0xd8] sm:$0xff] %vm1679, 0.0
      %v3295 = vld [vmem:[%s1682] ss:$8 sm:$0x3]
      %v3297 = vlaneseq
      %v3298 = vshrl.u32 %v3297, 7
      %v3299 = vsub.s32 0, %v3298
      %v3300 = vrot.slane %v3295, %v3299
      %v3301 = vlaneseq
      %v3302 = vshrl.u32 %v3301, 7
      %v3303 = vsub.s32 1, %v3302
      %v3304 = vrot.slane %v3295, %v3303
      %3305 = vrot.lane.b32.xlu0 %v3300, 16
      %v3306 = vpop.permute.xlu0 %3305
      %3307 = vrot.lane.b32.xlu0 %v3304, 16
      %v3308 = vpop.permute.xlu0 %3307
      %v3309 = vsel %vm621, %v3306, %v3308
      %v3312 = vmul.f32 %v3001, %v3306
      %v3313 = vmul.f32 %v3002, %v3309
      %v3314 = vmul.f32 %v3003, %v3306
      %v3315 = vmul.f32 %v3004, %v3309
      %3320 = vrot.lane.b32.xlu0 %v3312, 112
      %v3321 = vpop.permute.xlu0 %3320
      %3322 = vrot.lane.b32.xlu0 %v3313, 112
      %v3323 = vpop.permute.xlu0 %3322
      %3324 = vrot.lane.b32.xlu0 %v3314, 112
      %v3325 = vpop.permute.xlu0 %3324
      %3326 = vrot.lane.b32.xlu0 %v3315, 112
      %v3327 = vpop.permute.xlu0 %3326
      %v3328 = vsel %vm613, %v3321, %v3323
      %v3329 = vsel %vm613, %v3325, %v3327
      %3334 = vst [vmem:[#allocation3 + $0xe0] sm:$0xff] %v3328
      %3335 = vst.msk [vmem:[#allocation3 + $0xe8] sm:$0xff] %vm613, %v3323
      %3336 = vst [vmem:[#allocation3 + $0xf0] sm:$0xff] %v3329
      %3337 = vst.msk [vmem:[#allocation3 + $0xf8] sm:$0xff] %vm613, %v3327
      %3338 = vst.msk [vmem:[#allocation3 + $0xe8] sm:$0xff] %vm1726, 0.0
      %3339 = vst.msk [vmem:[#allocation3 + $0xf8] sm:$0xff] %vm1726, 0.0
      %v3340 = vld [vmem:[%s1729] ss:$8 sm:$0x3]
      %v3342 = vlaneseq
      %v3343 = vshrl.u32 %v3342, 7
      %v3344 = vsub.s32 0, %v3343
      %v3345 = vrot.slane %v3340, %v3344
      %v3346 = vlaneseq
      %v3347 = vshrl.u32 %v3346, 7
      %v3348 = vsub.s32 1, %v3347
      %v3349 = vrot.slane %v3340, %v3348
      %3350 = vrot.lane.b32.xlu0 %v3345, 17
      %v3351 = vpop.permute.xlu0 %3350
      %3352 = vrot.lane.b32.xlu0 %v3349, 17
      %v3353 = vpop.permute.xlu0 %3352
      %v3354 = vsel %vm597, %v3351, %v3353
      %v3357 = vmul.f32 %v3001, %v3351
      %v3358 = vmul.f32 %v3002, %v3354
      %v3359 = vmul.f32 %v3003, %v3351
      %v3360 = vmul.f32 %v3004, %v3354
      %3365 = vrot.lane.b32.xlu0 %v3357, 111
      %v3366 = vpop.permute.xlu0 %3365
      %3367 = vrot.lane.b32.xlu0 %v3358, 111
      %v3368 = vpop.permute.xlu0 %3367
      %3369 = vrot.lane.b32.xlu0 %v3359, 111
      %v3370 = vpop.permute.xlu0 %3369
      %3371 = vrot.lane.b32.xlu0 %v3360, 111
      %v3372 = vpop.permute.xlu0 %3371
      %v3373 = vsel %vm589, %v3366, %v3368
      %v3374 = vsel %vm589, %v3370, %v3372
      %3379 = vst [vmem:[#allocation3 + $0x100] sm:$0xff] %v3373
      %3380 = vst.msk [vmem:[#allocation3 + $0x108] sm:$0xff] %vm589, %v3368
      %3381 = vst [vmem:[#allocation3 + $0x110] sm:$0xff] %v3374
      %3382 = vst.msk [vmem:[#allocation3 + $0x118] sm:$0xff] %vm589, %v3372
      %3383 = vst.msk [vmem:[#allocation3 + $0x108] sm:$0xff] %vm1773, 0.0
      %3384 = vst.msk [vmem:[#allocation3 + $0x118] sm:$0xff] %vm1773, 0.0
      %s3385 = scalar_lea.vmem %s7, 96
      %v3386 = vld [vmem:[%s3385] sm:$0xff]
      %v3387 = vld [vmem:[%s3385 + $0x8] sm:$0xff]
      %v3388 = vld [vmem:[%s3385 + $0x10] sm:$0xff]
      %v3389 = vld [vmem:[%s3385 + $0x18] sm:$0xff]
      %v3390 = vld [vmem:[#allocation3] sm:$0xff]
      %v3391 = vld [vmem:[#allocation3 + $0x8] sm:$0xff]
      %v3392 = vld [vmem:[#allocation3 + $0x10] sm:$0xff]
      %v3393 = vld [vmem:[#allocation3 + $0x18] sm:$0xff]
      %v3394 = vld [vmem:[#allocation3 + $0x20] sm:$0xff]
      %v3395 = vld [vmem:[#allocation3 + $0x28] sm:$0xff]
      %v3396 = vld [vmem:[#allocation3 + $0x30] sm:$0xff]
      %v3397 = vld [vmem:[#allocation3 + $0x38] sm:$0xff]
      %v3398 = vld [vmem:[#allocation3 + $0x40] sm:$0xff]
      %v3399 = vld [vmem:[#allocation3 + $0x48] sm:$0xff]
      %v3400 = vld [vmem:[#allocation3 + $0x50] sm:$0xff]
      %v3401 = vld [vmem:[#allocation3 + $0x58] sm:$0xff]
      %v3402 = vld [vmem:[#allocation3 + $0x60] sm:$0xff]
      %v3403 = vld [vmem:[#allocation3 + $0x68] sm:$0xff]
      %v3404 = vld [vmem:[#allocation3 + $0x70] sm:$0xff]
      %v3405 = vld [vmem:[#allocation3 + $0x78] sm:$0xff]
      %v3406 = vld [vmem:[#allocation3 + $0x80] sm:$0xff]
      %v3407 = vld [vmem:[#allocation3 + $0x88] sm:$0xff]
      %v3408 = vld [vmem:[#allocation3 + $0x90] sm:$0xff]
      %v3409 = vld [vmem:[#allocation3 + $0x98] sm:$0xff]
      %v3410 = vld [vmem:[#allocation3 + $0xa0] sm:$0xff]
      %v3411 = vld [vmem:[#allocation3 + $0xa8] sm:$0xff]
      %v3412 = vld [vmem:[#allocation3 + $0xb0] sm:$0xff]
      %v3413 = vld [vmem:[#allocation3 + $0xb8] sm:$0xff]
      %v3414 = vld [vmem:[#allocation3 + $0xc0] sm:$0xff]
      %v3415 = vld [vmem:[#allocation3 + $0xc8] sm:$0xff]
      %v3416 = vld [vmem:[#allocation3 + $0xd0] sm:$0xff]
      %v3417 = vld [vmem:[#allocation3 + $0xd8] sm:$0xff]
      %v3418 = vld [vmem:[#allocation3 + $0xe0] sm:$0xff]
      %v3419 = vld [vmem:[#allocation3 + $0xe8] sm:$0xff]
      %v3420 = vld [vmem:[#allocation3 + $0xf0] sm:$0xff]
      %v3421 = vld [vmem:[#allocation3 + $0xf8] sm:$0xff]
      %v3422 = vld [vmem:[#allocation3 + $0x100] sm:$0xff]
      %v3423 = vld [vmem:[#allocation3 + $0x108] sm:$0xff]
      %v3424 = vld [vmem:[#allocation3 + $0x110] sm:$0xff]
      %v3425 = vld [vmem:[#allocation3 + $0x118] sm:$0xff]
      %s3426 = scalar_lea.vmem %s8, 48
      %v3427 = vld [vmem:[%s3426] sm:$0xff]
      %v3428 = vld [vmem:[%s3426 + $0x8] sm:$0xff]
      %3430 = vset.pattern.permute.xlu0 0
      %3431 = vperm.xlu0 %3430, %v3427
      %v3432 = vpop.permute.xlu0 %3431
      %3435 = vset.pattern.permute.xlu0 0
      %3436 = vperm.xlu0 %3435, %v3428
      %v3437 = vpop.permute.xlu0 %3436
      %v3440 = vsel %vm621, %v3387, 0
      %v3443 = vsel %vm621, %v3389, 0
      %3445 = vmatprep.subr.mxu0 %v3421
      %3446 = vmatpush1.msra.mxu0 %v3420
      %3447 = vmatprep.subr.mxu0 %v3419
      %3448 = vmatpush1.msra.mxu0 %v3418
      %3449 = vmatprep.subr.mxu0 %v3417
      %3450 = vmatpush1.msra.mxu0 %v3416
      %3451 = vmatprep.subr.mxu0 %v3415
      %3452 = vmatpush1.msra.mxu0 %v3414
      %3453 = vmatprep.subr.mxu0 %v3413
      %3454 = vmatpush1.msra.mxu0 %v3412
      %3455 = vmatprep.subr.mxu0 %v3411
      %3456 = vmatpush1.msra.mxu0 %v3410
      %3457 = vmatprep.subr.mxu0 %v3409
      %3458 = vmatpush1.msra.mxu0 %v3408
      %3459 = vmatprep.subr.mxu0 %v3407
      %3460 = vmatpush1.msra.mxu0 %v3406
      %3461 = vmatprep.subr.mxu0 %v3405
      %3462 = vmatpush1.msra.mxu0 %v3404
      %3463 = vmatprep.subr.mxu0 %v3403
      %3464 = vmatpush1.msra.mxu0 %v3402
      %3465 = vmatprep.subr.mxu0 %v3401
      %3466 = vmatpush1.msra.mxu0 %v3400
      %3467 = vmatprep.subr.mxu0 %v3399
      %3468 = vmatpush1.msra.mxu0 %v3398
      %3469 = vmatprep.subr.mxu0 %v3397
      %3470 = vmatpush1.msra.mxu0 %v3396
      %3471 = vmatprep.subr.mxu0 %v3395
      %3472 = vmatpush1.msra.mxu0 %v3394
      %3473 = vmatprep.subr.mxu0 %v3393
      %3474 = vmatpush1.msra.mxu0 %v3392
      %3475 = vmatprep.subr.mxu0 %v3391
      %3476 = vmatpush1.msra.mxu0 %v3390
      %3477 = vmatprep.subr.mxu0 0.0
      %3478 = vmatpush2.msra.mxu0 0.0
      %3479 = vmatprep.subr.mxu0 0.0
      %3480 = vmatpush2.msra.mxu0 0.0
      %3481 = vmatprep.subr.mxu0 0.0
      %3482 = vmatpush2.msra.mxu0 0.0
      %3483 = vmatprep.subr.mxu0 0.0
      %3484 = vmatpush2.msra.mxu0 0.0
      %3485 = vmatprep.subr.mxu0 0.0
      %3486 = vmatpush2.msra.mxu0 0.0
      %3487 = vmatprep.subr.mxu0 0.0
      %3488 = vmatpush2.msra.mxu0 0.0
      %3489 = vmatprep.subr.mxu0 0.0
      %3490 = vmatpush2.msra.mxu0 0.0
      %3491 = vmatprep.subr.mxu0 0.0
      %3492 = vmatpush2.msra.mxu0 0.0
      %3493 = vmatprep.subr.mxu0 0.0
      %3494 = vmatpush2.msra.mxu0 0.0
      %3495 = vmatprep.subr.mxu0 0.0
      %3496 = vmatpush2.msra.mxu0 0.0
      %3497 = vmatprep.subr.mxu0 0.0
      %3498 = vmatpush2.msra.mxu0 0.0
      %3499 = vmatprep.subr.mxu0 0.0
      %3500 = vmatpush2.msra.mxu0 0.0
      %3501 = vmatprep.subr.mxu0 0.0
      %3502 = vmatpush2.msra.mxu0 0.0
      %3503 = vmatprep.subr.mxu0 0.0
      %3504 = vmatpush2.msra.mxu0 0.0
      %3505 = vmatprep.subr.mxu0 %v3425
      %3506 = vmatpush2.msra.mxu0 %v3424
      %3507 = vmatprep.subr.mxu0 %v3423
      %3508 = vmatpush2.msra.mxu0 %v3422
      %3509 = vmatprep.mubr.f32.mxu0 %v3440
      %3510 = vmatmul.mubr.f32.gmra.mxu0 %v3386
      %v3511 = vpop.f32.mrf.mxu0
      %v3512 = vadd.f32 %v3432, %v3511
      %v3513 = vpop.f32.mrf.mxu0
      %v3514 = vadd.f32 %v3432, %v3513
      %3515 = vmatprep.mubr.f32.mxu0 %v3443
      %3516 = vmatmul.mubr.f32.gmra.mxu0 %v3388
      %v3517 = vpop.f32.mrf.mxu0
      %v3518 = vadd.f32 %v3437, %v3517
      %v3519 = vpop.f32.mrf.mxu0
      %v3520 = vadd.f32 %v3437, %v3519
      %3521 = vdwg.mxu0
      %vm3522 = vcmp.ge.f32.partialorder %v3512, 0.0
      %vm3523 = vcmp.ge.f32.partialorder %v3514, 0.0
      %vm3524 = vcmp.ge.f32.partialorder %v3518, 0.0
      %vm3525 = vcmp.ge.f32.partialorder %v3520, 0.0
      %3526 = vset.pattern.permute.xlu0 1
      %3527 = vperm.xlu0 %3526, %v3427
      %v3528 = vpop.permute.xlu0 %3527
      %3530 = vset.pattern.permute.xlu0 1
      %3531 = vperm.xlu0 %3530, %v3428
      %v3532 = vpop.permute.xlu0 %3531
      %v3534 = vmul.f32 %v3512, %v3528
      %v3535 = vmul.f32 %v3514, %v3528
      %v3536 = vmul.f32 %v3518, %v3532
      %v3537 = vmul.f32 %v3520, %v3532
      %v3538 = vsel %vm3522, %v3512, %v3534
      %v3539 = vsel %vm3523, %v3514, %v3535
      %v3540 = vsel %vm3524, %v3518, %v3536
      %v3541 = vsel %vm3525, %v3520, %v3537
      %v3542 = vld [vmem:[%s9] sm:$0xff]
      %v3543 = vld [vmem:[%s9 + $0x8] sm:$0xff]
      %v3544 = vld [vmem:[%s9 + $0x10] sm:$0xff]
      %v3545 = vld [vmem:[%s9 + $0x18] sm:$0xff]
      %v3546 = vld [vmem:[%s9 + $0x20] sm:$0xff]
      %v3547 = vld [vmem:[%s9 + $0x28] sm:$0xff]
      %v3548 = vld [vmem:[%s9 + $0x30] sm:$0xff]
      %v3549 = vld [vmem:[%s10] sm:$0xff]
      %v3550 = vld [vmem:[%s10 + $0x8] sm:$0xff]
      %v3551 = vld [vmem:[%s10 + $0x10] sm:$0xff]
      %v3552 = vld [vmem:[%s10 + $0x18] sm:$0xff]
      %v3553 = vld [vmem:[%s10 + $0x20] sm:$0xff]
      %v3554 = vld [vmem:[%s10 + $0x28] sm:$0xff]
      %v3555 = vld [vmem:[%s10 + $0x30] sm:$0xff]
      %3557 = vset.pattern.permute.xlu0 0
      %3558 = vperm.xlu0 %3557, %v3549
      %v3559 = vpop.permute.xlu0 %3558
      %3562 = vset.pattern.permute.xlu0 0
      %3563 = vperm.xlu0 %3562, %v3550
      %v3564 = vpop.permute.xlu0 %3563
      %3567 = vset.pattern.permute.xlu0 0
      %3568 = vperm.xlu0 %3567, %v3551
      %v3569 = vpop.permute.xlu0 %3568
      %3572 = vset.pattern.permute.xlu0 0
      %3573 = vperm.xlu0 %3572, %v3552
      %v3574 = vpop.permute.xlu0 %3573
      %3577 = vset.pattern.permute.xlu0 0
      %3578 = vperm.xlu0 %3577, %v3553
      %v3579 = vpop.permute.xlu0 %3578
      %3582 = vset.pattern.permute.xlu0 0
      %3583 = vperm.xlu0 %3582, %v3554
      %v3584 = vpop.permute.xlu0 %3583
      %3587 = vset.pattern.permute.xlu0 0
      %3588 = vperm.xlu0 %3587, %v3555
      %v3589 = vpop.permute.xlu0 %3588
      %v3592 = vsel %vm621, %v3542, 0
      %v3595 = vsel %vm621, %v3543, 0
      %v3598 = vsel %vm621, %v3544, 0
      %v3601 = vsel %vm621, %v3545, 0
      %v3604 = vsel %vm621, %v3546, 0
      %v3607 = vsel %vm621, %v3547, 0
      %v3610 = vsel %vm621, %v3548, 0
      %3612 = vmatprep.subr.mxu0 0.0
      %3613 = vmatpush1.msra.mxu0 0.0
      %3614 = vmatprep.subr.mxu0 0.0
      %3615 = vmatpush1.msra.mxu0 0.0
      %3616 = vmatprep.subr.mxu0 0.0
      %3617 = vmatpush1.msra.mxu0 0.0
      %3618 = vmatprep.subr.mxu0 0.0
      %3619 = vmatpush1.msra.mxu0 0.0
      %3620 = vmatprep.subr.mxu0 0.0
      %3621 = vmatpush1.msra.mxu0 0.0
      %3622 = vmatprep.subr.mxu0 0.0
      %3623 = vmatpush1.msra.mxu0 0.0
      %3624 = vmatprep.subr.mxu0 0.0
      %3625 = vmatpush1.msra.mxu0 0.0
      %3626 = vmatprep.subr.mxu0 0.0
      %3627 = vmatpush1.msra.mxu0 0.0
      %3628 = vmatprep.subr.mxu0 0.0
      %3629 = vmatpush1.msra.mxu0 0.0
      %3630 = vmatprep.subr.mxu0 0.0
      %3631 = vmatpush1.msra.mxu0 0.0
      %3632 = vmatprep.subr.mxu0 0.0
      %3633 = vmatpush1.msra.mxu0 0.0
      %3634 = vmatprep.subr.mxu0 0.0
      %3635 = vmatpush1.msra.mxu0 0.0
      %3636 = vmatprep.subr.mxu0 0.0
      %3637 = vmatpush1.msra.mxu0 0.0
      %3638 = vmatprep.subr.mxu0 0.0
      %3639 = vmatpush1.msra.mxu0 0.0
      %3640 = vmatprep.subr.mxu0 %v3541
      %3641 = vmatpush1.msra.mxu0 %v3540
      %3642 = vmatprep.subr.mxu0 %v3539
      %3643 = vmatpush1.msra.mxu0 %v3538
      %3644 = vmatprep.subr.mxu0 0.0
      %3645 = vmatpush2.msra.mxu0 0.0
      %3646 = vmatprep.subr.mxu0 0.0
      %3647 = vmatpush2.msra.mxu0 0.0
      %3648 = vmatprep.subr.mxu0 0.0
      %3649 = vmatpush2.msra.mxu0 0.0
      %3650 = vmatprep.subr.mxu0 0.0
      %3651 = vmatpush2.msra.mxu0 0.0
      %3652 = vmatprep.subr.mxu0 0.0
      %3653 = vmatpush2.msra.mxu0 0.0
      %3654 = vmatprep.subr.mxu0 0.0
      %3655 = vmatpush2.msra.mxu0 0.0
      %3656 = vmatprep.subr.mxu0 0.0
      %3657 = vmatpush2.msra.mxu0 0.0
      %3658 = vmatprep.subr.mxu0 0.0
      %3659 = vmatpush2.msra.mxu0 0.0
      %3660 = vmatprep.subr.mxu0 0.0
      %3661 = vmatpush2.msra.mxu0 0.0
      %3662 = vmatprep.subr.mxu0 0.0
      %3663 = vmatpush2.msra.mxu0 0.0
      %3664 = vmatprep.subr.mxu0 0.0
      %3665 = vmatpush2.msra.mxu0 0.0
      %3666 = vmatprep.subr.mxu0 0.0
      %3667 = vmatpush2.msra.mxu0 0.0
      %3668 = vmatprep.subr.mxu0 0.0
      %3669 = vmatpush2.msra.mxu0 0.0
      %3670 = vmatprep.subr.mxu0 0.0
      %3671 = vmatpush2.msra.mxu0 0.0
      %3672 = vmatprep.subr.mxu0 0.0
      %3673 = vmatpush2.msra.mxu0 0.0
      %3674 = vmatprep.subr.mxu0 0.0
      %3675 = vmatpush2.msra.mxu0 0.0
      %3676 = vmatprep.mubr.f32.mxu0 0.0
      %3677 = vmatmul.mubr.f32.gmra.mxu0 %v3592
      %v3678 = vpop.f32.mrf.mxu0
      %v3679 = vadd.f32 %v3559, %v3678
      %v3680 = vpop.f32.mrf.mxu0
      %v3681 = vadd.f32 %v3559, %v3680
      %3682 = vmatprep.mubr.f32.mxu0 0.0
      %3683 = vmatmul.mubr.f32.gmra.mxu0 %v3595
      %v3684 = vpop.f32.mrf.mxu0
      %v3685 = vadd.f32 %v3564, %v3684
      %v3686 = vpop.f32.mrf.mxu0
      %v3687 = vadd.f32 %v3564, %v3686
      %3688 = vmatprep.mubr.f32.mxu0 0.0
      %3689 = vmatmul.mubr.f32.gmra.mxu0 %v3598
      %v3690 = vpop.f32.mrf.mxu0
      %v3691 = vadd.f32 %v3569, %v3690
      %v3692 = vpop.f32.mrf.mxu0
      %v3693 = vadd.f32 %v3569, %v3692
      %3694 = vmatprep.mubr.f32.mxu0 0.0
      %3695 = vmatmul.mubr.f32.gmra.mxu0 %v3601
      %v3696 = vpop.f32.mrf.mxu0
      %v3697 = vadd.f32 %v3574, %v3696
      %v3698 = vpop.f32.mrf.mxu0
      %v3699 = vadd.f32 %v3574, %v3698
      %3700 = vmatprep.mubr.f32.mxu0 0.0
      %3701 = vmatmul.mubr.f32.gmra.mxu0 %v3604
      %v3702 = vpop.f32.mrf.mxu0
      %v3703 = vadd.f32 %v3579, %v3702
      %v3704 = vpop.f32.mrf.mxu0
      %v3705 = vadd.f32 %v3579, %v3704
      %3706 = vmatprep.mubr.f32.mxu0 0.0
      %3707 = vmatmul.mubr.f32.gmra.mxu0 %v3607
      %v3708 = vpop.f32.mrf.mxu0
      %v3709 = vadd.f32 %v3584, %v3708
      %v3710 = vpop.f32.mrf.mxu0
      %v3711 = vadd.f32 %v3584, %v3710
      %3712 = vmatprep.mubr.f32.mxu0 0.0
      %3713 = vmatmul.mubr.f32.gmra.mxu0 %v3610
      %v3714 = vpop.f32.mrf.mxu0
      %v3715 = vadd.f32 %v3589, %v3714
      %v3716 = vpop.f32.mrf.mxu0
      %v3717 = vadd.f32 %v3589, %v3716
      %3718 = vdwg.mxu0
      %vm3719 = vcmp.ge.f32.partialorder %v3679, 0.0
      %vm3720 = vcmp.ge.f32.partialorder %v3681, 0.0
      %vm3721 = vcmp.ge.f32.partialorder %v3685, 0.0
      %vm3722 = vcmp.ge.f32.partialorder %v3687, 0.0
      %vm3723 = vcmp.ge.f32.partialorder %v3691, 0.0
      %vm3724 = vcmp.ge.f32.partialorder %v3693, 0.0
      %vm3725 = vcmp.ge.f32.partialorder %v3697, 0.0
      %vm3726 = vcmp.ge.f32.partialorder %v3699, 0.0
      %vm3727 = vcmp.ge.f32.partialorder %v3703, 0.0
      %vm3728 = vcmp.ge.f32.partialorder %v3705, 0.0
      %vm3729 = vcmp.ge.f32.partialorder %v3709, 0.0
      %vm3730 = vcmp.ge.f32.partialorder %v3711, 0.0
      %vm3731 = vcmp.ge.f32.partialorder %v3715, 0.0
      %vm3732 = vcmp.ge.f32.partialorder %v3717, 0.0
      %3733 = vset.pattern.permute.xlu0 1
      %3734 = vperm.xlu0 %3733, %v3549
      %v3735 = vpop.permute.xlu0 %3734
      %3737 = vset.pattern.permute.xlu0 1
      %3738 = vperm.xlu0 %3737, %v3550
      %v3739 = vpop.permute.xlu0 %3738
      %3741 = vset.pattern.permute.xlu0 1
      %3742 = vperm.xlu0 %3741, %v3551
      %v3743 = vpop.permute.xlu0 %3742
      %3745 = vset.pattern.permute.xlu0 1
      %3746 = vperm.xlu0 %3745, %v3552
      %v3747 = vpop.permute.xlu0 %3746
      %3749 = vset.pattern.permute.xlu0 1
      %3750 = vperm.xlu0 %3749, %v3553
      %v3751 = vpop.permute.xlu0 %3750
      %3753 = vset.pattern.permute.xlu0 1
      %3754 = vperm.xlu0 %3753, %v3554
      %v3755 = vpop.permute.xlu0 %3754
      %3757 = vset.pattern.permute.xlu0 1
      %3758 = vperm.xlu0 %3757, %v3555
      %v3759 = vpop.permute.xlu0 %3758
      %v3761 = vmul.f32 %v3679, %v3735
      %v3762 = vmul.f32 %v3681, %v3735
      %v3763 = vmul.f32 %v3685, %v3739
      %v3764 = vmul.f32 %v3687, %v3739
      %v3765 = vmul.f32 %v3691, %v3743
      %v3766 = vmul.f32 %v3693, %v3743
      %v3767 = vmul.f32 %v3697, %v3747
      %v3768 = vmul.f32 %v3699, %v3747
      %v3769 = vmul.f32 %v3703, %v3751
      %v3770 = vmul.f32 %v3705, %v3751
      %v3771 = vmul.f32 %v3709, %v3755
      %v3772 = vmul.f32 %v3711, %v3755
      %v3773 = vmul.f32 %v3715, %v3759
      %v3774 = vmul.f32 %v3717, %v3759
      %v3775 = vsel %vm3719, %v3679, %v3761
      %v3776 = vsel %vm3720, %v3681, %v3762
      %v3777 = vsel %vm3721, %v3685, %v3763
      %v3778 = vsel %vm3722, %v3687, %v3764
      %v3779 = vsel %vm3723, %v3691, %v3765
      %v3780 = vsel %vm3724, %v3693, %v3766
      %v3781 = vsel %vm3725, %v3697, %v3767
      %v3782 = vsel %vm3726, %v3699, %v3768
      %v3783 = vsel %vm3727, %v3703, %v3769
      %v3784 = vsel %vm3728, %v3705, %v3770
      %v3785 = vsel %vm3729, %v3709, %v3771
      %v3786 = vsel %vm3730, %v3711, %v3772
      %v3787 = vsel %vm3731, %v3715, %v3773
      %v3788 = vsel %vm3732, %v3717, %v3774
      %v3789 = vld [vmem:[%s1] ss:$8 sm:$0x3]
      %v3791 = vlaneseq
      %v3792 = vshrl.u32 %v3791, 7
      %v3793 = vsub.s32 0, %v3792
      %v3794 = vrot.slane %v3789, %v3793
      %v3795 = vlaneseq
      %v3796 = vshrl.u32 %v3795, 7
      %v3797 = vsub.s32 1, %v3796
      %v3798 = vrot.slane %v3789, %v3797
      %3799 = vrot.lane.b32.xlu0 %v3794, 94
      %v3800 = vpop.permute.xlu0 %3799
      %3801 = vrot.lane.b32.xlu0 %v3798, 94
      %v3802 = vpop.permute.xlu0 %3801
      %v3803 = vsel %vm444, %v3800, %v3802
      %v3806 = vmul.f32 %v3775, %v3803
      %v3807 = vmul.f32 %v3776, %v3802
      %v3808 = vmul.f32 %v3777, %v3803
      %v3809 = vmul.f32 %v3778, %v3802
      %v3810 = vmul.f32 %v3779, %v3803
      %v3811 = vmul.f32 %v3780, %v3802
      %v3812 = vmul.f32 %v3781, %v3803
      %v3813 = vmul.f32 %v3782, %v3802
      %v3814 = vmul.f32 %v3783, %v3803
      %v3815 = vmul.f32 %v3784, %v3802
      %v3816 = vmul.f32 %v3785, %v3803
      %v3817 = vmul.f32 %v3786, %v3802
      %v3818 = vmul.f32 %v3787, %v3803
      %v3819 = vmul.f32 %v3788, %v3802
      %3834 = vrot.lane.b32.xlu0 %v3806, 34
      %v3835 = vpop.permute.xlu0 %3834
      %3836 = vrot.lane.b32.xlu0 %v3807, 34
      %v3837 = vpop.permute.xlu0 %3836
      %3838 = vrot.lane.b32.xlu0 %v3808, 34
      %v3839 = vpop.permute.xlu0 %3838
      %3840 = vrot.lane.b32.xlu0 %v3809, 34
      %v3841 = vpop.permute.xlu0 %3840
      %3842 = vrot.lane.b32.xlu0 %v3810, 34
      %v3843 = vpop.permute.xlu0 %3842
      %3844 = vrot.lane.b32.xlu0 %v3811, 34
      %v3845 = vpop.permute.xlu0 %3844
      %3846 = vrot.lane.b32.xlu0 %v3812, 34
      %v3847 = vpop.permute.xlu0 %3846
      %3848 = vrot.lane.b32.xlu0 %v3813, 34
      %v3849 = vpop.permute.xlu0 %3848
      %3850 = vrot.lane.b32.xlu0 %v3814, 34
      %v3851 = vpop.permute.xlu0 %3850
      %3852 = vrot.lane.b32.xlu0 %v3815, 34
      %v3853 = vpop.permute.xlu0 %3852
      %3854 = vrot.lane.b32.xlu0 %v3816, 34
      %v3855 = vpop.permute.xlu0 %3854
      %3856 = vrot.lane.b32.xlu0 %v3817, 34
      %v3857 = vpop.permute.xlu0 %3856
      %3858 = vrot.lane.b32.xlu0 %v3818, 34
      %v3859 = vpop.permute.xlu0 %3858
      %3860 = vrot.lane.b32.xlu0 %v3819, 34
      %v3861 = vpop.permute.xlu0 %3860
      %v3862 = vsel %vm452, %v3835, %v3837
      %v3863 = vsel %vm452, %v3839, %v3841
      %v3864 = vsel %vm452, %v3843, %v3845
      %v3865 = vsel %vm452, %v3847, %v3849
      %v3866 = vsel %vm452, %v3851, %v3853
      %v3867 = vsel %vm452, %v3855, %v3857
      %v3868 = vsel %vm452, %v3859, %v3861
      %vm3883 = vcmask 1047824
      %3884 = vst.msk [vmem:[#allocation4] sm:$0xff] %vm3883, %v3835
      %3885 = vst [vmem:[#allocation4 + $0x8] sm:$0xff] %v3862
      %3886 = vst.msk [vmem:[#allocation4 + $0x10] sm:$0xff] %vm3883, %v3839
      %3887 = vst [vmem:[#allocation4 + $0x18] sm:$0xff] %v3863
      %3888 = vst.msk [vmem:[#allocation4 + $0x20] sm:$0xff] %vm3883, %v3843
      %3889 = vst [vmem:[#allocation4 + $0x28] sm:$0xff] %v3864
      %3890 = vst.msk [vmem:[#allocation4 + $0x30] sm:$0xff] %vm3883, %v3847
      %3891 = vst [vmem:[#allocation4 + $0x38] sm:$0xff] %v3865
      %3892 = vst.msk [vmem:[#allocation4 + $0x40] sm:$0xff] %vm3883, %v3851
      %3893 = vst [vmem:[#allocation4 + $0x48] sm:$0xff] %v3866
      %3894 = vst.msk [vmem:[#allocation4 + $0x50] sm:$0xff] %vm3883, %v3855
      %3895 = vst [vmem:[#allocation4 + $0x58] sm:$0xff] %v3867
      %3896 = vst.msk [vmem:[#allocation4 + $0x60] sm:$0xff] %vm3883, %v3859
      %3897 = vst [vmem:[#allocation4 + $0x68] sm:$0xff] %v3868
      %3898 = vst.msk [vmem:[#allocation4] sm:$0xff] %vm452, 0.0
      %3899 = vst.msk [vmem:[#allocation4 + $0x10] sm:$0xff] %vm452, 0.0
      %3900 = vst.msk [vmem:[#allocation4 + $0x20] sm:$0xff] %vm452, 0.0
      %3901 = vst.msk [vmem:[#allocation4 + $0x30] sm:$0xff] %vm452, 0.0
      %3902 = vst.msk [vmem:[#allocation4 + $0x40] sm:$0xff] %vm452, 0.0
      %3903 = vst.msk [vmem:[#allocation4 + $0x50] sm:$0xff] %vm452, 0.0
      %3904 = vst.msk [vmem:[#allocation4 + $0x60] sm:$0xff] %vm452, 0.0
      %v3905 = vld [vmem:[%s463] ss:$8 sm:$0x3]
      %v3907 = vlaneseq
      %v3908 = vshrl.u32 %v3907, 7
      %v3909 = vsub.s32 0, %v3908
      %v3910 = vrot.slane %v3905, %v3909
      %v3911 = vlaneseq
      %v3912 = vshrl.u32 %v3911, 7
      %v3913 = vsub.s32 1, %v3912
      %v3914 = vrot.slane %v3905, %v3913
      %3915 = vrot.lane.b32.xlu0 %v3910, 95
      %v3916 = vpop.permute.xlu0 %3915
      %3917 = vrot.lane.b32.xlu0 %v3914, 95
      %v3918 = vpop.permute.xlu0 %3917
      %v3919 = vsel %vm469, %v3916, %v3918
      %v3922 = vmul.f32 %v3775, %v3919
      %v3923 = vmul.f32 %v3776, %v3918
      %v3924 = vmul.f32 %v3777, %v3919
      %v3925 = vmul.f32 %v3778, %v3918
      %v3926 = vmul.f32 %v3779, %v3919
      %v3927 = vmul.f32 %v3780, %v3918
      %v3928 = vmul.f32 %v3781, %v3919
      %v3929 = vmul.f32 %v3782, %v3918
      %v3930 = vmul.f32 %v3783, %v3919
      %v3931 = vmul.f32 %v3784, %v3918
      %v3932 = vmul.f32 %v3785, %v3919
      %v3933 = vmul.f32 %v3786, %v3918
      %v3934 = vmul.f32 %v3787, %v3919
      %v3935 = vmul.f32 %v3788, %v3918
      %3950 = vrot.lane.b32.xlu0 %v3922, 33
      %v3951 = vpop.permute.xlu0 %3950
      %3952 = vrot.lane.b32.xlu0 %v3923, 33
      %v3953 = vpop.permute.xlu0 %3952
      %3954 = vrot.lane.b32.xlu0 %v3924, 33
      %v3955 = vpop.permute.xlu0 %3954
      %3956 = vrot.lane.b32.xlu0 %v3925, 33
      %v3957 = vpop.permute.xlu0 %3956
      %3958 = vrot.lane.b32.xlu0 %v3926, 33
      %v3959 = vpop.permute.xlu0 %3958
      %3960 = vrot.lane.b32.xlu0 %v3927, 33
      %v3961 = vpop.permute.xlu0 %3960
      %3962 = vrot.lane.b32.xlu0 %v3928, 33
      %v3963 = vpop.permute.xlu0 %3962
      %3964 = vrot.lane.b32.xlu0 %v3929, 33
      %v3965 = vpop.permute.xlu0 %3964
      %3966 = vrot.lane.b32.xlu0 %v3930, 33
      %v3967 = vpop.permute.xlu0 %3966
      %3968 = vrot.lane.b32.xlu0 %v3931, 33
      %v3969 = vpop.permute.xlu0 %3968
      %3970 = vrot.lane.b32.xlu0 %v3932, 33
      %v3971 = vpop.permute.xlu0 %3970
      %3972 = vrot.lane.b32.xlu0 %v3933, 33
      %v3973 = vpop.permute.xlu0 %3972
      %3974 = vrot.lane.b32.xlu0 %v3934, 33
      %v3975 = vpop.permute.xlu0 %3974
      %3976 = vrot.lane.b32.xlu0 %v3935, 33
      %v3977 = vpop.permute.xlu0 %3976
      %v3978 = vsel %vm477, %v3951, %v3953
      %v3979 = vsel %vm477, %v3955, %v3957
      %v3980 = vsel %vm477, %v3959, %v3961
      %v3981 = vsel %vm477, %v3963, %v3965
      %v3982 = vsel %vm477, %v3967, %v3969
      %v3983 = vsel %vm477, %v3971, %v3973
      %v3984 = vsel %vm477, %v3975, %v3977
      %vm3999 = vcmask 1047816
      %4000 = vst.msk [vmem:[#allocation4 + $0x70] sm:$0xff] %vm3999, %v3951
      %4001 = vst [vmem:[#allocation4 + $0x78] sm:$0xff] %v3978
      %4002 = vst.msk [vmem:[#allocation4 + $0x80] sm:$0xff] %vm3999, %v3955
      %4003 = vst [vmem:[#allocation4 + $0x88] sm:$0xff] %v3979
      %4004 = vst.msk [vmem:[#allocation4 + $0x90] sm:$0xff] %vm3999, %v3959
      %4005 = vst [vmem:[#allocation4 + $0x98] sm:$0xff] %v3980
      %4006 = vst.msk [vmem:[#allocation4 + $0xa0] sm:$0xff] %vm3999, %v3963
      %4007 = vst [vmem:[#allocation4 + $0xa8] sm:$0xff] %v3981
      %4008 = vst.msk [vmem:[#allocation4 + $0xb0] sm:$0xff] %vm3999, %v3967
      %4009 = vst [vmem:[#allocation4 + $0xb8] sm:$0xff] %v3982
      %4010 = vst.msk [vmem:[#allocation4 + $0xc0] sm:$0xff] %vm3999, %v3971
      %4011 = vst [vmem:[#allocation4 + $0xc8] sm:$0xff] %v3983
      %4012 = vst.msk [vmem:[#allocation4 + $0xd0] sm:$0xff] %vm3999, %v3975
      %4013 = vst [vmem:[#allocation4 + $0xd8] sm:$0xff] %v3984
      %4014 = vst.msk [vmem:[#allocation4 + $0x70] sm:$0xff] %vm477, 0.0
      %4015 = vst.msk [vmem:[#allocation4 + $0x80] sm:$0xff] %vm477, 0.0
      %4016 = vst.msk [vmem:[#allocation4 + $0x90] sm:$0xff] %vm477, 0.0
      %4017 = vst.msk [vmem:[#allocation4 + $0xa0] sm:$0xff] %vm477, 0.0
      %4018 = vst.msk [vmem:[#allocation4 + $0xb0] sm:$0xff] %vm477, 0.0
      %4019 = vst.msk [vmem:[#allocation4 + $0xc0] sm:$0xff] %vm477, 0.0
      %4020 = vst.msk [vmem:[#allocation4 + $0xd0] sm:$0xff] %vm477, 0.0
      %v4021 = vld [vmem:[%s487] ss:$8 sm:$0x3]
      %v4023 = vlaneseq
      %v4024 = vshrl.u32 %v4023, 7
      %v4025 = vsub.s32 0, %v4024
      %v4026 = vrot.slane %v4021, %v4025
      %v4027 = vlaneseq
      %v4028 = vshrl.u32 %v4027, 7
      %v4029 = vsub.s32 1, %v4028
      %v4030 = vrot.slane %v4021, %v4029
      %4031 = vrot.lane.b32.xlu0 %v4026, 96
      %v4032 = vpop.permute.xlu0 %4031
      %4033 = vrot.lane.b32.xlu0 %v4030, 96
      %v4034 = vpop.permute.xlu0 %4033
      %v4035 = vsel %vm493, %v4032, %v4034
      %v4038 = vmul.f32 %v3775, %v4035
      %v4039 = vmul.f32 %v3776, %v4034
      %v4040 = vmul.f32 %v3777, %v4035
      %v4041 = vmul.f32 %v3778, %v4034
      %v4042 = vmul.f32 %v3779, %v4035
      %v4043 = vmul.f32 %v3780, %v4034
      %v4044 = vmul.f32 %v3781, %v4035
      %v4045 = vmul.f32 %v3782, %v4034
      %v4046 = vmul.f32 %v3783, %v4035
      %v4047 = vmul.f32 %v3784, %v4034
      %v4048 = vmul.f32 %v3785, %v4035
      %v4049 = vmul.f32 %v3786, %v4034
      %v4050 = vmul.f32 %v3787, %v4035
      %v4051 = vmul.f32 %v3788, %v4034
      %4066 = vrot.lane.b32.xlu0 %v4038, 32
      %v4067 = vpop.permute.xlu0 %4066
      %4068 = vrot.lane.b32.xlu0 %v4039, 32
      %v4069 = vpop.permute.xlu0 %4068
      %4070 = vrot.lane.b32.xlu0 %v4040, 32
      %v4071 = vpop.permute.xlu0 %4070
      %4072 = vrot.lane.b32.xlu0 %v4041, 32
      %v4073 = vpop.permute.xlu0 %4072
      %4074 = vrot.lane.b32.xlu0 %v4042, 32
      %v4075 = vpop.permute.xlu0 %4074
      %4076 = vrot.lane.b32.xlu0 %v4043, 32
      %v4077 = vpop.permute.xlu0 %4076
      %4078 = vrot.lane.b32.xlu0 %v4044, 32
      %v4079 = vpop.permute.xlu0 %4078
      %4080 = vrot.lane.b32.xlu0 %v4045, 32
      %v4081 = vpop.permute.xlu0 %4080
      %4082 = vrot.lane.b32.xlu0 %v4046, 32
      %v4083 = vpop.permute.xlu0 %4082
      %4084 = vrot.lane.b32.xlu0 %v4047, 32
      %v4085 = vpop.permute.xlu0 %4084
      %4086 = vrot.lane.b32.xlu0 %v4048, 32
      %v4087 = vpop.permute.xlu0 %4086
      %4088 = vrot.lane.b32.xlu0 %v4049, 32
      %v4089 = vpop.permute.xlu0 %4088
      %4090 = vrot.lane.b32.xlu0 %v4050, 32
      %v4091 = vpop.permute.xlu0 %4090
      %4092 = vrot.lane.b32.xlu0 %v4051, 32
      %v4093 = vpop.permute.xlu0 %4092
      %v4094 = vsel %vm501, %v4067, %v4069
      %v4095 = vsel %vm501, %v4071, %v4073
      %v4096 = vsel %vm501, %v4075, %v4077
      %v4097 = vsel %vm501, %v4079, %v4081
      %v4098 = vsel %vm501, %v4083, %v4085
      %v4099 = vsel %vm501, %v4087, %v4089
      %v4100 = vsel %vm501, %v4091, %v4093
      %vm4115 = vcmask 1047808
      %4116 = vst.msk [vmem:[#allocation4 + $0xe0] sm:$0xff] %vm4115, %v4067
      %4117 = vst [vmem:[#allocation4 + $0xe8] sm:$0xff] %v4094
      %4118 = vst.msk [vmem:[#allocation4 + $0xf0] sm:$0xff] %vm4115, %v4071
      %4119 = vst [vmem:[#allocation4 + $0xf8] sm:$0xff] %v4095
      %4120 = vst.msk [vmem:[#allocation4 + $0x100] sm:$0xff] %vm4115, %v4075
      %4121 = vst [vmem:[#allocation4 + $0x108] sm:$0xff] %v4096
      %4122 = vst.msk [vmem:[#allocation4 + $0x110] sm:$0xff] %vm4115, %v4079
      %4123 = vst [vmem:[#allocation4 + $0x118] sm:$0xff] %v4097
      %4124 = vst.msk [vmem:[#allocation4 + $0x120] sm:$0xff] %vm4115, %v4083
      %4125 = vst [vmem:[#allocation4 + $0x128] sm:$0xff] %v4098
      %4126 = vst.msk [vmem:[#allocation4 + $0x130] sm:$0xff] %vm4115, %v4087
      %4127 = vst [vmem:[#allocation4 + $0x138] sm:$0xff] %v4099
      %4128 = vst.msk [vmem:[#allocation4 + $0x140] sm:$0xff] %vm4115, %v4091
      %4129 = vst [vmem:[#allocation4 + $0x148] sm:$0xff] %v4100
      %4130 = vst.msk [vmem:[#allocation4 + $0xe0] sm:$0xff] %vm501, 0.0
      %4131 = vst.msk [vmem:[#allocation4 + $0xf0] sm:$0xff] %vm501, 0.0
      %4132 = vst.msk [vmem:[#allocation4 + $0x100] sm:$0xff] %vm501, 0.0
      %4133 = vst.msk [vmem:[#allocation4 + $0x110] sm:$0xff] %vm501, 0.0
      %4134 = vst.msk [vmem:[#allocation4 + $0x120] sm:$0xff] %vm501, 0.0
      %4135 = vst.msk [vmem:[#allocation4 + $0x130] sm:$0xff] %vm501, 0.0
      %4136 = vst.msk [vmem:[#allocation4 + $0x140] sm:$0xff] %vm501, 0.0
      %v4137 = vld [vmem:[%s511] ss:$8 sm:$0x3]
      %v4139 = vlaneseq
      %v4140 = vshrl.u32 %v4139, 7
      %v4141 = vsub.s32 0, %v4140
      %v4142 = vrot.slane %v4137, %v4141
      %v4143 = vlaneseq
      %v4144 = vshrl.u32 %v4143, 7
      %v4145 = vsub.s32 1, %v4144
      %v4146 = vrot.slane %v4137, %v4145
      %4147 = vrot.lane.b32.xlu0 %v4142, 97
      %v4148 = vpop.permute.xlu0 %4147
      %4149 = vrot.lane.b32.xlu0 %v4146, 97
      %v4150 = vpop.permute.xlu0 %4149
      %v4151 = vsel %vm517, %v4148, %v4150
      %v4154 = vmul.f32 %v3775, %v4151
      %v4155 = vmul.f32 %v3776, %v4150
      %v4156 = vmul.f32 %v3777, %v4151
      %v4157 = vmul.f32 %v3778, %v4150
      %v4158 = vmul.f32 %v3779, %v4151
      %v4159 = vmul.f32 %v3780, %v4150
      %v4160 = vmul.f32 %v3781, %v4151
      %v4161 = vmul.f32 %v3782, %v4150
      %v4162 = vmul.f32 %v3783, %v4151
      %v4163 = vmul.f32 %v3784, %v4150
      %v4164 = vmul.f32 %v3785, %v4151
      %v4165 = vmul.f32 %v3786, %v4150
      %v4166 = vmul.f32 %v3787, %v4151
      %v4167 = vmul.f32 %v3788, %v4150
      %4182 = vrot.lane.b32.xlu0 %v4154, 31
      %v4183 = vpop.permute.xlu0 %4182
      %4184 = vrot.lane.b32.xlu0 %v4155, 31
      %v4185 = vpop.permute.xlu0 %4184
      %4186 = vrot.lane.b32.xlu0 %v4156, 31
      %v4187 = vpop.permute.xlu0 %4186
      %4188 = vrot.lane.b32.xlu0 %v4157, 31
      %v4189 = vpop.permute.xlu0 %4188
      %4190 = vrot.lane.b32.xlu0 %v4158, 31
      %v4191 = vpop.permute.xlu0 %4190
      %4192 = vrot.lane.b32.xlu0 %v4159, 31
      %v4193 = vpop.permute.xlu0 %4192
      %4194 = vrot.lane.b32.xlu0 %v4160, 31
      %v4195 = vpop.permute.xlu0 %4194
      %4196 = vrot.lane.b32.xlu0 %v4161, 31
      %v4197 = vpop.permute.xlu0 %4196
      %4198 = vrot.lane.b32.xlu0 %v4162, 31
      %v4199 = vpop.permute.xlu0 %4198
      %4200 = vrot.lane.b32.xlu0 %v4163, 31
      %v4201 = vpop.permute.xlu0 %4200
      %4202 = vrot.lane.b32.xlu0 %v4164, 31
      %v4203 = vpop.permute.xlu0 %4202
      %4204 = vrot.lane.b32.xlu0 %v4165, 31
      %v4205 = vpop.permute.xlu0 %4204
      %4206 = vrot.lane.b32.xlu0 %v4166, 31
      %v4207 = vpop.permute.xlu0 %4206
      %4208 = vrot.lane.b32.xlu0 %v4167, 31
      %v4209 = vpop.permute.xlu0 %4208
      %v4210 = vsel %vm525, %v4183, %v4185
      %v4211 = vsel %vm525, %v4187, %v4189
      %v4212 = vsel %vm525, %v4191, %v4193
      %v4213 = vsel %vm525, %v4195, %v4197
      %v4214 = vsel %vm525, %v4199, %v4201
      %v4215 = vsel %vm525, %v4203, %v4205
      %v4216 = vsel %vm525, %v4207, %v4209
      %vm4231 = vcmask 1047800
      %4232 = vst.msk [vmem:[#allocation4 + $0x150] sm:$0xff] %vm4231, %v4183
      %4233 = vst [vmem:[#allocation4 + $0x158] sm:$0xff] %v4210
      %4234 = vst.msk [vmem:[#allocation4 + $0x160] sm:$0xff] %vm4231, %v4187
      %4235 = vst [vmem:[#allocation4 + $0x168] sm:$0xff] %v4211
      %4236 = vst.msk [vmem:[#allocation4 + $0x170] sm:$0xff] %vm4231, %v4191
      %4237 = vst [vmem:[#allocation4 + $0x178] sm:$0xff] %v4212
      %4238 = vst.msk [vmem:[#allocation4 + $0x180] sm:$0xff] %vm4231, %v4195
      %4239 = vst [vmem:[#allocation4 + $0x188] sm:$0xff] %v4213
      %4240 = vst.msk [vmem:[#allocation4 + $0x190] sm:$0xff] %vm4231, %v4199
      %4241 = vst [vmem:[#allocation4 + $0x198] sm:$0xff] %v4214
      %4242 = vst.msk [vmem:[#allocation4 + $0x1a0] sm:$0xff] %vm4231, %v4203
      %4243 = vst [vmem:[#allocation4 + $0x1a8] sm:$0xff] %v4215
      %4244 = vst.msk [vmem:[#allocation4 + $0x1b0] sm:$0xff] %vm4231, %v4207
      %4245 = vst [vmem:[#allocation4 + $0x1b8] sm:$0xff] %v4216
      %4246 = vst.msk [vmem:[#allocation4 + $0x150] sm:$0xff] %vm525, 0.0
      %4247 = vst.msk [vmem:[#allocation4 + $0x160] sm:$0xff] %vm525, 0.0
      %4248 = vst.msk [vmem:[#allocation4 + $0x170] sm:$0xff] %vm525, 0.0
      %4249 = vst.msk [vmem:[#allocation4 + $0x180] sm:$0xff] %vm525, 0.0
      %4250 = vst.msk [vmem:[#allocation4 + $0x190] sm:$0xff] %vm525, 0.0
      %4251 = vst.msk [vmem:[#allocation4 + $0x1a0] sm:$0xff] %vm525, 0.0
      %4252 = vst.msk [vmem:[#allocation4 + $0x1b0] sm:$0xff] %vm525, 0.0
      %v4253 = vld [vmem:[%s535] ss:$8 sm:$0x3]
      %v4255 = vlaneseq
      %v4256 = vshrl.u32 %v4255, 7
      %v4257 = vsub.s32 0, %v4256
      %v4258 = vrot.slane %v4253, %v4257
      %v4259 = vlaneseq
      %v4260 = vshrl.u32 %v4259, 7
      %v4261 = vsub.s32 1, %v4260
      %v4262 = vrot.slane %v4253, %v4261
      %4263 = vrot.lane.b32.xlu0 %v4258, 98
      %v4264 = vpop.permute.xlu0 %4263
      %4265 = vrot.lane.b32.xlu0 %v4262, 98
      %v4266 = vpop.permute.xlu0 %4265
      %v4267 = vsel %vm541, %v4264, %v4266
      %v4270 = vmul.f32 %v3775, %v4267
      %v4271 = vmul.f32 %v3776, %v4266
      %v4272 = vmul.f32 %v3777, %v4267
      %v4273 = vmul.f32 %v3778, %v4266
      %v4274 = vmul.f32 %v3779, %v4267
      %v4275 = vmul.f32 %v3780, %v4266
      %v4276 = vmul.f32 %v3781, %v4267
      %v4277 = vmul.f32 %v3782, %v4266
      %v4278 = vmul.f32 %v3783, %v4267
      %v4279 = vmul.f32 %v3784, %v4266
      %v4280 = vmul.f32 %v3785, %v4267
      %v4281 = vmul.f32 %v3786, %v4266
      %v4282 = vmul.f32 %v3787, %v4267
      %v4283 = vmul.f32 %v3788, %v4266
      %4298 = vrot.lane.b32.xlu0 %v4270, 30
      %v4299 = vpop.permute.xlu0 %4298
      %4300 = vrot.lane.b32.xlu0 %v4271, 30
      %v4301 = vpop.permute.xlu0 %4300
      %4302 = vrot.lane.b32.xlu0 %v4272, 30
      %v4303 = vpop.permute.xlu0 %4302
      %4304 = vrot.lane.b32.xlu0 %v4273, 30
      %v4305 = vpop.permute.xlu0 %4304
      %4306 = vrot.lane.b32.xlu0 %v4274, 30
      %v4307 = vpop.permute.xlu0 %4306
      %4308 = vrot.lane.b32.xlu0 %v4275, 30
      %v4309 = vpop.permute.xlu0 %4308
      %4310 = vrot.lane.b32.xlu0 %v4276, 30
      %v4311 = vpop.permute.xlu0 %4310
      %4312 = vrot.lane.b32.xlu0 %v4277, 30
      %v4313 = vpop.permute.xlu0 %4312
      %4314 = vrot.lane.b32.xlu0 %v4278, 30
      %v4315 = vpop.permute.xlu0 %4314
      %4316 = vrot.lane.b32.xlu0 %v4279, 30
      %v4317 = vpop.permute.xlu0 %4316
      %4318 = vrot.lane.b32.xlu0 %v4280, 30
      %v4319 = vpop.permute.xlu0 %4318
      %4320 = vrot.lane.b32.xlu0 %v4281, 30
      %v4321 = vpop.permute.xlu0 %4320
      %4322 = vrot.lane.b32.xlu0 %v4282, 30
      %v4323 = vpop.permute.xlu0 %4322
      %4324 = vrot.lane.b32.xlu0 %v4283, 30
      %v4325 = vpop.permute.xlu0 %4324
      %v4326 = vsel %vm549, %v4299, %v4301
      %v4327 = vsel %vm549, %v4303, %v4305
      %v4328 = vsel %vm549, %v4307, %v4309
      %v4329 = vsel %vm549, %v4311, %v4313
      %v4330 = vsel %vm549, %v4315, %v4317
      %v4331 = vsel %vm549, %v4319, %v4321
      %v4332 = vsel %vm549, %v4323, %v4325
      %vm4347 = vcmask 1047792
      %4348 = vst.msk [vmem:[#allocation4 + $0x1c0] sm:$0xff] %vm4347, %v4299
      %4349 = vst [vmem:[#allocation4 + $0x1c8] sm:$0xff] %v4326
      %4350 = vst.msk [vmem:[#allocation4 + $0x1d0] sm:$0xff] %vm4347, %v4303
      %4351 = vst [vmem:[#allocation4 + $0x1d8] sm:$0xff] %v4327
      %4352 = vst.msk [vmem:[#allocation4 + $0x1e0] sm:$0xff] %vm4347, %v4307
      %4353 = vst [vmem:[#allocation4 + $0x1e8] sm:$0xff] %v4328
      %4354 = vst.msk [vmem:[#allocation4 + $0x1f0] sm:$0xff] %vm4347, %v4311
      %4355 = vst [vmem:[#allocation4 + $0x1f8] sm:$0xff] %v4329
      %4356 = vst.msk [vmem:[#allocation4 + $0x200] sm:$0xff] %vm4347, %v4315
      %4357 = vst [vmem:[#allocation4 + $0x208] sm:$0xff] %v4330
      %4358 = vst.msk [vmem:[#allocation4 + $0x210] sm:$0xff] %vm4347, %v4319
      %4359 = vst [vmem:[#allocation4 + $0x218] sm:$0xff] %v4331
      %4360 = vst.msk [vmem:[#allocation4 + $0x220] sm:$0xff] %vm4347, %v4323
      %4361 = vst [vmem:[#allocation4 + $0x228] sm:$0xff] %v4332
      %4362 = vst.msk [vmem:[#allocation4 + $0x1c0] sm:$0xff] %vm549, 0.0
      %4363 = vst.msk [vmem:[#allocation4 + $0x1d0] sm:$0xff] %vm549, 0.0
      %4364 = vst.msk [vmem:[#allocation4 + $0x1e0] sm:$0xff] %vm549, 0.0
      %4365 = vst.msk [vmem:[#allocation4 + $0x1f0] sm:$0xff] %vm549, 0.0
      %4366 = vst.msk [vmem:[#allocation4 + $0x200] sm:$0xff] %vm549, 0.0
      %4367 = vst.msk [vmem:[#allocation4 + $0x210] sm:$0xff] %vm549, 0.0
      %4368 = vst.msk [vmem:[#allocation4 + $0x220] sm:$0xff] %vm549, 0.0
      %v4369 = vld [vmem:[%s559] ss:$8 sm:$0x3]
      %v4371 = vlaneseq
      %v4372 = vshrl.u32 %v4371, 7
      %v4373 = vsub.s32 0, %v4372
      %v4374 = vrot.slane %v4369, %v4373
      %v4375 = vlaneseq
      %v4376 = vshrl.u32 %v4375, 7
      %v4377 = vsub.s32 1, %v4376
      %v4378 = vrot.slane %v4369, %v4377
      %4379 = vrot.lane.b32.xlu0 %v4374, 110
      %v4380 = vpop.permute.xlu0 %4379
      %4381 = vrot.lane.b32.xlu0 %v4378, 110
      %v4382 = vpop.permute.xlu0 %4381
      %v4383 = vsel %vm565, %v4380, %v4382
      %v4386 = vmul.f32 %v3775, %v4383
      %v4387 = vmul.f32 %v3776, %v4382
      %v4388 = vmul.f32 %v3777, %v4383
      %v4389 = vmul.f32 %v3778, %v4382
      %v4390 = vmul.f32 %v3779, %v4383
      %v4391 = vmul.f32 %v3780, %v4382
      %v4392 = vmul.f32 %v3781, %v4383
      %v4393 = vmul.f32 %v3782, %v4382
      %v4394 = vmul.f32 %v3783, %v4383
      %v4395 = vmul.f32 %v3784, %v4382
      %v4396 = vmul.f32 %v3785, %v4383
      %v4397 = vmul.f32 %v3786, %v4382
      %v4398 = vmul.f32 %v3787, %v4383
      %v4399 = vmul.f32 %v3788, %v4382
      %4414 = vrot.lane.b32.xlu0 %v4386, 18
      %v4415 = vpop.permute.xlu0 %4414
      %4416 = vrot.lane.b32.xlu0 %v4387, 18
      %v4417 = vpop.permute.xlu0 %4416
      %4418 = vrot.lane.b32.xlu0 %v4388, 18
      %v4419 = vpop.permute.xlu0 %4418
      %4420 = vrot.lane.b32.xlu0 %v4389, 18
      %v4421 = vpop.permute.xlu0 %4420
      %4422 = vrot.lane.b32.xlu0 %v4390, 18
      %v4423 = vpop.permute.xlu0 %4422
      %4424 = vrot.lane.b32.xlu0 %v4391, 18
      %v4425 = vpop.permute.xlu0 %4424
      %4426 = vrot.lane.b32.xlu0 %v4392, 18
      %v4427 = vpop.permute.xlu0 %4426
      %4428 = vrot.lane.b32.xlu0 %v4393, 18
      %v4429 = vpop.permute.xlu0 %4428
      %4430 = vrot.lane.b32.xlu0 %v4394, 18
      %v4431 = vpop.permute.xlu0 %4430
      %4432 = vrot.lane.b32.xlu0 %v4395, 18
      %v4433 = vpop.permute.xlu0 %4432
      %4434 = vrot.lane.b32.xlu0 %v4396, 18
      %v4435 = vpop.permute.xlu0 %4434
      %4436 = vrot.lane.b32.xlu0 %v4397, 18
      %v4437 = vpop.permute.xlu0 %4436
      %4438 = vrot.lane.b32.xlu0 %v4398, 18
      %v4439 = vpop.permute.xlu0 %4438
      %4440 = vrot.lane.b32.xlu0 %v4399, 18
      %v4441 = vpop.permute.xlu0 %4440
      %v4442 = vsel %vm573, %v4415, %v4417
      %v4443 = vsel %vm573, %v4419, %v4421
      %v4444 = vsel %vm573, %v4423, %v4425
      %v4445 = vsel %vm573, %v4427, %v4429
      %v4446 = vsel %vm573, %v4431, %v4433
      %v4447 = vsel %vm573, %v4435, %v4437
      %v4448 = vsel %vm573, %v4439, %v4441
      %vm4463 = vcmask 1047696
      %4464 = vst.msk [vmem:[#allocation4 + $0x230] sm:$0xff] %vm4463, %v4415
      %4465 = vst [vmem:[#allocation4 + $0x238] sm:$0xff] %v4442
      %4466 = vst.msk [vmem:[#allocation4 + $0x240] sm:$0xff] %vm4463, %v4419
      %4467 = vst [vmem:[#allocation4 + $0x248] sm:$0xff] %v4443
      %4468 = vst.msk [vmem:[#allocation4 + $0x250] sm:$0xff] %vm4463, %v4423
      %4469 = vst [vmem:[#allocation4 + $0x258] sm:$0xff] %v4444
      %4470 = vst.msk [vmem:[#allocation4 + $0x260] sm:$0xff] %vm4463, %v4427
      %4471 = vst [vmem:[#allocation4 + $0x268] sm:$0xff] %v4445
      %4472 = vst.msk [vmem:[#allocation4 + $0x270] sm:$0xff] %vm4463, %v4431
      %4473 = vst [vmem:[#allocation4 + $0x278] sm:$0xff] %v4446
      %4474 = vst.msk [vmem:[#allocation4 + $0x280] sm:$0xff] %vm4463, %v4435
      %4475 = vst [vmem:[#allocation4 + $0x288] sm:$0xff] %v4447
      %4476 = vst.msk [vmem:[#allocation4 + $0x290] sm:$0xff] %vm4463, %v4439
      %4477 = vst [vmem:[#allocation4 + $0x298] sm:$0xff] %v4448
      %4478 = vst.msk [vmem:[#allocation4 + $0x230] sm:$0xff] %vm573, 0.0
      %4479 = vst.msk [vmem:[#allocation4 + $0x240] sm:$0xff] %vm573, 0.0
      %4480 = vst.msk [vmem:[#allocation4 + $0x250] sm:$0xff] %vm573, 0.0
      %4481 = vst.msk [vmem:[#allocation4 + $0x260] sm:$0xff] %vm573, 0.0
      %4482 = vst.msk [vmem:[#allocation4 + $0x270] sm:$0xff] %vm573, 0.0
      %4483 = vst.msk [vmem:[#allocation4 + $0x280] sm:$0xff] %vm573, 0.0
      %4484 = vst.msk [vmem:[#allocation4 + $0x290] sm:$0xff] %vm573, 0.0
      %v4485 = vld [vmem:[%s583] ss:$8 sm:$0x3]
      %v4487 = vlaneseq
      %v4488 = vshrl.u32 %v4487, 7
      %v4489 = vsub.s32 0, %v4488
      %v4490 = vrot.slane %v4485, %v4489
      %v4491 = vlaneseq
      %v4492 = vshrl.u32 %v4491, 7
      %v4493 = vsub.s32 1, %v4492
      %v4494 = vrot.slane %v4485, %v4493
      %4495 = vrot.lane.b32.xlu0 %v4490, 111
      %v4496 = vpop.permute.xlu0 %4495
      %4497 = vrot.lane.b32.xlu0 %v4494, 111
      %v4498 = vpop.permute.xlu0 %4497
      %v4499 = vsel %vm589, %v4496, %v4498
      %v4502 = vmul.f32 %v3775, %v4499
      %v4503 = vmul.f32 %v3776, %v4498
      %v4504 = vmul.f32 %v3777, %v4499
      %v4505 = vmul.f32 %v3778, %v4498
      %v4506 = vmul.f32 %v3779, %v4499
      %v4507 = vmul.f32 %v3780, %v4498
      %v4508 = vmul.f32 %v3781, %v4499
      %v4509 = vmul.f32 %v3782, %v4498
      %v4510 = vmul.f32 %v3783, %v4499
      %v4511 = vmul.f32 %v3784, %v4498
      %v4512 = vmul.f32 %v3785, %v4499
      %v4513 = vmul.f32 %v3786, %v4498
      %v4514 = vmul.f32 %v3787, %v4499
      %v4515 = vmul.f32 %v3788, %v4498
      %4530 = vrot.lane.b32.xlu0 %v4502, 17
      %v4531 = vpop.permute.xlu0 %4530
      %4532 = vrot.lane.b32.xlu0 %v4503, 17
      %v4533 = vpop.permute.xlu0 %4532
      %4534 = vrot.lane.b32.xlu0 %v4504, 17
      %v4535 = vpop.permute.xlu0 %4534
      %4536 = vrot.lane.b32.xlu0 %v4505, 17
      %v4537 = vpop.permute.xlu0 %4536
      %4538 = vrot.lane.b32.xlu0 %v4506, 17
      %v4539 = vpop.permute.xlu0 %4538
      %4540 = vrot.lane.b32.xlu0 %v4507, 17
      %v4541 = vpop.permute.xlu0 %4540
      %4542 = vrot.lane.b32.xlu0 %v4508, 17
      %v4543 = vpop.permute.xlu0 %4542
      %4544 = vrot.lane.b32.xlu0 %v4509, 17
      %v4545 = vpop.permute.xlu0 %4544
      %4546 = vrot.lane.b32.xlu0 %v4510, 17
      %v4547 = vpop.permute.xlu0 %4546
      %4548 = vrot.lane.b32.xlu0 %v4511, 17
      %v4549 = vpop.permute.xlu0 %4548
      %4550 = vrot.lane.b32.xlu0 %v4512, 17
      %v4551 = vpop.permute.xlu0 %4550
      %4552 = vrot.lane.b32.xlu0 %v4513, 17
      %v4553 = vpop.permute.xlu0 %4552
      %4554 = vrot.lane.b32.xlu0 %v4514, 17
      %v4555 = vpop.permute.xlu0 %4554
      %4556 = vrot.lane.b32.xlu0 %v4515, 17
      %v4557 = vpop.permute.xlu0 %4556
      %v4558 = vsel %vm597, %v4531, %v4533
      %v4559 = vsel %vm597, %v4535, %v4537
      %v4560 = vsel %vm597, %v4539, %v4541
      %v4561 = vsel %vm597, %v4543, %v4545
      %v4562 = vsel %vm597, %v4547, %v4549
      %v4563 = vsel %vm597, %v4551, %v4553
      %v4564 = vsel %vm597, %v4555, %v4557
      %4579 = vst.msk [vmem:[#allocation4 + $0x2a0] sm:$0xff] %vm1419, %v4531
      %4580 = vst [vmem:[#allocation4 + $0x2a8] sm:$0xff] %v4558
      %4581 = vst.msk [vmem:[#allocation4 + $0x2b0] sm:$0xff] %vm1419, %v4535
      %4582 = vst [vmem:[#allocation4 + $0x2b8] sm:$0xff] %v4559
      %4583 = vst.msk [vmem:[#allocation4 + $0x2c0] sm:$0xff] %vm1419, %v4539
      %4584 = vst [vmem:[#allocation4 + $0x2c8] sm:$0xff] %v4560
      %4585 = vst.msk [vmem:[#allocation4 + $0x2d0] sm:$0xff] %vm1419, %v4543
      %4586 = vst [vmem:[#allocation4 + $0x2d8] sm:$0xff] %v4561
      %4587 = vst.msk [vmem:[#allocation4 + $0x2e0] sm:$0xff] %vm1419, %v4547
      %4588 = vst [vmem:[#allocation4 + $0x2e8] sm:$0xff] %v4562
      %4589 = vst.msk [vmem:[#allocation4 + $0x2f0] sm:$0xff] %vm1419, %v4551
      %4590 = vst [vmem:[#allocation4 + $0x2f8] sm:$0xff] %v4563
      %4591 = vst.msk [vmem:[#allocation4 + $0x300] sm:$0xff] %vm1419, %v4555
      %4592 = vst [vmem:[#allocation4 + $0x308] sm:$0xff] %v4564
      %4593 = vst.msk [vmem:[#allocation4 + $0x2a0] sm:$0xff] %vm597, 0.0
      %4594 = vst.msk [vmem:[#allocation4 + $0x2b0] sm:$0xff] %vm597, 0.0
      %4595 = vst.msk [vmem:[#allocation4 + $0x2c0] sm:$0xff] %vm597, 0.0
      %4596 = vst.msk [vmem:[#allocation4 + $0x2d0] sm:$0xff] %vm597, 0.0
      %4597 = vst.msk [vmem:[#allocation4 + $0x2e0] sm:$0xff] %vm597, 0.0
      %4598 = vst.msk [vmem:[#allocation4 + $0x2f0] sm:$0xff] %vm597, 0.0
      %4599 = vst.msk [vmem:[#allocation4 + $0x300] sm:$0xff] %vm597, 0.0
      %v4600 = vld [vmem:[%s607] ss:$8 sm:$0x3]
      %v4602 = vlaneseq
      %v4603 = vshrl.u32 %v4602, 7
      %v4604 = vsub.s32 0, %v4603
      %v4605 = vrot.slane %v4600, %v4604
      %v4606 = vlaneseq
      %v4607 = vshrl.u32 %v4606, 7
      %v4608 = vsub.s32 1, %v4607
      %v4609 = vrot.slane %v4600, %v4608
      %4610 = vrot.lane.b32.xlu0 %v4605, 112
      %v4611 = vpop.permute.xlu0 %4610
      %4612 = vrot.lane.b32.xlu0 %v4609, 112
      %v4613 = vpop.permute.xlu0 %4612
      %v4614 = vsel %vm613, %v4611, %v4613
      %v4617 = vmul.f32 %v3775, %v4614
      %v4618 = vmul.f32 %v3776, %v4613
      %v4619 = vmul.f32 %v3777, %v4614
      %v4620 = vmul.f32 %v3778, %v4613
      %v4621 = vmul.f32 %v3779, %v4614
      %v4622 = vmul.f32 %v3780, %v4613
      %v4623 = vmul.f32 %v3781, %v4614
      %v4624 = vmul.f32 %v3782, %v4613
      %v4625 = vmul.f32 %v3783, %v4614
      %v4626 = vmul.f32 %v3784, %v4613
      %v4627 = vmul.f32 %v3785, %v4614
      %v4628 = vmul.f32 %v3786, %v4613
      %v4629 = vmul.f32 %v3787, %v4614
      %v4630 = vmul.f32 %v3788, %v4613
      %4645 = vrot.lane.b32.xlu0 %v4617, 16
      %v4646 = vpop.permute.xlu0 %4645
      %4647 = vrot.lane.b32.xlu0 %v4618, 16
      %v4648 = vpop.permute.xlu0 %4647
      %4649 = vrot.lane.b32.xlu0 %v4619, 16
      %v4650 = vpop.permute.xlu0 %4649
      %4651 = vrot.lane.b32.xlu0 %v4620, 16
      %v4652 = vpop.permute.xlu0 %4651
      %4653 = vrot.lane.b32.xlu0 %v4621, 16
      %v4654 = vpop.permute.xlu0 %4653
      %4655 = vrot.lane.b32.xlu0 %v4622, 16
      %v4656 = vpop.permute.xlu0 %4655
      %4657 = vrot.lane.b32.xlu0 %v4623, 16
      %v4658 = vpop.permute.xlu0 %4657
      %4659 = vrot.lane.b32.xlu0 %v4624, 16
      %v4660 = vpop.permute.xlu0 %4659
      %4661 = vrot.lane.b32.xlu0 %v4625, 16
      %v4662 = vpop.permute.xlu0 %4661
      %4663 = vrot.lane.b32.xlu0 %v4626, 16
      %v4664 = vpop.permute.xlu0 %4663
      %4665 = vrot.lane.b32.xlu0 %v4627, 16
      %v4666 = vpop.permute.xlu0 %4665
      %4667 = vrot.lane.b32.xlu0 %v4628, 16
      %v4668 = vpop.permute.xlu0 %4667
      %4669 = vrot.lane.b32.xlu0 %v4629, 16
      %v4670 = vpop.permute.xlu0 %4669
      %4671 = vrot.lane.b32.xlu0 %v4630, 16
      %v4672 = vpop.permute.xlu0 %4671
      %v4673 = vsel %vm621, %v4646, %v4648
      %v4674 = vsel %vm621, %v4650, %v4652
      %v4675 = vsel %vm621, %v4654, %v4656
      %v4676 = vsel %vm621, %v4658, %v4660
      %v4677 = vsel %vm621, %v4662, %v4664
      %v4678 = vsel %vm621, %v4666, %v4668
      %v4679 = vsel %vm621, %v4670, %v4672
      %4694 = vst.msk [vmem:[#allocation4 + $0x310] sm:$0xff] %vm1466, %v4646
      %4695 = vst [vmem:[#allocation4 + $0x318] sm:$0xff] %v4673
      %4696 = vst.msk [vmem:[#allocation4 + $0x320] sm:$0xff] %vm1466, %v4650
      %4697 = vst [vmem:[#allocation4 + $0x328] sm:$0xff] %v4674
      %4698 = vst.msk [vmem:[#allocation4 + $0x330] sm:$0xff] %vm1466, %v4654
      %4699 = vst [vmem:[#allocation4 + $0x338] sm:$0xff] %v4675
      %4700 = vst.msk [vmem:[#allocation4 + $0x340] sm:$0xff] %vm1466, %v4658
      %4701 = vst [vmem:[#allocation4 + $0x348] sm:$0xff] %v4676
      %4702 = vst.msk [vmem:[#allocation4 + $0x350] sm:$0xff] %vm1466, %v4662
      %4703 = vst [vmem:[#allocation4 + $0x358] sm:$0xff] %v4677
      %4704 = vst.msk [vmem:[#allocation4 + $0x360] sm:$0xff] %vm1466, %v4666
      %4705 = vst [vmem:[#allocation4 + $0x368] sm:$0xff] %v4678
      %4706 = vst.msk [vmem:[#allocation4 + $0x370] sm:$0xff] %vm1466, %v4670
      %4707 = vst [vmem:[#allocation4 + $0x378] sm:$0xff] %v4679
      %4708 = vst.msk [vmem:[#allocation4 + $0x310] sm:$0xff] %vm621, 0.0
      %4709 = vst.msk [vmem:[#allocation4 + $0x320] sm:$0xff] %vm621, 0.0
      %4710 = vst.msk [vmem:[#allocation4 + $0x330] sm:$0xff] %vm621, 0.0
      %4711 = vst.msk [vmem:[#allocation4 + $0x340] sm:$0xff] %vm621, 0.0
      %4712 = vst.msk [vmem:[#allocation4 + $0x350] sm:$0xff] %vm621, 0.0
      %4713 = vst.msk [vmem:[#allocation4 + $0x360] sm:$0xff] %vm621, 0.0
      %4714 = vst.msk [vmem:[#allocation4 + $0x370] sm:$0xff] %vm621, 0.0
      %v4715 = vld [vmem:[%s631] ss:$8 sm:$0x3]
      %v4717 = vlaneseq
      %v4718 = vshrl.u32 %v4717, 7
      %v4719 = vsub.s32 0, %v4718
      %v4720 = vrot.slane %v4715, %v4719
      %v4721 = vlaneseq
      %v4722 = vshrl.u32 %v4721, 7
      %v4723 = vsub.s32 1, %v4722
      %v4724 = vrot.slane %v4715, %v4723
      %4725 = vrot.lane.b32.xlu0 %v4720, 113
      %v4726 = vpop.permute.xlu0 %4725
      %4727 = vrot.lane.b32.xlu0 %v4724, 113
      %v4728 = vpop.permute.xlu0 %4727
      %v4729 = vsel %vm637, %v4726, %v4728
      %v4732 = vmul.f32 %v3775, %v4729
      %v4733 = vmul.f32 %v3776, %v4728
      %v4734 = vmul.f32 %v3777, %v4729
      %v4735 = vmul.f32 %v3778, %v4728
      %v4736 = vmul.f32 %v3779, %v4729
      %v4737 = vmul.f32 %v3780, %v4728
      %v4738 = vmul.f32 %v3781, %v4729
      %v4739 = vmul.f32 %v3782, %v4728
      %v4740 = vmul.f32 %v3783, %v4729
      %v4741 = vmul.f32 %v3784, %v4728
      %v4742 = vmul.f32 %v3785, %v4729
      %v4743 = vmul.f32 %v3786, %v4728
      %v4744 = vmul.f32 %v3787, %v4729
      %v4745 = vmul.f32 %v3788, %v4728
      %4760 = vrot.lane.b32.xlu0 %v4732, 15
      %v4761 = vpop.permute.xlu0 %4760
      %4762 = vrot.lane.b32.xlu0 %v4733, 15
      %v4763 = vpop.permute.xlu0 %4762
      %4764 = vrot.lane.b32.xlu0 %v4734, 15
      %v4765 = vpop.permute.xlu0 %4764
      %4766 = vrot.lane.b32.xlu0 %v4735, 15
      %v4767 = vpop.permute.xlu0 %4766
      %4768 = vrot.lane.b32.xlu0 %v4736, 15
      %v4769 = vpop.permute.xlu0 %4768
      %4770 = vrot.lane.b32.xlu0 %v4737, 15
      %v4771 = vpop.permute.xlu0 %4770
      %4772 = vrot.lane.b32.xlu0 %v4738, 15
      %v4773 = vpop.permute.xlu0 %4772
      %4774 = vrot.lane.b32.xlu0 %v4739, 15
      %v4775 = vpop.permute.xlu0 %4774
      %4776 = vrot.lane.b32.xlu0 %v4740, 15
      %v4777 = vpop.permute.xlu0 %4776
      %4778 = vrot.lane.b32.xlu0 %v4741, 15
      %v4779 = vpop.permute.xlu0 %4778
      %4780 = vrot.lane.b32.xlu0 %v4742, 15
      %v4781 = vpop.permute.xlu0 %4780
      %4782 = vrot.lane.b32.xlu0 %v4743, 15
      %v4783 = vpop.permute.xlu0 %4782
      %4784 = vrot.lane.b32.xlu0 %v4744, 15
      %v4785 = vpop.permute.xlu0 %4784
      %4786 = vrot.lane.b32.xlu0 %v4745, 15
      %v4787 = vpop.permute.xlu0 %4786
      %v4788 = vsel %vm645, %v4761, %v4763
      %v4789 = vsel %vm645, %v4765, %v4767
      %v4790 = vsel %vm645, %v4769, %v4771
      %v4791 = vsel %vm645, %v4773, %v4775
      %v4792 = vsel %vm645, %v4777, %v4779
      %v4793 = vsel %vm645, %v4781, %v4783
      %v4794 = vsel %vm645, %v4785, %v4787
      %4809 = vst.msk [vmem:[#allocation4 + $0x380] sm:$0xff] %vm1513, %v4761
      %4810 = vst [vmem:[#allocation4 + $0x388] sm:$0xff] %v4788
      %4811 = vst.msk [vmem:[#allocation4 + $0x390] sm:$0xff] %vm1513, %v4765
      %4812 = vst [vmem:[#allocation4 + $0x398] sm:$0xff] %v4789
      %4813 = vst.msk [vmem:[#allocation4 + $0x3a0] sm:$0xff] %vm1513, %v4769
      %4814 = vst [vmem:[#allocation4 + $0x3a8] sm:$0xff] %v4790
      %4815 = vst.msk [vmem:[#allocation4 + $0x3b0] sm:$0xff] %vm1513, %v4773
      %4816 = vst [vmem:[#allocation4 + $0x3b8] sm:$0xff] %v4791
      %4817 = vst.msk [vmem:[#allocation4 + $0x3c0] sm:$0xff] %vm1513, %v4777
      %4818 = vst [vmem:[#allocation4 + $0x3c8] sm:$0xff] %v4792
      %4819 = vst.msk [vmem:[#allocation4 + $0x3d0] sm:$0xff] %vm1513, %v4781
      %4820 = vst [vmem:[#allocation4 + $0x3d8] sm:$0xff] %v4793
      %4821 = vst.msk [vmem:[#allocation4 + $0x3e0] sm:$0xff] %vm1513, %v4785
      %4822 = vst [vmem:[#allocation4 + $0x3e8] sm:$0xff] %v4794
      %4823 = vst.msk [vmem:[#allocation4 + $0x380] sm:$0xff] %vm645, 0.0
      %4824 = vst.msk [vmem:[#allocation4 + $0x390] sm:$0xff] %vm645, 0.0
      %4825 = vst.msk [vmem:[#allocation4 + $0x3a0] sm:$0xff] %vm645, 0.0
      %4826 = vst.msk [vmem:[#allocation4 + $0x3b0] sm:$0xff] %vm645, 0.0
      %4827 = vst.msk [vmem:[#allocation4 + $0x3c0] sm:$0xff] %vm645, 0.0
      %4828 = vst.msk [vmem:[#allocation4 + $0x3d0] sm:$0xff] %vm645, 0.0
      %4829 = vst.msk [vmem:[#allocation4 + $0x3e0] sm:$0xff] %vm645, 0.0
      %v4830 = vld [vmem:[%s655] ss:$8 sm:$0x3]
      %v4832 = vlaneseq
      %v4833 = vshrl.u32 %v4832, 7
      %v4834 = vsub.s32 0, %v4833
      %v4835 = vrot.slane %v4830, %v4834
      %v4836 = vlaneseq
      %v4837 = vshrl.u32 %v4836, 7
      %v4838 = vsub.s32 1, %v4837
      %v4839 = vrot.slane %v4830, %v4838
      %4840 = vrot.lane.b32.xlu0 %v4835, 114
      %v4841 = vpop.permute.xlu0 %4840
      %4842 = vrot.lane.b32.xlu0 %v4839, 114
      %v4843 = vpop.permute.xlu0 %4842
      %v4844 = vsel %vm661, %v4841, %v4843
      %v4847 = vmul.f32 %v3775, %v4844
      %v4848 = vmul.f32 %v3776, %v4843
      %v4849 = vmul.f32 %v3777, %v4844
      %v4850 = vmul.f32 %v3778, %v4843
      %v4851 = vmul.f32 %v3779, %v4844
      %v4852 = vmul.f32 %v3780, %v4843
      %v4853 = vmul.f32 %v3781, %v4844
      %v4854 = vmul.f32 %v3782, %v4843
      %v4855 = vmul.f32 %v3783, %v4844
      %v4856 = vmul.f32 %v3784, %v4843
      %v4857 = vmul.f32 %v3785, %v4844
      %v4858 = vmul.f32 %v3786, %v4843
      %v4859 = vmul.f32 %v3787, %v4844
      %v4860 = vmul.f32 %v3788, %v4843
      %4875 = vrot.lane.b32.xlu0 %v4847, 14
      %v4876 = vpop.permute.xlu0 %4875
      %4877 = vrot.lane.b32.xlu0 %v4848, 14
      %v4878 = vpop.permute.xlu0 %4877
      %4879 = vrot.lane.b32.xlu0 %v4849, 14
      %v4880 = vpop.permute.xlu0 %4879
      %4881 = vrot.lane.b32.xlu0 %v4850, 14
      %v4882 = vpop.permute.xlu0 %4881
      %4883 = vrot.lane.b32.xlu0 %v4851, 14
      %v4884 = vpop.permute.xlu0 %4883
      %4885 = vrot.lane.b32.xlu0 %v4852, 14
      %v4886 = vpop.permute.xlu0 %4885
      %4887 = vrot.lane.b32.xlu0 %v4853, 14
      %v4888 = vpop.permute.xlu0 %4887
      %4889 = vrot.lane.b32.xlu0 %v4854, 14
      %v4890 = vpop.permute.xlu0 %4889
      %4891 = vrot.lane.b32.xlu0 %v4855, 14
      %v4892 = vpop.permute.xlu0 %4891
      %4893 = vrot.lane.b32.xlu0 %v4856, 14
      %v4894 = vpop.permute.xlu0 %4893
      %4895 = vrot.lane.b32.xlu0 %v4857, 14
      %v4896 = vpop.permute.xlu0 %4895
      %4897 = vrot.lane.b32.xlu0 %v4858, 14
      %v4898 = vpop.permute.xlu0 %4897
      %4899 = vrot.lane.b32.xlu0 %v4859, 14
      %v4900 = vpop.permute.xlu0 %4899
      %4901 = vrot.lane.b32.xlu0 %v4860, 14
      %v4902 = vpop.permute.xlu0 %4901
      %v4903 = vsel %vm669, %v4876, %v4878
      %v4904 = vsel %vm669, %v4880, %v4882
      %v4905 = vsel %vm669, %v4884, %v4886
      %v4906 = vsel %vm669, %v4888, %v4890
      %v4907 = vsel %vm669, %v4892, %v4894
      %v4908 = vsel %vm669, %v4896, %v4898
      %v4909 = vsel %vm669, %v4900, %v4902
      %vm4924 = vcmask 1047664
      %4925 = vst.msk [vmem:[#allocation4 + $0x3f0] sm:$0xff] %vm4924, %v4876
      %4926 = vst [vmem:[#allocation4 + $0x3f8] sm:$0xff] %v4903
      %4927 = vst.msk [vmem:[#allocation4 + $0x400] sm:$0xff] %vm4924, %v4880
      %4928 = vst [vmem:[#allocation4 + $0x408] sm:$0xff] %v4904
      %4929 = vst.msk [vmem:[#allocation4 + $0x410] sm:$0xff] %vm4924, %v4884
      %4930 = vst [vmem:[#allocation4 + $0x418] sm:$0xff] %v4905
      %4931 = vst.msk [vmem:[#allocation4 + $0x420] sm:$0xff] %vm4924, %v4888
      %4932 = vst [vmem:[#allocation4 + $0x428] sm:$0xff] %v4906
      %4933 = vst.msk [vmem:[#allocation4 + $0x430] sm:$0xff] %vm4924, %v4892
      %4934 = vst [vmem:[#allocation4 + $0x438] sm:$0xff] %v4907
      %4935 = vst.msk [vmem:[#allocation4 + $0x440] sm:$0xff] %vm4924, %v4896
      %4936 = vst [vmem:[#allocation4 + $0x448] sm:$0xff] %v4908
      %4937 = vst.msk [vmem:[#allocation4 + $0x450] sm:$0xff] %vm4924, %v4900
      %4938 = vst [vmem:[#allocation4 + $0x458] sm:$0xff] %v4909
      %4939 = vst.msk [vmem:[#allocation4 + $0x3f0] sm:$0xff] %vm669, 0.0
      %4940 = vst.msk [vmem:[#allocation4 + $0x400] sm:$0xff] %vm669, 0.0
      %4941 = vst.msk [vmem:[#allocation4 + $0x410] sm:$0xff] %vm669, 0.0
      %4942 = vst.msk [vmem:[#allocation4 + $0x420] sm:$0xff] %vm669, 0.0
      %4943 = vst.msk [vmem:[#allocation4 + $0x430] sm:$0xff] %vm669, 0.0
      %4944 = vst.msk [vmem:[#allocation4 + $0x440] sm:$0xff] %vm669, 0.0
      %4945 = vst.msk [vmem:[#allocation4 + $0x450] sm:$0xff] %vm669, 0.0
      %v4946 = vld [vmem:[%s679] ss:$8 sm:$0x3]
      %v4948 = vlaneseq
      %v4949 = vshrl.u32 %v4948, 7
      %v4950 = vsub.s32 0, %v4949
      %v4951 = vrot.slane %v4946, %v4950
      %v4952 = vlaneseq
      %v4953 = vshrl.u32 %v4952, 7
      %v4954 = vsub.s32 1, %v4953
      %v4955 = vrot.slane %v4946, %v4954
      %4956 = vrot.lane.b32.xlu0 %v4951, 126
      %v4957 = vpop.permute.xlu0 %4956
      %4958 = vrot.lane.b32.xlu0 %v4955, 126
      %v4959 = vpop.permute.xlu0 %4958
      %v4960 = vsel %vm685, %v4957, %v4959
      %v4963 = vmul.f32 %v3775, %v4960
      %v4964 = vmul.f32 %v3776, %v4959
      %v4965 = vmul.f32 %v3777, %v4960
      %v4966 = vmul.f32 %v3778, %v4959
      %v4967 = vmul.f32 %v3779, %v4960
      %v4968 = vmul.f32 %v3780, %v4959
      %v4969 = vmul.f32 %v3781, %v4960
      %v4970 = vmul.f32 %v3782, %v4959
      %v4971 = vmul.f32 %v3783, %v4960
      %v4972 = vmul.f32 %v3784, %v4959
      %v4973 = vmul.f32 %v3785, %v4960
      %v4974 = vmul.f32 %v3786, %v4959
      %v4975 = vmul.f32 %v3787, %v4960
      %v4976 = vmul.f32 %v3788, %v4959
      %4991 = vrot.lane.b32.xlu0 %v4963, 2
      %v4992 = vpop.permute.xlu0 %4991
      %4993 = vrot.lane.b32.xlu0 %v4964, 2
      %v4994 = vpop.permute.xlu0 %4993
      %4995 = vrot.lane.b32.xlu0 %v4965, 2
      %v4996 = vpop.permute.xlu0 %4995
      %4997 = vrot.lane.b32.xlu0 %v4966, 2
      %v4998 = vpop.permute.xlu0 %4997
      %4999 = vrot.lane.b32.xlu0 %v4967, 2
      %v5000 = vpop.permute.xlu0 %4999
      %5001 = vrot.lane.b32.xlu0 %v4968, 2
      %v5002 = vpop.permute.xlu0 %5001
      %5003 = vrot.lane.b32.xlu0 %v4969, 2
      %v5004 = vpop.permute.xlu0 %5003
      %5005 = vrot.lane.b32.xlu0 %v4970, 2
      %v5006 = vpop.permute.xlu0 %5005
      %5007 = vrot.lane.b32.xlu0 %v4971, 2
      %v5008 = vpop.permute.xlu0 %5007
      %5009 = vrot.lane.b32.xlu0 %v4972, 2
      %v5010 = vpop.permute.xlu0 %5009
      %5011 = vrot.lane.b32.xlu0 %v4973, 2
      %v5012 = vpop.permute.xlu0 %5011
      %5013 = vrot.lane.b32.xlu0 %v4974, 2
      %v5014 = vpop.permute.xlu0 %5013
      %5015 = vrot.lane.b32.xlu0 %v4975, 2
      %v5016 = vpop.permute.xlu0 %5015
      %5017 = vrot.lane.b32.xlu0 %v4976, 2
      %v5018 = vpop.permute.xlu0 %5017
      %v5019 = vsel %vm693, %v4992, %v4994
      %v5020 = vsel %vm693, %v4996, %v4998
      %v5021 = vsel %vm693, %v5000, %v5002
      %v5022 = vsel %vm693, %v5004, %v5006
      %v5023 = vsel %vm693, %v5008, %v5010
      %v5024 = vsel %vm693, %v5012, %v5014
      %v5025 = vsel %vm693, %v5016, %v5018
      %vm5040 = vcmask 1047568
      %5041 = vst.msk [vmem:[#allocation4 + $0x460] sm:$0xff] %vm5040, %v4992
      %5042 = vst [vmem:[#allocation4 + $0x468] sm:$0xff] %v5019
      %5043 = vst.msk [vmem:[#allocation4 + $0x470] sm:$0xff] %vm5040, %v4996
      %5044 = vst [vmem:[#allocation4 + $0x478] sm:$0xff] %v5020
      %5045 = vst.msk [vmem:[#allocation4 + $0x480] sm:$0xff] %vm5040, %v5000
      %5046 = vst [vmem:[#allocation4 + $0x488] sm:$0xff] %v5021
      %5047 = vst.msk [vmem:[#allocation4 + $0x490] sm:$0xff] %vm5040, %v5004
      %5048 = vst [vmem:[#allocation4 + $0x498] sm:$0xff] %v5022
      %5049 = vst.msk [vmem:[#allocation4 + $0x4a0] sm:$0xff] %vm5040, %v5008
      %5050 = vst [vmem:[#allocation4 + $0x4a8] sm:$0xff] %v5023
      %5051 = vst.msk [vmem:[#allocation4 + $0x4b0] sm:$0xff] %vm5040, %v5012
      %5052 = vst [vmem:[#allocation4 + $0x4b8] sm:$0xff] %v5024
      %5053 = vst.msk [vmem:[#allocation4 + $0x4c0] sm:$0xff] %vm5040, %v5016
      %5054 = vst [vmem:[#allocation4 + $0x4c8] sm:$0xff] %v5025
      %5055 = vst.msk [vmem:[#allocation4 + $0x460] sm:$0xff] %vm693, 0.0
      %5056 = vst.msk [vmem:[#allocation4 + $0x470] sm:$0xff] %vm693, 0.0
      %5057 = vst.msk [vmem:[#allocation4 + $0x480] sm:$0xff] %vm693, 0.0
      %5058 = vst.msk [vmem:[#allocation4 + $0x490] sm:$0xff] %vm693, 0.0
      %5059 = vst.msk [vmem:[#allocation4 + $0x4a0] sm:$0xff] %vm693, 0.0
      %5060 = vst.msk [vmem:[#allocation4 + $0x4b0] sm:$0xff] %vm693, 0.0
      %5061 = vst.msk [vmem:[#allocation4 + $0x4c0] sm:$0xff] %vm693, 0.0
      %v5062 = vld [vmem:[%s703] ss:$8 sm:$0x3]
      %v5064 = vlaneseq
      %v5065 = vshrl.u32 %v5064, 7
      %v5066 = vsub.s32 0, %v5065
      %v5067 = vrot.slane %v5062, %v5066
      %v5068 = vlaneseq
      %v5069 = vshrl.u32 %v5068, 7
      %v5070 = vsub.s32 1, %v5069
      %v5071 = vrot.slane %v5062, %v5070
      %5072 = vrot.lane.b32.xlu0 %v5067, 127
      %v5073 = vpop.permute.xlu0 %5072
      %5074 = vrot.lane.b32.xlu0 %v5071, 127
      %v5075 = vpop.permute.xlu0 %5074
      %v5076 = vsel %vm709, %v5073, %v5075
      %v5079 = vmul.f32 %v3775, %v5076
      %v5080 = vmul.f32 %v3776, %v5075
      %v5081 = vmul.f32 %v3777, %v5076
      %v5082 = vmul.f32 %v3778, %v5075
      %v5083 = vmul.f32 %v3779, %v5076
      %v5084 = vmul.f32 %v3780, %v5075
      %v5085 = vmul.f32 %v3781, %v5076
      %v5086 = vmul.f32 %v3782, %v5075
      %v5087 = vmul.f32 %v3783, %v5076
      %v5088 = vmul.f32 %v3784, %v5075
      %v5089 = vmul.f32 %v3785, %v5076
      %v5090 = vmul.f32 %v3786, %v5075
      %v5091 = vmul.f32 %v3787, %v5076
      %v5092 = vmul.f32 %v3788, %v5075
      %5107 = vrot.lane.b32.xlu0 %v5079, 1
      %v5108 = vpop.permute.xlu0 %5107
      %5109 = vrot.lane.b32.xlu0 %v5080, 1
      %v5110 = vpop.permute.xlu0 %5109
      %5111 = vrot.lane.b32.xlu0 %v5081, 1
      %v5112 = vpop.permute.xlu0 %5111
      %5113 = vrot.lane.b32.xlu0 %v5082, 1
      %v5114 = vpop.permute.xlu0 %5113
      %5115 = vrot.lane.b32.xlu0 %v5083, 1
      %v5116 = vpop.permute.xlu0 %5115
      %5117 = vrot.lane.b32.xlu0 %v5084, 1
      %v5118 = vpop.permute.xlu0 %5117
      %5119 = vrot.lane.b32.xlu0 %v5085, 1
      %v5120 = vpop.permute.xlu0 %5119
      %5121 = vrot.lane.b32.xlu0 %v5086, 1
      %v5122 = vpop.permute.xlu0 %5121
      %5123 = vrot.lane.b32.xlu0 %v5087, 1
      %v5124 = vpop.permute.xlu0 %5123
      %5125 = vrot.lane.b32.xlu0 %v5088, 1
      %v5126 = vpop.permute.xlu0 %5125
      %5127 = vrot.lane.b32.xlu0 %v5089, 1
      %v5128 = vpop.permute.xlu0 %5127
      %5129 = vrot.lane.b32.xlu0 %v5090, 1
      %v5130 = vpop.permute.xlu0 %5129
      %5131 = vrot.lane.b32.xlu0 %v5091, 1
      %v5132 = vpop.permute.xlu0 %5131
      %5133 = vrot.lane.b32.xlu0 %v5092, 1
      %v5134 = vpop.permute.xlu0 %5133
      %v5135 = vsel %vm717, %v5108, %v5110
      %v5136 = vsel %vm717, %v5112, %v5114
      %v5137 = vsel %vm717, %v5116, %v5118
      %v5138 = vsel %vm717, %v5120, %v5122
      %v5139 = vsel %vm717, %v5124, %v5126
      %v5140 = vsel %vm717, %v5128, %v5130
      %v5141 = vsel %vm717, %v5132, %v5134
      %5156 = vst.msk [vmem:[#allocation4 + $0x4d0] sm:$0xff] %vm1560, %v5108
      %5157 = vst [vmem:[#allocation4 + $0x4d8] sm:$0xff] %v5135
      %5158 = vst.msk [vmem:[#allocation4 + $0x4e0] sm:$0xff] %vm1560, %v5112
      %5159 = vst [vmem:[#allocation4 + $0x4e8] sm:$0xff] %v5136
      %5160 = vst.msk [vmem:[#allocation4 + $0x4f0] sm:$0xff] %vm1560, %v5116
      %5161 = vst [vmem:[#allocation4 + $0x4f8] sm:$0xff] %v5137
      %5162 = vst.msk [vmem:[#allocation4 + $0x500] sm:$0xff] %vm1560, %v5120
      %5163 = vst [vmem:[#allocation4 + $0x508] sm:$0xff] %v5138
      %5164 = vst.msk [vmem:[#allocation4 + $0x510] sm:$0xff] %vm1560, %v5124
      %5165 = vst [vmem:[#allocation4 + $0x518] sm:$0xff] %v5139
      %5166 = vst.msk [vmem:[#allocation4 + $0x520] sm:$0xff] %vm1560, %v5128
      %5167 = vst [vmem:[#allocation4 + $0x528] sm:$0xff] %v5140
      %5168 = vst.msk [vmem:[#allocation4 + $0x530] sm:$0xff] %vm1560, %v5132
      %5169 = vst [vmem:[#allocation4 + $0x538] sm:$0xff] %v5141
      %5170 = vst.msk [vmem:[#allocation4 + $0x4d0] sm:$0xff] %vm717, 0.0
      %5171 = vst.msk [vmem:[#allocation4 + $0x4e0] sm:$0xff] %vm717, 0.0
      %5172 = vst.msk [vmem:[#allocation4 + $0x4f0] sm:$0xff] %vm717, 0.0
      %5173 = vst.msk [vmem:[#allocation4 + $0x500] sm:$0xff] %vm717, 0.0
      %5174 = vst.msk [vmem:[#allocation4 + $0x510] sm:$0xff] %vm717, 0.0
      %5175 = vst.msk [vmem:[#allocation4 + $0x520] sm:$0xff] %vm717, 0.0
      %5176 = vst.msk [vmem:[#allocation4 + $0x530] sm:$0xff] %vm717, 0.0
      %v5177 = vld [vmem:[%s727] ss:$8 sm:$0x3]
      %v5179 = vlaneseq
      %v5180 = vshrl.u32 %v5179, 7
      %v5181 = vsub.s32 0, %v5180
      %v5182 = vrot.slane %v5177, %v5181
      %v5183 = vlaneseq
      %v5184 = vshrl.u32 %v5183, 7
      %v5185 = vsub.s32 1, %v5184
      %v5186 = vrot.slane %v5177, %v5185
      %v5189 = vmul.f32 %v3775, %v5182
      %v5190 = vmul.f32 %v3776, %v5186
      %v5191 = vmul.f32 %v3777, %v5182
      %v5192 = vmul.f32 %v3778, %v5186
      %v5193 = vmul.f32 %v3779, %v5182
      %v5194 = vmul.f32 %v3780, %v5186
      %v5195 = vmul.f32 %v3781, %v5182
      %v5196 = vmul.f32 %v3782, %v5186
      %v5197 = vmul.f32 %v3783, %v5182
      %v5198 = vmul.f32 %v3784, %v5186
      %v5199 = vmul.f32 %v3785, %v5182
      %v5200 = vmul.f32 %v3786, %v5186
      %v5201 = vmul.f32 %v3787, %v5182
      %v5202 = vmul.f32 %v3788, %v5186
      %5203 = vst [vmem:[#allocation4 + $0x540] sm:$0xff] %v5189
      %5204 = vst [vmem:[#allocation4 + $0x548] sm:$0xff] %v5190
      %5205 = vst [vmem:[#allocation4 + $0x550] sm:$0xff] %v5191
      %5206 = vst [vmem:[#allocation4 + $0x558] sm:$0xff] %v5192
      %5207 = vst [vmem:[#allocation4 + $0x560] sm:$0xff] %v5193
      %5208 = vst [vmem:[#allocation4 + $0x568] sm:$0xff] %v5194
      %5209 = vst [vmem:[#allocation4 + $0x570] sm:$0xff] %v5195
      %5210 = vst [vmem:[#allocation4 + $0x578] sm:$0xff] %v5196
      %5211 = vst [vmem:[#allocation4 + $0x580] sm:$0xff] %v5197
      %5212 = vst [vmem:[#allocation4 + $0x588] sm:$0xff] %v5198
      %5213 = vst [vmem:[#allocation4 + $0x590] sm:$0xff] %v5199
      %5214 = vst [vmem:[#allocation4 + $0x598] sm:$0xff] %v5200
      %5215 = vst [vmem:[#allocation4 + $0x5a0] sm:$0xff] %v5201
      %5216 = vst [vmem:[#allocation4 + $0x5a8] sm:$0xff] %v5202
      %v5217 = vld [vmem:[%s735] ss:$8 sm:$0x3]
      %v5219 = vlaneseq
      %v5220 = vshrl.u32 %v5219, 7
      %v5221 = vsub.s32 0, %v5220
      %v5222 = vrot.slane %v5217, %v5221
      %v5223 = vlaneseq
      %v5224 = vshrl.u32 %v5223, 7
      %v5225 = vsub.s32 1, %v5224
      %v5226 = vrot.slane %v5217, %v5225
      %5227 = vrot.lane.b32.xlu0 %v5222, 1
      %v5228 = vpop.permute.xlu0 %5227
      %5229 = vrot.lane.b32.xlu0 %v5226, 1
      %v5230 = vpop.permute.xlu0 %5229
      %v5231 = vsel %vm717, %v5228, %v5230
      %v5234 = vmul.f32 %v3775, %v5228
      %v5235 = vmul.f32 %v3776, %v5231
      %v5236 = vmul.f32 %v3777, %v5228
      %v5237 = vmul.f32 %v3778, %v5231
      %v5238 = vmul.f32 %v3779, %v5228
      %v5239 = vmul.f32 %v3780, %v5231
      %v5240 = vmul.f32 %v3781, %v5228
      %v5241 = vmul.f32 %v3782, %v5231
      %v5242 = vmul.f32 %v3783, %v5228
      %v5243 = vmul.f32 %v3784, %v5231
      %v5244 = vmul.f32 %v3785, %v5228
      %v5245 = vmul.f32 %v3786, %v5231
      %v5246 = vmul.f32 %v3787, %v5228
      %v5247 = vmul.f32 %v3788, %v5231
      %5262 = vrot.lane.b32.xlu0 %v5234, 127
      %v5263 = vpop.permute.xlu0 %5262
      %5264 = vrot.lane.b32.xlu0 %v5235, 127
      %v5265 = vpop.permute.xlu0 %5264
      %5266 = vrot.lane.b32.xlu0 %v5236, 127
      %v5267 = vpop.permute.xlu0 %5266
      %5268 = vrot.lane.b32.xlu0 %v5237, 127
      %v5269 = vpop.permute.xlu0 %5268
      %5270 = vrot.lane.b32.xlu0 %v5238, 127
      %v5271 = vpop.permute.xlu0 %5270
      %5272 = vrot.lane.b32.xlu0 %v5239, 127
      %v5273 = vpop.permute.xlu0 %5272
      %5274 = vrot.lane.b32.xlu0 %v5240, 127
      %v5275 = vpop.permute.xlu0 %5274
      %5276 = vrot.lane.b32.xlu0 %v5241, 127
      %v5277 = vpop.permute.xlu0 %5276
      %5278 = vrot.lane.b32.xlu0 %v5242, 127
      %v5279 = vpop.permute.xlu0 %5278
      %5280 = vrot.lane.b32.xlu0 %v5243, 127
      %v5281 = vpop.permute.xlu0 %5280
      %5282 = vrot.lane.b32.xlu0 %v5244, 127
      %v5283 = vpop.permute.xlu0 %5282
      %5284 = vrot.lane.b32.xlu0 %v5245, 127
      %v5285 = vpop.permute.xlu0 %5284
      %5286 = vrot.lane.b32.xlu0 %v5246, 127
      %v5287 = vpop.permute.xlu0 %5286
      %5288 = vrot.lane.b32.xlu0 %v5247, 127
      %v5289 = vpop.permute.xlu0 %5288
      %v5290 = vsel %vm709, %v5263, %v5265
      %v5291 = vsel %vm709, %v5267, %v5269
      %v5292 = vsel %vm709, %v5271, %v5273
      %v5293 = vsel %vm709, %v5275, %v5277
      %v5294 = vsel %vm709, %v5279, %v5281
      %v5295 = vsel %vm709, %v5283, %v5285
      %v5296 = vsel %vm709, %v5287, %v5289
      %5311 = vst [vmem:[#allocation4 + $0x5b0] sm:$0xff] %v5290
      %5312 = vst.msk [vmem:[#allocation4 + $0x5b8] sm:$0xff] %vm709, %v5265
      %5313 = vst [vmem:[#allocation4 + $0x5c0] sm:$0xff] %v5291
      %5314 = vst.msk [vmem:[#allocation4 + $0x5c8] sm:$0xff] %vm709, %v5269
      %5315 = vst [vmem:[#allocation4 + $0x5d0] sm:$0xff] %v5292
      %5316 = vst.msk [vmem:[#allocation4 + $0x5d8] sm:$0xff] %vm709, %v5273
      %5317 = vst [vmem:[#allocation4 + $0x5e0] sm:$0xff] %v5293
      %5318 = vst.msk [vmem:[#allocation4 + $0x5e8] sm:$0xff] %vm709, %v5277
      %5319 = vst [vmem:[#allocation4 + $0x5f0] sm:$0xff] %v5294
      %5320 = vst.msk [vmem:[#allocation4 + $0x5f8] sm:$0xff] %vm709, %v5281
      %5321 = vst [vmem:[#allocation4 + $0x600] sm:$0xff] %v5295
      %5322 = vst.msk [vmem:[#allocation4 + $0x608] sm:$0xff] %vm709, %v5285
      %5323 = vst [vmem:[#allocation4 + $0x610] sm:$0xff] %v5296
      %5324 = vst.msk [vmem:[#allocation4 + $0x618] sm:$0xff] %vm709, %v5289
      %5325 = vst.msk [vmem:[#allocation4 + $0x5b8] sm:$0xff] %vm1632, 0.0
      %5326 = vst.msk [vmem:[#allocation4 + $0x5c8] sm:$0xff] %vm1632, 0.0
      %5327 = vst.msk [vmem:[#allocation4 + $0x5d8] sm:$0xff] %vm1632, 0.0
      %5328 = vst.msk [vmem:[#allocation4 + $0x5e8] sm:$0xff] %vm1632, 0.0
      %5329 = vst.msk [vmem:[#allocation4 + $0x5f8] sm:$0xff] %vm1632, 0.0
      %5330 = vst.msk [vmem:[#allocation4 + $0x608] sm:$0xff] %vm1632, 0.0
      %5331 = vst.msk [vmem:[#allocation4 + $0x618] sm:$0xff] %vm1632, 0.0
      %v5332 = vld [vmem:[%s757] ss:$8 sm:$0x3]
      %v5334 = vlaneseq
      %v5335 = vshrl.u32 %v5334, 7
      %v5336 = vsub.s32 0, %v5335
      %v5337 = vrot.slane %v5332, %v5336
      %v5338 = vlaneseq
      %v5339 = vshrl.u32 %v5338, 7
      %v5340 = vsub.s32 1, %v5339
      %v5341 = vrot.slane %v5332, %v5340
      %5342 = vrot.lane.b32.xlu0 %v5337, 2
      %v5343 = vpop.permute.xlu0 %5342
      %5344 = vrot.lane.b32.xlu0 %v5341, 2
      %v5345 = vpop.permute.xlu0 %5344
      %v5346 = vsel %vm693, %v5343, %v5345
      %v5349 = vmul.f32 %v3775, %v5343
      %v5350 = vmul.f32 %v3776, %v5346
      %v5351 = vmul.f32 %v3777, %v5343
      %v5352 = vmul.f32 %v3778, %v5346
      %v5353 = vmul.f32 %v3779, %v5343
      %v5354 = vmul.f32 %v3780, %v5346
      %v5355 = vmul.f32 %v3781, %v5343
      %v5356 = vmul.f32 %v3782, %v5346
      %v5357 = vmul.f32 %v3783, %v5343
      %v5358 = vmul.f32 %v3784, %v5346
      %v5359 = vmul.f32 %v3785, %v5343
      %v5360 = vmul.f32 %v3786, %v5346
      %v5361 = vmul.f32 %v3787, %v5343
      %v5362 = vmul.f32 %v3788, %v5346
      %5377 = vrot.lane.b32.xlu0 %v5349, 126
      %v5378 = vpop.permute.xlu0 %5377
      %5379 = vrot.lane.b32.xlu0 %v5350, 126
      %v5380 = vpop.permute.xlu0 %5379
      %5381 = vrot.lane.b32.xlu0 %v5351, 126
      %v5382 = vpop.permute.xlu0 %5381
      %5383 = vrot.lane.b32.xlu0 %v5352, 126
      %v5384 = vpop.permute.xlu0 %5383
      %5385 = vrot.lane.b32.xlu0 %v5353, 126
      %v5386 = vpop.permute.xlu0 %5385
      %5387 = vrot.lane.b32.xlu0 %v5354, 126
      %v5388 = vpop.permute.xlu0 %5387
      %5389 = vrot.lane.b32.xlu0 %v5355, 126
      %v5390 = vpop.permute.xlu0 %5389
      %5391 = vrot.lane.b32.xlu0 %v5356, 126
      %v5392 = vpop.permute.xlu0 %5391
      %5393 = vrot.lane.b32.xlu0 %v5357, 126
      %v5394 = vpop.permute.xlu0 %5393
      %5395 = vrot.lane.b32.xlu0 %v5358, 126
      %v5396 = vpop.permute.xlu0 %5395
      %5397 = vrot.lane.b32.xlu0 %v5359, 126
      %v5398 = vpop.permute.xlu0 %5397
      %5399 = vrot.lane.b32.xlu0 %v5360, 126
      %v5400 = vpop.permute.xlu0 %5399
      %5401 = vrot.lane.b32.xlu0 %v5361, 126
      %v5402 = vpop.permute.xlu0 %5401
      %5403 = vrot.lane.b32.xlu0 %v5362, 126
      %v5404 = vpop.permute.xlu0 %5403
      %v5405 = vsel %vm685, %v5378, %v5380
      %v5406 = vsel %vm685, %v5382, %v5384
      %v5407 = vsel %vm685, %v5386, %v5388
      %v5408 = vsel %vm685, %v5390, %v5392
      %v5409 = vsel %vm685, %v5394, %v5396
      %v5410 = vsel %vm685, %v5398, %v5400
      %v5411 = vsel %vm685, %v5402, %v5404
      %5426 = vst [vmem:[#allocation4 + $0x620] sm:$0xff] %v5405
      %5427 = vst.msk [vmem:[#allocation4 + $0x628] sm:$0xff] %vm685, %v5380
      %5428 = vst [vmem:[#allocation4 + $0x630] sm:$0xff] %v5406
      %5429 = vst.msk [vmem:[#allocation4 + $0x638] sm:$0xff] %vm685, %v5384
      %5430 = vst [vmem:[#allocation4 + $0x640] sm:$0xff] %v5407
      %5431 = vst.msk [vmem:[#allocation4 + $0x648] sm:$0xff] %vm685, %v5388
      %5432 = vst [vmem:[#allocation4 + $0x650] sm:$0xff] %v5408
      %5433 = vst.msk [vmem:[#allocation4 + $0x658] sm:$0xff] %vm685, %v5392
      %5434 = vst [vmem:[#allocation4 + $0x660] sm:$0xff] %v5409
      %5435 = vst.msk [vmem:[#allocation4 + $0x668] sm:$0xff] %vm685, %v5396
      %5436 = vst [vmem:[#allocation4 + $0x670] sm:$0xff] %v5410
      %5437 = vst.msk [vmem:[#allocation4 + $0x678] sm:$0xff] %vm685, %v5400
      %5438 = vst [vmem:[#allocation4 + $0x680] sm:$0xff] %v5411
      %5439 = vst.msk [vmem:[#allocation4 + $0x688] sm:$0xff] %vm685, %v5404
      %vm5440 = vcmask 1048560
      %5441 = vst.msk [vmem:[#allocation4 + $0x628] sm:$0xff] %vm5440, 0.0
      %5442 = vst.msk [vmem:[#allocation4 + $0x638] sm:$0xff] %vm5440, 0.0
      %5443 = vst.msk [vmem:[#allocation4 + $0x648] sm:$0xff] %vm5440, 0.0
      %5444 = vst.msk [vmem:[#allocation4 + $0x658] sm:$0xff] %vm5440, 0.0
      %5445 = vst.msk [vmem:[#allocation4 + $0x668] sm:$0xff] %vm5440, 0.0
      %5446 = vst.msk [vmem:[#allocation4 + $0x678] sm:$0xff] %vm5440, 0.0
      %5447 = vst.msk [vmem:[#allocation4 + $0x688] sm:$0xff] %vm5440, 0.0
      %v5448 = vld [vmem:[%s779] ss:$8 sm:$0x3]
      %v5450 = vlaneseq
      %v5451 = vshrl.u32 %v5450, 7
      %v5452 = vsub.s32 0, %v5451
      %v5453 = vrot.slane %v5448, %v5452
      %v5454 = vlaneseq
      %v5455 = vshrl.u32 %v5454, 7
      %v5456 = vsub.s32 1, %v5455
      %v5457 = vrot.slane %v5448, %v5456
      %5458 = vrot.lane.b32.xlu0 %v5453, 14
      %v5459 = vpop.permute.xlu0 %5458
      %5460 = vrot.lane.b32.xlu0 %v5457, 14
      %v5461 = vpop.permute.xlu0 %5460
      %v5462 = vsel %vm669, %v5459, %v5461
      %v5465 = vmul.f32 %v3775, %v5459
      %v5466 = vmul.f32 %v3776, %v5462
      %v5467 = vmul.f32 %v3777, %v5459
      %v5468 = vmul.f32 %v3778, %v5462
      %v5469 = vmul.f32 %v3779, %v5459
      %v5470 = vmul.f32 %v3780, %v5462
      %v5471 = vmul.f32 %v3781, %v5459
      %v5472 = vmul.f32 %v3782, %v5462
      %v5473 = vmul.f32 %v3783, %v5459
      %v5474 = vmul.f32 %v3784, %v5462
      %v5475 = vmul.f32 %v3785, %v5459
      %v5476 = vmul.f32 %v3786, %v5462
      %v5477 = vmul.f32 %v3787, %v5459
      %v5478 = vmul.f32 %v3788, %v5462
      %5493 = vrot.lane.b32.xlu0 %v5465, 114
      %v5494 = vpop.permute.xlu0 %5493
      %5495 = vrot.lane.b32.xlu0 %v5466, 114
      %v5496 = vpop.permute.xlu0 %5495
      %5497 = vrot.lane.b32.xlu0 %v5467, 114
      %v5498 = vpop.permute.xlu0 %5497
      %5499 = vrot.lane.b32.xlu0 %v5468, 114
      %v5500 = vpop.permute.xlu0 %5499
      %5501 = vrot.lane.b32.xlu0 %v5469, 114
      %v5502 = vpop.permute.xlu0 %5501
      %5503 = vrot.lane.b32.xlu0 %v5470, 114
      %v5504 = vpop.permute.xlu0 %5503
      %5505 = vrot.lane.b32.xlu0 %v5471, 114
      %v5506 = vpop.permute.xlu0 %5505
      %5507 = vrot.lane.b32.xlu0 %v5472, 114
      %v5508 = vpop.permute.xlu0 %5507
      %5509 = vrot.lane.b32.xlu0 %v5473, 114
      %v5510 = vpop.permute.xlu0 %5509
      %5511 = vrot.lane.b32.xlu0 %v5474, 114
      %v5512 = vpop.permute.xlu0 %5511
      %5513 = vrot.lane.b32.xlu0 %v5475, 114
      %v5514 = vpop.permute.xlu0 %5513
      %5515 = vrot.lane.b32.xlu0 %v5476, 114
      %v5516 = vpop.permute.xlu0 %5515
      %5517 = vrot.lane.b32.xlu0 %v5477, 114
      %v5518 = vpop.permute.xlu0 %5517
      %5519 = vrot.lane.b32.xlu0 %v5478, 114
      %v5520 = vpop.permute.xlu0 %5519
      %v5521 = vsel %vm661, %v5494, %v5496
      %v5522 = vsel %vm661, %v5498, %v5500
      %v5523 = vsel %vm661, %v5502, %v5504
      %v5524 = vsel %vm661, %v5506, %v5508
      %v5525 = vsel %vm661, %v5510, %v5512
      %v5526 = vsel %vm661, %v5514, %v5516
      %v5527 = vsel %vm661, %v5518, %v5520
      %5542 = vst [vmem:[#allocation4 + $0x690] sm:$0xff] %v5521
      %5543 = vst.msk [vmem:[#allocation4 + $0x698] sm:$0xff] %vm661, %v5496
      %5544 = vst [vmem:[#allocation4 + $0x6a0] sm:$0xff] %v5522
      %5545 = vst.msk [vmem:[#allocation4 + $0x6a8] sm:$0xff] %vm661, %v5500
      %5546 = vst [vmem:[#allocation4 + $0x6b0] sm:$0xff] %v5523
      %5547 = vst.msk [vmem:[#allocation4 + $0x6b8] sm:$0xff] %vm661, %v5504
      %5548 = vst [vmem:[#allocation4 + $0x6c0] sm:$0xff] %v5524
      %5549 = vst.msk [vmem:[#allocation4 + $0x6c8] sm:$0xff] %vm661, %v5508
      %5550 = vst [vmem:[#allocation4 + $0x6d0] sm:$0xff] %v5525
      %5551 = vst.msk [vmem:[#allocation4 + $0x6d8] sm:$0xff] %vm661, %v5512
      %5552 = vst [vmem:[#allocation4 + $0x6e0] sm:$0xff] %v5526
      %5553 = vst.msk [vmem:[#allocation4 + $0x6e8] sm:$0xff] %vm661, %v5516
      %5554 = vst [vmem:[#allocation4 + $0x6f0] sm:$0xff] %v5527
      %5555 = vst.msk [vmem:[#allocation4 + $0x6f8] sm:$0xff] %vm661, %v5520
      %vm5556 = vcmask 1048464
      %5557 = vst.msk [vmem:[#allocation4 + $0x698] sm:$0xff] %vm5556, 0.0
      %5558 = vst.msk [vmem:[#allocation4 + $0x6a8] sm:$0xff] %vm5556, 0.0
      %5559 = vst.msk [vmem:[#allocation4 + $0x6b8] sm:$0xff] %vm5556, 0.0
      %5560 = vst.msk [vmem:[#allocation4 + $0x6c8] sm:$0xff] %vm5556, 0.0
      %5561 = vst.msk [vmem:[#allocation4 + $0x6d8] sm:$0xff] %vm5556, 0.0
      %5562 = vst.msk [vmem:[#allocation4 + $0x6e8] sm:$0xff] %vm5556, 0.0
      %5563 = vst.msk [vmem:[#allocation4 + $0x6f8] sm:$0xff] %vm5556, 0.0
      %v5564 = vld [vmem:[%s801] ss:$8 sm:$0x3]
      %v5566 = vlaneseq
      %v5567 = vshrl.u32 %v5566, 7
      %v5568 = vsub.s32 0, %v5567
      %v5569 = vrot.slane %v5564, %v5568
      %v5570 = vlaneseq
      %v5571 = vshrl.u32 %v5570, 7
      %v5572 = vsub.s32 1, %v5571
      %v5573 = vrot.slane %v5564, %v5572
      %5574 = vrot.lane.b32.xlu0 %v5569, 15
      %v5575 = vpop.permute.xlu0 %5574
      %5576 = vrot.lane.b32.xlu0 %v5573, 15
      %v5577 = vpop.permute.xlu0 %5576
      %v5578 = vsel %vm645, %v5575, %v5577
      %v5581 = vmul.f32 %v3775, %v5575
      %v5582 = vmul.f32 %v3776, %v5578
      %v5583 = vmul.f32 %v3777, %v5575
      %v5584 = vmul.f32 %v3778, %v5578
      %v5585 = vmul.f32 %v3779, %v5575
      %v5586 = vmul.f32 %v3780, %v5578
      %v5587 = vmul.f32 %v3781, %v5575
      %v5588 = vmul.f32 %v3782, %v5578
      %v5589 = vmul.f32 %v3783, %v5575
      %v5590 = vmul.f32 %v3784, %v5578
      %v5591 = vmul.f32 %v3785, %v5575
      %v5592 = vmul.f32 %v3786, %v5578
      %v5593 = vmul.f32 %v3787, %v5575
      %v5594 = vmul.f32 %v3788, %v5578
      %5609 = vrot.lane.b32.xlu0 %v5581, 113
      %v5610 = vpop.permute.xlu0 %5609
      %5611 = vrot.lane.b32.xlu0 %v5582, 113
      %v5612 = vpop.permute.xlu0 %5611
      %5613 = vrot.lane.b32.xlu0 %v5583, 113
      %v5614 = vpop.permute.xlu0 %5613
      %5615 = vrot.lane.b32.xlu0 %v5584, 113
      %v5616 = vpop.permute.xlu0 %5615
      %5617 = vrot.lane.b32.xlu0 %v5585, 113
      %v5618 = vpop.permute.xlu0 %5617
      %5619 = vrot.lane.b32.xlu0 %v5586, 113
      %v5620 = vpop.permute.xlu0 %5619
      %5621 = vrot.lane.b32.xlu0 %v5587, 113
      %v5622 = vpop.permute.xlu0 %5621
      %5623 = vrot.lane.b32.xlu0 %v5588, 113
      %v5624 = vpop.permute.xlu0 %5623
      %5625 = vrot.lane.b32.xlu0 %v5589, 113
      %v5626 = vpop.permute.xlu0 %5625
      %5627 = vrot.lane.b32.xlu0 %v5590, 113
      %v5628 = vpop.permute.xlu0 %5627
      %5629 = vrot.lane.b32.xlu0 %v5591, 113
      %v5630 = vpop.permute.xlu0 %5629
      %5631 = vrot.lane.b32.xlu0 %v5592, 113
      %v5632 = vpop.permute.xlu0 %5631
      %5633 = vrot.lane.b32.xlu0 %v5593, 113
      %v5634 = vpop.permute.xlu0 %5633
      %5635 = vrot.lane.b32.xlu0 %v5594, 113
      %v5636 = vpop.permute.xlu0 %5635
      %v5637 = vsel %vm637, %v5610, %v5612
      %v5638 = vsel %vm637, %v5614, %v5616
      %v5639 = vsel %vm637, %v5618, %v5620
      %v5640 = vsel %vm637, %v5622, %v5624
      %v5641 = vsel %vm637, %v5626, %v5628
      %v5642 = vsel %vm637, %v5630, %v5632
      %v5643 = vsel %vm637, %v5634, %v5636
      %5658 = vst [vmem:[#allocation4 + $0x700] sm:$0xff] %v5637
      %5659 = vst.msk [vmem:[#allocation4 + $0x708] sm:$0xff] %vm637, %v5612
      %5660 = vst [vmem:[#allocation4 + $0x710] sm:$0xff] %v5638
      %5661 = vst.msk [vmem:[#allocation4 + $0x718] sm:$0xff] %vm637, %v5616
      %5662 = vst [vmem:[#allocation4 + $0x720] sm:$0xff] %v5639
      %5663 = vst.msk [vmem:[#allocation4 + $0x728] sm:$0xff] %vm637, %v5620
      %5664 = vst [vmem:[#allocation4 + $0x730] sm:$0xff] %v5640
      %5665 = vst.msk [vmem:[#allocation4 + $0x738] sm:$0xff] %vm637, %v5624
      %5666 = vst [vmem:[#allocation4 + $0x740] sm:$0xff] %v5641
      %5667 = vst.msk [vmem:[#allocation4 + $0x748] sm:$0xff] %vm637, %v5628
      %5668 = vst [vmem:[#allocation4 + $0x750] sm:$0xff] %v5642
      %5669 = vst.msk [vmem:[#allocation4 + $0x758] sm:$0xff] %vm637, %v5632
      %5670 = vst [vmem:[#allocation4 + $0x760] sm:$0xff] %v5643
      %5671 = vst.msk [vmem:[#allocation4 + $0x768] sm:$0xff] %vm637, %v5636
      %5672 = vst.msk [vmem:[#allocation4 + $0x708] sm:$0xff] %vm1679, 0.0
      %5673 = vst.msk [vmem:[#allocation4 + $0x718] sm:$0xff] %vm1679, 0.0
      %5674 = vst.msk [vmem:[#allocation4 + $0x728] sm:$0xff] %vm1679, 0.0
      %5675 = vst.msk [vmem:[#allocation4 + $0x738] sm:$0xff] %vm1679, 0.0
      %5676 = vst.msk [vmem:[#allocation4 + $0x748] sm:$0xff] %vm1679, 0.0
      %5677 = vst.msk [vmem:[#allocation4 + $0x758] sm:$0xff] %vm1679, 0.0
      %5678 = vst.msk [vmem:[#allocation4 + $0x768] sm:$0xff] %vm1679, 0.0
      %v5679 = vld [vmem:[%s823] ss:$8 sm:$0x3]
      %v5681 = vlaneseq
      %v5682 = vshrl.u32 %v5681, 7
      %v5683 = vsub.s32 0, %v5682
      %v5684 = vrot.slane %v5679, %v5683
      %v5685 = vlaneseq
      %v5686 = vshrl.u32 %v5685, 7
      %v5687 = vsub.s32 1, %v5686
      %v5688 = vrot.slane %v5679, %v5687
      %5689 = vrot.lane.b32.xlu0 %v5684, 16
      %v5690 = vpop.permute.xlu0 %5689
      %5691 = vrot.lane.b32.xlu0 %v5688, 16
      %v5692 = vpop.permute.xlu0 %5691
      %v5693 = vsel %vm621, %v5690, %v5692
      %v5696 = vmul.f32 %v3775, %v5690
      %v5697 = vmul.f32 %v3776, %v5693
      %v5698 = vmul.f32 %v3777, %v5690
      %v5699 = vmul.f32 %v3778, %v5693
      %v5700 = vmul.f32 %v3779, %v5690
      %v5701 = vmul.f32 %v3780, %v5693
      %v5702 = vmul.f32 %v3781, %v5690
      %v5703 = vmul.f32 %v3782, %v5693
      %v5704 = vmul.f32 %v3783, %v5690
      %v5705 = vmul.f32 %v3784, %v5693
      %v5706 = vmul.f32 %v3785, %v5690
      %v5707 = vmul.f32 %v3786, %v5693
      %v5708 = vmul.f32 %v3787, %v5690
      %v5709 = vmul.f32 %v3788, %v5693
      %5724 = vrot.lane.b32.xlu0 %v5696, 112
      %v5725 = vpop.permute.xlu0 %5724
      %5726 = vrot.lane.b32.xlu0 %v5697, 112
      %v5727 = vpop.permute.xlu0 %5726
      %5728 = vrot.lane.b32.xlu0 %v5698, 112
      %v5729 = vpop.permute.xlu0 %5728
      %5730 = vrot.lane.b32.xlu0 %v5699, 112
      %v5731 = vpop.permute.xlu0 %5730
      %5732 = vrot.lane.b32.xlu0 %v5700, 112
      %v5733 = vpop.permute.xlu0 %5732
      %5734 = vrot.lane.b32.xlu0 %v5701, 112
      %v5735 = vpop.permute.xlu0 %5734
      %5736 = vrot.lane.b32.xlu0 %v5702, 112
      %v5737 = vpop.permute.xlu0 %5736
      %5738 = vrot.lane.b32.xlu0 %v5703, 112
      %v5739 = vpop.permute.xlu0 %5738
      %5740 = vrot.lane.b32.xlu0 %v5704, 112
      %v5741 = vpop.permute.xlu0 %5740
      %5742 = vrot.lane.b32.xlu0 %v5705, 112
      %v5743 = vpop.permute.xlu0 %5742
      %5744 = vrot.lane.b32.xlu0 %v5706, 112
      %v5745 = vpop.permute.xlu0 %5744
      %5746 = vrot.lane.b32.xlu0 %v5707, 112
      %v5747 = vpop.permute.xlu0 %5746
      %5748 = vrot.lane.b32.xlu0 %v5708, 112
      %v5749 = vpop.permute.xlu0 %5748
      %5750 = vrot.lane.b32.xlu0 %v5709, 112
      %v5751 = vpop.permute.xlu0 %5750
      %v5752 = vsel %vm613, %v5725, %v5727
      %v5753 = vsel %vm613, %v5729, %v5731
      %v5754 = vsel %vm613, %v5733, %v5735
      %v5755 = vsel %vm613, %v5737, %v5739
      %v5756 = vsel %vm613, %v5741, %v5743
      %v5757 = vsel %vm613, %v5745, %v5747
      %v5758 = vsel %vm613, %v5749, %v5751
      %5773 = vst [vmem:[#allocation4 + $0x770] sm:$0xff] %v5752
      %5774 = vst.msk [vmem:[#allocation4 + $0x778] sm:$0xff] %vm613, %v5727
      %5775 = vst [vmem:[#allocation4 + $0x780] sm:$0xff] %v5753
      %5776 = vst.msk [vmem:[#allocation4 + $0x788] sm:$0xff] %vm613, %v5731
      %5777 = vst [vmem:[#allocation4 + $0x790] sm:$0xff] %v5754
      %5778 = vst.msk [vmem:[#allocation4 + $0x798] sm:$0xff] %vm613, %v5735
      %5779 = vst [vmem:[#allocation4 + $0x7a0] sm:$0xff] %v5755
      %5780 = vst.msk [vmem:[#allocation4 + $0x7a8] sm:$0xff] %vm613, %v5739
      %5781 = vst [vmem:[#allocation4 + $0x7b0] sm:$0xff] %v5756
      %5782 = vst.msk [vmem:[#allocation4 + $0x7b8] sm:$0xff] %vm613, %v5743
      %5783 = vst [vmem:[#allocation4 + $0x7c0] sm:$0xff] %v5757
      %5784 = vst.msk [vmem:[#allocation4 + $0x7c8] sm:$0xff] %vm613, %v5747
      %5785 = vst [vmem:[#allocation4 + $0x7d0] sm:$0xff] %v5758
      %5786 = vst.msk [vmem:[#allocation4 + $0x7d8] sm:$0xff] %vm613, %v5751
      %5787 = vst.msk [vmem:[#allocation4 + $0x778] sm:$0xff] %vm1726, 0.0
      %5788 = vst.msk [vmem:[#allocation4 + $0x788] sm:$0xff] %vm1726, 0.0
      %5789 = vst.msk [vmem:[#allocation4 + $0x798] sm:$0xff] %vm1726, 0.0
      %5790 = vst.msk [vmem:[#allocation4 + $0x7a8] sm:$0xff] %vm1726, 0.0
      %5791 = vst.msk [vmem:[#allocation4 + $0x7b8] sm:$0xff] %vm1726, 0.0
      %5792 = vst.msk [vmem:[#allocation4 + $0x7c8] sm:$0xff] %vm1726, 0.0
      %5793 = vst.msk [vmem:[#allocation4 + $0x7d8] sm:$0xff] %vm1726, 0.0
      %v5794 = vld [vmem:[%s845] ss:$8 sm:$0x3]
      %v5796 = vlaneseq
      %v5797 = vshrl.u32 %v5796, 7
      %v5798 = vsub.s32 0, %v5797
      %v5799 = vrot.slane %v5794, %v5798
      %v5800 = vlaneseq
      %v5801 = vshrl.u32 %v5800, 7
      %v5802 = vsub.s32 1, %v5801
      %v5803 = vrot.slane %v5794, %v5802
      %5804 = vrot.lane.b32.xlu0 %v5799, 17
      %v5805 = vpop.permute.xlu0 %5804
      %5806 = vrot.lane.b32.xlu0 %v5803, 17
      %v5807 = vpop.permute.xlu0 %5806
      %v5808 = vsel %vm597, %v5805, %v5807
      %v5811 = vmul.f32 %v3775, %v5805
      %v5812 = vmul.f32 %v3776, %v5808
      %v5813 = vmul.f32 %v3777, %v5805
      %v5814 = vmul.f32 %v3778, %v5808
      %v5815 = vmul.f32 %v3779, %v5805
      %v5816 = vmul.f32 %v3780, %v5808
      %v5817 = vmul.f32 %v3781, %v5805
      %v5818 = vmul.f32 %v3782, %v5808
      %v5819 = vmul.f32 %v3783, %v5805
      %v5820 = vmul.f32 %v3784, %v5808
      %v5821 = vmul.f32 %v3785, %v5805
      %v5822 = vmul.f32 %v3786, %v5808
      %v5823 = vmul.f32 %v3787, %v5805
      %v5824 = vmul.f32 %v3788, %v5808
      %5839 = vrot.lane.b32.xlu0 %v5811, 111
      %v5840 = vpop.permute.xlu0 %5839
      %5841 = vrot.lane.b32.xlu0 %v5812, 111
      %v5842 = vpop.permute.xlu0 %5841
      %5843 = vrot.lane.b32.xlu0 %v5813, 111
      %v5844 = vpop.permute.xlu0 %5843
      %5845 = vrot.lane.b32.xlu0 %v5814, 111
      %v5846 = vpop.permute.xlu0 %5845
      %5847 = vrot.lane.b32.xlu0 %v5815, 111
      %v5848 = vpop.permute.xlu0 %5847
      %5849 = vrot.lane.b32.xlu0 %v5816, 111
      %v5850 = vpop.permute.xlu0 %5849
      %5851 = vrot.lane.b32.xlu0 %v5817, 111
      %v5852 = vpop.permute.xlu0 %5851
      %5853 = vrot.lane.b32.xlu0 %v5818, 111
      %v5854 = vpop.permute.xlu0 %5853
      %5855 = vrot.lane.b32.xlu0 %v5819, 111
      %v5856 = vpop.permute.xlu0 %5855
      %5857 = vrot.lane.b32.xlu0 %v5820, 111
      %v5858 = vpop.permute.xlu0 %5857
      %5859 = vrot.lane.b32.xlu0 %v5821, 111
      %v5860 = vpop.permute.xlu0 %5859
      %5861 = vrot.lane.b32.xlu0 %v5822, 111
      %v5862 = vpop.permute.xlu0 %5861
      %5863 = vrot.lane.b32.xlu0 %v5823, 111
      %v5864 = vpop.permute.xlu0 %5863
      %5865 = vrot.lane.b32.xlu0 %v5824, 111
      %v5866 = vpop.permute.xlu0 %5865
      %v5867 = vsel %vm589, %v5840, %v5842
      %v5868 = vsel %vm589, %v5844, %v5846
      %v5869 = vsel %vm589, %v5848, %v5850
      %v5870 = vsel %vm589, %v5852, %v5854
      %v5871 = vsel %vm589, %v5856, %v5858
      %v5872 = vsel %vm589, %v5860, %v5862
      %v5873 = vsel %vm589, %v5864, %v5866
      %5888 = vst [vmem:[#allocation4 + $0x7e0] sm:$0xff] %v5867
      %5889 = vst.msk [vmem:[#allocation4 + $0x7e8] sm:$0xff] %vm589, %v5842
      %5890 = vst [vmem:[#allocation4 + $0x7f0] sm:$0xff] %v5868
      %5891 = vst.msk [vmem:[#allocation4 + $0x7f8] sm:$0xff] %vm589, %v5846
      %5892 = vst [vmem:[#allocation4 + $0x800] sm:$0xff] %v5869
      %5893 = vst.msk [vmem:[#allocation4 + $0x808] sm:$0xff] %vm589, %v5850
      %5894 = vst [vmem:[#allocation4 + $0x810] sm:$0xff] %v5870
      %5895 = vst.msk [vmem:[#allocation4 + $0x818] sm:$0xff] %vm589, %v5854
      %5896 = vst [vmem:[#allocation4 + $0x820] sm:$0xff] %v5871
      %5897 = vst.msk [vmem:[#allocation4 + $0x828] sm:$0xff] %vm589, %v5858
      %5898 = vst [vmem:[#allocation4 + $0x830] sm:$0xff] %v5872
      %5899 = vst.msk [vmem:[#allocation4 + $0x838] sm:$0xff] %vm589, %v5862
      %5900 = vst [vmem:[#allocation4 + $0x840] sm:$0xff] %v5873
      %5901 = vst.msk [vmem:[#allocation4 + $0x848] sm:$0xff] %vm589, %v5866
      %5902 = vst.msk [vmem:[#allocation4 + $0x7e8] sm:$0xff] %vm1773, 0.0
      %5903 = vst.msk [vmem:[#allocation4 + $0x7f8] sm:$0xff] %vm1773, 0.0
      %5904 = vst.msk [vmem:[#allocation4 + $0x808] sm:$0xff] %vm1773, 0.0
      %5905 = vst.msk [vmem:[#allocation4 + $0x818] sm:$0xff] %vm1773, 0.0
      %5906 = vst.msk [vmem:[#allocation4 + $0x828] sm:$0xff] %vm1773, 0.0
      %5907 = vst.msk [vmem:[#allocation4 + $0x838] sm:$0xff] %vm1773, 0.0
      %5908 = vst.msk [vmem:[#allocation4 + $0x848] sm:$0xff] %vm1773, 0.0
      %v5909 = vld [vmem:[%s867] ss:$8 sm:$0x3]
      %v5911 = vlaneseq
      %v5912 = vshrl.u32 %v5911, 7
      %v5913 = vsub.s32 0, %v5912
      %v5914 = vrot.slane %v5909, %v5913
      %v5915 = vlaneseq
      %v5916 = vshrl.u32 %v5915, 7
      %v5917 = vsub.s32 1, %v5916
      %v5918 = vrot.slane %v5909, %v5917
      %5919 = vrot.lane.b32.xlu0 %v5914, 18
      %v5920 = vpop.permute.xlu0 %5919
      %5921 = vrot.lane.b32.xlu0 %v5918, 18
      %v5922 = vpop.permute.xlu0 %5921
      %v5923 = vsel %vm573, %v5920, %v5922
      %v5926 = vmul.f32 %v3775, %v5920
      %v5927 = vmul.f32 %v3776, %v5923
      %v5928 = vmul.f32 %v3777, %v5920
      %v5929 = vmul.f32 %v3778, %v5923
      %v5930 = vmul.f32 %v3779, %v5920
      %v5931 = vmul.f32 %v3780, %v5923
      %v5932 = vmul.f32 %v3781, %v5920
      %v5933 = vmul.f32 %v3782, %v5923
      %v5934 = vmul.f32 %v3783, %v5920
      %v5935 = vmul.f32 %v3784, %v5923
      %v5936 = vmul.f32 %v3785, %v5920
      %v5937 = vmul.f32 %v3786, %v5923
      %v5938 = vmul.f32 %v3787, %v5920
      %v5939 = vmul.f32 %v3788, %v5923
      %5954 = vrot.lane.b32.xlu0 %v5926, 110
      %v5955 = vpop.permute.xlu0 %5954
      %5956 = vrot.lane.b32.xlu0 %v5927, 110
      %v5957 = vpop.permute.xlu0 %5956
      %5958 = vrot.lane.b32.xlu0 %v5928, 110
      %v5959 = vpop.permute.xlu0 %5958
      %5960 = vrot.lane.b32.xlu0 %v5929, 110
      %v5961 = vpop.permute.xlu0 %5960
      %5962 = vrot.lane.b32.xlu0 %v5930, 110
      %v5963 = vpop.permute.xlu0 %5962
      %5964 = vrot.lane.b32.xlu0 %v5931, 110
      %v5965 = vpop.permute.xlu0 %5964
      %5966 = vrot.lane.b32.xlu0 %v5932, 110
      %v5967 = vpop.permute.xlu0 %5966
      %5968 = vrot.lane.b32.xlu0 %v5933, 110
      %v5969 = vpop.permute.xlu0 %5968
      %5970 = vrot.lane.b32.xlu0 %v5934, 110
      %v5971 = vpop.permute.xlu0 %5970
      %5972 = vrot.lane.b32.xlu0 %v5935, 110
      %v5973 = vpop.permute.xlu0 %5972
      %5974 = vrot.lane.b32.xlu0 %v5936, 110
      %v5975 = vpop.permute.xlu0 %5974
      %5976 = vrot.lane.b32.xlu0 %v5937, 110
      %v5977 = vpop.permute.xlu0 %5976
      %5978 = vrot.lane.b32.xlu0 %v5938, 110
      %v5979 = vpop.permute.xlu0 %5978
      %5980 = vrot.lane.b32.xlu0 %v5939, 110
      %v5981 = vpop.permute.xlu0 %5980
      %v5982 = vsel %vm565, %v5955, %v5957
      %v5983 = vsel %vm565, %v5959, %v5961
      %v5984 = vsel %vm565, %v5963, %v5965
      %v5985 = vsel %vm565, %v5967, %v5969
      %v5986 = vsel %vm565, %v5971, %v5973
      %v5987 = vsel %vm565, %v5975, %v5977
      %v5988 = vsel %vm565, %v5979, %v5981
      %6003 = vst [vmem:[#allocation4 + $0x850] sm:$0xff] %v5982
      %6004 = vst.msk [vmem:[#allocation4 + $0x858] sm:$0xff] %vm565, %v5957
      %6005 = vst [vmem:[#allocation4 + $0x860] sm:$0xff] %v5983
      %6006 = vst.msk [vmem:[#allocation4 + $0x868] sm:$0xff] %vm565, %v5961
      %6007 = vst [vmem:[#allocation4 + $0x870] sm:$0xff] %v5984
      %6008 = vst.msk [vmem:[#allocation4 + $0x878] sm:$0xff] %vm565, %v5965
      %6009 = vst [vmem:[#allocation4 + $0x880] sm:$0xff] %v5985
      %6010 = vst.msk [vmem:[#allocation4 + $0x888] sm:$0xff] %vm565, %v5969
      %6011 = vst [vmem:[#allocation4 + $0x890] sm:$0xff] %v5986
      %6012 = vst.msk [vmem:[#allocation4 + $0x898] sm:$0xff] %vm565, %v5973
      %6013 = vst [vmem:[#allocation4 + $0x8a0] sm:$0xff] %v5987
      %6014 = vst.msk [vmem:[#allocation4 + $0x8a8] sm:$0xff] %vm565, %v5977
      %6015 = vst [vmem:[#allocation4 + $0x8b0] sm:$0xff] %v5988
      %6016 = vst.msk [vmem:[#allocation4 + $0x8b8] sm:$0xff] %vm565, %v5981
      %vm6017 = vcmask 1048432
      %6018 = vst.msk [vmem:[#allocation4 + $0x858] sm:$0xff] %vm6017, 0.0
      %6019 = vst.msk [vmem:[#allocation4 + $0x868] sm:$0xff] %vm6017, 0.0
      %6020 = vst.msk [vmem:[#allocation4 + $0x878] sm:$0xff] %vm6017, 0.0
      %6021 = vst.msk [vmem:[#allocation4 + $0x888] sm:$0xff] %vm6017, 0.0
      %6022 = vst.msk [vmem:[#allocation4 + $0x898] sm:$0xff] %vm6017, 0.0
      %6023 = vst.msk [vmem:[#allocation4 + $0x8a8] sm:$0xff] %vm6017, 0.0
      %6024 = vst.msk [vmem:[#allocation4 + $0x8b8] sm:$0xff] %vm6017, 0.0
      %v6025 = vld [vmem:[%s889] ss:$8 sm:$0x3]
      %v6027 = vlaneseq
      %v6028 = vshrl.u32 %v6027, 7
      %v6029 = vsub.s32 0, %v6028
      %v6030 = vrot.slane %v6025, %v6029
      %v6031 = vlaneseq
      %v6032 = vshrl.u32 %v6031, 7
      %v6033 = vsub.s32 1, %v6032
      %v6034 = vrot.slane %v6025, %v6033
      %6035 = vrot.lane.b32.xlu0 %v6030, 30
      %v6036 = vpop.permute.xlu0 %6035
      %6037 = vrot.lane.b32.xlu0 %v6034, 30
      %v6038 = vpop.permute.xlu0 %6037
      %v6039 = vsel %vm549, %v6036, %v6038
      %v6042 = vmul.f32 %v3775, %v6036
      %v6043 = vmul.f32 %v3776, %v6039
      %v6044 = vmul.f32 %v3777, %v6036
      %v6045 = vmul.f32 %v3778, %v6039
      %v6046 = vmul.f32 %v3779, %v6036
      %v6047 = vmul.f32 %v3780, %v6039
      %v6048 = vmul.f32 %v3781, %v6036
      %v6049 = vmul.f32 %v3782, %v6039
      %v6050 = vmul.f32 %v3783, %v6036
      %v6051 = vmul.f32 %v3784, %v6039
      %v6052 = vmul.f32 %v3785, %v6036
      %v6053 = vmul.f32 %v3786, %v6039
      %v6054 = vmul.f32 %v3787, %v6036
      %v6055 = vmul.f32 %v3788, %v6039
      %6070 = vrot.lane.b32.xlu0 %v6042, 98
      %v6071 = vpop.permute.xlu0 %6070
      %6072 = vrot.lane.b32.xlu0 %v6043, 98
      %v6073 = vpop.permute.xlu0 %6072
      %6074 = vrot.lane.b32.xlu0 %v6044, 98
      %v6075 = vpop.permute.xlu0 %6074
      %6076 = vrot.lane.b32.xlu0 %v6045, 98
      %v6077 = vpop.permute.xlu0 %6076
      %6078 = vrot.lane.b32.xlu0 %v6046, 98
      %v6079 = vpop.permute.xlu0 %6078
      %6080 = vrot.lane.b32.xlu0 %v6047, 98
      %v6081 = vpop.permute.xlu0 %6080
      %6082 = vrot.lane.b32.xlu0 %v6048, 98
      %v6083 = vpop.permute.xlu0 %6082
      %6084 = vrot.lane.b32.xlu0 %v6049, 98
      %v6085 = vpop.permute.xlu0 %6084
      %6086 = vrot.lane.b32.xlu0 %v6050, 98
      %v6087 = vpop.permute.xlu0 %6086
      %6088 = vrot.lane.b32.xlu0 %v6051, 98
      %v6089 = vpop.permute.xlu0 %6088
      %6090 = vrot.lane.b32.xlu0 %v6052, 98
      %v6091 = vpop.permute.xlu0 %6090
      %6092 = vrot.lane.b32.xlu0 %v6053, 98
      %v6093 = vpop.permute.xlu0 %6092
      %6094 = vrot.lane.b32.xlu0 %v6054, 98
      %v6095 = vpop.permute.xlu0 %6094
      %6096 = vrot.lane.b32.xlu0 %v6055, 98
      %v6097 = vpop.permute.xlu0 %6096
      %v6098 = vsel %vm541, %v6071, %v6073
      %v6099 = vsel %vm541, %v6075, %v6077
      %v6100 = vsel %vm541, %v6079, %v6081
      %v6101 = vsel %vm541, %v6083, %v6085
      %v6102 = vsel %vm541, %v6087, %v6089
      %v6103 = vsel %vm541, %v6091, %v6093
      %v6104 = vsel %vm541, %v6095, %v6097
      %6119 = vst [vmem:[#allocation4 + $0x8c0] sm:$0xff] %v6098
      %6120 = vst.msk [vmem:[#allocation4 + $0x8c8] sm:$0xff] %vm541, %v6073
      %6121 = vst [vmem:[#allocation4 + $0x8d0] sm:$0xff] %v6099
      %6122 = vst.msk [vmem:[#allocation4 + $0x8d8] sm:$0xff] %vm541, %v6077
      %6123 = vst [vmem:[#allocation4 + $0x8e0] sm:$0xff] %v6100
      %6124 = vst.msk [vmem:[#allocation4 + $0x8e8] sm:$0xff] %vm541, %v6081
      %6125 = vst [vmem:[#allocation4 + $0x8f0] sm:$0xff] %v6101
      %6126 = vst.msk [vmem:[#allocation4 + $0x8f8] sm:$0xff] %vm541, %v6085
      %6127 = vst [vmem:[#allocation4 + $0x900] sm:$0xff] %v6102
      %6128 = vst.msk [vmem:[#allocation4 + $0x908] sm:$0xff] %vm541, %v6089
      %6129 = vst [vmem:[#allocation4 + $0x910] sm:$0xff] %v6103
      %6130 = vst.msk [vmem:[#allocation4 + $0x918] sm:$0xff] %vm541, %v6093
      %6131 = vst [vmem:[#allocation4 + $0x920] sm:$0xff] %v6104
      %6132 = vst.msk [vmem:[#allocation4 + $0x928] sm:$0xff] %vm541, %v6097
      %vm6133 = vcmask 1048336
      %6134 = vst.msk [vmem:[#allocation4 + $0x8c8] sm:$0xff] %vm6133, 0.0
      %6135 = vst.msk [vmem:[#allocation4 + $0x8d8] sm:$0xff] %vm6133, 0.0
      %6136 = vst.msk [vmem:[#allocation4 + $0x8e8] sm:$0xff] %vm6133, 0.0
      %6137 = vst.msk [vmem:[#allocation4 + $0x8f8] sm:$0xff] %vm6133, 0.0
      %6138 = vst.msk [vmem:[#allocation4 + $0x908] sm:$0xff] %vm6133, 0.0
      %6139 = vst.msk [vmem:[#allocation4 + $0x918] sm:$0xff] %vm6133, 0.0
      %6140 = vst.msk [vmem:[#allocation4 + $0x928] sm:$0xff] %vm6133, 0.0
      %v6141 = vld [vmem:[%s911] ss:$8 sm:$0x3]
      %v6143 = vlaneseq
      %v6144 = vshrl.u32 %v6143, 7
      %v6145 = vsub.s32 0, %v6144
      %v6146 = vrot.slane %v6141, %v6145
      %v6147 = vlaneseq
      %v6148 = vshrl.u32 %v6147, 7
      %v6149 = vsub.s32 1, %v6148
      %v6150 = vrot.slane %v6141, %v6149
      %6151 = vrot.lane.b32.xlu0 %v6146, 31
      %v6152 = vpop.permute.xlu0 %6151
      %6153 = vrot.lane.b32.xlu0 %v6150, 31
      %v6154 = vpop.permute.xlu0 %6153
      %v6155 = vsel %vm525, %v6152, %v6154
      %v6158 = vmul.f32 %v3775, %v6152
      %v6159 = vmul.f32 %v3776, %v6155
      %v6160 = vmul.f32 %v3777, %v6152
      %v6161 = vmul.f32 %v3778, %v6155
      %v6162 = vmul.f32 %v3779, %v6152
      %v6163 = vmul.f32 %v3780, %v6155
      %v6164 = vmul.f32 %v3781, %v6152
      %v6165 = vmul.f32 %v3782, %v6155
      %v6166 = vmul.f32 %v3783, %v6152
      %v6167 = vmul.f32 %v3784, %v6155
      %v6168 = vmul.f32 %v3785, %v6152
      %v6169 = vmul.f32 %v3786, %v6155
      %v6170 = vmul.f32 %v3787, %v6152
      %v6171 = vmul.f32 %v3788, %v6155
      %6186 = vrot.lane.b32.xlu0 %v6158, 97
      %v6187 = vpop.permute.xlu0 %6186
      %6188 = vrot.lane.b32.xlu0 %v6159, 97
      %v6189 = vpop.permute.xlu0 %6188
      %6190 = vrot.lane.b32.xlu0 %v6160, 97
      %v6191 = vpop.permute.xlu0 %6190
      %6192 = vrot.lane.b32.xlu0 %v6161, 97
      %v6193 = vpop.permute.xlu0 %6192
      %6194 = vrot.lane.b32.xlu0 %v6162, 97
      %v6195 = vpop.permute.xlu0 %6194
      %6196 = vrot.lane.b32.xlu0 %v6163, 97
      %v6197 = vpop.permute.xlu0 %6196
      %6198 = vrot.lane.b32.xlu0 %v6164, 97
      %v6199 = vpop.permute.xlu0 %6198
      %6200 = vrot.lane.b32.xlu0 %v6165, 97
      %v6201 = vpop.permute.xlu0 %6200
      %6202 = vrot.lane.b32.xlu0 %v6166, 97
      %v6203 = vpop.permute.xlu0 %6202
      %6204 = vrot.lane.b32.xlu0 %v6167, 97
      %v6205 = vpop.permute.xlu0 %6204
      %6206 = vrot.lane.b32.xlu0 %v6168, 97
      %v6207 = vpop.permute.xlu0 %6206
      %6208 = vrot.lane.b32.xlu0 %v6169, 97
      %v6209 = vpop.permute.xlu0 %6208
      %6210 = vrot.lane.b32.xlu0 %v6170, 97
      %v6211 = vpop.permute.xlu0 %6210
      %6212 = vrot.lane.b32.xlu0 %v6171, 97
      %v6213 = vpop.permute.xlu0 %6212
      %v6214 = vsel %vm517, %v6187, %v6189
      %v6215 = vsel %vm517, %v6191, %v6193
      %v6216 = vsel %vm517, %v6195, %v6197
      %v6217 = vsel %vm517, %v6199, %v6201
      %v6218 = vsel %vm517, %v6203, %v6205
      %v6219 = vsel %vm517, %v6207, %v6209
      %v6220 = vsel %vm517, %v6211, %v6213
      %6235 = vst [vmem:[#allocation4 + $0x930] sm:$0xff] %v6214
      %6236 = vst.msk [vmem:[#allocation4 + $0x938] sm:$0xff] %vm517, %v6189
      %6237 = vst [vmem:[#allocation4 + $0x940] sm:$0xff] %v6215
      %6238 = vst.msk [vmem:[#allocation4 + $0x948] sm:$0xff] %vm517, %v6193
      %6239 = vst [vmem:[#allocation4 + $0x950] sm:$0xff] %v6216
      %6240 = vst.msk [vmem:[#allocation4 + $0x958] sm:$0xff] %vm517, %v6197
      %6241 = vst [vmem:[#allocation4 + $0x960] sm:$0xff] %v6217
      %6242 = vst.msk [vmem:[#allocation4 + $0x968] sm:$0xff] %vm517, %v6201
      %6243 = vst [vmem:[#allocation4 + $0x970] sm:$0xff] %v6218
      %6244 = vst.msk [vmem:[#allocation4 + $0x978] sm:$0xff] %vm517, %v6205
      %6245 = vst [vmem:[#allocation4 + $0x980] sm:$0xff] %v6219
      %6246 = vst.msk [vmem:[#allocation4 + $0x988] sm:$0xff] %vm517, %v6209
      %6247 = vst [vmem:[#allocation4 + $0x990] sm:$0xff] %v6220
      %6248 = vst.msk [vmem:[#allocation4 + $0x998] sm:$0xff] %vm517, %v6213
      %vm6249 = vcmask 1048328
      %6250 = vst.msk [vmem:[#allocation4 + $0x938] sm:$0xff] %vm6249, 0.0
      %6251 = vst.msk [vmem:[#allocation4 + $0x948] sm:$0xff] %vm6249, 0.0
      %6252 = vst.msk [vmem:[#allocation4 + $0x958] sm:$0xff] %vm6249, 0.0
      %6253 = vst.msk [vmem:[#allocation4 + $0x968] sm:$0xff] %vm6249, 0.0
      %6254 = vst.msk [vmem:[#allocation4 + $0x978] sm:$0xff] %vm6249, 0.0
      %6255 = vst.msk [vmem:[#allocation4 + $0x988] sm:$0xff] %vm6249, 0.0
      %6256 = vst.msk [vmem:[#allocation4 + $0x998] sm:$0xff] %vm6249, 0.0
      %v6257 = vld [vmem:[%s933] ss:$8 sm:$0x3]
      %v6259 = vlaneseq
      %v6260 = vshrl.u32 %v6259, 7
      %v6261 = vsub.s32 0, %v6260
      %v6262 = vrot.slane %v6257, %v6261
      %v6263 = vlaneseq
      %v6264 = vshrl.u32 %v6263, 7
      %v6265 = vsub.s32 1, %v6264
      %v6266 = vrot.slane %v6257, %v6265
      %6267 = vrot.lane.b32.xlu0 %v6262, 32
      %v6268 = vpop.permute.xlu0 %6267
      %6269 = vrot.lane.b32.xlu0 %v6266, 32
      %v6270 = vpop.permute.xlu0 %6269
      %v6271 = vsel %vm501, %v6268, %v6270
      %v6274 = vmul.f32 %v3775, %v6268
      %v6275 = vmul.f32 %v3776, %v6271
      %v6276 = vmul.f32 %v3777, %v6268
      %v6277 = vmul.f32 %v3778, %v6271
      %v6278 = vmul.f32 %v3779, %v6268
      %v6279 = vmul.f32 %v3780, %v6271
      %v6280 = vmul.f32 %v3781, %v6268
      %v6281 = vmul.f32 %v3782, %v6271
      %v6282 = vmul.f32 %v3783, %v6268
      %v6283 = vmul.f32 %v3784, %v6271
      %v6284 = vmul.f32 %v3785, %v6268
      %v6285 = vmul.f32 %v3786, %v6271
      %v6286 = vmul.f32 %v3787, %v6268
      %v6287 = vmul.f32 %v3788, %v6271
      %6302 = vrot.lane.b32.xlu0 %v6274, 96
      %v6303 = vpop.permute.xlu0 %6302
      %6304 = vrot.lane.b32.xlu0 %v6275, 96
      %v6305 = vpop.permute.xlu0 %6304
      %6306 = vrot.lane.b32.xlu0 %v6276, 96
      %v6307 = vpop.permute.xlu0 %6306
      %6308 = vrot.lane.b32.xlu0 %v6277, 96
      %v6309 = vpop.permute.xlu0 %6308
      %6310 = vrot.lane.b32.xlu0 %v6278, 96
      %v6311 = vpop.permute.xlu0 %6310
      %6312 = vrot.lane.b32.xlu0 %v6279, 96
      %v6313 = vpop.permute.xlu0 %6312
      %6314 = vrot.lane.b32.xlu0 %v6280, 96
      %v6315 = vpop.permute.xlu0 %6314
      %6316 = vrot.lane.b32.xlu0 %v6281, 96
      %v6317 = vpop.permute.xlu0 %6316
      %6318 = vrot.lane.b32.xlu0 %v6282, 96
      %v6319 = vpop.permute.xlu0 %6318
      %6320 = vrot.lane.b32.xlu0 %v6283, 96
      %v6321 = vpop.permute.xlu0 %6320
      %6322 = vrot.lane.b32.xlu0 %v6284, 96
      %v6323 = vpop.permute.xlu0 %6322
      %6324 = vrot.lane.b32.xlu0 %v6285, 96
      %v6325 = vpop.permute.xlu0 %6324
      %6326 = vrot.lane.b32.xlu0 %v6286, 96
      %v6327 = vpop.permute.xlu0 %6326
      %6328 = vrot.lane.b32.xlu0 %v6287, 96
      %v6329 = vpop.permute.xlu0 %6328
      %v6330 = vsel %vm493, %v6303, %v6305
      %v6331 = vsel %vm493, %v6307, %v6309
      %v6332 = vsel %vm493, %v6311, %v6313
      %v6333 = vsel %vm493, %v6315, %v6317
      %v6334 = vsel %vm493, %v6319, %v6321
      %v6335 = vsel %vm493, %v6323, %v6325
      %v6336 = vsel %vm493, %v6327, %v6329
      %6351 = vst [vmem:[#allocation4 + $0x9a0] sm:$0xff] %v6330
      %6352 = vst.msk [vmem:[#allocation4 + $0x9a8] sm:$0xff] %vm493, %v6305
      %6353 = vst [vmem:[#allocation4 + $0x9b0] sm:$0xff] %v6331
      %6354 = vst.msk [vmem:[#allocation4 + $0x9b8] sm:$0xff] %vm493, %v6309
      %6355 = vst [vmem:[#allocation4 + $0x9c0] sm:$0xff] %v6332
      %6356 = vst.msk [vmem:[#allocation4 + $0x9c8] sm:$0xff] %vm493, %v6313
      %6357 = vst [vmem:[#allocation4 + $0x9d0] sm:$0xff] %v6333
      %6358 = vst.msk [vmem:[#allocation4 + $0x9d8] sm:$0xff] %vm493, %v6317
      %6359 = vst [vmem:[#allocation4 + $0x9e0] sm:$0xff] %v6334
      %6360 = vst.msk [vmem:[#allocation4 + $0x9e8] sm:$0xff] %vm493, %v6321
      %6361 = vst [vmem:[#allocation4 + $0x9f0] sm:$0xff] %v6335
      %6362 = vst.msk [vmem:[#allocation4 + $0x9f8] sm:$0xff] %vm493, %v6325
      %6363 = vst [vmem:[#allocation4 + $0xa00] sm:$0xff] %v6336
      %6364 = vst.msk [vmem:[#allocation4 + $0xa08] sm:$0xff] %vm493, %v6329
      %vm6365 = vcmask 1048320
      %6366 = vst.msk [vmem:[#allocation4 + $0x9a8] sm:$0xff] %vm6365, 0.0
      %6367 = vst.msk [vmem:[#allocation4 + $0x9b8] sm:$0xff] %vm6365, 0.0
      %6368 = vst.msk [vmem:[#allocation4 + $0x9c8] sm:$0xff] %vm6365, 0.0
      %6369 = vst.msk [vmem:[#allocation4 + $0x9d8] sm:$0xff] %vm6365, 0.0
      %6370 = vst.msk [vmem:[#allocation4 + $0x9e8] sm:$0xff] %vm6365, 0.0
      %6371 = vst.msk [vmem:[#allocation4 + $0x9f8] sm:$0xff] %vm6365, 0.0
      %6372 = vst.msk [vmem:[#allocation4 + $0xa08] sm:$0xff] %vm6365, 0.0
      %v6373 = vld [vmem:[%s955] ss:$8 sm:$0x3]
      %v6375 = vlaneseq
      %v6376 = vshrl.u32 %v6375, 7
      %v6377 = vsub.s32 0, %v6376
      %v6378 = vrot.slane %v6373, %v6377
      %v6379 = vlaneseq
      %v6380 = vshrl.u32 %v6379, 7
      %v6381 = vsub.s32 1, %v6380
      %v6382 = vrot.slane %v6373, %v6381
      %6383 = vrot.lane.b32.xlu0 %v6378, 33
      %v6384 = vpop.permute.xlu0 %6383
      %6385 = vrot.lane.b32.xlu0 %v6382, 33
      %v6386 = vpop.permute.xlu0 %6385
      %v6387 = vsel %vm477, %v6384, %v6386
      %v6390 = vmul.f32 %v3775, %v6384
      %v6391 = vmul.f32 %v3776, %v6387
      %v6392 = vmul.f32 %v3777, %v6384
      %v6393 = vmul.f32 %v3778, %v6387
      %v6394 = vmul.f32 %v3779, %v6384
      %v6395 = vmul.f32 %v3780, %v6387
      %v6396 = vmul.f32 %v3781, %v6384
      %v6397 = vmul.f32 %v3782, %v6387
      %v6398 = vmul.f32 %v3783, %v6384
      %v6399 = vmul.f32 %v3784, %v6387
      %v6400 = vmul.f32 %v3785, %v6384
      %v6401 = vmul.f32 %v3786, %v6387
      %v6402 = vmul.f32 %v3787, %v6384
      %v6403 = vmul.f32 %v3788, %v6387
      %6418 = vrot.lane.b32.xlu0 %v6390, 95
      %v6419 = vpop.permute.xlu0 %6418
      %6420 = vrot.lane.b32.xlu0 %v6391, 95
      %v6421 = vpop.permute.xlu0 %6420
      %6422 = vrot.lane.b32.xlu0 %v6392, 95
      %v6423 = vpop.permute.xlu0 %6422
      %6424 = vrot.lane.b32.xlu0 %v6393, 95
      %v6425 = vpop.permute.xlu0 %6424
      %6426 = vrot.lane.b32.xlu0 %v6394, 95
      %v6427 = vpop.permute.xlu0 %6426
      %6428 = vrot.lane.b32.xlu0 %v6395, 95
      %v6429 = vpop.permute.xlu0 %6428
      %6430 = vrot.lane.b32.xlu0 %v6396, 95
      %v6431 = vpop.permute.xlu0 %6430
      %6432 = vrot.lane.b32.xlu0 %v6397, 95
      %v6433 = vpop.permute.xlu0 %6432
      %6434 = vrot.lane.b32.xlu0 %v6398, 95
      %v6435 = vpop.permute.xlu0 %6434
      %6436 = vrot.lane.b32.xlu0 %v6399, 95
      %v6437 = vpop.permute.xlu0 %6436
      %6438 = vrot.lane.b32.xlu0 %v6400, 95
      %v6439 = vpop.permute.xlu0 %6438
      %6440 = vrot.lane.b32.xlu0 %v6401, 95
      %v6441 = vpop.permute.xlu0 %6440
      %6442 = vrot.lane.b32.xlu0 %v6402, 95
      %v6443 = vpop.permute.xlu0 %6442
      %6444 = vrot.lane.b32.xlu0 %v6403, 95
      %v6445 = vpop.permute.xlu0 %6444
      %v6446 = vsel %vm469, %v6419, %v6421
      %v6447 = vsel %vm469, %v6423, %v6425
      %v6448 = vsel %vm469, %v6427, %v6429
      %v6449 = vsel %vm469, %v6431, %v6433
      %v6450 = vsel %vm469, %v6435, %v6437
      %v6451 = vsel %vm469, %v6439, %v6441
      %v6452 = vsel %vm469, %v6443, %v6445
      %6467 = vst [vmem:[#allocation4 + $0xa10] sm:$0xff] %v6446
      %6468 = vst.msk [vmem:[#allocation4 + $0xa18] sm:$0xff] %vm469, %v6421
      %6469 = vst [vmem:[#allocation4 + $0xa20] sm:$0xff] %v6447
      %6470 = vst.msk [vmem:[#allocation4 + $0xa28] sm:$0xff] %vm469, %v6425
      %6471 = vst [vmem:[#allocation4 + $0xa30] sm:$0xff] %v6448
      %6472 = vst.msk [vmem:[#allocation4 + $0xa38] sm:$0xff] %vm469, %v6429
      %6473 = vst [vmem:[#allocation4 + $0xa40] sm:$0xff] %v6449
      %6474 = vst.msk [vmem:[#allocation4 + $0xa48] sm:$0xff] %vm469, %v6433
      %6475 = vst [vmem:[#allocation4 + $0xa50] sm:$0xff] %v6450
      %6476 = vst.msk [vmem:[#allocation4 + $0xa58] sm:$0xff] %vm469, %v6437
      %6477 = vst [vmem:[#allocation4 + $0xa60] sm:$0xff] %v6451
      %6478 = vst.msk [vmem:[#allocation4 + $0xa68] sm:$0xff] %vm469, %v6441
      %6479 = vst [vmem:[#allocation4 + $0xa70] sm:$0xff] %v6452
      %6480 = vst.msk [vmem:[#allocation4 + $0xa78] sm:$0xff] %vm469, %v6445
      %vm6481 = vcmask 1048312
      %6482 = vst.msk [vmem:[#allocation4 + $0xa18] sm:$0xff] %vm6481, 0.0
      %6483 = vst.msk [vmem:[#allocation4 + $0xa28] sm:$0xff] %vm6481, 0.0
      %6484 = vst.msk [vmem:[#allocation4 + $0xa38] sm:$0xff] %vm6481, 0.0
      %6485 = vst.msk [vmem:[#allocation4 + $0xa48] sm:$0xff] %vm6481, 0.0
      %6486 = vst.msk [vmem:[#allocation4 + $0xa58] sm:$0xff] %vm6481, 0.0
      %6487 = vst.msk [vmem:[#allocation4 + $0xa68] sm:$0xff] %vm6481, 0.0
      %6488 = vst.msk [vmem:[#allocation4 + $0xa78] sm:$0xff] %vm6481, 0.0
      %v6489 = vld [vmem:[%s977] ss:$8 sm:$0x3]
      %v6491 = vlaneseq
      %v6492 = vshrl.u32 %v6491, 7
      %v6493 = vsub.s32 0, %v6492
      %v6494 = vrot.slane %v6489, %v6493
      %v6495 = vlaneseq
      %v6496 = vshrl.u32 %v6495, 7
      %v6497 = vsub.s32 1, %v6496
      %v6498 = vrot.slane %v6489, %v6497
      %6499 = vrot.lane.b32.xlu0 %v6494, 34
      %v6500 = vpop.permute.xlu0 %6499
      %6501 = vrot.lane.b32.xlu0 %v6498, 34
      %v6502 = vpop.permute.xlu0 %6501
      %v6503 = vsel %vm452, %v6500, %v6502
      %v6506 = vmul.f32 %v3775, %v6500
      %v6507 = vmul.f32 %v3776, %v6503
      %v6508 = vmul.f32 %v3777, %v6500
      %v6509 = vmul.f32 %v3778, %v6503
      %v6510 = vmul.f32 %v3779, %v6500
      %v6511 = vmul.f32 %v3780, %v6503
      %v6512 = vmul.f32 %v3781, %v6500
      %v6513 = vmul.f32 %v3782, %v6503
      %v6514 = vmul.f32 %v3783, %v6500
      %v6515 = vmul.f32 %v3784, %v6503
      %v6516 = vmul.f32 %v3785, %v6500
      %v6517 = vmul.f32 %v3786, %v6503
      %v6518 = vmul.f32 %v3787, %v6500
      %v6519 = vmul.f32 %v3788, %v6503
      %6534 = vrot.lane.b32.xlu0 %v6506, 94
      %v6535 = vpop.permute.xlu0 %6534
      %6536 = vrot.lane.b32.xlu0 %v6507, 94
      %v6537 = vpop.permute.xlu0 %6536
      %6538 = vrot.lane.b32.xlu0 %v6508, 94
      %v6539 = vpop.permute.xlu0 %6538
      %6540 = vrot.lane.b32.xlu0 %v6509, 94
      %v6541 = vpop.permute.xlu0 %6540
      %6542 = vrot.lane.b32.xlu0 %v6510, 94
      %v6543 = vpop.permute.xlu0 %6542
      %6544 = vrot.lane.b32.xlu0 %v6511, 94
      %v6545 = vpop.permute.xlu0 %6544
      %6546 = vrot.lane.b32.xlu0 %v6512, 94
      %v6547 = vpop.permute.xlu0 %6546
      %6548 = vrot.lane.b32.xlu0 %v6513, 94
      %v6549 = vpop.permute.xlu0 %6548
      %6550 = vrot.lane.b32.xlu0 %v6514, 94
      %v6551 = vpop.permute.xlu0 %6550
      %6552 = vrot.lane.b32.xlu0 %v6515, 94
      %v6553 = vpop.permute.xlu0 %6552
      %6554 = vrot.lane.b32.xlu0 %v6516, 94
      %v6555 = vpop.permute.xlu0 %6554
      %6556 = vrot.lane.b32.xlu0 %v6517, 94
      %v6557 = vpop.permute.xlu0 %6556
      %6558 = vrot.lane.b32.xlu0 %v6518, 94
      %v6559 = vpop.permute.xlu0 %6558
      %6560 = vrot.lane.b32.xlu0 %v6519, 94
      %v6561 = vpop.permute.xlu0 %6560
      %v6562 = vsel %vm444, %v6535, %v6537
      %v6563 = vsel %vm444, %v6539, %v6541
      %v6564 = vsel %vm444, %v6543, %v6545
      %v6565 = vsel %vm444, %v6547, %v6549
      %v6566 = vsel %vm444, %v6551, %v6553
      %v6567 = vsel %vm444, %v6555, %v6557
      %v6568 = vsel %vm444, %v6559, %v6561
      %6583 = vst [vmem:[#allocation4 + $0xa80] sm:$0xff] %v6562
      %6584 = vst.msk [vmem:[#allocation4 + $0xa88] sm:$0xff] %vm444, %v6537
      %6585 = vst [vmem:[#allocation4 + $0xa90] sm:$0xff] %v6563
      %6586 = vst.msk [vmem:[#allocation4 + $0xa98] sm:$0xff] %vm444, %v6541
      %6587 = vst [vmem:[#allocation4 + $0xaa0] sm:$0xff] %v6564
      %6588 = vst.msk [vmem:[#allocation4 + $0xaa8] sm:$0xff] %vm444, %v6545
      %6589 = vst [vmem:[#allocation4 + $0xab0] sm:$0xff] %v6565
      %6590 = vst.msk [vmem:[#allocation4 + $0xab8] sm:$0xff] %vm444, %v6549
      %6591 = vst [vmem:[#allocation4 + $0xac0] sm:$0xff] %v6566
      %6592 = vst.msk [vmem:[#allocation4 + $0xac8] sm:$0xff] %vm444, %v6553
      %6593 = vst [vmem:[#allocation4 + $0xad0] sm:$0xff] %v6567
      %6594 = vst.msk [vmem:[#allocation4 + $0xad8] sm:$0xff] %vm444, %v6557
      %6595 = vst [vmem:[#allocation4 + $0xae0] sm:$0xff] %v6568
      %6596 = vst.msk [vmem:[#allocation4 + $0xae8] sm:$0xff] %vm444, %v6561
      %vm6597 = vcmask 1048304
      %6598 = vst.msk [vmem:[#allocation4 + $0xa88] sm:$0xff] %vm6597, 0.0
      %6599 = vst.msk [vmem:[#allocation4 + $0xa98] sm:$0xff] %vm6597, 0.0
      %6600 = vst.msk [vmem:[#allocation4 + $0xaa8] sm:$0xff] %vm6597, 0.0
      %6601 = vst.msk [vmem:[#allocation4 + $0xab8] sm:$0xff] %vm6597, 0.0
      %6602 = vst.msk [vmem:[#allocation4 + $0xac8] sm:$0xff] %vm6597, 0.0
      %6603 = vst.msk [vmem:[#allocation4 + $0xad8] sm:$0xff] %vm6597, 0.0
      %6604 = vst.msk [vmem:[#allocation4 + $0xae8] sm:$0xff] %vm6597, 0.0
      %v6605 = vld [vmem:[%s11] sm:$0xff]
      %v6606 = vld [vmem:[%s11 + $0x8] sm:$0xff]
      %v6607 = vld [vmem:[%s11 + $0x10] sm:$0xff]
      %v6608 = vld [vmem:[%s11 + $0x18] sm:$0xff]
      %v6609 = vld [vmem:[%s11 + $0x20] sm:$0xff]
      %v6610 = vld [vmem:[%s11 + $0x28] sm:$0xf]
      %v6611 = vld [vmem:[#allocation4] sm:$0xff]
      %v6612 = vld [vmem:[#allocation4 + $0x8] sm:$0xff]
      %v6613 = vld [vmem:[#allocation4 + $0x10] sm:$0xff]
      %v6614 = vld [vmem:[#allocation4 + $0x18] sm:$0xff]
      %v6615 = vld [vmem:[#allocation4 + $0x20] sm:$0xff]
      %v6616 = vld [vmem:[#allocation4 + $0x28] sm:$0xff]
      %v6617 = vld [vmem:[#allocation4 + $0x30] sm:$0xff]
      %v6618 = vld [vmem:[#allocation4 + $0x38] sm:$0xff]
      %v6619 = vld [vmem:[#allocation4 + $0x40] sm:$0xff]
      %v6620 = vld [vmem:[#allocation4 + $0x48] sm:$0xff]
      %v6621 = vld [vmem:[#allocation4 + $0x50] sm:$0xff]
      %v6622 = vld [vmem:[#allocation4 + $0x58] sm:$0xff]
      %v6623 = vld [vmem:[#allocation4 + $0x60] sm:$0xff]
      %v6624 = vld [vmem:[#allocation4 + $0x68] sm:$0xff]
      %v6625 = vld [vmem:[#allocation4 + $0x70] sm:$0xff]
      %v6626 = vld [vmem:[#allocation4 + $0x78] sm:$0xff]
      %v6627 = vld [vmem:[#allocation4 + $0x80] sm:$0xff]
      %v6628 = vld [vmem:[#allocation4 + $0x88] sm:$0xff]
      %v6629 = vld [vmem:[#allocation4 + $0x90] sm:$0xff]
      %v6630 = vld [vmem:[#allocation4 + $0x98] sm:$0xff]
      %v6631 = vld [vmem:[#allocation4 + $0xa0] sm:$0xff]
      %v6632 = vld [vmem:[#allocation4 + $0xa8] sm:$0xff]
      %v6633 = vld [vmem:[#allocation4 + $0xb0] sm:$0xff]
      %v6634 = vld [vmem:[#allocation4 + $0xb8] sm:$0xff]
      %v6635 = vld [vmem:[#allocation4 + $0xc0] sm:$0xff]
      %v6636 = vld [vmem:[#allocation4 + $0xc8] sm:$0xff]
      %v6637 = vld [vmem:[#allocation4 + $0xd0] sm:$0xff]
      %v6638 = vld [vmem:[#allocation4 + $0xd8] sm:$0xff]
      %v6639 = vld [vmem:[#allocation4 + $0xe0] sm:$0xff]
      %v6640 = vld [vmem:[#allocation4 + $0xe8] sm:$0xff]
      %v6641 = vld [vmem:[#allocation4 + $0xf0] sm:$0xff]
      %v6642 = vld [vmem:[#allocation4 + $0xf8] sm:$0xff]
      %v6643 = vld [vmem:[#allocation4 + $0x100] sm:$0xff]
      %v6644 = vld [vmem:[#allocation4 + $0x108] sm:$0xff]
      %v6645 = vld [vmem:[#allocation4 + $0x110] sm:$0xff]
      %v6646 = vld [vmem:[#allocation4 + $0x118] sm:$0xff]
      %v6647 = vld [vmem:[#allocation4 + $0x120] sm:$0xff]
      %v6648 = vld [vmem:[#allocation4 + $0x128] sm:$0xff]
      %v6649 = vld [vmem:[#allocation4 + $0x130] sm:$0xff]
      %v6650 = vld [vmem:[#allocation4 + $0x138] sm:$0xff]
      %v6651 = vld [vmem:[#allocation4 + $0x140] sm:$0xff]
      %v6652 = vld [vmem:[#allocation4 + $0x148] sm:$0xff]
      %v6653 = vld [vmem:[#allocation4 + $0x150] sm:$0xff]
      %v6654 = vld [vmem:[#allocation4 + $0x158] sm:$0xff]
      %v6655 = vld [vmem:[#allocation4 + $0x160] sm:$0xff]
      %v6656 = vld [vmem:[#allocation4 + $0x168] sm:$0xff]
      %v6657 = vld [vmem:[#allocation4 + $0x170] sm:$0xff]
      %v6658 = vld [vmem:[#allocation4 + $0x178] sm:$0xff]
      %v6659 = vld [vmem:[#allocation4 + $0x180] sm:$0xff]
      %v6660 = vld [vmem:[#allocation4 + $0x188] sm:$0xff]
      %v6661 = vld [vmem:[#allocation4 + $0x190] sm:$0xff]
      %v6662 = vld [vmem:[#allocation4 + $0x198] sm:$0xff]
      %v6663 = vld [vmem:[#allocation4 + $0x1a0] sm:$0xff]
      %v6664 = vld [vmem:[#allocation4 + $0x1a8] sm:$0xff]
      %v6665 = vld [vmem:[#allocation4 + $0x1b0] sm:$0xff]
      %v6666 = vld [vmem:[#allocation4 + $0x1b8] sm:$0xff]
      %v6667 = vld [vmem:[#allocation4 + $0x1c0] sm:$0xff]
      %v6668 = vld [vmem:[#allocation4 + $0x1c8] sm:$0xff]
      %v6669 = vld [vmem:[#allocation4 + $0x1d0] sm:$0xff]
      %v6670 = vld [vmem:[#allocation4 + $0x1d8] sm:$0xff]
      %v6671 = vld [vmem:[#allocation4 + $0x1e0] sm:$0xff]
      %v6672 = vld [vmem:[#allocation4 + $0x1e8] sm:$0xff]
      %v6673 = vld [vmem:[#allocation4 + $0x1f0] sm:$0xff]
      %v6674 = vld [vmem:[#allocation4 + $0x1f8] sm:$0xff]
      %v6675 = vld [vmem:[#allocation4 + $0x200] sm:$0xff]
      %v6676 = vld [vmem:[#allocation4 + $0x208] sm:$0xff]
      %v6677 = vld [vmem:[#allocation4 + $0x210] sm:$0xff]
      %v6678 = vld [vmem:[#allocation4 + $0x218] sm:$0xff]
      %v6679 = vld [vmem:[#allocation4 + $0x220] sm:$0xff]
      %v6680 = vld [vmem:[#allocation4 + $0x228] sm:$0xff]
      %v6681 = vld [vmem:[#allocation4 + $0x230] sm:$0xff]
      %v6682 = vld [vmem:[#allocation4 + $0x238] sm:$0xff]
      %v6683 = vld [vmem:[#allocation4 + $0x240] sm:$0xff]
      %v6684 = vld [vmem:[#allocation4 + $0x248] sm:$0xff]
      %v6685 = vld [vmem:[#allocation4 + $0x250] sm:$0xff]
      %v6686 = vld [vmem:[#allocation4 + $0x258] sm:$0xff]
      %v6687 = vld [vmem:[#allocation4 + $0x260] sm:$0xff]
      %v6688 = vld [vmem:[#allocation4 + $0x268] sm:$0xff]
      %v6689 = vld [vmem:[#allocation4 + $0x270] sm:$0xff]
      %v6690 = vld [vmem:[#allocation4 + $0x278] sm:$0xff]
      %v6691 = vld [vmem:[#allocation4 + $0x280] sm:$0xff]
      %v6692 = vld [vmem:[#allocation4 + $0x288] sm:$0xff]
      %v6693 = vld [vmem:[#allocation4 + $0x290] sm:$0xff]
      %v6694 = vld [vmem:[#allocation4 + $0x298] sm:$0xff]
      %v6695 = vld [vmem:[#allocation4 + $0x2a0] sm:$0xff]
      %v6696 = vld [vmem:[#allocation4 + $0x2a8] sm:$0xff]
      %v6697 = vld [vmem:[#allocation4 + $0x2b0] sm:$0xff]
      %v6698 = vld [vmem:[#allocation4 + $0x2b8] sm:$0xff]
      %v6699 = vld [vmem:[#allocation4 + $0x2c0] sm:$0xff]
      %v6700 = vld [vmem:[#allocation4 + $0x2c8] sm:$0xff]
      %v6701 = vld [vmem:[#allocation4 + $0x2d0] sm:$0xff]
      %v6702 = vld [vmem:[#allocation4 + $0x2d8] sm:$0xff]
      %v6703 = vld [vmem:[#allocation4 + $0x2e0] sm:$0xff]
      %v6704 = vld [vmem:[#allocation4 + $0x2e8] sm:$0xff]
      %v6705 = vld [vmem:[#allocation4 + $0x2f0] sm:$0xff]
      %v6706 = vld [vmem:[#allocation4 + $0x2f8] sm:$0xff]
      %v6707 = vld [vmem:[#allocation4 + $0x300] sm:$0xff]
      %v6708 = vld [vmem:[#allocation4 + $0x308] sm:$0xff]
      %v6709 = vld [vmem:[#allocation4 + $0x310] sm:$0xff]
      %v6710 = vld [vmem:[#allocation4 + $0x318] sm:$0xff]
      %v6711 = vld [vmem:[#allocation4 + $0x320] sm:$0xff]
      %v6712 = vld [vmem:[#allocation4 + $0x328] sm:$0xff]
      %v6713 = vld [vmem:[#allocation4 + $0x330] sm:$0xff]
      %v6714 = vld [vmem:[#allocation4 + $0x338] sm:$0xff]
      %v6715 = vld [vmem:[#allocation4 + $0x340] sm:$0xff]
      %v6716 = vld [vmem:[#allocation4 + $0x348] sm:$0xff]
      %v6717 = vld [vmem:[#allocation4 + $0x350] sm:$0xff]
      %v6718 = vld [vmem:[#allocation4 + $0x358] sm:$0xff]
      %v6719 = vld [vmem:[#allocation4 + $0x360] sm:$0xff]
      %v6720 = vld [vmem:[#allocation4 + $0x368] sm:$0xff]
      %v6721 = vld [vmem:[#allocation4 + $0x370] sm:$0xff]
      %v6722 = vld [vmem:[#allocation4 + $0x378] sm:$0xff]
      %v6723 = vld [vmem:[#allocation4 + $0x380] sm:$0xff]
      %v6724 = vld [vmem:[#allocation4 + $0x388] sm:$0xff]
      %v6725 = vld [vmem:[#allocation4 + $0x390] sm:$0xff]
      %v6726 = vld [vmem:[#allocation4 + $0x398] sm:$0xff]
      %v6727 = vld [vmem:[#allocation4 + $0x3a0] sm:$0xff]
      %v6728 = vld [vmem:[#allocation4 + $0x3a8] sm:$0xff]
      %v6729 = vld [vmem:[#allocation4 + $0x3b0] sm:$0xff]
      %v6730 = vld [vmem:[#allocation4 + $0x3b8] sm:$0xff]
      %v6731 = vld [vmem:[#allocation4 + $0x3c0] sm:$0xff]
      %v6732 = vld [vmem:[#allocation4 + $0x3c8] sm:$0xff]
      %v6733 = vld [vmem:[#allocation4 + $0x3d0] sm:$0xff]
      %v6734 = vld [vmem:[#allocation4 + $0x3d8] sm:$0xff]
      %v6735 = vld [vmem:[#allocation4 + $0x3e0] sm:$0xff]
      %v6736 = vld [vmem:[#allocation4 + $0x3e8] sm:$0xff]
      %v6737 = vld [vmem:[#allocation4 + $0x3f0] sm:$0xff]
      %v6738 = vld [vmem:[#allocation4 + $0x3f8] sm:$0xff]
      %v6739 = vld [vmem:[#allocation4 + $0x400] sm:$0xff]
      %v6740 = vld [vmem:[#allocation4 + $0x408] sm:$0xff]
      %v6741 = vld [vmem:[#allocation4 + $0x410] sm:$0xff]
      %v6742 = vld [vmem:[#allocation4 + $0x418] sm:$0xff]
      %v6743 = vld [vmem:[#allocation4 + $0x420] sm:$0xff]
      %v6744 = vld [vmem:[#allocation4 + $0x428] sm:$0xff]
      %v6745 = vld [vmem:[#allocation4 + $0x430] sm:$0xff]
      %v6746 = vld [vmem:[#allocation4 + $0x438] sm:$0xff]
      %v6747 = vld [vmem:[#allocation4 + $0x440] sm:$0xff]
      %v6748 = vld [vmem:[#allocation4 + $0x448] sm:$0xff]
      %v6749 = vld [vmem:[#allocation4 + $0x450] sm:$0xff]
      %v6750 = vld [vmem:[#allocation4 + $0x458] sm:$0xff]
      %v6751 = vld [vmem:[#allocation4 + $0x460] sm:$0xff]
      %v6752 = vld [vmem:[#allocation4 + $0x468] sm:$0xff]
      %v6753 = vld [vmem:[#allocation4 + $0x470] sm:$0xff]
      %v6754 = vld [vmem:[#allocation4 + $0x478] sm:$0xff]
      %v6755 = vld [vmem:[#allocation4 + $0x480] sm:$0xff]
      %v6756 = vld [vmem:[#allocation4 + $0x488] sm:$0xff]
      %v6757 = vld [vmem:[#allocation4 + $0x490] sm:$0xff]
      %v6758 = vld [vmem:[#allocation4 + $0x498] sm:$0xff]
      %v6759 = vld [vmem:[#allocation4 + $0x4a0] sm:$0xff]
      %v6760 = vld [vmem:[#allocation4 + $0x4a8] sm:$0xff]
      %v6761 = vld [vmem:[#allocation4 + $0x4b0] sm:$0xff]
      %v6762 = vld [vmem:[#allocation4 + $0x4b8] sm:$0xff]
      %v6763 = vld [vmem:[#allocation4 + $0x4c0] sm:$0xff]
      %v6764 = vld [vmem:[#allocation4 + $0x4c8] sm:$0xff]
      %v6765 = vld [vmem:[#allocation4 + $0x4d0] sm:$0xff]
      %v6766 = vld [vmem:[#allocation4 + $0x4d8] sm:$0xff]
      %v6767 = vld [vmem:[#allocation4 + $0x4e0] sm:$0xff]
      %v6768 = vld [vmem:[#allocation4 + $0x4e8] sm:$0xff]
      %v6769 = vld [vmem:[#allocation4 + $0x4f0] sm:$0xff]
      %v6770 = vld [vmem:[#allocation4 + $0x4f8] sm:$0xff]
      %v6771 = vld [vmem:[#allocation4 + $0x500] sm:$0xff]
      %v6772 = vld [vmem:[#allocation4 + $0x508] sm:$0xff]
      %v6773 = vld [vmem:[#allocation4 + $0x510] sm:$0xff]
      %v6774 = vld [vmem:[#allocation4 + $0x518] sm:$0xff]
      %v6775 = vld [vmem:[#allocation4 + $0x520] sm:$0xff]
      %v6776 = vld [vmem:[#allocation4 + $0x528] sm:$0xff]
      %v6777 = vld [vmem:[#allocation4 + $0x530] sm:$0xff]
      %v6778 = vld [vmem:[#allocation4 + $0x538] sm:$0xff]
      %v6779 = vld [vmem:[#allocation4 + $0x540] sm:$0xff]
      %v6780 = vld [vmem:[#allocation4 + $0x548] sm:$0xff]
      %v6781 = vld [vmem:[#allocation4 + $0x550] sm:$0xff]
      %v6782 = vld [vmem:[#allocation4 + $0x558] sm:$0xff]
      %v6783 = vld [vmem:[#allocation4 + $0x560] sm:$0xff]
      %v6784 = vld [vmem:[#allocation4 + $0x568] sm:$0xff]
      %v6785 = vld [vmem:[#allocation4 + $0x570] sm:$0xff]
      %v6786 = vld [vmem:[#allocation4 + $0x578] sm:$0xff]
      %v6787 = vld [vmem:[#allocation4 + $0x580] sm:$0xff]
      %v6788 = vld [vmem:[#allocation4 + $0x588] sm:$0xff]
      %v6789 = vld [vmem:[#allocation4 + $0x590] sm:$0xff]
      %v6790 = vld [vmem:[#allocation4 + $0x598] sm:$0xff]
      %v6791 = vld [vmem:[#allocation4 + $0x5a0] sm:$0xff]
      %v6792 = vld [vmem:[#allocation4 + $0x5a8] sm:$0xff]
      %v6793 = vld [vmem:[#allocation4 + $0x5b0] sm:$0xff]
      %v6794 = vld [vmem:[#allocation4 + $0x5b8] sm:$0xff]
      %v6795 = vld [vmem:[#allocation4 + $0x5c0] sm:$0xff]
      %v6796 = vld [vmem:[#allocation4 + $0x5c8] sm:$0xff]
      %v6797 = vld [vmem:[#allocation4 + $0x5d0] sm:$0xff]
      %v6798 = vld [vmem:[#allocation4 + $0x5d8] sm:$0xff]
      %v6799 = vld [vmem:[#allocation4 + $0x5e0] sm:$0xff]
      %v6800 = vld [vmem:[#allocation4 + $0x5e8] sm:$0xff]
      %v6801 = vld [vmem:[#allocation4 + $0x5f0] sm:$0xff]
      %v6802 = vld [vmem:[#allocation4 + $0x5f8] sm:$0xff]
      %v6803 = vld [vmem:[#allocation4 + $0x600] sm:$0xff]
      %v6804 = vld [vmem:[#allocation4 + $0x608] sm:$0xff]
      %v6805 = vld [vmem:[#allocation4 + $0x610] sm:$0xff]
      %v6806 = vld [vmem:[#allocation4 + $0x618] sm:$0xff]
      %v6807 = vld [vmem:[#allocation4 + $0x620] sm:$0xff]
      %v6808 = vld [vmem:[#allocation4 + $0x628] sm:$0xff]
      %v6809 = vld [vmem:[#allocation4 + $0x630] sm:$0xff]
      %v6810 = vld [vmem:[#allocation4 + $0x638] sm:$0xff]
      %v6811 = vld [vmem:[#allocation4 + $0x640] sm:$0xff]
      %v6812 = vld [vmem:[#allocation4 + $0x648] sm:$0xff]
      %v6813 = vld [vmem:[#allocation4 + $0x650] sm:$0xff]
      %v6814 = vld [vmem:[#allocation4 + $0x658] sm:$0xff]
      %v6815 = vld [vmem:[#allocation4 + $0x660] sm:$0xff]
      %v6816 = vld [vmem:[#allocation4 + $0x668] sm:$0xff]
      %v6817 = vld [vmem:[#allocation4 + $0x670] sm:$0xff]
      %v6818 = vld [vmem:[#allocation4 + $0x678] sm:$0xff]
      %v6819 = vld [vmem:[#allocation4 + $0x680] sm:$0xff]
      %v6820 = vld [vmem:[#allocation4 + $0x688] sm:$0xff]
      %v6821 = vld [vmem:[#allocation4 + $0x690] sm:$0xff]
      %v6822 = vld [vmem:[#allocation4 + $0x698] sm:$0xff]
      %v6823 = vld [vmem:[#allocation4 + $0x6a0] sm:$0xff]
      %v6824 = vld [vmem:[#allocation4 + $0x6a8] sm:$0xff]
      %v6825 = vld [vmem:[#allocation4 + $0x6b0] sm:$0xff]
      %v6826 = vld [vmem:[#allocation4 + $0x6b8] sm:$0xff]
      %v6827 = vld [vmem:[#allocation4 + $0x6c0] sm:$0xff]
      %v6828 = vld [vmem:[#allocation4 + $0x6c8] sm:$0xff]
      %v6829 = vld [vmem:[#allocation4 + $0x6d0] sm:$0xff]
      %v6830 = vld [vmem:[#allocation4 + $0x6d8] sm:$0xff]
      %v6831 = vld [vmem:[#allocation4 + $0x6e0] sm:$0xff]
      %v6832 = vld [vmem:[#allocation4 + $0x6e8] sm:$0xff]
      %v6833 = vld [vmem:[#allocation4 + $0x6f0] sm:$0xff]
      %v6834 = vld [vmem:[#allocation4 + $0x6f8] sm:$0xff]
      %v6835 = vld [vmem:[#allocation4 + $0x700] sm:$0xff]
      %v6836 = vld [vmem:[#allocation4 + $0x708] sm:$0xff]
      %v6837 = vld [vmem:[#allocation4 + $0x710] sm:$0xff]
      %v6838 = vld [vmem:[#allocation4 + $0x718] sm:$0xff]
      %v6839 = vld [vmem:[#allocation4 + $0x720] sm:$0xff]
      %v6840 = vld [vmem:[#allocation4 + $0x728] sm:$0xff]
      %v6841 = vld [vmem:[#allocation4 + $0x730] sm:$0xff]
      %v6842 = vld [vmem:[#allocation4 + $0x738] sm:$0xff]
      %v6843 = vld [vmem:[#allocation4 + $0x740] sm:$0xff]
      %v6844 = vld [vmem:[#allocation4 + $0x748] sm:$0xff]
      %v6845 = vld [vmem:[#allocation4 + $0x750] sm:$0xff]
      %v6846 = vld [vmem:[#allocation4 + $0x758] sm:$0xff]
      %v6847 = vld [vmem:[#allocation4 + $0x760] sm:$0xff]
      %v6848 = vld [vmem:[#allocation4 + $0x768] sm:$0xff]
      %v6849 = vld [vmem:[#allocation4 + $0x770] sm:$0xff]
      %v6850 = vld [vmem:[#allocation4 + $0x778] sm:$0xff]
      %v6851 = vld [vmem:[#allocation4 + $0x780] sm:$0xff]
      %v6852 = vld [vmem:[#allocation4 + $0x788] sm:$0xff]
      %v6853 = vld [vmem:[#allocation4 + $0x790] sm:$0xff]
      %v6854 = vld [vmem:[#allocation4 + $0x798] sm:$0xff]
      %v6855 = vld [vmem:[#allocation4 + $0x7a0] sm:$0xff]
      %v6856 = vld [vmem:[#allocation4 + $0x7a8] sm:$0xff]
      %v6857 = vld [vmem:[#allocation4 + $0x7b0] sm:$0xff]
      %v6858 = vld [vmem:[#allocation4 + $0x7b8] sm:$0xff]
      %v6859 = vld [vmem:[#allocation4 + $0x7c0] sm:$0xff]
      %v6860 = vld [vmem:[#allocation4 + $0x7c8] sm:$0xff]
      %v6861 = vld [vmem:[#allocation4 + $0x7d0] sm:$0xff]
      %v6862 = vld [vmem:[#allocation4 + $0x7d8] sm:$0xff]
      %v6863 = vld [vmem:[#allocation4 + $0x7e0] sm:$0xff]
      %v6864 = vld [vmem:[#allocation4 + $0x7e8] sm:$0xff]
      %v6865 = vld [vmem:[#allocation4 + $0x7f0] sm:$0xff]
      %v6866 = vld [vmem:[#allocation4 + $0x7f8] sm:$0xff]
      %v6867 = vld [vmem:[#allocation4 + $0x800] sm:$0xff]
      %v6868 = vld [vmem:[#allocation4 + $0x808] sm:$0xff]
      %v6869 = vld [vmem:[#allocation4 + $0x810] sm:$0xff]
      %v6870 = vld [vmem:[#allocation4 + $0x818] sm:$0xff]
      %v6871 = vld [vmem:[#allocation4 + $0x820] sm:$0xff]
      %v6872 = vld [vmem:[#allocation4 + $0x828] sm:$0xff]
      %v6873 = vld [vmem:[#allocation4 + $0x830] sm:$0xff]
      %v6874 = vld [vmem:[#allocation4 + $0x838] sm:$0xff]
      %v6875 = vld [vmem:[#allocation4 + $0x840] sm:$0xff]
      %v6876 = vld [vmem:[#allocation4 + $0x848] sm:$0xff]
      %v6877 = vld [vmem:[#allocation4 + $0x850] sm:$0xff]
      %v6878 = vld [vmem:[#allocation4 + $0x858] sm:$0xff]
      %v6879 = vld [vmem:[#allocation4 + $0x860] sm:$0xff]
      %v6880 = vld [vmem:[#allocation4 + $0x868] sm:$0xff]
      %v6881 = vld [vmem:[#allocation4 + $0x870] sm:$0xff]
      %v6882 = vld [vmem:[#allocation4 + $0x878] sm:$0xff]
      %v6883 = vld [vmem:[#allocation4 + $0x880] sm:$0xff]
      %v6884 = vld [vmem:[#allocation4 + $0x888] sm:$0xff]
      %v6885 = vld [vmem:[#allocation4 + $0x890] sm:$0xff]
      %v6886 = vld [vmem:[#allocation4 + $0x898] sm:$0xff]
      %v6887 = vld [vmem:[#allocation4 + $0x8a0] sm:$0xff]
      %v6888 = vld [vmem:[#allocation4 + $0x8a8] sm:$0xff]
      %v6889 = vld [vmem:[#allocation4 + $0x8b0] sm:$0xff]
      %v6890 = vld [vmem:[#allocation4 + $0x8b8] sm:$0xff]
      %v6891 = vld [vmem:[#allocation4 + $0x8c0] sm:$0xff]
      %v6892 = vld [vmem:[#allocation4 + $0x8c8] sm:$0xff]
      %v6893 = vld [vmem:[#allocation4 + $0x8d0] sm:$0xff]
      %v6894 = vld [vmem:[#allocation4 + $0x8d8] sm:$0xff]
      %v6895 = vld [vmem:[#allocation4 + $0x8e0] sm:$0xff]
      %v6896 = vld [vmem:[#allocation4 + $0x8e8] sm:$0xff]
      %v6897 = vld [vmem:[#allocation4 + $0x8f0] sm:$0xff]
      %v6898 = vld [vmem:[#allocation4 + $0x8f8] sm:$0xff]
      %v6899 = vld [vmem:[#allocation4 + $0x900] sm:$0xff]
      %v6900 = vld [vmem:[#allocation4 + $0x908] sm:$0xff]
      %v6901 = vld [vmem:[#allocation4 + $0x910] sm:$0xff]
      %v6902 = vld [vmem:[#allocation4 + $0x918] sm:$0xff]
      %v6903 = vld [vmem:[#allocation4 + $0x920] sm:$0xff]
      %v6904 = vld [vmem:[#allocation4 + $0x928] sm:$0xff]
      %v6905 = vld [vmem:[#allocation4 + $0x930] sm:$0xff]
      %v6906 = vld [vmem:[#allocation4 + $0x938] sm:$0xff]
      %v6907 = vld [vmem:[#allocation4 + $0x940] sm:$0xff]
      %v6908 = vld [vmem:[#allocation4 + $0x948] sm:$0xff]
      %v6909 = vld [vmem:[#allocation4 + $0x950] sm:$0xff]
      %v6910 = vld [vmem:[#allocation4 + $0x958] sm:$0xff]
      %v6911 = vld [vmem:[#allocation4 + $0x960] sm:$0xff]
      %v6912 = vld [vmem:[#allocation4 + $0x968] sm:$0xff]
      %v6913 = vld [vmem:[#allocation4 + $0x970] sm:$0xff]
      %v6914 = vld [vmem:[#allocation4 + $0x978] sm:$0xff]
      %v6915 = vld [vmem:[#allocation4 + $0x980] sm:$0xff]
      %v6916 = vld [vmem:[#allocation4 + $0x988] sm:$0xff]
      %v6917 = vld [vmem:[#allocation4 + $0x990] sm:$0xff]
      %v6918 = vld [vmem:[#allocation4 + $0x998] sm:$0xff]
      %v6919 = vld [vmem:[#allocation4 + $0x9a0] sm:$0xff]
      %v6920 = vld [vmem:[#allocation4 + $0x9a8] sm:$0xff]
      %v6921 = vld [vmem:[#allocation4 + $0x9b0] sm:$0xff]
      %v6922 = vld [vmem:[#allocation4 + $0x9b8] sm:$0xff]
      %v6923 = vld [vmem:[#allocation4 + $0x9c0] sm:$0xff]
      %v6924 = vld [vmem:[#allocation4 + $0x9c8] sm:$0xff]
      %v6925 = vld [vmem:[#allocation4 + $0x9d0] sm:$0xff]
      %v6926 = vld [vmem:[#allocation4 + $0x9d8] sm:$0xff]
      %v6927 = vld [vmem:[#allocation4 + $0x9e0] sm:$0xff]
      %v6928 = vld [vmem:[#allocation4 + $0x9e8] sm:$0xff]
      %v6929 = vld [vmem:[#allocation4 + $0x9f0] sm:$0xff]
      %v6930 = vld [vmem:[#allocation4 + $0x9f8] sm:$0xff]
      %v6931 = vld [vmem:[#allocation4 + $0xa00] sm:$0xff]
      %v6932 = vld [vmem:[#allocation4 + $0xa08] sm:$0xff]
      %v6933 = vld [vmem:[#allocation4 + $0xa10] sm:$0xff]
      %v6934 = vld [vmem:[#allocation4 + $0xa18] sm:$0xff]
      %v6935 = vld [vmem:[#allocation4 + $0xa20] sm:$0xff]
      %v6936 = vld [vmem:[#allocation4 + $0xa28] sm:$0xff]
      %v6937 = vld [vmem:[#allocation4 + $0xa30] sm:$0xff]
      %v6938 = vld [vmem:[#allocation4 + $0xa38] sm:$0xff]
      %v6939 = vld [vmem:[#allocation4 + $0xa40] sm:$0xff]
      %v6940 = vld [vmem:[#allocation4 + $0xa48] sm:$0xff]
      %v6941 = vld [vmem:[#allocation4 + $0xa50] sm:$0xff]
      %v6942 = vld [vmem:[#allocation4 + $0xa58] sm:$0xff]
      %v6943 = vld [vmem:[#allocation4 + $0xa60] sm:$0xff]
      %v6944 = vld [vmem:[#allocation4 + $0xa68] sm:$0xff]
      %v6945 = vld [vmem:[#allocation4 + $0xa70] sm:$0xff]
      %v6946 = vld [vmem:[#allocation4 + $0xa78] sm:$0xff]
      %v6947 = vld [vmem:[#allocation4 + $0xa80] sm:$0xff]
      %v6948 = vld [vmem:[#allocation4 + $0xa88] sm:$0xff]
      %v6949 = vld [vmem:[#allocation4 + $0xa90] sm:$0xff]
      %v6950 = vld [vmem:[#allocation4 + $0xa98] sm:$0xff]
      %v6951 = vld [vmem:[#allocation4 + $0xaa0] sm:$0xff]
      %v6952 = vld [vmem:[#allocation4 + $0xaa8] sm:$0xff]
      %v6953 = vld [vmem:[#allocation4 + $0xab0] sm:$0xff]
      %v6954 = vld [vmem:[#allocation4 + $0xab8] sm:$0xff]
      %v6955 = vld [vmem:[#allocation4 + $0xac0] sm:$0xff]
      %v6956 = vld [vmem:[#allocation4 + $0xac8] sm:$0xff]
      %v6957 = vld [vmem:[#allocation4 + $0xad0] sm:$0xff]
      %v6958 = vld [vmem:[#allocation4 + $0xad8] sm:$0xff]
      %v6959 = vld [vmem:[#allocation4 + $0xae0] sm:$0xff]
      %v6960 = vld [vmem:[#allocation4 + $0xae8] sm:$0xff]
      %v6961 = vld [vmem:[%s12] sm:$0xf]
      %6963 = vset.pattern.permute.xlu0 0
      %6964 = vperm.xlu0 %6963, %v6961
      %v6965 = vpop.permute.xlu0 %6964
      %v6973 = vcombine.high %v6605, %v6605
      %v6974 = vcombine.high %v6606, %v6606
      %v6975 = vcombine.high %v6607, %v6607
      %v6976 = vcombine.high %v6608, %v6608
      %v6977 = vcombine.high %v6609, %v6609
      %vm6983 = vcmask 982016
      %v6984 = vsel %vm6983, %v6610, 0
      %6986 = vmatprep.subr.mxu0 %v6642
      %6987 = vmatpush1.msra.mxu0 %v6641
      %6988 = vmatprep.subr.mxu0 %v6640
      %6989 = vmatpush1.msra.mxu0 %v6639
      %6990 = vmatprep.subr.mxu0 %v6638
      %6991 = vmatpush1.msra.mxu0 %v6637
      %6992 = vmatprep.subr.mxu0 %v6636
      %6993 = vmatpush1.msra.mxu0 %v6635
      %6994 = vmatprep.subr.mxu0 %v6634
      %6995 = vmatpush1.msra.mxu0 %v6633
      %6996 = vmatprep.subr.mxu0 %v6632
      %6997 = vmatpush1.msra.mxu0 %v6631
      %6998 = vmatprep.subr.mxu0 %v6630
      %6999 = vmatpush1.msra.mxu0 %v6629
      %7000 = vmatprep.subr.mxu0 %v6628
      %7001 = vmatpush1.msra.mxu0 %v6627
      %7002 = vmatprep.subr.mxu0 %v6626
      %7003 = vmatpush1.msra.mxu0 %v6625
      %7004 = vmatprep.subr.mxu0 %v6624
      %7005 = vmatpush1.msra.mxu0 %v6623
      %7006 = vmatprep.subr.mxu0 %v6622
      %7007 = vmatpush1.msra.mxu0 %v6621
      %7008 = vmatprep.subr.mxu0 %v6620
      %7009 = vmatpush1.msra.mxu0 %v6619
      %7010 = vmatprep.subr.mxu0 %v6618
      %7011 = vmatpush1.msra.mxu0 %v6617
      %7012 = vmatprep.subr.mxu0 %v6616
      %7013 = vmatpush1.msra.mxu0 %v6615
      %7014 = vmatprep.subr.mxu0 %v6614
      %7015 = vmatpush1.msra.mxu0 %v6613
      %7016 = vmatprep.subr.mxu0 %v6612
      %7017 = vmatpush1.msra.mxu0 %v6611
      %7018 = vmatprep.subr.mxu0 %v6674
      %7019 = vmatpush2.msra.mxu0 %v6673
      %7020 = vmatprep.subr.mxu0 %v6672
      %7021 = vmatpush2.msra.mxu0 %v6671
      %7022 = vmatprep.subr.mxu0 %v6670
      %7023 = vmatpush2.msra.mxu0 %v6669
      %7024 = vmatprep.subr.mxu0 %v6668
      %7025 = vmatpush2.msra.mxu0 %v6667
      %7026 = vmatprep.subr.mxu0 %v6666
      %7027 = vmatpush2.msra.mxu0 %v6665
      %7028 = vmatprep.subr.mxu0 %v6664
      %7029 = vmatpush2.msra.mxu0 %v6663
      %7030 = vmatprep.subr.mxu0 %v6662
      %7031 = vmatpush2.msra.mxu0 %v6661
      %7032 = vmatprep.subr.mxu0 %v6660
      %7033 = vmatpush2.msra.mxu0 %v6659
      %7034 = vmatprep.subr.mxu0 %v6658
      %7035 = vmatpush2.msra.mxu0 %v6657
      %7036 = vmatprep.subr.mxu0 %v6656
      %7037 = vmatpush2.msra.mxu0 %v6655
      %7038 = vmatprep.subr.mxu0 %v6654
      %7039 = vmatpush2.msra.mxu0 %v6653
      %7040 = vmatprep.subr.mxu0 %v6652
      %7041 = vmatpush2.msra.mxu0 %v6651
      %7042 = vmatprep.subr.mxu0 %v6650
      %7043 = vmatpush2.msra.mxu0 %v6649
      %7044 = vmatprep.subr.mxu0 %v6648
      %7045 = vmatpush2.msra.mxu0 %v6647
      %7046 = vmatprep.subr.mxu0 %v6646
      %7047 = vmatpush2.msra.mxu0 %v6645
      %7048 = vmatprep.subr.mxu0 %v6644
      %7049 = vmatpush2.msra.mxu0 %v6643
      %7050 = vmatprep.mubr.f32.mxu0 %v6973
      %7051 = vmatmul.mubr.f32.gmra.mxu0 %v6605
      %v7052 = vpop.f32.mrf.mxu0
      %v7053 = vadd.f32 %v6965, %v7052
      %v7054 = vpop.f32.mrf.mxu0
      %v7055 = vadd.f32 %v6965, %v7054
      %7056 = vdwg.mxu0
      %7057 = vmatprep.subr.mxu0 %v6706
      %7058 = vmatpush1.msra.mxu0 %v6705
      %7059 = vmatprep.subr.mxu0 %v6704
      %7060 = vmatpush1.msra.mxu0 %v6703
      %7061 = vmatprep.subr.mxu0 %v6702
      %7062 = vmatpush1.msra.mxu0 %v6701
      %7063 = vmatprep.subr.mxu0 %v6700
      %7064 = vmatpush1.msra.mxu0 %v6699
      %7065 = vmatprep.subr.mxu0 %v6698
      %7066 = vmatpush1.msra.mxu0 %v6697
      %7067 = vmatprep.subr.mxu0 %v6696
      %7068 = vmatpush1.msra.mxu0 %v6695
      %7069 = vmatprep.subr.mxu0 %v6694
      %7070 = vmatpush1.msra.mxu0 %v6693
      %7071 = vmatprep.subr.mxu0 %v6692
      %7072 = vmatpush1.msra.mxu0 %v6691
      %7073 = vmatprep.subr.mxu0 %v6690
      %7074 = vmatpush1.msra.mxu0 %v6689
      %7075 = vmatprep.subr.mxu0 %v6688
      %7076 = vmatpush1.msra.mxu0 %v6687
      %7077 = vmatprep.subr.mxu0 %v6686
      %7078 = vmatpush1.msra.mxu0 %v6685
      %7079 = vmatprep.subr.mxu0 %v6684
      %7080 = vmatpush1.msra.mxu0 %v6683
      %7081 = vmatprep.subr.mxu0 %v6682
      %7082 = vmatpush1.msra.mxu0 %v6681
      %7083 = vmatprep.subr.mxu0 %v6680
      %7084 = vmatpush1.msra.mxu0 %v6679
      %7085 = vmatprep.subr.mxu0 %v6678
      %7086 = vmatpush1.msra.mxu0 %v6677
      %7087 = vmatprep.subr.mxu0 %v6676
      %7088 = vmatpush1.msra.mxu0 %v6675
      %7089 = vmatprep.subr.mxu0 %v6738
      %7090 = vmatpush2.msra.mxu0 %v6737
      %7091 = vmatprep.subr.mxu0 %v6736
      %7092 = vmatpush2.msra.mxu0 %v6735
      %7093 = vmatprep.subr.mxu0 %v6734
      %7094 = vmatpush2.msra.mxu0 %v6733
      %7095 = vmatprep.subr.mxu0 %v6732
      %7096 = vmatpush2.msra.mxu0 %v6731
      %7097 = vmatprep.subr.mxu0 %v6730
      %7098 = vmatpush2.msra.mxu0 %v6729
      %7099 = vmatprep.subr.mxu0 %v6728
      %7100 = vmatpush2.msra.mxu0 %v6727
      %7101 = vmatprep.subr.mxu0 %v6726
      %7102 = vmatpush2.msra.mxu0 %v6725
      %7103 = vmatprep.subr.mxu0 %v6724
      %7104 = vmatpush2.msra.mxu0 %v6723
      %7105 = vmatprep.subr.mxu0 %v6722
      %7106 = vmatpush2.msra.mxu0 %v6721
      %7107 = vmatprep.subr.mxu0 %v6720
      %7108 = vmatpush2.msra.mxu0 %v6719
      %7109 = vmatprep.subr.mxu0 %v6718
      %7110 = vmatpush2.msra.mxu0 %v6717
      %7111 = vmatprep.subr.mxu0 %v6716
      %7112 = vmatpush2.msra.mxu0 %v6715
      %7113 = vmatprep.subr.mxu0 %v6714
      %7114 = vmatpush2.msra.mxu0 %v6713
      %7115 = vmatprep.subr.mxu0 %v6712
      %7116 = vmatpush2.msra.mxu0 %v6711
      %7117 = vmatprep.subr.mxu0 %v6710
      %7118 = vmatpush2.msra.mxu0 %v6709
      %7119 = vmatprep.subr.mxu0 %v6708
      %7120 = vmatpush2.msra.mxu0 %v6707
      %7121 = vmatprep.mubr.f32.mxu0 %v6974
      %7122 = vmatmul.mubr.f32.gmra.mxu0 %v6606
      %v7123 = vpop.f32.mrf.mxu0
      %v7124 = vadd.f32 %v7053, %v7123
      %v7125 = vpop.f32.mrf.mxu0
      %v7126 = vadd.f32 %v7055, %v7125
      %7127 = vdwg.mxu0
      %7128 = vmatprep.subr.mxu0 %v6770
      %7129 = vmatpush1.msra.mxu0 %v6769
      %7130 = vmatprep.subr.mxu0 %v6768
      %7131 = vmatpush1.msra.mxu0 %v6767
      %7132 = vmatprep.subr.mxu0 %v6766
      %7133 = vmatpush1.msra.mxu0 %v6765
      %7134 = vmatprep.subr.mxu0 %v6764
      %7135 = vmatpush1.msra.mxu0 %v6763
      %7136 = vmatprep.subr.mxu0 %v6762
      %7137 = vmatpush1.msra.mxu0 %v6761
      %7138 = vmatprep.subr.mxu0 %v6760
      %7139 = vmatpush1.msra.mxu0 %v6759
      %7140 = vmatprep.subr.mxu0 %v6758
      %7141 = vmatpush1.msra.mxu0 %v6757
      %7142 = vmatprep.subr.mxu0 %v6756
      %7143 = vmatpush1.msra.mxu0 %v6755
      %7144 = vmatprep.subr.mxu0 %v6754
      %7145 = vmatpush1.msra.mxu0 %v6753
      %7146 = vmatprep.subr.mxu0 %v6752
      %7147 = vmatpush1.msra.mxu0 %v6751
      %7148 = vmatprep.subr.mxu0 %v6750
      %7149 = vmatpush1.msra.mxu0 %v6749
      %7150 = vmatprep.subr.mxu0 %v6748
      %7151 = vmatpush1.msra.mxu0 %v6747
      %7152 = vmatprep.subr.mxu0 %v6746
      %7153 = vmatpush1.msra.mxu0 %v6745
      %7154 = vmatprep.subr.mxu0 %v6744
      %7155 = vmatpush1.msra.mxu0 %v6743
      %7156 = vmatprep.subr.mxu0 %v6742
      %7157 = vmatpush1.msra.mxu0 %v6741
      %7158 = vmatprep.subr.mxu0 %v6740
      %7159 = vmatpush1.msra.mxu0 %v6739
      %7160 = vmatprep.subr.mxu0 %v6802
      %7161 = vmatpush2.msra.mxu0 %v6801
      %7162 = vmatprep.subr.mxu0 %v6800
      %7163 = vmatpush2.msra.mxu0 %v6799
      %7164 = vmatprep.subr.mxu0 %v6798
      %7165 = vmatpush2.msra.mxu0 %v6797
      %7166 = vmatprep.subr.mxu0 %v6796
      %7167 = vmatpush2.msra.mxu0 %v6795
      %7168 = vmatprep.subr.mxu0 %v6794
      %7169 = vmatpush2.msra.mxu0 %v6793
      %7170 = vmatprep.subr.mxu0 %v6792
      %7171 = vmatpush2.msra.mxu0 %v6791
      %7172 = vmatprep.subr.mxu0 %v6790
      %7173 = vmatpush2.msra.mxu0 %v6789
      %7174 = vmatprep.subr.mxu0 %v6788
      %7175 = vmatpush2.msra.mxu0 %v6787
      %7176 = vmatprep.subr.mxu0 %v6786
      %7177 = vmatpush2.msra.mxu0 %v6785
      %7178 = vmatprep.subr.mxu0 %v6784
      %7179 = vmatpush2.msra.mxu0 %v6783
      %7180 = vmatprep.subr.mxu0 %v6782
      %7181 = vmatpush2.msra.mxu0 %v6781
      %7182 = vmatprep.subr.mxu0 %v6780
      %7183 = vmatpush2.msra.mxu0 %v6779
      %7184 = vmatprep.subr.mxu0 %v6778
      %7185 = vmatpush2.msra.mxu0 %v6777
      %7186 = vmatprep.subr.mxu0 %v6776
      %7187 = vmatpush2.msra.mxu0 %v6775
      %7188 = vmatprep.subr.mxu0 %v6774
      %7189 = vmatpush2.msra.mxu0 %v6773
      %7190 = vmatprep.subr.mxu0 %v6772
      %7191 = vmatpush2.msra.mxu0 %v6771
      %7192 = vmatprep.mubr.f32.mxu0 %v6975
      %7193 = vmatmul.mubr.f32.gmra.mxu0 %v6607
      %v7194 = vpop.f32.mrf.mxu0
      %v7195 = vadd.f32 %v7124, %v7194
      %v7196 = vpop.f32.mrf.mxu0
      %v7197 = vadd.f32 %v7126, %v7196
      %7198 = vdwg.mxu0
      %7199 = vmatprep.subr.mxu0 %v6834
      %7200 = vmatpush1.msra.mxu0 %v6833
      %7201 = vmatprep.subr.mxu0 %v6832
      %7202 = vmatpush1.msra.mxu0 %v6831
      %7203 = vmatprep.subr.mxu0 %v6830
      %7204 = vmatpush1.msra.mxu0 %v6829
      %7205 = vmatprep.subr.mxu0 %v6828
      %7206 = vmatpush1.msra.mxu0 %v6827
      %7207 = vmatprep.subr.mxu0 %v6826
      %7208 = vmatpush1.msra.mxu0 %v6825
      %7209 = vmatprep.subr.mxu0 %v6824
      %7210 = vmatpush1.msra.mxu0 %v6823
      %7211 = vmatprep.subr.mxu0 %v6822
      %7212 = vmatpush1.msra.mxu0 %v6821
      %7213 = vmatprep.subr.mxu0 %v6820
      %7214 = vmatpush1.msra.mxu0 %v6819
      %7215 = vmatprep.subr.mxu0 %v6818
      %7216 = vmatpush1.msra.mxu0 %v6817
      %7217 = vmatprep.subr.mxu0 %v6816
      %7218 = vmatpush1.msra.mxu0 %v6815
      %7219 = vmatprep.subr.mxu0 %v6814
      %7220 = vmatpush1.msra.mxu0 %v6813
      %7221 = vmatprep.subr.mxu0 %v6812
      %7222 = vmatpush1.msra.mxu0 %v6811
      %7223 = vmatprep.subr.mxu0 %v6810
      %7224 = vmatpush1.msra.mxu0 %v6809
      %7225 = vmatprep.subr.mxu0 %v6808
      %7226 = vmatpush1.msra.mxu0 %v6807
      %7227 = vmatprep.subr.mxu0 %v6806
      %7228 = vmatpush1.msra.mxu0 %v6805
      %7229 = vmatprep.subr.mxu0 %v6804
      %7230 = vmatpush1.msra.mxu0 %v6803
      %7231 = vmatprep.subr.mxu0 %v6866
      %7232 = vmatpush2.msra.mxu0 %v6865
      %7233 = vmatprep.subr.mxu0 %v6864
      %7234 = vmatpush2.msra.mxu0 %v6863
      %7235 = vmatprep.subr.mxu0 %v6862
      %7236 = vmatpush2.msra.mxu0 %v6861
      %7237 = vmatprep.subr.mxu0 %v6860
      %7238 = vmatpush2.msra.mxu0 %v6859
      %7239 = vmatprep.subr.mxu0 %v6858
      %7240 = vmatpush2.msra.mxu0 %v6857
      %7241 = vmatprep.subr.mxu0 %v6856
      %7242 = vmatpush2.msra.mxu0 %v6855
      %7243 = vmatprep.subr.mxu0 %v6854
      %7244 = vmatpush2.msra.mxu0 %v6853
      %7245 = vmatprep.subr.mxu0 %v6852
      %7246 = vmatpush2.msra.mxu0 %v6851
      %7247 = vmatprep.subr.mxu0 %v6850
      %7248 = vmatpush2.msra.mxu0 %v6849
      %7249 = vmatprep.subr.mxu0 %v6848
      %7250 = vmatpush2.msra.mxu0 %v6847
      %7251 = vmatprep.subr.mxu0 %v6846
      %7252 = vmatpush2.msra.mxu0 %v6845
      %7253 = vmatprep.subr.mxu0 %v6844
      %7254 = vmatpush2.msra.mxu0 %v6843
      %7255 = vmatprep.subr.mxu0 %v6842
      %7256 = vmatpush2.msra.mxu0 %v6841
      %7257 = vmatprep.subr.mxu0 %v6840
      %7258 = vmatpush2.msra.mxu0 %v6839
      %7259 = vmatprep.subr.mxu0 %v6838
      %7260 = vmatpush2.msra.mxu0 %v6837
      %7261 = vmatprep.subr.mxu0 %v6836
      %7262 = vmatpush2.msra.mxu0 %v6835
      %7263 = vmatprep.mubr.f32.mxu0 %v6976
      %7264 = vmatmul.mubr.f32.gmra.mxu0 %v6608
      %v7265 = vpop.f32.mrf.mxu0
      %v7266 = vadd.f32 %v7195, %v7265
      %v7267 = vpop.f32.mrf.mxu0
      %v7268 = vadd.f32 %v7197, %v7267
      %7269 = vdwg.mxu0
      %7270 = vmatprep.subr.mxu0 %v6898
      %7271 = vmatpush1.msra.mxu0 %v6897
      %7272 = vmatprep.subr.mxu0 %v6896
      %7273 = vmatpush1.msra.mxu0 %v6895
      %7274 = vmatprep.subr.mxu0 %v6894
      %7275 = vmatpush1.msra.mxu0 %v6893
      %7276 = vmatprep.subr.mxu0 %v6892
      %7277 = vmatpush1.msra.mxu0 %v6891
      %7278 = vmatprep.subr.mxu0 %v6890
      %7279 = vmatpush1.msra.mxu0 %v6889
      %7280 = vmatprep.subr.mxu0 %v6888
      %7281 = vmatpush1.msra.mxu0 %v6887
      %7282 = vmatprep.subr.mxu0 %v6886
      %7283 = vmatpush1.msra.mxu0 %v6885
      %7284 = vmatprep.subr.mxu0 %v6884
      %7285 = vmatpush1.msra.mxu0 %v6883
      %7286 = vmatprep.subr.mxu0 %v6882
      %7287 = vmatpush1.msra.mxu0 %v6881
      %7288 = vmatprep.subr.mxu0 %v6880
      %7289 = vmatpush1.msra.mxu0 %v6879
      %7290 = vmatprep.subr.mxu0 %v6878
      %7291 = vmatpush1.msra.mxu0 %v6877
      %7292 = vmatprep.subr.mxu0 %v6876
      %7293 = vmatpush1.msra.mxu0 %v6875
      %7294 = vmatprep.subr.mxu0 %v6874
      %7295 = vmatpush1.msra.mxu0 %v6873
      %7296 = vmatprep.subr.mxu0 %v6872
      %7297 = vmatpush1.msra.mxu0 %v6871
      %7298 = vmatprep.subr.mxu0 %v6870
      %7299 = vmatpush1.msra.mxu0 %v6869
      %7300 = vmatprep.subr.mxu0 %v6868
      %7301 = vmatpush1.msra.mxu0 %v6867
      %7302 = vmatprep.subr.mxu0 %v6930
      %7303 = vmatpush2.msra.mxu0 %v6929
      %7304 = vmatprep.subr.mxu0 %v6928
      %7305 = vmatpush2.msra.mxu0 %v6927
      %7306 = vmatprep.subr.mxu0 %v6926
      %7307 = vmatpush2.msra.mxu0 %v6925
      %7308 = vmatprep.subr.mxu0 %v6924
      %7309 = vmatpush2.msra.mxu0 %v6923
      %7310 = vmatprep.subr.mxu0 %v6922
      %7311 = vmatpush2.msra.mxu0 %v6921
      %7312 = vmatprep.subr.mxu0 %v6920
      %7313 = vmatpush2.msra.mxu0 %v6919
      %7314 = vmatprep.subr.mxu0 %v6918
      %7315 = vmatpush2.msra.mxu0 %v6917
      %7316 = vmatprep.subr.mxu0 %v6916
      %7317 = vmatpush2.msra.mxu0 %v6915
      %7318 = vmatprep.subr.mxu0 %v6914
      %7319 = vmatpush2.msra.mxu0 %v6913
      %7320 = vmatprep.subr.mxu0 %v6912
      %7321 = vmatpush2.msra.mxu0 %v6911
      %7322 = vmatprep.subr.mxu0 %v6910
      %7323 = vmatpush2.msra.mxu0 %v6909
      %7324 = vmatprep.subr.mxu0 %v6908
      %7325 = vmatpush2.msra.mxu0 %v6907
      %7326 = vmatprep.subr.mxu0 %v6906
      %7327 = vmatpush2.msra.mxu0 %v6905
      %7328 = vmatprep.subr.mxu0 %v6904
      %7329 = vmatpush2.msra.mxu0 %v6903
      %7330 = vmatprep.subr.mxu0 %v6902
      %7331 = vmatpush2.msra.mxu0 %v6901
      %7332 = vmatprep.subr.mxu0 %v6900
      %7333 = vmatpush2.msra.mxu0 %v6899
      %7334 = vmatprep.mubr.f32.mxu0 %v6977
      %7335 = vmatmul.mubr.f32.gmra.mxu0 %v6609
      %v7336 = vpop.f32.mrf.mxu0
      %v7337 = vadd.f32 %v7266, %v7336
      %v7338 = vpop.f32.mrf.mxu0
      %v7339 = vadd.f32 %v7268, %v7338
      %7340 = vdwg.mxu0
      %7341 = vmatprep.subr.mxu0 0.0
      %7342 = vmatpush1.msra.mxu0 0.0
      %7343 = vmatprep.subr.mxu0 %v6960
      %7344 = vmatpush1.msra.mxu0 %v6959
      %7345 = vmatprep.subr.mxu0 %v6958
      %7346 = vmatpush1.msra.mxu0 %v6957
      %7347 = vmatprep.subr.mxu0 %v6956
      %7348 = vmatpush1.msra.mxu0 %v6955
      %7349 = vmatprep.subr.mxu0 %v6954
      %7350 = vmatpush1.msra.mxu0 %v6953
      %7351 = vmatprep.subr.mxu0 %v6952
      %7352 = vmatpush1.msra.mxu0 %v6951
      %7353 = vmatprep.subr.mxu0 %v6950
      %7354 = vmatpush1.msra.mxu0 %v6949
      %7355 = vmatprep.subr.mxu0 %v6948
      %7356 = vmatpush1.msra.mxu0 %v6947
      %7357 = vmatprep.subr.mxu0 %v6946
      %7358 = vmatpush1.msra.mxu0 %v6945
      %7359 = vmatprep.subr.mxu0 %v6944
      %7360 = vmatpush1.msra.mxu0 %v6943
      %7361 = vmatprep.subr.mxu0 %v6942
      %7362 = vmatpush1.msra.mxu0 %v6941
      %7363 = vmatprep.subr.mxu0 %v6940
      %7364 = vmatpush1.msra.mxu0 %v6939
      %7365 = vmatprep.subr.mxu0 %v6938
      %7366 = vmatpush1.msra.mxu0 %v6937
      %7367 = vmatprep.subr.mxu0 %v6936
      %7368 = vmatpush1.msra.mxu0 %v6935
      %7369 = vmatprep.subr.mxu0 %v6934
      %7370 = vmatpush1.msra.mxu0 %v6933
      %7371 = vmatprep.subr.mxu0 %v6932
      %7372 = vmatpush1.msra.mxu0 %v6931
      %7373 = vmatprep.subr.mxu0 0.0
      %7374 = vmatpush2.msra.mxu0 0.0
      %7375 = vmatprep.subr.mxu0 0.0
      %7376 = vmatpush2.msra.mxu0 0.0
      %7377 = vmatprep.subr.mxu0 0.0
      %7378 = vmatpush2.msra.mxu0 0.0
      %7379 = vmatprep.subr.mxu0 0.0
      %7380 = vmatpush2.msra.mxu0 0.0
      %7381 = vmatprep.subr.mxu0 0.0
      %7382 = vmatpush2.msra.mxu0 0.0
      %7383 = vmatprep.subr.mxu0 0.0
      %7384 = vmatpush2.msra.mxu0 0.0
      %7385 = vmatprep.subr.mxu0 0.0
      %7386 = vmatpush2.msra.mxu0 0.0
      %7387 = vmatprep.subr.mxu0 0.0
      %7388 = vmatpush2.msra.mxu0 0.0
      %7389 = vmatprep.subr.mxu0 0.0
      %7390 = vmatpush2.msra.mxu0 0.0
      %7391 = vmatprep.subr.mxu0 0.0
      %7392 = vmatpush2.msra.mxu0 0.0
      %7393 = vmatprep.subr.mxu0 0.0
      %7394 = vmatpush2.msra.mxu0 0.0
      %7395 = vmatprep.subr.mxu0 0.0
      %7396 = vmatpush2.msra.mxu0 0.0
      %7397 = vmatprep.subr.mxu0 0.0
      %7398 = vmatpush2.msra.mxu0 0.0
      %7399 = vmatprep.subr.mxu0 0.0
      %7400 = vmatpush2.msra.mxu0 0.0
      %7401 = vmatprep.subr.mxu0 0.0
      %7402 = vmatpush2.msra.mxu0 0.0
      %7403 = vmatprep.subr.mxu0 0.0
      %7404 = vmatpush2.msra.mxu0 0.0
      %7405 = vmatprep.mubr.f32.mxu0 0.0
      %7406 = vmatmul.mubr.f32.gmra.mxu0 %v6984
      %v7407 = vpop.f32.mrf.mxu0
      %v7408 = vadd.f32 %v7337, %v7407
      %v7409 = vpop.f32.mrf.mxu0
      %v7410 = vadd.f32 %v7339, %v7409
      %7411 = vdwg.mxu0
      %v7414 = vcombine.low %v7408, %v7410
      %7416 = vst [vmem:[%s437] sm:$0xff] %v7414
      %p7417 = scmp.lt.s32.totalorder %s24, 1
      %s7418 = scalar_select %p7417, %s24, 1
      %s7419 = smul.addr %s7418, 2
      %s7420 = smul.addr %s7419, 4
      %s7421 = scalar_lea.vmem %s13, %s7420
      // Predicated region
      $region73: #{fsrcnn_forward.1} parent=71 // pred_check
        %p7422 = pneg %p320
      $region74: #{fsrcnn_forward.1} parent=71 // pred_check_branch
        %7424 = sbr.rel (%p7422) target = $region76
      $region75: #{fsrcnn_forward.1} parent=71 // pred_region
        _
      $region76: #{fsrcnn_forward.1} parent=71 // pred_fallthru
        _
    $region72: #{fsrcnn_forward.1} parent=5 // pred_fallthru
      _
    %p7425 = scmp.le.s32.totalorder 2, %s19
    // Predicated region
    $region77: #{fsrcnn_forward.1} parent=5 // pred_check
      %p7426 = pneg %p7425
    $region78: #{fsrcnn_forward.1} parent=5 // pred_check_branch
      %7428 = sbr.rel (%p7426) target = $region80
    $region79: #{fsrcnn_forward.1} parent=5 // pred_region
      %s7429 = ssub.s32 %s19, 2
      // Predicated region
      $region81: #{fsrcnn_forward.1} parent=79 // pred_check
        %p7430 = pneg %p326
      $region82: #{fsrcnn_forward.1} parent=79 // pred_check_branch
        %7432 = sbr.rel (%p7430) target = $region84
      $region83: #{fsrcnn_forward.1} parent=79 // pred_region
        %p7433 = scmp.lt.s32.totalorder %s25, 1
        %s7434 = scalar_select %p7433, %s25, 1
        %s7435 = smul.addr %s7434, 2
        %s7436 = smul.addr %s7435, 4
        %s7437 = scalar_lea.vmem %s13, %s7436
      $region84: #{fsrcnn_forward.1} parent=79 // pred_fallthru
        _
    $region80: #{fsrcnn_forward.1} parent=5 // pred_fallthru
      _
  $region6: #{fsrcnn_forward.1} parent=0 // loop_footer
    %s23 = sadd.s32 1, %s19
  $region7: #{fsrcnn_forward.1} parent=0 // loop_footer_branch
    %18 = sbr.rel target = $region3
  $region8: #{fsrcnn_forward.1} parent=0 // loop_exit
    _

</llo_original>
